<compile_context>
chip_gen: v7x
topology: tpu7x:2x2x1
jax: 0.10.0
libtpu: 0.0.40
codegen_flags: <defaults>
</compile_context>

<pallas_src>
import functools

import jax
import jax.numpy as jnp
from jax.experimental import pallas as pl
from jax.experimental.pallas import tpu as pltpu

L_EMBED = 6          # unused by forward (kept for parity with the module)
TRUNK_DEPTH = 8
TRUNK_WIDTH = 256
INPUT_SIZE = 3
OUTPUT_SIZE = 4
SKIPS = (4,)
OUT_PAD = 128        # lane-dense padded output width (>= OUTPUT_SIZE)


def _round_up(x, m):
    return ((x + m - 1) // m) * m


def _pick_tile_b(batch):
    """Batch-tile size: big enough to amortize grid-step overhead, small enough
    to keep >= 2 grid steps (v7x megacore) and modest VMEM/padding waste."""
    kind = jax.devices()[0].device_kind.lower()
    older = any(t in kind for t in ("v2", "v3", "v5 lite", "v5e", "v5lite"))
    max_tile = 1024 if older else 2048
    half = (batch + 1) // 2
    return min(max_tile, max(256, _round_up(half, 256)))


def nerf_kernel(x_ref,
                w0, b0, w1, b1, w2, b2, w3, b3, w4, b4,
                w5a, w5b, b5, w6, b6, w7, b7,
                wout, bout,
                o_ref):
    """One batch-tile of the full NeRF MLP forward pass."""
    x = x_ref[...]                                            # (TB, 3) f32
    tb = x.shape[0]

    # Hoist the three lane-broadcasts of the input columns; reused by layer 0
    # and by the layer-5 skip term (x @ W5[:3]).
    xb = [jnp.broadcast_to(x[:, j:j + 1], (tb, TRUNK_WIDTH))
          for j in range(INPUT_SIZE)]

    def input_fma(w_ref, b_ref):
        # K=INPUT_SIZE contraction on the VPU: b + sum_j xb[j] * W[j, :].
        # Avoids an MXU pass that would be padded from K=3 to the full width.
        y = b_ref[...]
        for j in range(INPUT_SIZE):
            y = y + xb[j] * w_ref[j:j + 1, :]
        return y

    def lin_relu(h_f32, w_ref, b_ref):
        # bf16 operands on the MXU, f32 accumulation, f32 bias + ReLU.
        y = jnp.dot(h_f32.astype(jnp.bfloat16), w_ref[...],
                    preferred_element_type=jnp.float32)
        return jnp.maximum(y + b_ref[...], 0.0)

    # layer 0: 3 -> 256 on the VPU
    h = jnp.maximum(input_fma(w0, b0), 0.0)

    h = lin_relu(h, w1, b1)          # layer 1: 256 -> 256
    h = lin_relu(h, w2, b2)          # layer 2
    h = lin_relu(h, w3, b3)          # layer 3
    h = lin_relu(h, w4, b4)          # layer 4 (skip concat follows)

    # layer 5: cat([x, h]) @ W5 + b5  ==  x @ W5[:3] + h @ W5[3:] + b5 (exact)
    y5 = (input_fma(w5a, b5)
          + jnp.dot(h.astype(jnp.bfloat16), w5b[...],
                    preferred_element_type=jnp.float32))
    h = jnp.maximum(y5, 0.0)

    h = lin_relu(h, w6, b6)          # layer 6
    h = lin_relu(h, w7, b7)          # layer 7

    # output layer: 256 -> 128 (zero-padded from 4 -> lane-dense stores),
    # stored as bf16 to halve the padded HBM writeback.
    out = jnp.dot(h.astype(jnp.bfloat16), wout[...],
                  preferred_element_type=jnp.float32) + bout[...]
    o_ref[...] = out.astype(o_ref.dtype)


def init_params(key):
    """Deterministic synthetic parameters, stored as [in, out] / [1, out] f32."""
    W, isz, osz = TRUNK_WIDTH, INPUT_SIZE, OUTPUT_SIZE
    in_dims = [isz] + [W if i not in SKIPS else W + isz
                       for i in range(TRUNK_DEPTH - 1)]
    params = {}
    keys = jax.random.split(key, 2 * TRUNK_DEPTH + 2)
    for i, d_in in enumerate(in_dims):
        scale = 1.0 / jnp.sqrt(jnp.float32(d_in))
        params[f"w{i}"] = jax.random.uniform(
            keys[2 * i], (d_in, W), jnp.float32, -scale, scale)
        params[f"b{i}"] = jax.random.uniform(
            keys[2 * i + 1], (1, W), jnp.float32, -scale, scale)
    scale = 1.0 / jnp.sqrt(jnp.float32(W))
    params["wout"] = jax.random.uniform(
        keys[-2], (W, osz), jnp.float32, -scale, scale)
    params["bout"] = jax.random.uniform(
        keys[-1], (1, osz), jnp.float32, -scale, scale)
    return params


def nerf_forward_ref(params, x):
    """Pure-JAX f32 reference matching the PyTorch forward exactly."""
    h = x
    for i in range(TRUNK_DEPTH):
        h = jnp.maximum(h @ params[f"w{i}"] + params[f"b{i}"], 0.0)
        if i in SKIPS:
            h = jnp.concatenate([x, h], axis=-1)
    return h @ params["wout"] + params["bout"]


def nerf_forward_ref_bf16(params, x):
    """Reference that mirrors the kernel's mixed precision (bf16 MXU operands,
    f32 accumulation, f32 K=3 input paths / biases, bf16 final store)."""
    bf16 = jnp.bfloat16

    def mm(h, w):
        return jnp.dot(h.astype(bf16), w.astype(bf16),
                       preferred_element_type=jnp.float32)

    def in_mm(xx, w):  # exact f32 K=3 contraction (no MXU / no bf16 rounding)
        return sum(xx[:, j:j + 1] * w[j:j + 1, :] for j in range(INPUT_SIZE))

    h = jnp.maximum(in_mm(x, params["w0"]) + params["b0"], 0.0)
    for i in range(1, 5):
        h = jnp.maximum(mm(h, params[f"w{i}"]) + params[f"b{i}"], 0.0)
    w5 = params["w5"]
    y5 = in_mm(x, w5[:INPUT_SIZE]) + mm(h, w5[INPUT_SIZE:]) + params["b5"]
    h = jnp.maximum(y5, 0.0)
    for i in range(6, 8):
        h = jnp.maximum(mm(h, params[f"w{i}"]) + params[f"b{i}"], 0.0)
    out = mm(h, params["wout"]) + params["bout"]
    return out.astype(bf16).astype(jnp.float32)


@functools.partial(jax.jit, static_argnames=("tile_b",))
def nerf_forward_pallas(params, x, *, tile_b=None):
    B = x.shape[0]
    if tile_b is None:
        tile_b = _pick_tile_b(B)          # trace-time (static) choice
    assert tile_b % 8 == 0, "tile_b must be a multiple of 8 (sublane tiling)"

    B_pad = _round_up(max(B, 1), tile_b)
    x_pad = x if B_pad == B else jnp.pad(x, ((0, B_pad - B), (0, 0)))

    bf16 = jnp.bfloat16

    # Split layer-5 weight (259 x 256): input part stays f32 (VPU path),
    # hidden part goes bf16 (MXU path).
    w5 = params["w5"]
    w5a = w5[:INPUT_SIZE, :]
    w5b = w5[INPUT_SIZE:, :].astype(bf16)

    # Zero-pad output weight/bias 4 -> 128 lanes; MXU cost is unchanged
    # (N <= 128 is padded inside the MXU anyway), stores become lane-dense.
    wout = jnp.zeros((TRUNK_WIDTH, OUT_PAD), jnp.float32)
    wout = wout.at[:, :OUTPUT_SIZE].set(params["wout"]).astype(bf16)
    bout = jnp.zeros((1, OUT_PAD), jnp.float32)
    bout = bout.at[:, :OUTPUT_SIZE].set(params["bout"])

    flat_params = [
        params["w0"], params["b0"],                      # f32 (VPU path)
        params["w1"].astype(bf16), params["b1"],
        params["w2"].astype(bf16), params["b2"],
        params["w3"].astype(bf16), params["b3"],
        params["w4"].astype(bf16), params["b4"],
        w5a, w5b, params["b5"],
        params["w6"].astype(bf16), params["b6"],
        params["w7"].astype(bf16), params["b7"],
        wout, bout,
    ]

    # Input tiled over the batch; parameters passed as full blocks with a
    # constant index_map => they stay VMEM-resident across the whole grid.
    # (The (tile_b, 3) input DMA is tiny, ~12 B/row, and hidden under compute.)
    in_specs = [pl.BlockSpec((tile_b, INPUT_SIZE), lambda i: (i, 0))]
    for p in flat_params:
        in_specs.append(pl.BlockSpec(p.shape, lambda i: (0, 0)))

    grid = (B_pad // tile_b,)

    flops_per_row = 2 * (7 * TRUNK_WIDTH * TRUNK_WIDTH        # 7 MXU layers
                         + 2 * INPUT_SIZE * TRUNK_WIDTH       # 2 VPU input layers
                         + TRUNK_WIDTH * OUT_PAD)             # padded output layer
    param_bytes = sum(int(p.size) * p.dtype.itemsize for p in flat_params)
    cost = pl.CostEstimate(
        flops=flops_per_row * B_pad,
        transcendentals=0,
        bytes_accessed=(param_bytes
                        + int(x_pad.size) * x_pad.dtype.itemsize
                        + B_pad * OUT_PAD * 2))               # bf16 output

    out = pl.pallas_call(
        nerf_kernel,
        out_shape=jax.ShapeDtypeStruct((B_pad, OUT_PAD), jnp.bfloat16),
        grid_spec=pltpu.PrefetchScalarGridSpec(
            num_scalar_prefetch=0,
            grid=grid,
            in_specs=in_specs,
            out_specs=pl.BlockSpec((tile_b, OUT_PAD), lambda i: (i, 0)),
        ),
        compiler_params=pltpu.CompilerParams(
            dimension_semantics=("parallel",),
            vmem_limit_bytes=40 * 1024 * 1024),
        cost_estimate=cost,
    )(x_pad, *flat_params)

    # Strip batch padding / padded output lanes and return f32 (fused by XLA
    # into the same jit; consumers that accept the padded bf16 (B_pad, 128)
    # buffer can use `out` directly and skip this copy).
    return out[:B, :OUTPUT_SIZE].astype(jnp.float32)


if __name__ == "__main__":
    key = jax.random.PRNGKey(0)
    pkey, xkey = jax.random.split(key)

    params = init_params(pkey)

    # Small deterministic harness: 1000 sample points x 3 input features
    # (auto tile picker -> tile_b=512, padded to 1024 -> 2 grid steps).
    B = 1000
    x = jax.random.normal(xkey, (B, INPUT_SIZE), dtype=jnp.float32)

    out = nerf_forward_pallas(params, x)
    out = jax.block_until_ready(out)
    assert out.shape == (B, OUTPUT_SIZE)

    # Loose check vs. the exact f32 reference (bf16 trunk matmuls deviate).
    ref_f32 = nerf_forward_ref(params, x)
    assert jnp.allclose(out, ref_f32, atol=2e-2, rtol=2e-2), \
        "mismatch vs f32 JAX reference"

    # Tighter check vs. a reference that emulates the kernel's precision.
    ref_bf16 = nerf_forward_ref_bf16(params, x)
    assert jnp.allclose(out, ref_bf16, atol=1e-3, rtol=1e-2), \
        "mismatch vs bf16-emulated JAX reference"

    print("KERNEL_OK")
</pallas_src>

<mosaic_0001>
module attributes {stable_mosaic.version = 11 : i64} {
  func.func @nerf_kernel(%arg0: i32, %arg1: memref<512x3xf32, #tpu.memory_space<vmem>>, %arg2: memref<3x256xf32, #tpu.memory_space<vmem>>, %arg3: memref<1x256xf32, #tpu.memory_space<vmem>>, %arg4: memref<256x256xbf16, #tpu.memory_space<vmem>>, %arg5: memref<1x256xf32, #tpu.memory_space<vmem>>, %arg6: memref<256x256xbf16, #tpu.memory_space<vmem>>, %arg7: memref<1x256xf32, #tpu.memory_space<vmem>>, %arg8: memref<256x256xbf16, #tpu.memory_space<vmem>>, %arg9: memref<1x256xf32, #tpu.memory_space<vmem>>, %arg10: memref<256x256xbf16, #tpu.memory_space<vmem>>, %arg11: memref<1x256xf32, #tpu.memory_space<vmem>>, %arg12: memref<3x256xf32, #tpu.memory_space<vmem>>, %arg13: memref<256x256xbf16, #tpu.memory_space<vmem>>, %arg14: memref<1x256xf32, #tpu.memory_space<vmem>>, %arg15: memref<256x256xbf16, #tpu.memory_space<vmem>>, %arg16: memref<1x256xf32, #tpu.memory_space<vmem>>, %arg17: memref<256x256xbf16, #tpu.memory_space<vmem>>, %arg18: memref<1x256xf32, #tpu.memory_space<vmem>>, %arg19: memref<256x128xbf16, #tpu.memory_space<vmem>>, %arg20: memref<1x128xf32, #tpu.memory_space<vmem>>, %arg21: memref<512x128xbf16, #tpu.memory_space<vmem>>) attributes {dimension_semantics = [#tpu.dimension_semantics<parallel>], iteration_bounds = array<i64: 2>, scalar_prefetch = 0 : i64, scratch_operands = 0 : i64, tpu.core_type = #tpu.core_type<tc>, window_params = [{transform_indices = @transform_0, window_bounds = array<i64: 512, 3>}, {pipeline_mode = #tpu.pipeline_mode<synchronous>, transform_indices = @transform_1, window_bounds = array<i64: 3, 256>}, {pipeline_mode = #tpu.pipeline_mode<synchronous>, transform_indices = @transform_2, window_bounds = array<i64: 1, 256>}, {pipeline_mode = #tpu.pipeline_mode<synchronous>, transform_indices = @transform_3, window_bounds = array<i64: 256, 256>}, {pipeline_mode = #tpu.pipeline_mode<synchronous>, transform_indices = @transform_4, window_bounds = array<i64: 1, 256>}, {pipeline_mode = #tpu.pipeline_mode<synchronous>, transform_indices = @transform_5, window_bounds = array<i64: 256, 256>}, {pipeline_mode = #tpu.pipeline_mode<synchronous>, transform_indices = @transform_6, window_bounds = array<i64: 1, 256>}, {pipeline_mode = #tpu.pipeline_mode<synchronous>, transform_indices = @transform_7, window_bounds = array<i64: 256, 256>}, {pipeline_mode = #tpu.pipeline_mode<synchronous>, transform_indices = @transform_8, window_bounds = array<i64: 1, 256>}, {pipeline_mode = #tpu.pipeline_mode<synchronous>, transform_indices = @transform_9, window_bounds = array<i64: 256, 256>}, {pipeline_mode = #tpu.pipeline_mode<synchronous>, transform_indices = @transform_10, window_bounds = array<i64: 1, 256>}, {pipeline_mode = #tpu.pipeline_mode<synchronous>, transform_indices = @transform_11, window_bounds = array<i64: 3, 256>}, {pipeline_mode = #tpu.pipeline_mode<synchronous>, transform_indices = @transform_12, window_bounds = array<i64: 256, 256>}, {pipeline_mode = #tpu.pipeline_mode<synchronous>, transform_indices = @transform_13, window_bounds = array<i64: 1, 256>}, {pipeline_mode = #tpu.pipeline_mode<synchronous>, transform_indices = @transform_14, window_bounds = array<i64: 256, 256>}, {pipeline_mode = #tpu.pipeline_mode<synchronous>, transform_indices = @transform_15, window_bounds = array<i64: 1, 256>}, {pipeline_mode = #tpu.pipeline_mode<synchronous>, transform_indices = @transform_16, window_bounds = array<i64: 256, 256>}, {pipeline_mode = #tpu.pipeline_mode<synchronous>, transform_indices = @transform_17, window_bounds = array<i64: 1, 256>}, {pipeline_mode = #tpu.pipeline_mode<synchronous>, transform_indices = @transform_18, window_bounds = array<i64: 256, 128>}, {pipeline_mode = #tpu.pipeline_mode<synchronous>, transform_indices = @transform_19, window_bounds = array<i64: 1, 128>}, {transform_indices = @transform_20, window_bounds = array<i64: 512, 128>}]} {
    %c0 = arith.constant 0 : index
    %c0_0 = arith.constant 0 : index
    %0 = vector.load %arg1[%c0, %c0_0] : memref<512x3xf32, #tpu.memory_space<vmem>>, vector<512x3xf32>
    %1 = vector.extract_strided_slice %0 {offsets = [0, 0], sizes = [512, 1], strides = [1, 1]} : vector<512x3xf32> to vector<512x1xf32>
    %2 = vector.shape_cast %1 : vector<512x1xf32> to vector<512x1xf32>
    %3 = vector.broadcast %2 : vector<512x1xf32> to vector<512x256xf32>
    %4 = vector.extract_strided_slice %0 {offsets = [0, 1], sizes = [512, 1], strides = [1, 1]} : vector<512x3xf32> to vector<512x1xf32>
    %5 = vector.shape_cast %4 : vector<512x1xf32> to vector<512x1xf32>
    %6 = vector.broadcast %5 : vector<512x1xf32> to vector<512x256xf32>
    %7 = vector.extract_strided_slice %0 {offsets = [0, 2], sizes = [512, 1], strides = [1, 1]} : vector<512x3xf32> to vector<512x1xf32>
    %8 = vector.shape_cast %7 : vector<512x1xf32> to vector<512x1xf32>
    %9 = vector.broadcast %8 : vector<512x1xf32> to vector<512x256xf32>
    %c0_1 = arith.constant 0 : index
    %c0_2 = arith.constant 0 : index
    %10 = vector.load %arg3[%c0_1, %c0_2] : memref<1x256xf32, #tpu.memory_space<vmem>>, vector<1x256xf32>
    %c0_3 = arith.constant 0 : index
    %c0_4 = arith.constant 0 : index
    %11 = vector.load %arg2[%c0_3, %c0_4] : memref<3x256xf32, #tpu.memory_space<vmem>>, vector<1x256xf32>
    %12 = vector.broadcast %11 : vector<1x256xf32> to vector<512x256xf32>
    %13 = arith.mulf %3, %12 : vector<512x256xf32>
    %14 = vector.broadcast %10 : vector<1x256xf32> to vector<512x256xf32>
    %15 = arith.addf %14, %13 : vector<512x256xf32>
    %c1 = arith.constant 1 : index
    %c0_5 = arith.constant 0 : index
    %16 = vector.load %arg2[%c1, %c0_5] : memref<3x256xf32, #tpu.memory_space<vmem>>, vector<1x256xf32>
    %17 = vector.broadcast %16 : vector<1x256xf32> to vector<512x256xf32>
    %18 = arith.mulf %6, %17 : vector<512x256xf32>
    %19 = arith.addf %15, %18 : vector<512x256xf32>
    %c2 = arith.constant 2 : index
    %c0_6 = arith.constant 0 : index
    %20 = vector.load %arg2[%c2, %c0_6] : memref<3x256xf32, #tpu.memory_space<vmem>>, vector<1x256xf32>
    %21 = vector.broadcast %20 : vector<1x256xf32> to vector<512x256xf32>
    %22 = arith.mulf %9, %21 : vector<512x256xf32>
    %23 = arith.addf %19, %22 : vector<512x256xf32>
    %cst = arith.constant 0.000000e+00 : f32
    %24 = vector.broadcast %cst : f32 to vector<512x256xf32>
    %25 = arith.maximumf %23, %24 : vector<512x256xf32>
    %26 = arith.truncf %25 : vector<512x256xf32> to vector<512x256xbf16>
    %c0_7 = arith.constant 0 : index
    %c0_8 = arith.constant 0 : index
    %27 = vector.load %arg4[%c0_7, %c0_8] : memref<256x256xbf16, #tpu.memory_space<vmem>>, vector<256x256xbf16>
    %cst_9 = arith.constant dense<0.000000e+00> : vector<512x256xf32>
    %28 = tpu.matmul %26, %27, %cst_9 {dimension_numbers = #tpu.dot_dimension_numbers<[1], [0], [0], [1], [0, 0, 1, 1], [], []>} : vector<512x256xbf16>, vector<256x256xbf16>, vector<512x256xf32> -> vector<512x256xf32>
    %c0_10 = arith.constant 0 : index
    %c0_11 = arith.constant 0 : index
    %29 = vector.load %arg5[%c0_10, %c0_11] : memref<1x256xf32, #tpu.memory_space<vmem>>, vector<1x256xf32>
    %30 = vector.broadcast %29 : vector<1x256xf32> to vector<512x256xf32>
    %31 = arith.addf %28, %30 : vector<512x256xf32>
    %cst_12 = arith.constant 0.000000e+00 : f32
    %32 = vector.broadcast %cst_12 : f32 to vector<512x256xf32>
    %33 = arith.maximumf %31, %32 : vector<512x256xf32>
    %34 = arith.truncf %33 : vector<512x256xf32> to vector<512x256xbf16>
    %c0_13 = arith.constant 0 : index
    %c0_14 = arith.constant 0 : index
    %35 = vector.load %arg6[%c0_13, %c0_14] : memref<256x256xbf16, #tpu.memory_space<vmem>>, vector<256x256xbf16>
    %cst_15 = arith.constant dense<0.000000e+00> : vector<512x256xf32>
    %36 = tpu.matmul %34, %35, %cst_15 {dimension_numbers = #tpu.dot_dimension_numbers<[1], [0], [0], [1], [0, 0, 1, 1], [], []>} : vector<512x256xbf16>, vector<256x256xbf16>, vector<512x256xf32> -> vector<512x256xf32>
    %c0_16 = arith.constant 0 : index
    %c0_17 = arith.constant 0 : index
    %37 = vector.load %arg7[%c0_16, %c0_17] : memref<1x256xf32, #tpu.memory_space<vmem>>, vector<1x256xf32>
    %38 = vector.broadcast %37 : vector<1x256xf32> to vector<512x256xf32>
    %39 = arith.addf %36, %38 : vector<512x256xf32>
    %cst_18 = arith.constant 0.000000e+00 : f32
    %40 = vector.broadcast %cst_18 : f32 to vector<512x256xf32>
    %41 = arith.maximumf %39, %40 : vector<512x256xf32>
    %42 = arith.truncf %41 : vector<512x256xf32> to vector<512x256xbf16>
    %c0_19 = arith.constant 0 : index
    %c0_20 = arith.constant 0 : index
    %43 = vector.load %arg8[%c0_19, %c0_20] : memref<256x256xbf16, #tpu.memory_space<vmem>>, vector<256x256xbf16>
    %cst_21 = arith.constant dense<0.000000e+00> : vector<512x256xf32>
    %44 = tpu.matmul %42, %43, %cst_21 {dimension_numbers = #tpu.dot_dimension_numbers<[1], [0], [0], [1], [0, 0, 1, 1], [], []>} : vector<512x256xbf16>, vector<256x256xbf16>, vector<512x256xf32> -> vector<512x256xf32>
    %c0_22 = arith.constant 0 : index
    %c0_23 = arith.constant 0 : index
    %45 = vector.load %arg9[%c0_22, %c0_23] : memref<1x256xf32, #tpu.memory_space<vmem>>, vector<1x256xf32>
    %46 = vector.broadcast %45 : vector<1x256xf32> to vector<512x256xf32>
    %47 = arith.addf %44, %46 : vector<512x256xf32>
    %cst_24 = arith.constant 0.000000e+00 : f32
    %48 = vector.broadcast %cst_24 : f32 to vector<512x256xf32>
    %49 = arith.maximumf %47, %48 : vector<512x256xf32>
    %50 = arith.truncf %49 : vector<512x256xf32> to vector<512x256xbf16>
    %c0_25 = arith.constant 0 : index
    %c0_26 = arith.constant 0 : index
    %51 = vector.load %arg10[%c0_25, %c0_26] : memref<256x256xbf16, #tpu.memory_space<vmem>>, vector<256x256xbf16>
    %cst_27 = arith.constant dense<0.000000e+00> : vector<512x256xf32>
    %52 = tpu.matmul %50, %51, %cst_27 {dimension_numbers = #tpu.dot_dimension_numbers<[1], [0], [0], [1], [0, 0, 1, 1], [], []>} : vector<512x256xbf16>, vector<256x256xbf16>, vector<512x256xf32> -> vector<512x256xf32>
    %c0_28 = arith.constant 0 : index
    %c0_29 = arith.constant 0 : index
    %53 = vector.load %arg11[%c0_28, %c0_29] : memref<1x256xf32, #tpu.memory_space<vmem>>, vector<1x256xf32>
    %54 = vector.broadcast %53 : vector<1x256xf32> to vector<512x256xf32>
    %55 = arith.addf %52, %54 : vector<512x256xf32>
    %cst_30 = arith.constant 0.000000e+00 : f32
    %56 = vector.broadcast %cst_30 : f32 to vector<512x256xf32>
    %57 = arith.maximumf %55, %56 : vector<512x256xf32>
    %c0_31 = arith.constant 0 : index
    %c0_32 = arith.constant 0 : index
    %58 = vector.load %arg14[%c0_31, %c0_32] : memref<1x256xf32, #tpu.memory_space<vmem>>, vector<1x256xf32>
    %c0_33 = arith.constant 0 : index
    %c0_34 = arith.constant 0 : index
    %59 = vector.load %arg12[%c0_33, %c0_34] : memref<3x256xf32, #tpu.memory_space<vmem>>, vector<1x256xf32>
    %60 = vector.broadcast %59 : vector<1x256xf32> to vector<512x256xf32>
    %61 = arith.mulf %3, %60 : vector<512x256xf32>
    %62 = vector.broadcast %58 : vector<1x256xf32> to vector<512x256xf32>
    %63 = arith.addf %62, %61 : vector<512x256xf32>
    %c1_35 = arith.constant 1 : index
    %c0_36 = arith.constant 0 : index
    %64 = vector.load %arg12[%c1_35, %c0_36] : memref<3x256xf32, #tpu.memory_space<vmem>>, vector<1x256xf32>
    %65 = vector.broadcast %64 : vector<1x256xf32> to vector<512x256xf32>
    %66 = arith.mulf %6, %65 : vector<512x256xf32>
    %67 = arith.addf %63, %66 : vector<512x256xf32>
    %c2_37 = arith.constant 2 : index
    %c0_38 = arith.constant 0 : index
    %68 = vector.load %arg12[%c2_37, %c0_38] : memref<3x256xf32, #tpu.memory_space<vmem>>, vector<1x256xf32>
    %69 = vector.broadcast %68 : vector<1x256xf32> to vector<512x256xf32>
    %70 = arith.mulf %9, %69 : vector<512x256xf32>
    %71 = arith.addf %67, %70 : vector<512x256xf32>
    %72 = arith.truncf %57 : vector<512x256xf32> to vector<512x256xbf16>
    %c0_39 = arith.constant 0 : index
    %c0_40 = arith.constant 0 : index
    %73 = vector.load %arg13[%c0_39, %c0_40] : memref<256x256xbf16, #tpu.memory_space<vmem>>, vector<256x256xbf16>
    %cst_41 = arith.constant dense<0.000000e+00> : vector<512x256xf32>
    %74 = tpu.matmul %72, %73, %cst_41 {dimension_numbers = #tpu.dot_dimension_numbers<[1], [0], [0], [1], [0, 0, 1, 1], [], []>} : vector<512x256xbf16>, vector<256x256xbf16>, vector<512x256xf32> -> vector<512x256xf32>
    %75 = arith.addf %71, %74 : vector<512x256xf32>
    %cst_42 = arith.constant 0.000000e+00 : f32
    %76 = vector.broadcast %cst_42 : f32 to vector<512x256xf32>
    %77 = arith.maximumf %75, %76 : vector<512x256xf32>
    %78 = arith.truncf %77 : vector<512x256xf32> to vector<512x256xbf16>
    %c0_43 = arith.constant 0 : index
    %c0_44 = arith.constant 0 : index
    %79 = vector.load %arg15[%c0_43, %c0_44] : memref<256x256xbf16, #tpu.memory_space<vmem>>, vector<256x256xbf16>
    %cst_45 = arith.constant dense<0.000000e+00> : vector<512x256xf32>
    %80 = tpu.matmul %78, %79, %cst_45 {dimension_numbers = #tpu.dot_dimension_numbers<[1], [0], [0], [1], [0, 0, 1, 1], [], []>} : vector<512x256xbf16>, vector<256x256xbf16>, vector<512x256xf32> -> vector<512x256xf32>
    %c0_46 = arith.constant 0 : index
    %c0_47 = arith.constant 0 : index
    %81 = vector.load %arg16[%c0_46, %c0_47] : memref<1x256xf32, #tpu.memory_space<vmem>>, vector<1x256xf32>
    %82 = vector.broadcast %81 : vector<1x256xf32> to vector<512x256xf32>
    %83 = arith.addf %80, %82 : vector<512x256xf32>
    %cst_48 = arith.constant 0.000000e+00 : f32
    %84 = vector.broadcast %cst_48 : f32 to vector<512x256xf32>
    %85 = arith.maximumf %83, %84 : vector<512x256xf32>
    %86 = arith.truncf %85 : vector<512x256xf32> to vector<512x256xbf16>
    %c0_49 = arith.constant 0 : index
    %c0_50 = arith.constant 0 : index
    %87 = vector.load %arg17[%c0_49, %c0_50] : memref<256x256xbf16, #tpu.memory_space<vmem>>, vector<256x256xbf16>
    %cst_51 = arith.constant dense<0.000000e+00> : vector<512x256xf32>
    %88 = tpu.matmul %86, %87, %cst_51 {dimension_numbers = #tpu.dot_dimension_numbers<[1], [0], [0], [1], [0, 0, 1, 1], [], []>} : vector<512x256xbf16>, vector<256x256xbf16>, vector<512x256xf32> -> vector<512x256xf32>
    %c0_52 = arith.constant 0 : index
    %c0_53 = arith.constant 0 : index
    %89 = vector.load %arg18[%c0_52, %c0_53] : memref<1x256xf32, #tpu.memory_space<vmem>>, vector<1x256xf32>
    %90 = vector.broadcast %89 : vector<1x256xf32> to vector<512x256xf32>
    %91 = arith.addf %88, %90 : vector<512x256xf32>
    %cst_54 = arith.constant 0.000000e+00 : f32
    %92 = vector.broadcast %cst_54 : f32 to vector<512x256xf32>
    %93 = arith.maximumf %91, %92 : vector<512x256xf32>
    %94 = arith.truncf %93 : vector<512x256xf32> to vector<512x256xbf16>
    %c0_55 = arith.constant 0 : index
    %c0_56 = arith.constant 0 : index
    %95 = vector.load %arg19[%c0_55, %c0_56] : memref<256x128xbf16, #tpu.memory_space<vmem>>, vector<256x128xbf16>
    %cst_57 = arith.constant dense<0.000000e+00> : vector<512x128xf32>
    %96 = tpu.matmul %94, %95, %cst_57 {dimension_numbers = #tpu.dot_dimension_numbers<[1], [0], [0], [1], [0, 0, 1, 1], [], []>} : vector<512x256xbf16>, vector<256x128xbf16>, vector<512x128xf32> -> vector<512x128xf32>
    %c0_58 = arith.constant 0 : index
    %c0_59 = arith.constant 0 : index
    %97 = vector.load %arg20[%c0_58, %c0_59] : memref<1x128xf32, #tpu.memory_space<vmem>>, vector<1x128xf32>
    %98 = vector.broadcast %97 : vector<1x128xf32> to vector<512x128xf32>
    %99 = arith.addf %96, %98 : vector<512x128xf32>
    %100 = arith.truncf %99 : vector<512x128xf32> to vector<512x128xbf16>
    %c0_60 = arith.constant 0 : index
    %c0_61 = arith.constant 0 : index
    %101 = vector.load %arg21[%c0_60, %c0_61] : memref<512x128xbf16, #tpu.memory_space<vmem>>, vector<512x128xbf16>
    tpu.vector_store %arg21[%c0_60, %c0_61], %100 {strides = array<i32>} : memref<512x128xbf16, #tpu.memory_space<vmem>>, vector<512x128xbf16>,
    return
  }
  func.func @transform_0(%arg0: i32) -> (i32, i32) {
    %c0_i32 = arith.constant 0 : i32
    %c0_i32_0 = arith.constant 0 : i32
    return %arg0, %c0_i32 : i32, i32
  }
  func.func @transform_1(%arg0: i32) -> (i32, i32) {
    %c0_i32 = arith.constant 0 : i32
    %c0_i32_0 = arith.constant 0 : i32
    %c0_i32_1 = arith.constant 0 : i32
    return %c0_i32, %c0_i32_0 : i32, i32
  }
  func.func @transform_2(%arg0: i32) -> (i32, i32) {
    %c0_i32 = arith.constant 0 : i32
    %c0_i32_0 = arith.constant 0 : i32
    %c0_i32_1 = arith.constant 0 : i32
    return %c0_i32, %c0_i32_0 : i32, i32
  }
  func.func @transform_3(%arg0: i32) -> (i32, i32) {
    %c0_i32 = arith.constant 0 : i32
    %c0_i32_0 = arith.constant 0 : i32
    %c0_i32_1 = arith.constant 0 : i32
    return %c0_i32, %c0_i32_0 : i32, i32
  }
  func.func @transform_4(%arg0: i32) -> (i32, i32) {
    %c0_i32 = arith.constant 0 : i32
    %c0_i32_0 = arith.constant 0 : i32
    %c0_i32_1 = arith.constant 0 : i32
    return %c0_i32, %c0_i32_0 : i32, i32
  }
  func.func @transform_5(%arg0: i32) -> (i32, i32) {
    %c0_i32 = arith.constant 0 : i32
    %c0_i32_0 = arith.constant 0 : i32
    %c0_i32_1 = arith.constant 0 : i32
    return %c0_i32, %c0_i32_0 : i32, i32
  }
  func.func @transform_6(%arg0: i32) -> (i32, i32) {
    %c0_i32 = arith.constant 0 : i32
    %c0_i32_0 = arith.constant 0 : i32
    %c0_i32_1 = arith.constant 0 : i32
    return %c0_i32, %c0_i32_0 : i32, i32
  }
  func.func @transform_7(%arg0: i32) -> (i32, i32) {
    %c0_i32 = arith.constant 0 : i32
    %c0_i32_0 = arith.constant 0 : i32
    %c0_i32_1 = arith.constant 0 : i32
    return %c0_i32, %c0_i32_0 : i32, i32
  }
  func.func @transform_8(%arg0: i32) -> (i32, i32) {
    %c0_i32 = arith.constant 0 : i32
    %c0_i32_0 = arith.constant 0 : i32
    %c0_i32_1 = arith.constant 0 : i32
    return %c0_i32, %c0_i32_0 : i32, i32
  }
  func.func @transform_9(%arg0: i32) -> (i32, i32) {
    %c0_i32 = arith.constant 0 : i32
    %c0_i32_0 = arith.constant 0 : i32
    %c0_i32_1 = arith.constant 0 : i32
    return %c0_i32, %c0_i32_0 : i32, i32
  }
  func.func @transform_10(%arg0: i32) -> (i32, i32) {
    %c0_i32 = arith.constant 0 : i32
    %c0_i32_0 = arith.constant 0 : i32
    %c0_i32_1 = arith.constant 0 : i32
    return %c0_i32, %c0_i32_0 : i32, i32
  }
  func.func @transform_11(%arg0: i32) -> (i32, i32) {
    %c0_i32 = arith.constant 0 : i32
    %c0_i32_0 = arith.constant 0 : i32
    %c0_i32_1 = arith.constant 0 : i32
    return %c0_i32, %c0_i32_0 : i32, i32
  }
  func.func @transform_12(%arg0: i32) -> (i32, i32) {
    %c0_i32 = arith.constant 0 : i32
    %c0_i32_0 = arith.constant 0 : i32
    %c0_i32_1 = arith.constant 0 : i32
    return %c0_i32, %c0_i32_0 : i32, i32
  }
  func.func @transform_13(%arg0: i32) -> (i32, i32) {
    %c0_i32 = arith.constant 0 : i32
    %c0_i32_0 = arith.constant 0 : i32
    %c0_i32_1 = arith.constant 0 : i32
    return %c0_i32, %c0_i32_0 : i32, i32
  }
  func.func @transform_14(%arg0: i32) -> (i32, i32) {
    %c0_i32 = arith.constant 0 : i32
    %c0_i32_0 = arith.constant 0 : i32
    %c0_i32_1 = arith.constant 0 : i32
    return %c0_i32, %c0_i32_0 : i32, i32
  }
  func.func @transform_15(%arg0: i32) -> (i32, i32) {
    %c0_i32 = arith.constant 0 : i32
    %c0_i32_0 = arith.constant 0 : i32
    %c0_i32_1 = arith.constant 0 : i32
    return %c0_i32, %c0_i32_0 : i32, i32
  }
  func.func @transform_16(%arg0: i32) -> (i32, i32) {
    %c0_i32 = arith.constant 0 : i32
    %c0_i32_0 = arith.constant 0 : i32
    %c0_i32_1 = arith.constant 0 : i32
    return %c0_i32, %c0_i32_0 : i32, i32
  }
  func.func @transform_17(%arg0: i32) -> (i32, i32) {
    %c0_i32 = arith.constant 0 : i32
    %c0_i32_0 = arith.constant 0 : i32
    %c0_i32_1 = arith.constant 0 : i32
    return %c0_i32, %c0_i32_0 : i32, i32
  }
  func.func @transform_18(%arg0: i32) -> (i32, i32) {
    %c0_i32 = arith.constant 0 : i32
    %c0_i32_0 = arith.constant 0 : i32
    %c0_i32_1 = arith.constant 0 : i32
    return %c0_i32, %c0_i32_0 : i32, i32
  }
  func.func @transform_19(%arg0: i32) -> (i32, i32) {
    %c0_i32 = arith.constant 0 : i32
    %c0_i32_0 = arith.constant 0 : i32
    %c0_i32_1 = arith.constant 0 : i32
    return %c0_i32, %c0_i32_0 : i32, i32
  }
  func.func @transform_20(%arg0: i32) -> (i32, i32) {
    %c0_i32 = arith.constant 0 : i32
    %c0_i32_0 = arith.constant 0 : i32
    return %arg0, %c0_i32 : i32, i32
  }
}

</mosaic_0001>

<llo_original>
// kernel: nerf_forward_pallas.1
$region0: #{nerf_forward_pallas.1}
  #allocation0 [shape = 'u32[]', space=smem, size = 0x4, offset = 0x4, fixed_abs, tag = 'smem constant byte address 0x4 - core index']
  #allocation1 [shape = 'u32[144,128]{1,0:T(1,128)}', space=vmem, size = 0x12000, scoped, tag = 'internal scratch']
  %s0 = inlined_call_operand.vmem [shape: f32[1024,3], index: 0, kind: input, shape index: {}]
  %s1 = inlined_call_operand.vmem [shape: f32[3,256], index: 1, kind: input, shape index: {}]
  %s2 = inlined_call_operand.vmem [shape: f32[1,256], index: 2, kind: input, shape index: {}]
  %s3 = inlined_call_operand.vmem [shape: bf16[256,256], index: 3, kind: input, shape index: {}]
  %s4 = inlined_call_operand.vmem [shape: f32[1,256], index: 4, kind: input, shape index: {}]
  %s5 = inlined_call_operand.vmem [shape: bf16[256,256], index: 5, kind: input, shape index: {}]
  %s6 = inlined_call_operand.vmem [shape: f32[1,256], index: 6, kind: input, shape index: {}]
  %s7 = inlined_call_operand.vmem [shape: bf16[256,256], index: 7, kind: input, shape index: {}]
  %s8 = inlined_call_operand.vmem [shape: f32[1,256], index: 8, kind: input, shape index: {}]
  %s9 = inlined_call_operand.vmem [shape: bf16[256,256], index: 9, kind: input, shape index: {}]
  %s10 = inlined_call_operand.vmem [shape: f32[1,256], index: 10, kind: input, shape index: {}]
  %s11 = inlined_call_operand.vmem [shape: f32[3,256], index: 11, kind: input, shape index: {}]
  %s12 = inlined_call_operand.vmem [shape: bf16[256,256], index: 12, kind: input, shape index: {}]
  %s13 = inlined_call_operand.vmem [shape: f32[1,256], index: 13, kind: input, shape index: {}]
  %s14 = inlined_call_operand.vmem [shape: bf16[256,256], index: 14, kind: input, shape index: {}]
  %s15 = inlined_call_operand.vmem [shape: f32[1,256], index: 15, kind: input, shape index: {}]
  %s16 = inlined_call_operand.vmem [shape: bf16[256,256], index: 16, kind: input, shape index: {}]
  %s17 = inlined_call_operand.vmem [shape: f32[1,256], index: 17, kind: input, shape index: {}]
  %s18 = inlined_call_operand.vmem [shape: bf16[256,128], index: 18, kind: input, shape index: {}]
  %s19 = inlined_call_operand.vmem [shape: f32[1,128], index: 19, kind: input, shape index: {}]
  %s20 = inlined_call_operand.vmem [shape: bf16[1024,128], index: 20, kind: output, shape index: {}]
  %s21 = sld [smem:[#allocation0]]
  $region113: #{nerf_forward_pallas.1} parent=0
    _
  %s23 = ssub.s32 1, %s21
  %s24 = scalar_select 0, %s23, %s21
  loop: start=0, step=1, limit=4
  $region2: #{nerf_forward_pallas.1} parent=0 // loop_pre_header
    _
  $region3: #{nerf_forward_pallas.1} parent=0 // loop_header
    %s26 = sphi 0, %s30
    %p27 = scmp.ge.s32.totalorder %s26, 4
    %s36 = sphi 0, %s38
    %s39 = sphi 0, %s36
    %s40 = sphi 0, %s39
    %s56 = sphi 0, %s40
    %s60 = sphi 0, %s60
    %s62 = sphi 0, %s60
    %s63 = sphi 0, %s62
    %s77 = sphi 0, %s63
    %s81 = sphi 0, %s81
    %s83 = sphi 0, %s81
    %s84 = sphi 0, %s83
    %s98 = sphi 0, %s84
    %s102 = sphi 0, %s102
    %s104 = sphi 0, %s102
    %s105 = sphi 0, %s104
    %s119 = sphi 0, %s105
    %s123 = sphi 0, %s123
    %s125 = sphi 0, %s123
    %s126 = sphi 0, %s125
    %s140 = sphi 0, %s126
    %s144 = sphi 0, %s144
    %s146 = sphi 0, %s144
    %s147 = sphi 0, %s146
    %s161 = sphi 0, %s147
    %s165 = sphi 0, %s165
    %s167 = sphi 0, %s165
    %s168 = sphi 0, %s167
    %s182 = sphi 0, %s168
    %s186 = sphi 0, %s186
    %s188 = sphi 0, %s186
    %s189 = sphi 0, %s188
    %s203 = sphi 0, %s189
    %s207 = sphi 0, %s207
    %s209 = sphi 0, %s207
    %s210 = sphi 0, %s209
    %s224 = sphi 0, %s210
    %s228 = sphi 0, %s228
    %s230 = sphi 0, %s228
    %s231 = sphi 0, %s230
    %s245 = sphi 0, %s231
    %s249 = sphi 0, %s249
    %s251 = sphi 0, %s249
    %s252 = sphi 0, %s251
    %s266 = sphi 0, %s252
    %s270 = sphi 0, %s270
    %s272 = sphi 0, %s270
    %s273 = sphi 0, %s272
    %s287 = sphi 0, %s273
    %s291 = sphi 0, %s291
    %s293 = sphi 0, %s291
    %s294 = sphi 0, %s293
    %s308 = sphi 0, %s294
    %s312 = sphi 0, %s312
    %s314 = sphi 0, %s312
    %s315 = sphi 0, %s314
    %s329 = sphi 0, %s315
    %s333 = sphi 0, %s333
    %s335 = sphi 0, %s333
    %s336 = sphi 0, %s335
    %s350 = sphi 0, %s336
    %s354 = sphi 0, %s354
    %s356 = sphi 0, %s354
    %s357 = sphi 0, %s356
    %s371 = sphi 0, %s357
    %s375 = sphi 0, %s375
    %s377 = sphi 0, %s375
    %s378 = sphi 0, %s377
    %s392 = sphi 0, %s378
    %s396 = sphi 0, %s396
    %s398 = sphi 0, %s396
    %s399 = sphi 0, %s398
    %s413 = sphi 0, %s399
    %s417 = sphi 0, %s417
    %s419 = sphi 0, %s417
    %s420 = sphi 0, %s419
    %s434 = sphi 0, %s420
    %s438 = sphi 0, %s438
    %s440 = sphi 0, %s438
    %s441 = sphi 0, %s440
    %s455 = sphi 0, %s441
    %s461 = sphi 0, %s463
    %s464 = sphi 0, %s461
    %s465 = sphi 0, %s464
    %s481 = sphi 0, %s465
  $region4: #{nerf_forward_pallas.1} parent=0 // loop_header_branch
    %29 = sbr.rel (%p27) target = $region8
  $region5: #{nerf_forward_pallas.1} parent=0 // loop_body
    %s31 = ssub.s32 %s26, 1
    %s32 = ssub.s32 %s26, 2
    %s33 = sadd.s32 %s26, 1
    %s34 = ssub.s32 %s26, %s33
    %p35 = scmp.eq.s32.totalorder %s34, 0
    %s37 = sadd.s32 %s36, 1
    %s38 = scalar_select %p35, %s36, %s37
    %p41 = pneg %p35
    %p42 = scmp.eq.s32.totalorder %s26, 1
    %p43 = por %p41, %p42
    %p44 = scmp.ne.s32.totalorder %s36, %s39
    %p45 = scmp.eq.s32.totalorder %s26, 0
    %p46 = por %p44, %p45
    %p47 = scmp.ne.s32.totalorder %s36, %s39
    %p48 = scmp.eq.s32.totalorder %s31, 1
    %p49 = por %p47, %p48
    %p50 = scmp.ne.s32.totalorder %s39, %s40
    %p51 = scmp.eq.s32.totalorder %s31, 0
    %p52 = por %p50, %p51
    %p53 = scmp.ne.s32.totalorder %s39, %s40
    %p54 = scmp.eq.s32.totalorder %s32, 1
    %p55 = por %p53, %p54
    %p57 = scmp.ne.s32.totalorder %s40, %s56
    %p58 = scmp.eq.s32.totalorder %s32, 0
    %p59 = por %p57, %p58
    %s61 = sadd.s32 %s60, 1
    %p64 = scmp.eq.s32.totalorder %s26, 1
    %p65 = scmp.ne.s32.totalorder %s60, %s62
    %p66 = scmp.eq.s32.totalorder %s26, 0
    %p67 = por %p65, %p66
    %p68 = scmp.ne.s32.totalorder %s60, %s62
    %p69 = scmp.eq.s32.totalorder %s31, 1
    %p70 = por %p68, %p69
    %p71 = scmp.ne.s32.totalorder %s62, %s63
    %p72 = scmp.eq.s32.totalorder %s31, 0
    %p73 = por %p71, %p72
    %p74 = scmp.ne.s32.totalorder %s62, %s63
    %p75 = scmp.eq.s32.totalorder %s32, 1
    %p76 = por %p74, %p75
    %p78 = scmp.ne.s32.totalorder %s63, %s77
    %p79 = scmp.eq.s32.totalorder %s32, 0
    %p80 = por %p78, %p79
    %s82 = sadd.s32 %s81, 1
    %p85 = scmp.eq.s32.totalorder %s26, 1
    %p86 = scmp.ne.s32.totalorder %s81, %s83
    %p87 = scmp.eq.s32.totalorder %s26, 0
    %p88 = por %p86, %p87
    %p89 = scmp.ne.s32.totalorder %s81, %s83
    %p90 = scmp.eq.s32.totalorder %s31, 1
    %p91 = por %p89, %p90
    %p92 = scmp.ne.s32.totalorder %s83, %s84
    %p93 = scmp.eq.s32.totalorder %s31, 0
    %p94 = por %p92, %p93
    %p95 = scmp.ne.s32.totalorder %s83, %s84
    %p96 = scmp.eq.s32.totalorder %s32, 1
    %p97 = por %p95, %p96
    %p99 = scmp.ne.s32.totalorder %s84, %s98
    %p100 = scmp.eq.s32.totalorder %s32, 0
    %p101 = por %p99, %p100
    %s103 = sadd.s32 %s102, 1
    %p106 = scmp.eq.s32.totalorder %s26, 1
    %p107 = scmp.ne.s32.totalorder %s102, %s104
    %p108 = scmp.eq.s32.totalorder %s26, 0
    %p109 = por %p107, %p108
    %p110 = scmp.ne.s32.totalorder %s102, %s104
    %p111 = scmp.eq.s32.totalorder %s31, 1
    %p112 = por %p110, %p111
    %p113 = scmp.ne.s32.totalorder %s104, %s105
    %p114 = scmp.eq.s32.totalorder %s31, 0
    %p115 = por %p113, %p114
    %p116 = scmp.ne.s32.totalorder %s104, %s105
    %p117 = scmp.eq.s32.totalorder %s32, 1
    %p118 = por %p116, %p117
    %p120 = scmp.ne.s32.totalorder %s105, %s119
    %p121 = scmp.eq.s32.totalorder %s32, 0
    %p122 = por %p120, %p121
    %s124 = sadd.s32 %s123, 1
    %p127 = scmp.eq.s32.totalorder %s26, 1
    %p128 = scmp.ne.s32.totalorder %s123, %s125
    %p129 = scmp.eq.s32.totalorder %s26, 0
    %p130 = por %p128, %p129
    %p131 = scmp.ne.s32.totalorder %s123, %s125
    %p132 = scmp.eq.s32.totalorder %s31, 1
    %p133 = por %p131, %p132
    %p134 = scmp.ne.s32.totalorder %s125, %s126
    %p135 = scmp.eq.s32.totalorder %s31, 0
    %p136 = por %p134, %p135
    %p137 = scmp.ne.s32.totalorder %s125, %s126
    %p138 = scmp.eq.s32.totalorder %s32, 1
    %p139 = por %p137, %p138
    %p141 = scmp.ne.s32.totalorder %s126, %s140
    %p142 = scmp.eq.s32.totalorder %s32, 0
    %p143 = por %p141, %p142
    %s145 = sadd.s32 %s144, 1
    %p148 = scmp.eq.s32.totalorder %s26, 1
    %p149 = scmp.ne.s32.totalorder %s144, %s146
    %p150 = scmp.eq.s32.totalorder %s26, 0
    %p151 = por %p149, %p150
    %p152 = scmp.ne.s32.totalorder %s144, %s146
    %p153 = scmp.eq.s32.totalorder %s31, 1
    %p154 = por %p152, %p153
    %p155 = scmp.ne.s32.totalorder %s146, %s147
    %p156 = scmp.eq.s32.totalorder %s31, 0
    %p157 = por %p155, %p156
    %p158 = scmp.ne.s32.totalorder %s146, %s147
    %p159 = scmp.eq.s32.totalorder %s32, 1
    %p160 = por %p158, %p159
    %p162 = scmp.ne.s32.totalorder %s147, %s161
    %p163 = scmp.eq.s32.totalorder %s32, 0
    %p164 = por %p162, %p163
    %s166 = sadd.s32 %s165, 1
    %p169 = scmp.eq.s32.totalorder %s26, 1
    %p170 = scmp.ne.s32.totalorder %s165, %s167
    %p171 = scmp.eq.s32.totalorder %s26, 0
    %p172 = por %p170, %p171
    %p173 = scmp.ne.s32.totalorder %s165, %s167
    %p174 = scmp.eq.s32.totalorder %s31, 1
    %p175 = por %p173, %p174
    %p176 = scmp.ne.s32.totalorder %s167, %s168
    %p177 = scmp.eq.s32.totalorder %s31, 0
    %p178 = por %p176, %p177
    %p179 = scmp.ne.s32.totalorder %s167, %s168
    %p180 = scmp.eq.s32.totalorder %s32, 1
    %p181 = por %p179, %p180
    %p183 = scmp.ne.s32.totalorder %s168, %s182
    %p184 = scmp.eq.s32.totalorder %s32, 0
    %p185 = por %p183, %p184
    %s187 = sadd.s32 %s186, 1
    %p190 = scmp.eq.s32.totalorder %s26, 1
    %p191 = scmp.ne.s32.totalorder %s186, %s188
    %p192 = scmp.eq.s32.totalorder %s26, 0
    %p193 = por %p191, %p192
    %p194 = scmp.ne.s32.totalorder %s186, %s188
    %p195 = scmp.eq.s32.totalorder %s31, 1
    %p196 = por %p194, %p195
    %p197 = scmp.ne.s32.totalorder %s188, %s189
    %p198 = scmp.eq.s32.totalorder %s31, 0
    %p199 = por %p197, %p198
    %p200 = scmp.ne.s32.totalorder %s188, %s189
    %p201 = scmp.eq.s32.totalorder %s32, 1
    %p202 = por %p200, %p201
    %p204 = scmp.ne.s32.totalorder %s189, %s203
    %p205 = scmp.eq.s32.totalorder %s32, 0
    %p206 = por %p204, %p205
    %s208 = sadd.s32 %s207, 1
    %p211 = scmp.eq.s32.totalorder %s26, 1
    %p212 = scmp.ne.s32.totalorder %s207, %s209
    %p213 = scmp.eq.s32.totalorder %s26, 0
    %p214 = por %p212, %p213
    %p215 = scmp.ne.s32.totalorder %s207, %s209
    %p216 = scmp.eq.s32.totalorder %s31, 1
    %p217 = por %p215, %p216
    %p218 = scmp.ne.s32.totalorder %s209, %s210
    %p219 = scmp.eq.s32.totalorder %s31, 0
    %p220 = por %p218, %p219
    %p221 = scmp.ne.s32.totalorder %s209, %s210
    %p222 = scmp.eq.s32.totalorder %s32, 1
    %p223 = por %p221, %p222
    %p225 = scmp.ne.s32.totalorder %s210, %s224
    %p226 = scmp.eq.s32.totalorder %s32, 0
    %p227 = por %p225, %p226
    %s229 = sadd.s32 %s228, 1
    %p232 = scmp.eq.s32.totalorder %s26, 1
    %p233 = scmp.ne.s32.totalorder %s228, %s230
    %p234 = scmp.eq.s32.totalorder %s26, 0
    %p235 = por %p233, %p234
    %p236 = scmp.ne.s32.totalorder %s228, %s230
    %p237 = scmp.eq.s32.totalorder %s31, 1
    %p238 = por %p236, %p237
    %p239 = scmp.ne.s32.totalorder %s230, %s231
    %p240 = scmp.eq.s32.totalorder %s31, 0
    %p241 = por %p239, %p240
    %p242 = scmp.ne.s32.totalorder %s230, %s231
    %p243 = scmp.eq.s32.totalorder %s32, 1
    %p244 = por %p242, %p243
    %p246 = scmp.ne.s32.totalorder %s231, %s245
    %p247 = scmp.eq.s32.totalorder %s32, 0
    %p248 = por %p246, %p247
    %s250 = sadd.s32 %s249, 1
    %p253 = scmp.eq.s32.totalorder %s26, 1
    %p254 = scmp.ne.s32.totalorder %s249, %s251
    %p255 = scmp.eq.s32.totalorder %s26, 0
    %p256 = por %p254, %p255
    %p257 = scmp.ne.s32.totalorder %s249, %s251
    %p258 = scmp.eq.s32.totalorder %s31, 1
    %p259 = por %p257, %p258
    %p260 = scmp.ne.s32.totalorder %s251, %s252
    %p261 = scmp.eq.s32.totalorder %s31, 0
    %p262 = por %p260, %p261
    %p263 = scmp.ne.s32.totalorder %s251, %s252
    %p264 = scmp.eq.s32.totalorder %s32, 1
    %p265 = por %p263, %p264
    %p267 = scmp.ne.s32.totalorder %s252, %s266
    %p268 = scmp.eq.s32.totalorder %s32, 0
    %p269 = por %p267, %p268
    %s271 = sadd.s32 %s270, 1
    %p274 = scmp.eq.s32.totalorder %s26, 1
    %p275 = scmp.ne.s32.totalorder %s270, %s272
    %p276 = scmp.eq.s32.totalorder %s26, 0
    %p277 = por %p275, %p276
    %p278 = scmp.ne.s32.totalorder %s270, %s272
    %p279 = scmp.eq.s32.totalorder %s31, 1
    %p280 = por %p278, %p279
    %p281 = scmp.ne.s32.totalorder %s272, %s273
    %p282 = scmp.eq.s32.totalorder %s31, 0
    %p283 = por %p281, %p282
    %p284 = scmp.ne.s32.totalorder %s272, %s273
    %p285 = scmp.eq.s32.totalorder %s32, 1
    %p286 = por %p284, %p285
    %p288 = scmp.ne.s32.totalorder %s273, %s287
    %p289 = scmp.eq.s32.totalorder %s32, 0
    %p290 = por %p288, %p289
    %s292 = sadd.s32 %s291, 1
    %p295 = scmp.eq.s32.totalorder %s26, 1
    %p296 = scmp.ne.s32.totalorder %s291, %s293
    %p297 = scmp.eq.s32.totalorder %s26, 0
    %p298 = por %p296, %p297
    %p299 = scmp.ne.s32.totalorder %s291, %s293
    %p300 = scmp.eq.s32.totalorder %s31, 1
    %p301 = por %p299, %p300
    %p302 = scmp.ne.s32.totalorder %s293, %s294
    %p303 = scmp.eq.s32.totalorder %s31, 0
    %p304 = por %p302, %p303
    %p305 = scmp.ne.s32.totalorder %s293, %s294
    %p306 = scmp.eq.s32.totalorder %s32, 1
    %p307 = por %p305, %p306
    %p309 = scmp.ne.s32.totalorder %s294, %s308
    %p310 = scmp.eq.s32.totalorder %s32, 0
    %p311 = por %p309, %p310
    %s313 = sadd.s32 %s312, 1
    %p316 = scmp.eq.s32.totalorder %s26, 1
    %p317 = scmp.ne.s32.totalorder %s312, %s314
    %p318 = scmp.eq.s32.totalorder %s26, 0
    %p319 = por %p317, %p318
    %p320 = scmp.ne.s32.totalorder %s312, %s314
    %p321 = scmp.eq.s32.totalorder %s31, 1
    %p322 = por %p320, %p321
    %p323 = scmp.ne.s32.totalorder %s314, %s315
    %p324 = scmp.eq.s32.totalorder %s31, 0
    %p325 = por %p323, %p324
    %p326 = scmp.ne.s32.totalorder %s314, %s315
    %p327 = scmp.eq.s32.totalorder %s32, 1
    %p328 = por %p326, %p327
    %p330 = scmp.ne.s32.totalorder %s315, %s329
    %p331 = scmp.eq.s32.totalorder %s32, 0
    %p332 = por %p330, %p331
    %s334 = sadd.s32 %s333, 1
    %p337 = scmp.eq.s32.totalorder %s26, 1
    %p338 = scmp.ne.s32.totalorder %s333, %s335
    %p339 = scmp.eq.s32.totalorder %s26, 0
    %p340 = por %p338, %p339
    %p341 = scmp.ne.s32.totalorder %s333, %s335
    %p342 = scmp.eq.s32.totalorder %s31, 1
    %p343 = por %p341, %p342
    %p344 = scmp.ne.s32.totalorder %s335, %s336
    %p345 = scmp.eq.s32.totalorder %s31, 0
    %p346 = por %p344, %p345
    %p347 = scmp.ne.s32.totalorder %s335, %s336
    %p348 = scmp.eq.s32.totalorder %s32, 1
    %p349 = por %p347, %p348
    %p351 = scmp.ne.s32.totalorder %s336, %s350
    %p352 = scmp.eq.s32.totalorder %s32, 0
    %p353 = por %p351, %p352
    %s355 = sadd.s32 %s354, 1
    %p358 = scmp.eq.s32.totalorder %s26, 1
    %p359 = scmp.ne.s32.totalorder %s354, %s356
    %p360 = scmp.eq.s32.totalorder %s26, 0
    %p361 = por %p359, %p360
    %p362 = scmp.ne.s32.totalorder %s354, %s356
    %p363 = scmp.eq.s32.totalorder %s31, 1
    %p364 = por %p362, %p363
    %p365 = scmp.ne.s32.totalorder %s356, %s357
    %p366 = scmp.eq.s32.totalorder %s31, 0
    %p367 = por %p365, %p366
    %p368 = scmp.ne.s32.totalorder %s356, %s357
    %p369 = scmp.eq.s32.totalorder %s32, 1
    %p370 = por %p368, %p369
    %p372 = scmp.ne.s32.totalorder %s357, %s371
    %p373 = scmp.eq.s32.totalorder %s32, 0
    %p374 = por %p372, %p373
    %s376 = sadd.s32 %s375, 1
    %p379 = scmp.eq.s32.totalorder %s26, 1
    %p380 = scmp.ne.s32.totalorder %s375, %s377
    %p381 = scmp.eq.s32.totalorder %s26, 0
    %p382 = por %p380, %p381
    %p383 = scmp.ne.s32.totalorder %s375, %s377
    %p384 = scmp.eq.s32.totalorder %s31, 1
    %p385 = por %p383, %p384
    %p386 = scmp.ne.s32.totalorder %s377, %s378
    %p387 = scmp.eq.s32.totalorder %s31, 0
    %p388 = por %p386, %p387
    %p389 = scmp.ne.s32.totalorder %s377, %s378
    %p390 = scmp.eq.s32.totalorder %s32, 1
    %p391 = por %p389, %p390
    %p393 = scmp.ne.s32.totalorder %s378, %s392
    %p394 = scmp.eq.s32.totalorder %s32, 0
    %p395 = por %p393, %p394
    %s397 = sadd.s32 %s396, 1
    %p400 = scmp.eq.s32.totalorder %s26, 1
    %p401 = scmp.ne.s32.totalorder %s396, %s398
    %p402 = scmp.eq.s32.totalorder %s26, 0
    %p403 = por %p401, %p402
    %p404 = scmp.ne.s32.totalorder %s396, %s398
    %p405 = scmp.eq.s32.totalorder %s31, 1
    %p406 = por %p404, %p405
    %p407 = scmp.ne.s32.totalorder %s398, %s399
    %p408 = scmp.eq.s32.totalorder %s31, 0
    %p409 = por %p407, %p408
    %p410 = scmp.ne.s32.totalorder %s398, %s399
    %p411 = scmp.eq.s32.totalorder %s32, 1
    %p412 = por %p410, %p411
    %p414 = scmp.ne.s32.totalorder %s399, %s413
    %p415 = scmp.eq.s32.totalorder %s32, 0
    %p416 = por %p414, %p415
    %s418 = sadd.s32 %s417, 1
    %p421 = scmp.eq.s32.totalorder %s26, 1
    %p422 = scmp.ne.s32.totalorder %s417, %s419
    %p423 = scmp.eq.s32.totalorder %s26, 0
    %p424 = por %p422, %p423
    %p425 = scmp.ne.s32.totalorder %s417, %s419
    %p426 = scmp.eq.s32.totalorder %s31, 1
    %p427 = por %p425, %p426
    %p428 = scmp.ne.s32.totalorder %s419, %s420
    %p429 = scmp.eq.s32.totalorder %s31, 0
    %p430 = por %p428, %p429
    %p431 = scmp.ne.s32.totalorder %s419, %s420
    %p432 = scmp.eq.s32.totalorder %s32, 1
    %p433 = por %p431, %p432
    %p435 = scmp.ne.s32.totalorder %s420, %s434
    %p436 = scmp.eq.s32.totalorder %s32, 0
    %p437 = por %p435, %p436
    %s439 = sadd.s32 %s438, 1
    %p442 = scmp.eq.s32.totalorder %s26, 1
    %p443 = scmp.ne.s32.totalorder %s438, %s440
    %p444 = scmp.eq.s32.totalorder %s26, 0
    %p445 = por %p443, %p444
    %p446 = scmp.ne.s32.totalorder %s438, %s440
    %p447 = scmp.eq.s32.totalorder %s31, 1
    %p448 = por %p446, %p447
    %p449 = scmp.ne.s32.totalorder %s440, %s441
    %p450 = scmp.eq.s32.totalorder %s31, 0
    %p451 = por %p449, %p450
    %p452 = scmp.ne.s32.totalorder %s440, %s441
    %p453 = scmp.eq.s32.totalorder %s32, 1
    %p454 = por %p452, %p453
    %p456 = scmp.ne.s32.totalorder %s441, %s455
    %p457 = scmp.eq.s32.totalorder %s32, 0
    %p458 = por %p456, %p457
    %s459 = ssub.s32 %s26, %s33
    %p460 = scmp.eq.s32.totalorder %s459, 0
    %s462 = sadd.s32 %s461, 1
    %s463 = scalar_select %p460, %s461, %s462
    %p466 = pneg %p460
    %p467 = scmp.eq.s32.totalorder %s26, 1
    %p468 = por %p466, %p467
    %p469 = scmp.ne.s32.totalorder %s461, %s464
    %p470 = scmp.eq.s32.totalorder %s26, 0
    %p471 = por %p469, %p470
    %p472 = scmp.ne.s32.totalorder %s461, %s464
    %p473 = scmp.eq.s32.totalorder %s31, 1
    %p474 = por %p472, %p473
    %p475 = scmp.ne.s32.totalorder %s464, %s465
    %p476 = scmp.eq.s32.totalorder %s31, 0
    %p477 = por %p475, %p476
    %p478 = scmp.ne.s32.totalorder %s464, %s465
    %p479 = scmp.eq.s32.totalorder %s32, 1
    %p480 = por %p478, %p479
    %p482 = scmp.ne.s32.totalorder %s465, %s481
    %p483 = scmp.eq.s32.totalorder %s32, 0
    %p484 = por %p482, %p483
    %p485 = scmp.le.s32.totalorder 1, %s26
    %p486 = scmp.lt.s32.totalorder %s26, 3
    %p487 = pnand %p485, %p486
    %p488 = pneg %p487
    // Predicated region
    $region9: #{nerf_forward_pallas.1} parent=5 // pred_check
      _
    $region10: #{nerf_forward_pallas.1} parent=5 // pred_check_branch
      %490 = sbr.rel (%p487) target = $region12
    $region11: #{nerf_forward_pallas.1} parent=5 // pred_region
      %s491 = ssub.s32 %s26, 1
      // Predicated region
      $region13: #{nerf_forward_pallas.1} parent=11 // pred_check
        %p492 = pneg %p73
      $region14: #{nerf_forward_pallas.1} parent=11 // pred_check_branch
        %494 = sbr.rel (%p492) target = $region16
      $region15: #{nerf_forward_pallas.1} parent=11 // pred_region
        _
      $region16: #{nerf_forward_pallas.1} parent=11 // pred_fallthru
        _
      // Predicated region
      $region17: #{nerf_forward_pallas.1} parent=11 // pred_check
        %p495 = pneg %p94
      $region18: #{nerf_forward_pallas.1} parent=11 // pred_check_branch
        %497 = sbr.rel (%p495) target = $region20
      $region19: #{nerf_forward_pallas.1} parent=11 // pred_region
        _
      $region20: #{nerf_forward_pallas.1} parent=11 // pred_fallthru
        _
      // Predicated region
      $region21: #{nerf_forward_pallas.1} parent=11 // pred_check
        %p498 = pneg %p115
      $region22: #{nerf_forward_pallas.1} parent=11 // pred_check_branch
        %500 = sbr.rel (%p498) target = $region24
      $region23: #{nerf_forward_pallas.1} parent=11 // pred_region
        _
      $region24: #{nerf_forward_pallas.1} parent=11 // pred_fallthru
        _
      // Predicated region
      $region25: #{nerf_forward_pallas.1} parent=11 // pred_check
        %p501 = pneg %p136
      $region26: #{nerf_forward_pallas.1} parent=11 // pred_check_branch
        %503 = sbr.rel (%p501) target = $region28
      $region27: #{nerf_forward_pallas.1} parent=11 // pred_region
        _
      $region28: #{nerf_forward_pallas.1} parent=11 // pred_fallthru
        _
      // Predicated region
      $region29: #{nerf_forward_pallas.1} parent=11 // pred_check
        %p504 = pneg %p157
      $region30: #{nerf_forward_pallas.1} parent=11 // pred_check_branch
        %506 = sbr.rel (%p504) target = $region32
      $region31: #{nerf_forward_pallas.1} parent=11 // pred_region
        _
      $region32: #{nerf_forward_pallas.1} parent=11 // pred_fallthru
        _
      // Predicated region
      $region33: #{nerf_forward_pallas.1} parent=11 // pred_check
        %p507 = pneg %p178
      $region34: #{nerf_forward_pallas.1} parent=11 // pred_check_branch
        %509 = sbr.rel (%p507) target = $region36
      $region35: #{nerf_forward_pallas.1} parent=11 // pred_region
        _
      $region36: #{nerf_forward_pallas.1} parent=11 // pred_fallthru
        _
      // Predicated region
      $region37: #{nerf_forward_pallas.1} parent=11 // pred_check
        %p510 = pneg %p199
      $region38: #{nerf_forward_pallas.1} parent=11 // pred_check_branch
        %512 = sbr.rel (%p510) target = $region40
      $region39: #{nerf_forward_pallas.1} parent=11 // pred_region
        _
      $region40: #{nerf_forward_pallas.1} parent=11 // pred_fallthru
        _
      // Predicated region
      $region41: #{nerf_forward_pallas.1} parent=11 // pred_check
        %p513 = pneg %p220
      $region42: #{nerf_forward_pallas.1} parent=11 // pred_check_branch
        %515 = sbr.rel (%p513) target = $region44
      $region43: #{nerf_forward_pallas.1} parent=11 // pred_region
        _
      $region44: #{nerf_forward_pallas.1} parent=11 // pred_fallthru
        _
      // Predicated region
      $region45: #{nerf_forward_pallas.1} parent=11 // pred_check
        %p516 = pneg %p241
      $region46: #{nerf_forward_pallas.1} parent=11 // pred_check_branch
        %518 = sbr.rel (%p516) target = $region48
      $region47: #{nerf_forward_pallas.1} parent=11 // pred_region
        _
      $region48: #{nerf_forward_pallas.1} parent=11 // pred_fallthru
        _
      // Predicated region
      $region49: #{nerf_forward_pallas.1} parent=11 // pred_check
        %p519 = pneg %p262
      $region50: #{nerf_forward_pallas.1} parent=11 // pred_check_branch
        %521 = sbr.rel (%p519) target = $region52
      $region51: #{nerf_forward_pallas.1} parent=11 // pred_region
        _
      $region52: #{nerf_forward_pallas.1} parent=11 // pred_fallthru
        _
      // Predicated region
      $region53: #{nerf_forward_pallas.1} parent=11 // pred_check
        %p522 = pneg %p283
      $region54: #{nerf_forward_pallas.1} parent=11 // pred_check_branch
        %524 = sbr.rel (%p522) target = $region56
      $region55: #{nerf_forward_pallas.1} parent=11 // pred_region
        _
      $region56: #{nerf_forward_pallas.1} parent=11 // pred_fallthru
        _
      // Predicated region
      $region57: #{nerf_forward_pallas.1} parent=11 // pred_check
        %p525 = pneg %p304
      $region58: #{nerf_forward_pallas.1} parent=11 // pred_check_branch
        %527 = sbr.rel (%p525) target = $region60
      $region59: #{nerf_forward_pallas.1} parent=11 // pred_region
        _
      $region60: #{nerf_forward_pallas.1} parent=11 // pred_fallthru
        _
      // Predicated region
      $region61: #{nerf_forward_pallas.1} parent=11 // pred_check
        %p528 = pneg %p325
      $region62: #{nerf_forward_pallas.1} parent=11 // pred_check_branch
        %530 = sbr.rel (%p528) target = $region64
      $region63: #{nerf_forward_pallas.1} parent=11 // pred_region
        _
      $region64: #{nerf_forward_pallas.1} parent=11 // pred_fallthru
        _
      // Predicated region
      $region65: #{nerf_forward_pallas.1} parent=11 // pred_check
        %p531 = pneg %p346
      $region66: #{nerf_forward_pallas.1} parent=11 // pred_check_branch
        %533 = sbr.rel (%p531) target = $region68
      $region67: #{nerf_forward_pallas.1} parent=11 // pred_region
        _
      $region68: #{nerf_forward_pallas.1} parent=11 // pred_fallthru
        _
      // Predicated region
      $region69: #{nerf_forward_pallas.1} parent=11 // pred_check
        %p534 = pneg %p367
      $region70: #{nerf_forward_pallas.1} parent=11 // pred_check_branch
        %536 = sbr.rel (%p534) target = $region72
      $region71: #{nerf_forward_pallas.1} parent=11 // pred_region
        _
      $region72: #{nerf_forward_pallas.1} parent=11 // pred_fallthru
        _
      // Predicated region
      $region73: #{nerf_forward_pallas.1} parent=11 // pred_check
        %p537 = pneg %p388
      $region74: #{nerf_forward_pallas.1} parent=11 // pred_check_branch
        %539 = sbr.rel (%p537) target = $region76
      $region75: #{nerf_forward_pallas.1} parent=11 // pred_region
        _
      $region76: #{nerf_forward_pallas.1} parent=11 // pred_fallthru
        _
      // Predicated region
      $region77: #{nerf_forward_pallas.1} parent=11 // pred_check
        %p540 = pneg %p409
      $region78: #{nerf_forward_pallas.1} parent=11 // pred_check_branch
        %542 = sbr.rel (%p540) target = $region80
      $region79: #{nerf_forward_pallas.1} parent=11 // pred_region
        _
      $region80: #{nerf_forward_pallas.1} parent=11 // pred_fallthru
        _
      // Predicated region
      $region81: #{nerf_forward_pallas.1} parent=11 // pred_check
        %p543 = pneg %p430
      $region82: #{nerf_forward_pallas.1} parent=11 // pred_check_branch
        %545 = sbr.rel (%p543) target = $region84
      $region83: #{nerf_forward_pallas.1} parent=11 // pred_region
        _
      $region84: #{nerf_forward_pallas.1} parent=11 // pred_fallthru
        _
      // Predicated region
      $region85: #{nerf_forward_pallas.1} parent=11 // pred_check
        %p546 = pneg %p451
      $region86: #{nerf_forward_pallas.1} parent=11 // pred_check_branch
        %548 = sbr.rel (%p546) target = $region88
      $region87: #{nerf_forward_pallas.1} parent=11 // pred_region
        _
      $region88: #{nerf_forward_pallas.1} parent=11 // pred_fallthru
        _
    $region12: #{nerf_forward_pallas.1} parent=5 // pred_fallthru
      _
    %p549 = scmp.lt.s32.totalorder %s26, 2
    // Predicated region
    $region89: #{nerf_forward_pallas.1} parent=5 // pred_check
      %p550 = pneg %p549
    $region90: #{nerf_forward_pallas.1} parent=5 // pred_check_branch
      %552 = sbr.rel (%p550) target = $region92
    $region91: #{nerf_forward_pallas.1} parent=5 // pred_region
      // Predicated region
      $region93: #{nerf_forward_pallas.1} parent=91 // pred_check
        %p553 = pneg %p46
      $region94: #{nerf_forward_pallas.1} parent=91 // pred_check_branch
        %555 = sbr.rel (%p553) target = $region96
      $region95: #{nerf_forward_pallas.1} parent=91 // pred_region
        %s556 = smul.u32 64, %s26
        %p557 = scmp.lt.s32.totalorder %s556, 127
        %s558 = scalar_select %p557, %s556, 127
        %s559 = smul.addr %s558, 8
        %s560 = scalar_lea.vmem %s0, %s559
        %s561 = smul.u32 64, %s26
      $region96: #{nerf_forward_pallas.1} parent=91 // pred_fallthru
        _
    $region92: #{nerf_forward_pallas.1} parent=5 // pred_fallthru
      _
    %p562 = scmp.le.s32.totalorder 1, %s26
    %p563 = scmp.lt.s32.totalorder %s26, 3
    %p564 = pnand %p562, %p563
    %p565 = pneg %p564
    // Predicated region
    $region97: #{nerf_forward_pallas.1} parent=5 // pred_check
      _
    $region98: #{nerf_forward_pallas.1} parent=5 // pred_check_branch
      %567 = sbr.rel (%p564) target = $region100
    $region99: #{nerf_forward_pallas.1} parent=5 // pred_region
      %s568 = ssub.s32 %s26, 1
      %s569 = smul.u32 64, %s31
      %p570 = scmp.lt.s32.totalorder %s569, 127
      %s571 = scalar_select %p570, %s569, 127
      %s572 = smul.addr %s571, 8
      %s573 = scalar_lea.vmem %s0, %s572
      %p574 = pneg %p52
      %p575 = pneg %p49
      %p576 = pneg %p73
      %p577 = pneg %p70
      %p578 = pneg %p94
      %p579 = pneg %p91
      %p580 = pneg %p115
      %p581 = pneg %p112
      %p582 = pneg %p136
      %p583 = pneg %p133
      %p584 = pneg %p157
      %p585 = pneg %p154
      %p586 = pneg %p178
      %p587 = pneg %p175
      %p588 = pneg %p199
      %p589 = pneg %p196
      %p590 = pneg %p220
      %p591 = pneg %p217
      %p592 = pneg %p241
      %p593 = pneg %p238
      %p594 = pneg %p262
      %p595 = pneg %p259
      %p596 = pneg %p283
      %p597 = pneg %p280
      %p598 = pneg %p304
      %p599 = pneg %p301
      %p600 = pneg %p325
      %p601 = pneg %p322
      %p602 = pneg %p346
      %p603 = pneg %p343
      %p604 = pneg %p367
      %p605 = pneg %p364
      %p606 = pneg %p388
      %p607 = pneg %p385
      %p608 = pneg %p409
      %p609 = pneg %p406
      %p610 = pneg %p430
      %p611 = pneg %p427
      %p612 = pneg %p451
      %p613 = pneg %p448
      %p614 = pneg %p477
      %p615 = pneg %p474
      %s616 = smul.u32 64, %s31
      %p617 = scmp.lt.s32.totalorder %s616, 127
      %s618 = scalar_select %p617, %s616, 127
      %s619 = smul.addr %s618, 4
      %s620 = scalar_lea.vmem %s20, %s619
      %s621 = smul.u32 64, %s31
      %p622 = scmp.lt.s32.totalorder %s621, 127
      %s623 = scalar_select %p622, %s621, 127
      %s624 = smul.addr %s623, 8
      %s625 = scalar_lea.vmem %s0, %s624
      %s626 = smul.u32 64, %s31
      %s627 = smul.u32 64, %s31
      %p628 = scmp.lt.s32.totalorder %s627, 127
      %s629 = scalar_select %p628, %s627, 127
      %s630 = smul.addr %s629, 4
      %s631 = scalar_lea.vmem %s20, %s630
      %s632 = smul.u32 64, %s31
      %v634 = vld [vmem:[%s625] sm:$0xff]
      %v635 = vld [vmem:[%s625 + $0x8] sm:$0xff]
      %v636 = vld [vmem:[%s625 + $0x10] sm:$0xff]
      %v637 = vld [vmem:[%s625 + $0x18] sm:$0xff]
      %v638 = vld [vmem:[%s625 + $0x20] sm:$0xff]
      %v639 = vld [vmem:[%s625 + $0x28] sm:$0xff]
      %v640 = vld [vmem:[%s625 + $0x30] sm:$0xff]
      %v641 = vld [vmem:[%s625 + $0x38] sm:$0xff]
      %v642 = vld [vmem:[%s625 + $0x40] sm:$0xff]
      %v643 = vld [vmem:[%s625 + $0x48] sm:$0xff]
      %v644 = vld [vmem:[%s625 + $0x50] sm:$0xff]
      %v645 = vld [vmem:[%s625 + $0x58] sm:$0xff]
      %v646 = vld [vmem:[%s625 + $0x60] sm:$0xff]
      %v647 = vld [vmem:[%s625 + $0x68] sm:$0xff]
      %v648 = vld [vmem:[%s625 + $0x70] sm:$0xff]
      %v649 = vld [vmem:[%s625 + $0x78] sm:$0xff]
      %v650 = vld [vmem:[%s625 + $0x80] sm:$0xff]
      %v651 = vld [vmem:[%s625 + $0x88] sm:$0xff]
      %v652 = vld [vmem:[%s625 + $0x90] sm:$0xff]
      %v653 = vld [vmem:[%s625 + $0x98] sm:$0xff]
      %v654 = vld [vmem:[%s625 + $0xa0] sm:$0xff]
      %v655 = vld [vmem:[%s625 + $0xa8] sm:$0xff]
      %v656 = vld [vmem:[%s625 + $0xb0] sm:$0xff]
      %v657 = vld [vmem:[%s625 + $0xb8] sm:$0xff]
      %v658 = vld [vmem:[%s625 + $0xc0] sm:$0xff]
      %v659 = vld [vmem:[%s625 + $0xc8] sm:$0xff]
      %v660 = vld [vmem:[%s625 + $0xd0] sm:$0xff]
      %v661 = vld [vmem:[%s625 + $0xd8] sm:$0xff]
      %v662 = vld [vmem:[%s625 + $0xe0] sm:$0xff]
      %v663 = vld [vmem:[%s625 + $0xe8] sm:$0xff]
      %v664 = vld [vmem:[%s625 + $0xf0] sm:$0xff]
      %v665 = vld [vmem:[%s625 + $0xf8] sm:$0xff]
      %v666 = vld [vmem:[%s625 + $0x100] sm:$0xff]
      %v667 = vld [vmem:[%s625 + $0x108] sm:$0xff]
      %v668 = vld [vmem:[%s625 + $0x110] sm:$0xff]
      %v669 = vld [vmem:[%s625 + $0x118] sm:$0xff]
      %v670 = vld [vmem:[%s625 + $0x120] sm:$0xff]
      %v671 = vld [vmem:[%s625 + $0x128] sm:$0xff]
      %v672 = vld [vmem:[%s625 + $0x130] sm:$0xff]
      %v673 = vld [vmem:[%s625 + $0x138] sm:$0xff]
      %v674 = vld [vmem:[%s625 + $0x140] sm:$0xff]
      %v675 = vld [vmem:[%s625 + $0x148] sm:$0xff]
      %v676 = vld [vmem:[%s625 + $0x150] sm:$0xff]
      %v677 = vld [vmem:[%s625 + $0x158] sm:$0xff]
      %v678 = vld [vmem:[%s625 + $0x160] sm:$0xff]
      %v679 = vld [vmem:[%s625 + $0x168] sm:$0xff]
      %v680 = vld [vmem:[%s625 + $0x170] sm:$0xff]
      %v681 = vld [vmem:[%s625 + $0x178] sm:$0xff]
      %v682 = vld [vmem:[%s625 + $0x180] sm:$0xff]
      %v683 = vld [vmem:[%s625 + $0x188] sm:$0xff]
      %v684 = vld [vmem:[%s625 + $0x190] sm:$0xff]
      %v685 = vld [vmem:[%s625 + $0x198] sm:$0xff]
      %v686 = vld [vmem:[%s625 + $0x1a0] sm:$0xff]
      %v687 = vld [vmem:[%s625 + $0x1a8] sm:$0xff]
      %v688 = vld [vmem:[%s625 + $0x1b0] sm:$0xff]
      %v689 = vld [vmem:[%s625 + $0x1b8] sm:$0xff]
      %v690 = vld [vmem:[%s625 + $0x1c0] sm:$0xff]
      %v691 = vld [vmem:[%s625 + $0x1c8] sm:$0xff]
      %v692 = vld [vmem:[%s625 + $0x1d0] sm:$0xff]
      %v693 = vld [vmem:[%s625 + $0x1d8] sm:$0xff]
      %v694 = vld [vmem:[%s625 + $0x1e0] sm:$0xff]
      %v695 = vld [vmem:[%s625 + $0x1e8] sm:$0xff]
      %v696 = vld [vmem:[%s625 + $0x1f0] sm:$0xff]
      %v697 = vld [vmem:[%s625 + $0x1f8] sm:$0xff]
      %699 = vset.pattern.permute.xlu0 0
      %700 = vperm.xlu0 %699, %v634
      %v701 = vpop.permute.xlu0 %700
      %704 = vset.pattern.permute.xlu0 0
      %705 = vperm.xlu0 %704, %v635
      %v706 = vpop.permute.xlu0 %705
      %709 = vset.pattern.permute.xlu0 0
      %710 = vperm.xlu0 %709, %v636
      %v711 = vpop.permute.xlu0 %710
      %714 = vset.pattern.permute.xlu0 0
      %715 = vperm.xlu0 %714, %v637
      %v716 = vpop.permute.xlu0 %715
      %719 = vset.pattern.permute.xlu0 0
      %720 = vperm.xlu0 %719, %v638
      %v721 = vpop.permute.xlu0 %720
      %724 = vset.pattern.permute.xlu0 0
      %725 = vperm.xlu0 %724, %v639
      %v726 = vpop.permute.xlu0 %725
      %729 = vset.pattern.permute.xlu0 0
      %730 = vperm.xlu0 %729, %v640
      %v731 = vpop.permute.xlu0 %730
      %734 = vset.pattern.permute.xlu0 0
      %735 = vperm.xlu0 %734, %v641
      %v736 = vpop.permute.xlu0 %735
      %739 = vset.pattern.permute.xlu0 0
      %740 = vperm.xlu0 %739, %v642
      %v741 = vpop.permute.xlu0 %740
      %744 = vset.pattern.permute.xlu0 0
      %745 = vperm.xlu0 %744, %v643
      %v746 = vpop.permute.xlu0 %745
      %749 = vset.pattern.permute.xlu0 0
      %750 = vperm.xlu0 %749, %v644
      %v751 = vpop.permute.xlu0 %750
      %754 = vset.pattern.permute.xlu0 0
      %755 = vperm.xlu0 %754, %v645
      %v756 = vpop.permute.xlu0 %755
      %759 = vset.pattern.permute.xlu0 0
      %760 = vperm.xlu0 %759, %v646
      %v761 = vpop.permute.xlu0 %760
      %764 = vset.pattern.permute.xlu0 0
      %765 = vperm.xlu0 %764, %v647
      %v766 = vpop.permute.xlu0 %765
      %769 = vset.pattern.permute.xlu0 0
      %770 = vperm.xlu0 %769, %v648
      %v771 = vpop.permute.xlu0 %770
      %774 = vset.pattern.permute.xlu0 0
      %775 = vperm.xlu0 %774, %v649
      %v776 = vpop.permute.xlu0 %775
      %779 = vset.pattern.permute.xlu0 0
      %780 = vperm.xlu0 %779, %v650
      %v781 = vpop.permute.xlu0 %780
      %784 = vset.pattern.permute.xlu0 0
      %785 = vperm.xlu0 %784, %v651
      %v786 = vpop.permute.xlu0 %785
      %789 = vset.pattern.permute.xlu0 0
      %790 = vperm.xlu0 %789, %v652
      %v791 = vpop.permute.xlu0 %790
      %794 = vset.pattern.permute.xlu0 0
      %795 = vperm.xlu0 %794, %v653
      %v796 = vpop.permute.xlu0 %795
      %799 = vset.pattern.permute.xlu0 0
      %800 = vperm.xlu0 %799, %v654
      %v801 = vpop.permute.xlu0 %800
      %804 = vset.pattern.permute.xlu0 0
      %805 = vperm.xlu0 %804, %v655
      %v806 = vpop.permute.xlu0 %805
      %809 = vset.pattern.permute.xlu0 0
      %810 = vperm.xlu0 %809, %v656
      %v811 = vpop.permute.xlu0 %810
      %814 = vset.pattern.permute.xlu0 0
      %815 = vperm.xlu0 %814, %v657
      %v816 = vpop.permute.xlu0 %815
      %819 = vset.pattern.permute.xlu0 0
      %820 = vperm.xlu0 %819, %v658
      %v821 = vpop.permute.xlu0 %820
      %824 = vset.pattern.permute.xlu0 0
      %825 = vperm.xlu0 %824, %v659
      %v826 = vpop.permute.xlu0 %825
      %829 = vset.pattern.permute.xlu0 0
      %830 = vperm.xlu0 %829, %v660
      %v831 = vpop.permute.xlu0 %830
      %834 = vset.pattern.permute.xlu0 0
      %835 = vperm.xlu0 %834, %v661
      %v836 = vpop.permute.xlu0 %835
      %839 = vset.pattern.permute.xlu0 0
      %840 = vperm.xlu0 %839, %v662
      %v841 = vpop.permute.xlu0 %840
      %844 = vset.pattern.permute.xlu0 0
      %845 = vperm.xlu0 %844, %v663
      %v846 = vpop.permute.xlu0 %845
      %849 = vset.pattern.permute.xlu0 0
      %850 = vperm.xlu0 %849, %v664
      %v851 = vpop.permute.xlu0 %850
      %854 = vset.pattern.permute.xlu0 0
      %855 = vperm.xlu0 %854, %v665
      %v856 = vpop.permute.xlu0 %855
      %859 = vset.pattern.permute.xlu0 0
      %860 = vperm.xlu0 %859, %v666
      %v861 = vpop.permute.xlu0 %860
      %864 = vset.pattern.permute.xlu0 0
      %865 = vperm.xlu0 %864, %v667
      %v866 = vpop.permute.xlu0 %865
      %869 = vset.pattern.permute.xlu0 0
      %870 = vperm.xlu0 %869, %v668
      %v871 = vpop.permute.xlu0 %870
      %874 = vset.pattern.permute.xlu0 0
      %875 = vperm.xlu0 %874, %v669
      %v876 = vpop.permute.xlu0 %875
      %879 = vset.pattern.permute.xlu0 0
      %880 = vperm.xlu0 %879, %v670
      %v881 = vpop.permute.xlu0 %880
      %884 = vset.pattern.permute.xlu0 0
      %885 = vperm.xlu0 %884, %v671
      %v886 = vpop.permute.xlu0 %885
      %889 = vset.pattern.permute.xlu0 0
      %890 = vperm.xlu0 %889, %v672
      %v891 = vpop.permute.xlu0 %890
      %894 = vset.pattern.permute.xlu0 0
      %895 = vperm.xlu0 %894, %v673
      %v896 = vpop.permute.xlu0 %895
      %899 = vset.pattern.permute.xlu0 0
      %900 = vperm.xlu0 %899, %v674
      %v901 = vpop.permute.xlu0 %900
      %904 = vset.pattern.permute.xlu0 0
      %905 = vperm.xlu0 %904, %v675
      %v906 = vpop.permute.xlu0 %905
      %909 = vset.pattern.permute.xlu0 0
      %910 = vperm.xlu0 %909, %v676
      %v911 = vpop.permute.xlu0 %910
      %914 = vset.pattern.permute.xlu0 0
      %915 = vperm.xlu0 %914, %v677
      %v916 = vpop.permute.xlu0 %915
      %919 = vset.pattern.permute.xlu0 0
      %920 = vperm.xlu0 %919, %v678
      %v921 = vpop.permute.xlu0 %920
      %924 = vset.pattern.permute.xlu0 0
      %925 = vperm.xlu0 %924, %v679
      %v926 = vpop.permute.xlu0 %925
      %929 = vset.pattern.permute.xlu0 0
      %930 = vperm.xlu0 %929, %v680
      %v931 = vpop.permute.xlu0 %930
      %934 = vset.pattern.permute.xlu0 0
      %935 = vperm.xlu0 %934, %v681
      %v936 = vpop.permute.xlu0 %935
      %939 = vset.pattern.permute.xlu0 0
      %940 = vperm.xlu0 %939, %v682
      %v941 = vpop.permute.xlu0 %940
      %944 = vset.pattern.permute.xlu0 0
      %945 = vperm.xlu0 %944, %v683
      %v946 = vpop.permute.xlu0 %945
      %949 = vset.pattern.permute.xlu0 0
      %950 = vperm.xlu0 %949, %v684
      %v951 = vpop.permute.xlu0 %950
      %954 = vset.pattern.permute.xlu0 0
      %955 = vperm.xlu0 %954, %v685
      %v956 = vpop.permute.xlu0 %955
      %959 = vset.pattern.permute.xlu0 0
      %960 = vperm.xlu0 %959, %v686
      %v961 = vpop.permute.xlu0 %960
      %964 = vset.pattern.permute.xlu0 0
      %965 = vperm.xlu0 %964, %v687
      %v966 = vpop.permute.xlu0 %965
      %969 = vset.pattern.permute.xlu0 0
      %970 = vperm.xlu0 %969, %v688
      %v971 = vpop.permute.xlu0 %970
      %974 = vset.pattern.permute.xlu0 0
      %975 = vperm.xlu0 %974, %v689
      %v976 = vpop.permute.xlu0 %975
      %979 = vset.pattern.permute.xlu0 0
      %980 = vperm.xlu0 %979, %v690
      %v981 = vpop.permute.xlu0 %980
      %984 = vset.pattern.permute.xlu0 0
      %985 = vperm.xlu0 %984, %v691
      %v986 = vpop.permute.xlu0 %985
      %989 = vset.pattern.permute.xlu0 0
      %990 = vperm.xlu0 %989, %v692
      %v991 = vpop.permute.xlu0 %990
      %994 = vset.pattern.permute.xlu0 0
      %995 = vperm.xlu0 %994, %v693
      %v996 = vpop.permute.xlu0 %995
      %999 = vset.pattern.permute.xlu0 0
      %1000 = vperm.xlu0 %999, %v694
      %v1001 = vpop.permute.xlu0 %1000
      %1004 = vset.pattern.permute.xlu0 0
      %1005 = vperm.xlu0 %1004, %v695
      %v1006 = vpop.permute.xlu0 %1005
      %1009 = vset.pattern.permute.xlu0 0
      %1010 = vperm.xlu0 %1009, %v696
      %v1011 = vpop.permute.xlu0 %1010
      %1014 = vset.pattern.permute.xlu0 0
      %1015 = vperm.xlu0 %1014, %v697
      %v1016 = vpop.permute.xlu0 %1015
      %1018 = vset.pattern.permute.xlu0 1
      %1019 = vperm.xlu0 %1018, %v634
      %v1020 = vpop.permute.xlu0 %1019
      %1022 = vset.pattern.permute.xlu0 1
      %1023 = vperm.xlu0 %1022, %v635
      %v1024 = vpop.permute.xlu0 %1023
      %1026 = vset.pattern.permute.xlu0 1
      %1027 = vperm.xlu0 %1026, %v636
      %v1028 = vpop.permute.xlu0 %1027
      %1030 = vset.pattern.permute.xlu0 1
      %1031 = vperm.xlu0 %1030, %v637
      %v1032 = vpop.permute.xlu0 %1031
      %1034 = vset.pattern.permute.xlu0 1
      %1035 = vperm.xlu0 %1034, %v638
      %v1036 = vpop.permute.xlu0 %1035
      %1038 = vset.pattern.permute.xlu0 1
      %1039 = vperm.xlu0 %1038, %v639
      %v1040 = vpop.permute.xlu0 %1039
      %1042 = vset.pattern.permute.xlu0 1
      %1043 = vperm.xlu0 %1042, %v640
      %v1044 = vpop.permute.xlu0 %1043
      %1046 = vset.pattern.permute.xlu0 1
      %1047 = vperm.xlu0 %1046, %v641
      %v1048 = vpop.permute.xlu0 %1047
      %1050 = vset.pattern.permute.xlu0 1
      %1051 = vperm.xlu0 %1050, %v642
      %v1052 = vpop.permute.xlu0 %1051
      %1054 = vset.pattern.permute.xlu0 1
      %1055 = vperm.xlu0 %1054, %v643
      %v1056 = vpop.permute.xlu0 %1055
      %1058 = vset.pattern.permute.xlu0 1
      %1059 = vperm.xlu0 %1058, %v644
      %v1060 = vpop.permute.xlu0 %1059
      %1062 = vset.pattern.permute.xlu0 1
      %1063 = vperm.xlu0 %1062, %v645
      %v1064 = vpop.permute.xlu0 %1063
      %1066 = vset.pattern.permute.xlu0 1
      %1067 = vperm.xlu0 %1066, %v646
      %v1068 = vpop.permute.xlu0 %1067
      %1070 = vset.pattern.permute.xlu0 1
      %1071 = vperm.xlu0 %1070, %v647
      %v1072 = vpop.permute.xlu0 %1071
      %1074 = vset.pattern.permute.xlu0 1
      %1075 = vperm.xlu0 %1074, %v648
      %v1076 = vpop.permute.xlu0 %1075
      %1078 = vset.pattern.permute.xlu0 1
      %1079 = vperm.xlu0 %1078, %v649
      %v1080 = vpop.permute.xlu0 %1079
      %1082 = vset.pattern.permute.xlu0 1
      %1083 = vperm.xlu0 %1082, %v650
      %v1084 = vpop.permute.xlu0 %1083
      %1086 = vset.pattern.permute.xlu0 1
      %1087 = vperm.xlu0 %1086, %v651
      %v1088 = vpop.permute.xlu0 %1087
      %1090 = vset.pattern.permute.xlu0 1
      %1091 = vperm.xlu0 %1090, %v652
      %v1092 = vpop.permute.xlu0 %1091
      %1094 = vset.pattern.permute.xlu0 1
      %1095 = vperm.xlu0 %1094, %v653
      %v1096 = vpop.permute.xlu0 %1095
      %1098 = vset.pattern.permute.xlu0 1
      %1099 = vperm.xlu0 %1098, %v654
      %v1100 = vpop.permute.xlu0 %1099
      %1102 = vset.pattern.permute.xlu0 1
      %1103 = vperm.xlu0 %1102, %v655
      %v1104 = vpop.permute.xlu0 %1103
      %1106 = vset.pattern.permute.xlu0 1
      %1107 = vperm.xlu0 %1106, %v656
      %v1108 = vpop.permute.xlu0 %1107
      %1110 = vset.pattern.permute.xlu0 1
      %1111 = vperm.xlu0 %1110, %v657
      %v1112 = vpop.permute.xlu0 %1111
      %1114 = vset.pattern.permute.xlu0 1
      %1115 = vperm.xlu0 %1114, %v658
      %v1116 = vpop.permute.xlu0 %1115
      %1118 = vset.pattern.permute.xlu0 1
      %1119 = vperm.xlu0 %1118, %v659
      %v1120 = vpop.permute.xlu0 %1119
      %1122 = vset.pattern.permute.xlu0 1
      %1123 = vperm.xlu0 %1122, %v660
      %v1124 = vpop.permute.xlu0 %1123
      %1126 = vset.pattern.permute.xlu0 1
      %1127 = vperm.xlu0 %1126, %v661
      %v1128 = vpop.permute.xlu0 %1127
      %1130 = vset.pattern.permute.xlu0 1
      %1131 = vperm.xlu0 %1130, %v662
      %v1132 = vpop.permute.xlu0 %1131
      %1134 = vset.pattern.permute.xlu0 1
      %1135 = vperm.xlu0 %1134, %v663
      %v1136 = vpop.permute.xlu0 %1135
      %1138 = vset.pattern.permute.xlu0 1
      %1139 = vperm.xlu0 %1138, %v664
      %v1140 = vpop.permute.xlu0 %1139
      %1142 = vset.pattern.permute.xlu0 1
      %1143 = vperm.xlu0 %1142, %v665
      %v1144 = vpop.permute.xlu0 %1143
      %1146 = vset.pattern.permute.xlu0 1
      %1147 = vperm.xlu0 %1146, %v666
      %v1148 = vpop.permute.xlu0 %1147
      %1150 = vset.pattern.permute.xlu0 1
      %1151 = vperm.xlu0 %1150, %v667
      %v1152 = vpop.permute.xlu0 %1151
      %1154 = vset.pattern.permute.xlu0 1
      %1155 = vperm.xlu0 %1154, %v668
      %v1156 = vpop.permute.xlu0 %1155
      %1158 = vset.pattern.permute.xlu0 1
      %1159 = vperm.xlu0 %1158, %v669
      %v1160 = vpop.permute.xlu0 %1159
      %1162 = vset.pattern.permute.xlu0 1
      %1163 = vperm.xlu0 %1162, %v670
      %v1164 = vpop.permute.xlu0 %1163
      %1166 = vset.pattern.permute.xlu0 1
      %1167 = vperm.xlu0 %1166, %v671
      %v1168 = vpop.permute.xlu0 %1167
      %1170 = vset.pattern.permute.xlu0 1
      %1171 = vperm.xlu0 %1170, %v672
      %v1172 = vpop.permute.xlu0 %1171
      %1174 = vset.pattern.permute.xlu0 1
      %1175 = vperm.xlu0 %1174, %v673
      %v1176 = vpop.permute.xlu0 %1175
      %1178 = vset.pattern.permute.xlu0 1
      %1179 = vperm.xlu0 %1178, %v674
      %v1180 = vpop.permute.xlu0 %1179
      %1182 = vset.pattern.permute.xlu0 1
      %1183 = vperm.xlu0 %1182, %v675
      %v1184 = vpop.permute.xlu0 %1183
      %1186 = vset.pattern.permute.xlu0 1
      %1187 = vperm.xlu0 %1186, %v676
      %v1188 = vpop.permute.xlu0 %1187
      %1190 = vset.pattern.permute.xlu0 1
      %1191 = vperm.xlu0 %1190, %v677
      %v1192 = vpop.permute.xlu0 %1191
      %1194 = vset.pattern.permute.xlu0 1
      %1195 = vperm.xlu0 %1194, %v678
      %v1196 = vpop.permute.xlu0 %1195
      %1198 = vset.pattern.permute.xlu0 1
      %1199 = vperm.xlu0 %1198, %v679
      %v1200 = vpop.permute.xlu0 %1199
      %1202 = vset.pattern.permute.xlu0 1
      %1203 = vperm.xlu0 %1202, %v680
      %v1204 = vpop.permute.xlu0 %1203
      %1206 = vset.pattern.permute.xlu0 1
      %1207 = vperm.xlu0 %1206, %v681
      %v1208 = vpop.permute.xlu0 %1207
      %1210 = vset.pattern.permute.xlu0 1
      %1211 = vperm.xlu0 %1210, %v682
      %v1212 = vpop.permute.xlu0 %1211
      %1214 = vset.pattern.permute.xlu0 1
      %1215 = vperm.xlu0 %1214, %v683
      %v1216 = vpop.permute.xlu0 %1215
      %1218 = vset.pattern.permute.xlu0 1
      %1219 = vperm.xlu0 %1218, %v684
      %v1220 = vpop.permute.xlu0 %1219
      %1222 = vset.pattern.permute.xlu0 1
      %1223 = vperm.xlu0 %1222, %v685
      %v1224 = vpop.permute.xlu0 %1223
      %1226 = vset.pattern.permute.xlu0 1
      %1227 = vperm.xlu0 %1226, %v686
      %v1228 = vpop.permute.xlu0 %1227
      %1230 = vset.pattern.permute.xlu0 1
      %1231 = vperm.xlu0 %1230, %v687
      %v1232 = vpop.permute.xlu0 %1231
      %1234 = vset.pattern.permute.xlu0 1
      %1235 = vperm.xlu0 %1234, %v688
      %v1236 = vpop.permute.xlu0 %1235
      %1238 = vset.pattern.permute.xlu0 1
      %1239 = vperm.xlu0 %1238, %v689
      %v1240 = vpop.permute.xlu0 %1239
      %1242 = vset.pattern.permute.xlu0 1
      %1243 = vperm.xlu0 %1242, %v690
      %v1244 = vpop.permute.xlu0 %1243
      %1246 = vset.pattern.permute.xlu0 1
      %1247 = vperm.xlu0 %1246, %v691
      %v1248 = vpop.permute.xlu0 %1247
      %1250 = vset.pattern.permute.xlu0 1
      %1251 = vperm.xlu0 %1250, %v692
      %v1252 = vpop.permute.xlu0 %1251
      %1254 = vset.pattern.permute.xlu0 1
      %1255 = vperm.xlu0 %1254, %v693
      %v1256 = vpop.permute.xlu0 %1255
      %1258 = vset.pattern.permute.xlu0 1
      %1259 = vperm.xlu0 %1258, %v694
      %v1260 = vpop.permute.xlu0 %1259
      %1262 = vset.pattern.permute.xlu0 1
      %1263 = vperm.xlu0 %1262, %v695
      %v1264 = vpop.permute.xlu0 %1263
      %1266 = vset.pattern.permute.xlu0 1
      %1267 = vperm.xlu0 %1266, %v696
      %v1268 = vpop.permute.xlu0 %1267
      %1270 = vset.pattern.permute.xlu0 1
      %1271 = vperm.xlu0 %1270, %v697
      %v1272 = vpop.permute.xlu0 %1271
      %1274 = vset.pattern.permute.xlu0 2
      %1275 = vperm.xlu0 %1274, %v634
      %v1276 = vpop.permute.xlu0 %1275
      %1278 = vset.pattern.permute.xlu0 2
      %1279 = vperm.xlu0 %1278, %v635
      %v1280 = vpop.permute.xlu0 %1279
      %1282 = vset.pattern.permute.xlu0 2
      %1283 = vperm.xlu0 %1282, %v636
      %v1284 = vpop.permute.xlu0 %1283
      %1286 = vset.pattern.permute.xlu0 2
      %1287 = vperm.xlu0 %1286, %v637
      %v1288 = vpop.permute.xlu0 %1287
      %1290 = vset.pattern.permute.xlu0 2
      %1291 = vperm.xlu0 %1290, %v638
      %v1292 = vpop.permute.xlu0 %1291
      %1294 = vset.pattern.permute.xlu0 2
      %1295 = vperm.xlu0 %1294, %v639
      %v1296 = vpop.permute.xlu0 %1295
      %1298 = vset.pattern.permute.xlu0 2
      %1299 = vperm.xlu0 %1298, %v640
      %v1300 = vpop.permute.xlu0 %1299
      %1302 = vset.pattern.permute.xlu0 2
      %1303 = vperm.xlu0 %1302, %v641
      %v1304 = vpop.permute.xlu0 %1303
      %1306 = vset.pattern.permute.xlu0 2
      %1307 = vperm.xlu0 %1306, %v642
      %v1308 = vpop.permute.xlu0 %1307
      %1310 = vset.pattern.permute.xlu0 2
      %1311 = vperm.xlu0 %1310, %v643
      %v1312 = vpop.permute.xlu0 %1311
      %1314 = vset.pattern.permute.xlu0 2
      %1315 = vperm.xlu0 %1314, %v644
      %v1316 = vpop.permute.xlu0 %1315
      %1318 = vset.pattern.permute.xlu0 2
      %1319 = vperm.xlu0 %1318, %v645
      %v1320 = vpop.permute.xlu0 %1319
      %1322 = vset.pattern.permute.xlu0 2
      %1323 = vperm.xlu0 %1322, %v646
      %v1324 = vpop.permute.xlu0 %1323
      %1326 = vset.pattern.permute.xlu0 2
      %1327 = vperm.xlu0 %1326, %v647
      %v1328 = vpop.permute.xlu0 %1327
      %1330 = vset.pattern.permute.xlu0 2
      %1331 = vperm.xlu0 %1330, %v648
      %v1332 = vpop.permute.xlu0 %1331
      %1334 = vset.pattern.permute.xlu0 2
      %1335 = vperm.xlu0 %1334, %v649
      %v1336 = vpop.permute.xlu0 %1335
      %1338 = vset.pattern.permute.xlu0 2
      %1339 = vperm.xlu0 %1338, %v650
      %v1340 = vpop.permute.xlu0 %1339
      %1342 = vset.pattern.permute.xlu0 2
      %1343 = vperm.xlu0 %1342, %v651
      %v1344 = vpop.permute.xlu0 %1343
      %1346 = vset.pattern.permute.xlu0 2
      %1347 = vperm.xlu0 %1346, %v652
      %v1348 = vpop.permute.xlu0 %1347
      %1350 = vset.pattern.permute.xlu0 2
      %1351 = vperm.xlu0 %1350, %v653
      %v1352 = vpop.permute.xlu0 %1351
      %1354 = vset.pattern.permute.xlu0 2
      %1355 = vperm.xlu0 %1354, %v654
      %v1356 = vpop.permute.xlu0 %1355
      %1358 = vset.pattern.permute.xlu0 2
      %1359 = vperm.xlu0 %1358, %v655
      %v1360 = vpop.permute.xlu0 %1359
      %1362 = vset.pattern.permute.xlu0 2
      %1363 = vperm.xlu0 %1362, %v656
      %v1364 = vpop.permute.xlu0 %1363
      %1366 = vset.pattern.permute.xlu0 2
      %1367 = vperm.xlu0 %1366, %v657
      %v1368 = vpop.permute.xlu0 %1367
      %1370 = vset.pattern.permute.xlu0 2
      %1371 = vperm.xlu0 %1370, %v658
      %v1372 = vpop.permute.xlu0 %1371
      %1374 = vset.pattern.permute.xlu0 2
      %1375 = vperm.xlu0 %1374, %v659
      %v1376 = vpop.permute.xlu0 %1375
      %1378 = vset.pattern.permute.xlu0 2
      %1379 = vperm.xlu0 %1378, %v660
      %v1380 = vpop.permute.xlu0 %1379
      %1382 = vset.pattern.permute.xlu0 2
      %1383 = vperm.xlu0 %1382, %v661
      %v1384 = vpop.permute.xlu0 %1383
      %1386 = vset.pattern.permute.xlu0 2
      %1387 = vperm.xlu0 %1386, %v662
      %v1388 = vpop.permute.xlu0 %1387
      %1390 = vset.pattern.permute.xlu0 2
      %1391 = vperm.xlu0 %1390, %v663
      %v1392 = vpop.permute.xlu0 %1391
      %1394 = vset.pattern.permute.xlu0 2
      %1395 = vperm.xlu0 %1394, %v664
      %v1396 = vpop.permute.xlu0 %1395
      %1398 = vset.pattern.permute.xlu0 2
      %1399 = vperm.xlu0 %1398, %v665
      %v1400 = vpop.permute.xlu0 %1399
      %1402 = vset.pattern.permute.xlu0 2
      %1403 = vperm.xlu0 %1402, %v666
      %v1404 = vpop.permute.xlu0 %1403
      %1406 = vset.pattern.permute.xlu0 2
      %1407 = vperm.xlu0 %1406, %v667
      %v1408 = vpop.permute.xlu0 %1407
      %1410 = vset.pattern.permute.xlu0 2
      %1411 = vperm.xlu0 %1410, %v668
      %v1412 = vpop.permute.xlu0 %1411
      %1414 = vset.pattern.permute.xlu0 2
      %1415 = vperm.xlu0 %1414, %v669
      %v1416 = vpop.permute.xlu0 %1415
      %1418 = vset.pattern.permute.xlu0 2
      %1419 = vperm.xlu0 %1418, %v670
      %v1420 = vpop.permute.xlu0 %1419
      %1422 = vset.pattern.permute.xlu0 2
      %1423 = vperm.xlu0 %1422, %v671
      %v1424 = vpop.permute.xlu0 %1423
      %1426 = vset.pattern.permute.xlu0 2
      %1427 = vperm.xlu0 %1426, %v672
      %v1428 = vpop.permute.xlu0 %1427
      %1430 = vset.pattern.permute.xlu0 2
      %1431 = vperm.xlu0 %1430, %v673
      %v1432 = vpop.permute.xlu0 %1431
      %1434 = vset.pattern.permute.xlu0 2
      %1435 = vperm.xlu0 %1434, %v674
      %v1436 = vpop.permute.xlu0 %1435
      %1438 = vset.pattern.permute.xlu0 2
      %1439 = vperm.xlu0 %1438, %v675
      %v1440 = vpop.permute.xlu0 %1439
      %1442 = vset.pattern.permute.xlu0 2
      %1443 = vperm.xlu0 %1442, %v676
      %v1444 = vpop.permute.xlu0 %1443
      %1446 = vset.pattern.permute.xlu0 2
      %1447 = vperm.xlu0 %1446, %v677
      %v1448 = vpop.permute.xlu0 %1447
      %1450 = vset.pattern.permute.xlu0 2
      %1451 = vperm.xlu0 %1450, %v678
      %v1452 = vpop.permute.xlu0 %1451
      %1454 = vset.pattern.permute.xlu0 2
      %1455 = vperm.xlu0 %1454, %v679
      %v1456 = vpop.permute.xlu0 %1455
      %1458 = vset.pattern.permute.xlu0 2
      %1459 = vperm.xlu0 %1458, %v680
      %v1460 = vpop.permute.xlu0 %1459
      %1462 = vset.pattern.permute.xlu0 2
      %1463 = vperm.xlu0 %1462, %v681
      %v1464 = vpop.permute.xlu0 %1463
      %1466 = vset.pattern.permute.xlu0 2
      %1467 = vperm.xlu0 %1466, %v682
      %v1468 = vpop.permute.xlu0 %1467
      %1470 = vset.pattern.permute.xlu0 2
      %1471 = vperm.xlu0 %1470, %v683
      %v1472 = vpop.permute.xlu0 %1471
      %1474 = vset.pattern.permute.xlu0 2
      %1475 = vperm.xlu0 %1474, %v684
      %v1476 = vpop.permute.xlu0 %1475
      %1478 = vset.pattern.permute.xlu0 2
      %1479 = vperm.xlu0 %1478, %v685
      %v1480 = vpop.permute.xlu0 %1479
      %1482 = vset.pattern.permute.xlu0 2
      %1483 = vperm.xlu0 %1482, %v686
      %v1484 = vpop.permute.xlu0 %1483
      %1486 = vset.pattern.permute.xlu0 2
      %1487 = vperm.xlu0 %1486, %v687
      %v1488 = vpop.permute.xlu0 %1487
      %1490 = vset.pattern.permute.xlu0 2
      %1491 = vperm.xlu0 %1490, %v688
      %v1492 = vpop.permute.xlu0 %1491
      %1494 = vset.pattern.permute.xlu0 2
      %1495 = vperm.xlu0 %1494, %v689
      %v1496 = vpop.permute.xlu0 %1495
      %1498 = vset.pattern.permute.xlu0 2
      %1499 = vperm.xlu0 %1498, %v690
      %v1500 = vpop.permute.xlu0 %1499
      %1502 = vset.pattern.permute.xlu0 2
      %1503 = vperm.xlu0 %1502, %v691
      %v1504 = vpop.permute.xlu0 %1503
      %1506 = vset.pattern.permute.xlu0 2
      %1507 = vperm.xlu0 %1506, %v692
      %v1508 = vpop.permute.xlu0 %1507
      %1510 = vset.pattern.permute.xlu0 2
      %1511 = vperm.xlu0 %1510, %v693
      %v1512 = vpop.permute.xlu0 %1511
      %1514 = vset.pattern.permute.xlu0 2
      %1515 = vperm.xlu0 %1514, %v694
      %v1516 = vpop.permute.xlu0 %1515
      %1518 = vset.pattern.permute.xlu0 2
      %1519 = vperm.xlu0 %1518, %v695
      %v1520 = vpop.permute.xlu0 %1519
      %1522 = vset.pattern.permute.xlu0 2
      %1523 = vperm.xlu0 %1522, %v696
      %v1524 = vpop.permute.xlu0 %1523
      %1526 = vset.pattern.permute.xlu0 2
      %1527 = vperm.xlu0 %1526, %v697
      %v1528 = vpop.permute.xlu0 %1527
      %v1530 = vld [vmem:[%s2] sm:$0x3]
      %v1531 = vld [vmem:[%s1] ss:$4 sm:$0x3]
      %v1533 = vlaneseq
      %v1534 = vshrl.u32 %v1533, 7
      %v1535 = vsub.s32 0, %v1534
      %v1536 = vrot.slane %v1531, %v1535
      %v1537 = vlaneseq
      %v1538 = vshrl.u32 %v1537, 7
      %v1539 = vsub.s32 1, %v1538
      %v1540 = vrot.slane %v1531, %v1539
      %v1543 = vmul.f32 %v701, %v1536
      %v1544 = vmul.f32 %v701, %v1540
      %v1545 = vmul.f32 %v706, %v1536
      %v1546 = vmul.f32 %v706, %v1540
      %v1547 = vmul.f32 %v711, %v1536
      %v1548 = vmul.f32 %v711, %v1540
      %v1549 = vmul.f32 %v716, %v1536
      %v1550 = vmul.f32 %v716, %v1540
      %v1551 = vmul.f32 %v721, %v1536
      %v1552 = vmul.f32 %v721, %v1540
      %v1553 = vmul.f32 %v726, %v1536
      %v1554 = vmul.f32 %v726, %v1540
      %v1555 = vmul.f32 %v731, %v1536
      %v1556 = vmul.f32 %v731, %v1540
      %v1557 = vmul.f32 %v736, %v1536
      %v1558 = vmul.f32 %v736, %v1540
      %v1559 = vmul.f32 %v741, %v1536
      %v1560 = vmul.f32 %v741, %v1540
      %v1561 = vmul.f32 %v746, %v1536
      %v1562 = vmul.f32 %v746, %v1540
      %v1563 = vmul.f32 %v751, %v1536
      %v1564 = vmul.f32 %v751, %v1540
      %v1565 = vmul.f32 %v756, %v1536
      %v1566 = vmul.f32 %v756, %v1540
      %v1567 = vmul.f32 %v761, %v1536
      %v1568 = vmul.f32 %v761, %v1540
      %v1569 = vmul.f32 %v766, %v1536
      %v1570 = vmul.f32 %v766, %v1540
      %v1571 = vmul.f32 %v771, %v1536
      %v1572 = vmul.f32 %v771, %v1540
      %v1573 = vmul.f32 %v776, %v1536
      %v1574 = vmul.f32 %v776, %v1540
      %v1575 = vmul.f32 %v781, %v1536
      %v1576 = vmul.f32 %v781, %v1540
      %v1577 = vmul.f32 %v786, %v1536
      %v1578 = vmul.f32 %v786, %v1540
      %v1579 = vmul.f32 %v791, %v1536
      %v1580 = vmul.f32 %v791, %v1540
      %v1581 = vmul.f32 %v796, %v1536
      %v1582 = vmul.f32 %v796, %v1540
      %v1583 = vmul.f32 %v801, %v1536
      %v1584 = vmul.f32 %v801, %v1540
      %v1585 = vmul.f32 %v806, %v1536
      %v1586 = vmul.f32 %v806, %v1540
      %v1587 = vmul.f32 %v811, %v1536
      %v1588 = vmul.f32 %v811, %v1540
      %v1589 = vmul.f32 %v816, %v1536
      %v1590 = vmul.f32 %v816, %v1540
      %v1591 = vmul.f32 %v821, %v1536
      %v1592 = vmul.f32 %v821, %v1540
      %v1593 = vmul.f32 %v826, %v1536
      %v1594 = vmul.f32 %v826, %v1540
      %v1595 = vmul.f32 %v831, %v1536
      %v1596 = vmul.f32 %v831, %v1540
      %v1597 = vmul.f32 %v836, %v1536
      %v1598 = vmul.f32 %v836, %v1540
      %v1599 = vmul.f32 %v841, %v1536
      %v1600 = vmul.f32 %v841, %v1540
      %v1601 = vmul.f32 %v846, %v1536
      %v1602 = vmul.f32 %v846, %v1540
      %v1603 = vmul.f32 %v851, %v1536
      %v1604 = vmul.f32 %v851, %v1540
      %v1605 = vmul.f32 %v856, %v1536
      %v1606 = vmul.f32 %v856, %v1540
      %v1607 = vmul.f32 %v861, %v1536
      %v1608 = vmul.f32 %v861, %v1540
      %v1609 = vmul.f32 %v866, %v1536
      %v1610 = vmul.f32 %v866, %v1540
      %v1611 = vmul.f32 %v871, %v1536
      %v1612 = vmul.f32 %v871, %v1540
      %v1613 = vmul.f32 %v876, %v1536
      %v1614 = vmul.f32 %v876, %v1540
      %v1615 = vmul.f32 %v881, %v1536
      %v1616 = vmul.f32 %v881, %v1540
      %v1617 = vmul.f32 %v886, %v1536
      %v1618 = vmul.f32 %v886, %v1540
      %v1619 = vmul.f32 %v891, %v1536
      %v1620 = vmul.f32 %v891, %v1540
      %v1621 = vmul.f32 %v896, %v1536
      %v1622 = vmul.f32 %v896, %v1540
      %v1623 = vmul.f32 %v901, %v1536
      %v1624 = vmul.f32 %v901, %v1540
      %v1625 = vmul.f32 %v906, %v1536
      %v1626 = vmul.f32 %v906, %v1540
      %v1627 = vmul.f32 %v911, %v1536
      %v1628 = vmul.f32 %v911, %v1540
      %v1629 = vmul.f32 %v916, %v1536
      %v1630 = vmul.f32 %v916, %v1540
      %v1631 = vmul.f32 %v921, %v1536
      %v1632 = vmul.f32 %v921, %v1540
      %v1633 = vmul.f32 %v926, %v1536
      %v1634 = vmul.f32 %v926, %v1540
      %v1635 = vmul.f32 %v931, %v1536
      %v1636 = vmul.f32 %v931, %v1540
      %v1637 = vmul.f32 %v936, %v1536
      %v1638 = vmul.f32 %v936, %v1540
      %v1639 = vmul.f32 %v941, %v1536
      %v1640 = vmul.f32 %v941, %v1540
      %v1641 = vmul.f32 %v946, %v1536
      %v1642 = vmul.f32 %v946, %v1540
      %v1643 = vmul.f32 %v951, %v1536
      %v1644 = vmul.f32 %v951, %v1540
      %v1645 = vmul.f32 %v956, %v1536
      %v1646 = vmul.f32 %v956, %v1540
      %v1647 = vmul.f32 %v961, %v1536
      %v1648 = vmul.f32 %v961, %v1540
      %v1649 = vmul.f32 %v966, %v1536
      %v1650 = vmul.f32 %v966, %v1540
      %v1651 = vmul.f32 %v971, %v1536
      %v1652 = vmul.f32 %v971, %v1540
      %v1653 = vmul.f32 %v976, %v1536
      %v1654 = vmul.f32 %v976, %v1540
      %v1655 = vmul.f32 %v981, %v1536
      %v1656 = vmul.f32 %v981, %v1540
      %v1657 = vmul.f32 %v986, %v1536
      %v1658 = vmul.f32 %v986, %v1540
      %v1659 = vmul.f32 %v991, %v1536
      %v1660 = vmul.f32 %v991, %v1540
      %v1661 = vmul.f32 %v996, %v1536
      %v1662 = vmul.f32 %v996, %v1540
      %v1663 = vmul.f32 %v1001, %v1536
      %v1664 = vmul.f32 %v1001, %v1540
      %v1665 = vmul.f32 %v1006, %v1536
      %v1666 = vmul.f32 %v1006, %v1540
      %v1667 = vmul.f32 %v1011, %v1536
      %v1668 = vmul.f32 %v1011, %v1540
      %v1669 = vmul.f32 %v1016, %v1536
      %v1670 = vmul.f32 %v1016, %v1540
      %v1672 = vlaneseq
      %v1673 = vshrl.u32 %v1672, 7
      %v1674 = vsub.s32 0, %v1673
      %v1675 = vrot.slane %v1530, %v1674
      %v1676 = vlaneseq
      %v1677 = vshrl.u32 %v1676, 7
      %v1678 = vsub.s32 1, %v1677
      %v1679 = vrot.slane %v1530, %v1678
      %v1682 = vadd.f32 %v1675, %v1543
      %v1683 = vadd.f32 %v1679, %v1544
      %v1684 = vadd.f32 %v1675, %v1545
      %v1685 = vadd.f32 %v1679, %v1546
      %v1686 = vadd.f32 %v1675, %v1547
      %v1687 = vadd.f32 %v1679, %v1548
      %v1688 = vadd.f32 %v1675, %v1549
      %v1689 = vadd.f32 %v1679, %v1550
      %v1690 = vadd.f32 %v1675, %v1551
      %v1691 = vadd.f32 %v1679, %v1552
      %v1692 = vadd.f32 %v1675, %v1553
      %v1693 = vadd.f32 %v1679, %v1554
      %v1694 = vadd.f32 %v1675, %v1555
      %v1695 = vadd.f32 %v1679, %v1556
      %v1696 = vadd.f32 %v1675, %v1557
      %v1697 = vadd.f32 %v1679, %v1558
      %v1698 = vadd.f32 %v1675, %v1559
      %v1699 = vadd.f32 %v1679, %v1560
      %v1700 = vadd.f32 %v1675, %v1561
      %v1701 = vadd.f32 %v1679, %v1562
      %v1702 = vadd.f32 %v1675, %v1563
      %v1703 = vadd.f32 %v1679, %v1564
      %v1704 = vadd.f32 %v1675, %v1565
      %v1705 = vadd.f32 %v1679, %v1566
      %v1706 = vadd.f32 %v1675, %v1567
      %v1707 = vadd.f32 %v1679, %v1568
      %v1708 = vadd.f32 %v1675, %v1569
      %v1709 = vadd.f32 %v1679, %v1570
      %v1710 = vadd.f32 %v1675, %v1571
      %v1711 = vadd.f32 %v1679, %v1572
      %v1712 = vadd.f32 %v1675, %v1573
      %v1713 = vadd.f32 %v1679, %v1574
      %v1714 = vadd.f32 %v1675, %v1575
      %v1715 = vadd.f32 %v1679, %v1576
      %v1716 = vadd.f32 %v1675, %v1577
      %v1717 = vadd.f32 %v1679, %v1578
      %v1718 = vadd.f32 %v1675, %v1579
      %v1719 = vadd.f32 %v1679, %v1580
      %v1720 = vadd.f32 %v1675, %v1581
      %v1721 = vadd.f32 %v1679, %v1582
      %v1722 = vadd.f32 %v1675, %v1583
      %v1723 = vadd.f32 %v1679, %v1584
      %v1724 = vadd.f32 %v1675, %v1585
      %v1725 = vadd.f32 %v1679, %v1586
      %v1726 = vadd.f32 %v1675, %v1587
      %v1727 = vadd.f32 %v1679, %v1588
      %v1728 = vadd.f32 %v1675, %v1589
      %v1729 = vadd.f32 %v1679, %v1590
      %v1730 = vadd.f32 %v1675, %v1591
      %v1731 = vadd.f32 %v1679, %v1592
      %v1732 = vadd.f32 %v1675, %v1593
      %v1733 = vadd.f32 %v1679, %v1594
      %v1734 = vadd.f32 %v1675, %v1595
      %v1735 = vadd.f32 %v1679, %v1596
      %v1736 = vadd.f32 %v1675, %v1597
      %v1737 = vadd.f32 %v1679, %v1598
      %v1738 = vadd.f32 %v1675, %v1599
      %v1739 = vadd.f32 %v1679, %v1600
      %v1740 = vadd.f32 %v1675, %v1601
      %v1741 = vadd.f32 %v1679, %v1602
      %v1742 = vadd.f32 %v1675, %v1603
      %v1743 = vadd.f32 %v1679, %v1604
      %v1744 = vadd.f32 %v1675, %v1605
      %v1745 = vadd.f32 %v1679, %v1606
      %v1746 = vadd.f32 %v1675, %v1607
      %v1747 = vadd.f32 %v1679, %v1608
      %v1748 = vadd.f32 %v1675, %v1609
      %v1749 = vadd.f32 %v1679, %v1610
      %v1750 = vadd.f32 %v1675, %v1611
      %v1751 = vadd.f32 %v1679, %v1612
      %v1752 = vadd.f32 %v1675, %v1613
      %v1753 = vadd.f32 %v1679, %v1614
      %v1754 = vadd.f32 %v1675, %v1615
      %v1755 = vadd.f32 %v1679, %v1616
      %v1756 = vadd.f32 %v1675, %v1617
      %v1757 = vadd.f32 %v1679, %v1618
      %v1758 = vadd.f32 %v1675, %v1619
      %v1759 = vadd.f32 %v1679, %v1620
      %v1760 = vadd.f32 %v1675, %v1621
      %v1761 = vadd.f32 %v1679, %v1622
      %v1762 = vadd.f32 %v1675, %v1623
      %v1763 = vadd.f32 %v1679, %v1624
      %v1764 = vadd.f32 %v1675, %v1625
      %v1765 = vadd.f32 %v1679, %v1626
      %v1766 = vadd.f32 %v1675, %v1627
      %v1767 = vadd.f32 %v1679, %v1628
      %v1768 = vadd.f32 %v1675, %v1629
      %v1769 = vadd.f32 %v1679, %v1630
      %v1770 = vadd.f32 %v1675, %v1631
      %v1771 = vadd.f32 %v1679, %v1632
      %v1772 = vadd.f32 %v1675, %v1633
      %v1773 = vadd.f32 %v1679, %v1634
      %v1774 = vadd.f32 %v1675, %v1635
      %v1775 = vadd.f32 %v1679, %v1636
      %v1776 = vadd.f32 %v1675, %v1637
      %v1777 = vadd.f32 %v1679, %v1638
      %v1778 = vadd.f32 %v1675, %v1639
      %v1779 = vadd.f32 %v1679, %v1640
      %v1780 = vadd.f32 %v1675, %v1641
      %v1781 = vadd.f32 %v1679, %v1642
      %v1782 = vadd.f32 %v1675, %v1643
      %v1783 = vadd.f32 %v1679, %v1644
      %v1784 = vadd.f32 %v1675, %v1645
      %v1785 = vadd.f32 %v1679, %v1646
      %v1786 = vadd.f32 %v1675, %v1647
      %v1787 = vadd.f32 %v1679, %v1648
      %v1788 = vadd.f32 %v1675, %v1649
      %v1789 = vadd.f32 %v1679, %v1650
      %v1790 = vadd.f32 %v1675, %v1651
      %v1791 = vadd.f32 %v1679, %v1652
      %v1792 = vadd.f32 %v1675, %v1653
      %v1793 = vadd.f32 %v1679, %v1654
      %v1794 = vadd.f32 %v1675, %v1655
      %v1795 = vadd.f32 %v1679, %v1656
      %v1796 = vadd.f32 %v1675, %v1657
      %v1797 = vadd.f32 %v1679, %v1658
      %v1798 = vadd.f32 %v1675, %v1659
      %v1799 = vadd.f32 %v1679, %v1660
      %v1800 = vadd.f32 %v1675, %v1661
      %v1801 = vadd.f32 %v1679, %v1662
      %v1802 = vadd.f32 %v1675, %v1663
      %v1803 = vadd.f32 %v1679, %v1664
      %v1804 = vadd.f32 %v1675, %v1665
      %v1805 = vadd.f32 %v1679, %v1666
      %v1806 = vadd.f32 %v1675, %v1667
      %v1807 = vadd.f32 %v1679, %v1668
      %v1808 = vadd.f32 %v1675, %v1669
      %v1809 = vadd.f32 %v1679, %v1670
      %s1810 = scalar_lea.vmem %s1, 1
      %v1811 = vld [vmem:[%s1810] ss:$4 sm:$0x3]
      %v1813 = vlaneseq
      %v1814 = vshrl.u32 %v1813, 7
      %v1815 = vsub.s32 0, %v1814
      %v1816 = vrot.slane %v1811, %v1815
      %v1817 = vlaneseq
      %v1818 = vshrl.u32 %v1817, 7
      %v1819 = vsub.s32 1, %v1818
      %v1820 = vrot.slane %v1811, %v1819
      %v1823 = vmul.f32 %v1020, %v1816
      %v1824 = vmul.f32 %v1020, %v1820
      %v1825 = vmul.f32 %v1024, %v1816
      %v1826 = vmul.f32 %v1024, %v1820
      %v1827 = vmul.f32 %v1028, %v1816
      %v1828 = vmul.f32 %v1028, %v1820
      %v1829 = vmul.f32 %v1032, %v1816
      %v1830 = vmul.f32 %v1032, %v1820
      %v1831 = vmul.f32 %v1036, %v1816
      %v1832 = vmul.f32 %v1036, %v1820
      %v1833 = vmul.f32 %v1040, %v1816
      %v1834 = vmul.f32 %v1040, %v1820
      %v1835 = vmul.f32 %v1044, %v1816
      %v1836 = vmul.f32 %v1044, %v1820
      %v1837 = vmul.f32 %v1048, %v1816
      %v1838 = vmul.f32 %v1048, %v1820
      %v1839 = vmul.f32 %v1052, %v1816
      %v1840 = vmul.f32 %v1052, %v1820
      %v1841 = vmul.f32 %v1056, %v1816
      %v1842 = vmul.f32 %v1056, %v1820
      %v1843 = vmul.f32 %v1060, %v1816
      %v1844 = vmul.f32 %v1060, %v1820
      %v1845 = vmul.f32 %v1064, %v1816
      %v1846 = vmul.f32 %v1064, %v1820
      %v1847 = vmul.f32 %v1068, %v1816
      %v1848 = vmul.f32 %v1068, %v1820
      %v1849 = vmul.f32 %v1072, %v1816
      %v1850 = vmul.f32 %v1072, %v1820
      %v1851 = vmul.f32 %v1076, %v1816
      %v1852 = vmul.f32 %v1076, %v1820
      %v1853 = vmul.f32 %v1080, %v1816
      %v1854 = vmul.f32 %v1080, %v1820
      %v1855 = vmul.f32 %v1084, %v1816
      %v1856 = vmul.f32 %v1084, %v1820
      %v1857 = vmul.f32 %v1088, %v1816
      %v1858 = vmul.f32 %v1088, %v1820
      %v1859 = vmul.f32 %v1092, %v1816
      %v1860 = vmul.f32 %v1092, %v1820
      %v1861 = vmul.f32 %v1096, %v1816
      %v1862 = vmul.f32 %v1096, %v1820
      %v1863 = vmul.f32 %v1100, %v1816
      %v1864 = vmul.f32 %v1100, %v1820
      %v1865 = vmul.f32 %v1104, %v1816
      %v1866 = vmul.f32 %v1104, %v1820
      %v1867 = vmul.f32 %v1108, %v1816
      %v1868 = vmul.f32 %v1108, %v1820
      %v1869 = vmul.f32 %v1112, %v1816
      %v1870 = vmul.f32 %v1112, %v1820
      %v1871 = vmul.f32 %v1116, %v1816
      %v1872 = vmul.f32 %v1116, %v1820
      %v1873 = vmul.f32 %v1120, %v1816
      %v1874 = vmul.f32 %v1120, %v1820
      %v1875 = vmul.f32 %v1124, %v1816
      %v1876 = vmul.f32 %v1124, %v1820
      %v1877 = vmul.f32 %v1128, %v1816
      %v1878 = vmul.f32 %v1128, %v1820
      %v1879 = vmul.f32 %v1132, %v1816
      %v1880 = vmul.f32 %v1132, %v1820
      %v1881 = vmul.f32 %v1136, %v1816
      %v1882 = vmul.f32 %v1136, %v1820
      %v1883 = vmul.f32 %v1140, %v1816
      %v1884 = vmul.f32 %v1140, %v1820
      %v1885 = vmul.f32 %v1144, %v1816
      %v1886 = vmul.f32 %v1144, %v1820
      %v1887 = vmul.f32 %v1148, %v1816
      %v1888 = vmul.f32 %v1148, %v1820
      %v1889 = vmul.f32 %v1152, %v1816
      %v1890 = vmul.f32 %v1152, %v1820
      %v1891 = vmul.f32 %v1156, %v1816
      %v1892 = vmul.f32 %v1156, %v1820
      %v1893 = vmul.f32 %v1160, %v1816
      %v1894 = vmul.f32 %v1160, %v1820
      %v1895 = vmul.f32 %v1164, %v1816
      %v1896 = vmul.f32 %v1164, %v1820
      %v1897 = vmul.f32 %v1168, %v1816
      %v1898 = vmul.f32 %v1168, %v1820
      %v1899 = vmul.f32 %v1172, %v1816
      %v1900 = vmul.f32 %v1172, %v1820
      %v1901 = vmul.f32 %v1176, %v1816
      %v1902 = vmul.f32 %v1176, %v1820
      %v1903 = vmul.f32 %v1180, %v1816
      %v1904 = vmul.f32 %v1180, %v1820
      %v1905 = vmul.f32 %v1184, %v1816
      %v1906 = vmul.f32 %v1184, %v1820
      %v1907 = vmul.f32 %v1188, %v1816
      %v1908 = vmul.f32 %v1188, %v1820
      %v1909 = vmul.f32 %v1192, %v1816
      %v1910 = vmul.f32 %v1192, %v1820
      %v1911 = vmul.f32 %v1196, %v1816
      %v1912 = vmul.f32 %v1196, %v1820
      %v1913 = vmul.f32 %v1200, %v1816
      %v1914 = vmul.f32 %v1200, %v1820
      %v1915 = vmul.f32 %v1204, %v1816
      %v1916 = vmul.f32 %v1204, %v1820
      %v1917 = vmul.f32 %v1208, %v1816
      %v1918 = vmul.f32 %v1208, %v1820
      %v1919 = vmul.f32 %v1212, %v1816
      %v1920 = vmul.f32 %v1212, %v1820
      %v1921 = vmul.f32 %v1216, %v1816
      %v1922 = vmul.f32 %v1216, %v1820
      %v1923 = vmul.f32 %v1220, %v1816
      %v1924 = vmul.f32 %v1220, %v1820
      %v1925 = vmul.f32 %v1224, %v1816
      %v1926 = vmul.f32 %v1224, %v1820
      %v1927 = vmul.f32 %v1228, %v1816
      %v1928 = vmul.f32 %v1228, %v1820
      %v1929 = vmul.f32 %v1232, %v1816
      %v1930 = vmul.f32 %v1232, %v1820
      %v1931 = vmul.f32 %v1236, %v1816
      %v1932 = vmul.f32 %v1236, %v1820
      %v1933 = vmul.f32 %v1240, %v1816
      %v1934 = vmul.f32 %v1240, %v1820
      %v1935 = vmul.f32 %v1244, %v1816
      %v1936 = vmul.f32 %v1244, %v1820
      %v1937 = vmul.f32 %v1248, %v1816
      %v1938 = vmul.f32 %v1248, %v1820
      %v1939 = vmul.f32 %v1252, %v1816
      %v1940 = vmul.f32 %v1252, %v1820
      %v1941 = vmul.f32 %v1256, %v1816
      %v1942 = vmul.f32 %v1256, %v1820
      %v1943 = vmul.f32 %v1260, %v1816
      %v1944 = vmul.f32 %v1260, %v1820
      %v1945 = vmul.f32 %v1264, %v1816
      %v1946 = vmul.f32 %v1264, %v1820
      %v1947 = vmul.f32 %v1268, %v1816
      %v1948 = vmul.f32 %v1268, %v1820
      %v1949 = vmul.f32 %v1272, %v1816
      %v1950 = vmul.f32 %v1272, %v1820
      %v1951 = vadd.f32 %v1682, %v1823
      %v1952 = vadd.f32 %v1683, %v1824
      %v1953 = vadd.f32 %v1684, %v1825
      %v1954 = vadd.f32 %v1685, %v1826
      %v1955 = vadd.f32 %v1686, %v1827
      %v1956 = vadd.f32 %v1687, %v1828
      %v1957 = vadd.f32 %v1688, %v1829
      %v1958 = vadd.f32 %v1689, %v1830
      %v1959 = vadd.f32 %v1690, %v1831
      %v1960 = vadd.f32 %v1691, %v1832
      %v1961 = vadd.f32 %v1692, %v1833
      %v1962 = vadd.f32 %v1693, %v1834
      %v1963 = vadd.f32 %v1694, %v1835
      %v1964 = vadd.f32 %v1695, %v1836
      %v1965 = vadd.f32 %v1696, %v1837
      %v1966 = vadd.f32 %v1697, %v1838
      %v1967 = vadd.f32 %v1698, %v1839
      %v1968 = vadd.f32 %v1699, %v1840
      %v1969 = vadd.f32 %v1700, %v1841
      %v1970 = vadd.f32 %v1701, %v1842
      %v1971 = vadd.f32 %v1702, %v1843
      %v1972 = vadd.f32 %v1703, %v1844
      %v1973 = vadd.f32 %v1704, %v1845
      %v1974 = vadd.f32 %v1705, %v1846
      %v1975 = vadd.f32 %v1706, %v1847
      %v1976 = vadd.f32 %v1707, %v1848
      %v1977 = vadd.f32 %v1708, %v1849
      %v1978 = vadd.f32 %v1709, %v1850
      %v1979 = vadd.f32 %v1710, %v1851
      %v1980 = vadd.f32 %v1711, %v1852
      %v1981 = vadd.f32 %v1712, %v1853
      %v1982 = vadd.f32 %v1713, %v1854
      %v1983 = vadd.f32 %v1714, %v1855
      %v1984 = vadd.f32 %v1715, %v1856
      %v1985 = vadd.f32 %v1716, %v1857
      %v1986 = vadd.f32 %v1717, %v1858
      %v1987 = vadd.f32 %v1718, %v1859
      %v1988 = vadd.f32 %v1719, %v1860
      %v1989 = vadd.f32 %v1720, %v1861
      %v1990 = vadd.f32 %v1721, %v1862
      %v1991 = vadd.f32 %v1722, %v1863
      %v1992 = vadd.f32 %v1723, %v1864
      %v1993 = vadd.f32 %v1724, %v1865
      %v1994 = vadd.f32 %v1725, %v1866
      %v1995 = vadd.f32 %v1726, %v1867
      %v1996 = vadd.f32 %v1727, %v1868
      %v1997 = vadd.f32 %v1728, %v1869
      %v1998 = vadd.f32 %v1729, %v1870
      %v1999 = vadd.f32 %v1730, %v1871
      %v2000 = vadd.f32 %v1731, %v1872
      %v2001 = vadd.f32 %v1732, %v1873
      %v2002 = vadd.f32 %v1733, %v1874
      %v2003 = vadd.f32 %v1734, %v1875
      %v2004 = vadd.f32 %v1735, %v1876
      %v2005 = vadd.f32 %v1736, %v1877
      %v2006 = vadd.f32 %v1737, %v1878
      %v2007 = vadd.f32 %v1738, %v1879
      %v2008 = vadd.f32 %v1739, %v1880
      %v2009 = vadd.f32 %v1740, %v1881
      %v2010 = vadd.f32 %v1741, %v1882
      %v2011 = vadd.f32 %v1742, %v1883
      %v2012 = vadd.f32 %v1743, %v1884
      %v2013 = vadd.f32 %v1744, %v1885
      %v2014 = vadd.f32 %v1745, %v1886
      %v2015 = vadd.f32 %v1746, %v1887
      %v2016 = vadd.f32 %v1747, %v1888
      %v2017 = vadd.f32 %v1748, %v1889
      %v2018 = vadd.f32 %v1749, %v1890
      %v2019 = vadd.f32 %v1750, %v1891
      %v2020 = vadd.f32 %v1751, %v1892
      %v2021 = vadd.f32 %v1752, %v1893
      %v2022 = vadd.f32 %v1753, %v1894
      %v2023 = vadd.f32 %v1754, %v1895
      %v2024 = vadd.f32 %v1755, %v1896
      %v2025 = vadd.f32 %v1756, %v1897
      %v2026 = vadd.f32 %v1757, %v1898
      %v2027 = vadd.f32 %v1758, %v1899
      %v2028 = vadd.f32 %v1759, %v1900
      %v2029 = vadd.f32 %v1760, %v1901
      %v2030 = vadd.f32 %v1761, %v1902
      %v2031 = vadd.f32 %v1762, %v1903
      %v2032 = vadd.f32 %v1763, %v1904
      %v2033 = vadd.f32 %v1764, %v1905
      %v2034 = vadd.f32 %v1765, %v1906
      %v2035 = vadd.f32 %v1766, %v1907
      %v2036 = vadd.f32 %v1767, %v1908
      %v2037 = vadd.f32 %v1768, %v1909
      %v2038 = vadd.f32 %v1769, %v1910
      %v2039 = vadd.f32 %v1770, %v1911
      %v2040 = vadd.f32 %v1771, %v1912
      %v2041 = vadd.f32 %v1772, %v1913
      %v2042 = vadd.f32 %v1773, %v1914
      %v2043 = vadd.f32 %v1774, %v1915
      %v2044 = vadd.f32 %v1775, %v1916
      %v2045 = vadd.f32 %v1776, %v1917
      %v2046 = vadd.f32 %v1777, %v1918
      %v2047 = vadd.f32 %v1778, %v1919
      %v2048 = vadd.f32 %v1779, %v1920
      %v2049 = vadd.f32 %v1780, %v1921
      %v2050 = vadd.f32 %v1781, %v1922
      %v2051 = vadd.f32 %v1782, %v1923
      %v2052 = vadd.f32 %v1783, %v1924
      %v2053 = vadd.f32 %v1784, %v1925
      %v2054 = vadd.f32 %v1785, %v1926
      %v2055 = vadd.f32 %v1786, %v1927
      %v2056 = vadd.f32 %v1787, %v1928
      %v2057 = vadd.f32 %v1788, %v1929
      %v2058 = vadd.f32 %v1789, %v1930
      %v2059 = vadd.f32 %v1790, %v1931
      %v2060 = vadd.f32 %v1791, %v1932
      %v2061 = vadd.f32 %v1792, %v1933
      %v2062 = vadd.f32 %v1793, %v1934
      %v2063 = vadd.f32 %v1794, %v1935
      %v2064 = vadd.f32 %v1795, %v1936
      %v2065 = vadd.f32 %v1796, %v1937
      %v2066 = vadd.f32 %v1797, %v1938
      %v2067 = vadd.f32 %v1798, %v1939
      %v2068 = vadd.f32 %v1799, %v1940
      %v2069 = vadd.f32 %v1800, %v1941
      %v2070 = vadd.f32 %v1801, %v1942
      %v2071 = vadd.f32 %v1802, %v1943
      %v2072 = vadd.f32 %v1803, %v1944
      %v2073 = vadd.f32 %v1804, %v1945
      %v2074 = vadd.f32 %v1805, %v1946
      %v2075 = vadd.f32 %v1806, %v1947
      %v2076 = vadd.f32 %v1807, %v1948
      %v2077 = vadd.f32 %v1808, %v1949
      %v2078 = vadd.f32 %v1809, %v1950
      %s2079 = scalar_lea.vmem %s1, 2
      %v2080 = vld [vmem:[%s2079] ss:$4 sm:$0x3]
      %v2082 = vlaneseq
      %v2083 = vshrl.u32 %v2082, 7
      %v2084 = vsub.s32 0, %v2083
      %v2085 = vrot.slane %v2080, %v2084
      %v2086 = vlaneseq
      %v2087 = vshrl.u32 %v2086, 7
      %v2088 = vsub.s32 1, %v2087
      %v2089 = vrot.slane %v2080, %v2088
      %v2092 = vmul.f32 %v1276, %v2085
      %v2093 = vmul.f32 %v1276, %v2089
      %v2094 = vmul.f32 %v1280, %v2085
      %v2095 = vmul.f32 %v1280, %v2089
      %v2096 = vmul.f32 %v1284, %v2085
      %v2097 = vmul.f32 %v1284, %v2089
      %v2098 = vmul.f32 %v1288, %v2085
      %v2099 = vmul.f32 %v1288, %v2089
      %v2100 = vmul.f32 %v1292, %v2085
      %v2101 = vmul.f32 %v1292, %v2089
      %v2102 = vmul.f32 %v1296, %v2085
      %v2103 = vmul.f32 %v1296, %v2089
      %v2104 = vmul.f32 %v1300, %v2085
      %v2105 = vmul.f32 %v1300, %v2089
      %v2106 = vmul.f32 %v1304, %v2085
      %v2107 = vmul.f32 %v1304, %v2089
      %v2108 = vmul.f32 %v1308, %v2085
      %v2109 = vmul.f32 %v1308, %v2089
      %v2110 = vmul.f32 %v1312, %v2085
      %v2111 = vmul.f32 %v1312, %v2089
      %v2112 = vmul.f32 %v1316, %v2085
      %v2113 = vmul.f32 %v1316, %v2089
      %v2114 = vmul.f32 %v1320, %v2085
      %v2115 = vmul.f32 %v1320, %v2089
      %v2116 = vmul.f32 %v1324, %v2085
      %v2117 = vmul.f32 %v1324, %v2089
      %v2118 = vmul.f32 %v1328, %v2085
      %v2119 = vmul.f32 %v1328, %v2089
      %v2120 = vmul.f32 %v1332, %v2085
      %v2121 = vmul.f32 %v1332, %v2089
      %v2122 = vmul.f32 %v1336, %v2085
      %v2123 = vmul.f32 %v1336, %v2089
      %v2124 = vmul.f32 %v1340, %v2085
      %v2125 = vmul.f32 %v1340, %v2089
      %v2126 = vmul.f32 %v1344, %v2085
      %v2127 = vmul.f32 %v1344, %v2089
      %v2128 = vmul.f32 %v1348, %v2085
      %v2129 = vmul.f32 %v1348, %v2089
      %v2130 = vmul.f32 %v1352, %v2085
      %v2131 = vmul.f32 %v1352, %v2089
      %v2132 = vmul.f32 %v1356, %v2085
      %v2133 = vmul.f32 %v1356, %v2089
      %v2134 = vmul.f32 %v1360, %v2085
      %v2135 = vmul.f32 %v1360, %v2089
      %v2136 = vmul.f32 %v1364, %v2085
      %v2137 = vmul.f32 %v1364, %v2089
      %v2138 = vmul.f32 %v1368, %v2085
      %v2139 = vmul.f32 %v1368, %v2089
      %v2140 = vmul.f32 %v1372, %v2085
      %v2141 = vmul.f32 %v1372, %v2089
      %v2142 = vmul.f32 %v1376, %v2085
      %v2143 = vmul.f32 %v1376, %v2089
      %v2144 = vmul.f32 %v1380, %v2085
      %v2145 = vmul.f32 %v1380, %v2089
      %v2146 = vmul.f32 %v1384, %v2085
      %v2147 = vmul.f32 %v1384, %v2089
      %v2148 = vmul.f32 %v1388, %v2085
      %v2149 = vmul.f32 %v1388, %v2089
      %v2150 = vmul.f32 %v1392, %v2085
      %v2151 = vmul.f32 %v1392, %v2089
      %v2152 = vmul.f32 %v1396, %v2085
      %v2153 = vmul.f32 %v1396, %v2089
      %v2154 = vmul.f32 %v1400, %v2085
      %v2155 = vmul.f32 %v1400, %v2089
      %v2156 = vmul.f32 %v1404, %v2085
      %v2157 = vmul.f32 %v1404, %v2089
      %v2158 = vmul.f32 %v1408, %v2085
      %v2159 = vmul.f32 %v1408, %v2089
      %v2160 = vmul.f32 %v1412, %v2085
      %v2161 = vmul.f32 %v1412, %v2089
      %v2162 = vmul.f32 %v1416, %v2085
      %v2163 = vmul.f32 %v1416, %v2089
      %v2164 = vmul.f32 %v1420, %v2085
      %v2165 = vmul.f32 %v1420, %v2089
      %v2166 = vmul.f32 %v1424, %v2085
      %v2167 = vmul.f32 %v1424, %v2089
      %v2168 = vmul.f32 %v1428, %v2085
      %v2169 = vmul.f32 %v1428, %v2089
      %v2170 = vmul.f32 %v1432, %v2085
      %v2171 = vmul.f32 %v1432, %v2089
      %v2172 = vmul.f32 %v1436, %v2085
      %v2173 = vmul.f32 %v1436, %v2089
      %v2174 = vmul.f32 %v1440, %v2085
      %v2175 = vmul.f32 %v1440, %v2089
      %v2176 = vmul.f32 %v1444, %v2085
      %v2177 = vmul.f32 %v1444, %v2089
      %v2178 = vmul.f32 %v1448, %v2085
      %v2179 = vmul.f32 %v1448, %v2089
      %v2180 = vmul.f32 %v1452, %v2085
      %v2181 = vmul.f32 %v1452, %v2089
      %v2182 = vmul.f32 %v1456, %v2085
      %v2183 = vmul.f32 %v1456, %v2089
      %v2184 = vmul.f32 %v1460, %v2085
      %v2185 = vmul.f32 %v1460, %v2089
      %v2186 = vmul.f32 %v1464, %v2085
      %v2187 = vmul.f32 %v1464, %v2089
      %v2188 = vmul.f32 %v1468, %v2085
      %v2189 = vmul.f32 %v1468, %v2089
      %v2190 = vmul.f32 %v1472, %v2085
      %v2191 = vmul.f32 %v1472, %v2089
      %v2192 = vmul.f32 %v1476, %v2085
      %v2193 = vmul.f32 %v1476, %v2089
      %v2194 = vmul.f32 %v1480, %v2085
      %v2195 = vmul.f32 %v1480, %v2089
      %v2196 = vmul.f32 %v1484, %v2085
      %v2197 = vmul.f32 %v1484, %v2089
      %v2198 = vmul.f32 %v1488, %v2085
      %v2199 = vmul.f32 %v1488, %v2089
      %v2200 = vmul.f32 %v1492, %v2085
      %v2201 = vmul.f32 %v1492, %v2089
      %v2202 = vmul.f32 %v1496, %v2085
      %v2203 = vmul.f32 %v1496, %v2089
      %v2204 = vmul.f32 %v1500, %v2085
      %v2205 = vmul.f32 %v1500, %v2089
      %v2206 = vmul.f32 %v1504, %v2085
      %v2207 = vmul.f32 %v1504, %v2089
      %v2208 = vmul.f32 %v1508, %v2085
      %v2209 = vmul.f32 %v1508, %v2089
      %v2210 = vmul.f32 %v1512, %v2085
      %v2211 = vmul.f32 %v1512, %v2089
      %v2212 = vmul.f32 %v1516, %v2085
      %v2213 = vmul.f32 %v1516, %v2089
      %v2214 = vmul.f32 %v1520, %v2085
      %v2215 = vmul.f32 %v1520, %v2089
      %v2216 = vmul.f32 %v1524, %v2085
      %v2217 = vmul.f32 %v1524, %v2089
      %v2218 = vmul.f32 %v1528, %v2085
      %v2219 = vmul.f32 %v1528, %v2089
      %v2220 = vadd.f32 %v1951, %v2092
      %v2221 = vadd.f32 %v1952, %v2093
      %v2222 = vadd.f32 %v1953, %v2094
      %v2223 = vadd.f32 %v1954, %v2095
      %v2224 = vadd.f32 %v1955, %v2096
      %v2225 = vadd.f32 %v1956, %v2097
      %v2226 = vadd.f32 %v1957, %v2098
      %v2227 = vadd.f32 %v1958, %v2099
      %v2228 = vadd.f32 %v1959, %v2100
      %v2229 = vadd.f32 %v1960, %v2101
      %v2230 = vadd.f32 %v1961, %v2102
      %v2231 = vadd.f32 %v1962, %v2103
      %v2232 = vadd.f32 %v1963, %v2104
      %v2233 = vadd.f32 %v1964, %v2105
      %v2234 = vadd.f32 %v1965, %v2106
      %v2235 = vadd.f32 %v1966, %v2107
      %v2236 = vadd.f32 %v1967, %v2108
      %v2237 = vadd.f32 %v1968, %v2109
      %v2238 = vadd.f32 %v1969, %v2110
      %v2239 = vadd.f32 %v1970, %v2111
      %v2240 = vadd.f32 %v1971, %v2112
      %v2241 = vadd.f32 %v1972, %v2113
      %v2242 = vadd.f32 %v1973, %v2114
      %v2243 = vadd.f32 %v1974, %v2115
      %v2244 = vadd.f32 %v1975, %v2116
      %v2245 = vadd.f32 %v1976, %v2117
      %v2246 = vadd.f32 %v1977, %v2118
      %v2247 = vadd.f32 %v1978, %v2119
      %v2248 = vadd.f32 %v1979, %v2120
      %v2249 = vadd.f32 %v1980, %v2121
      %v2250 = vadd.f32 %v1981, %v2122
      %v2251 = vadd.f32 %v1982, %v2123
      %v2252 = vadd.f32 %v1983, %v2124
      %v2253 = vadd.f32 %v1984, %v2125
      %v2254 = vadd.f32 %v1985, %v2126
      %v2255 = vadd.f32 %v1986, %v2127
      %v2256 = vadd.f32 %v1987, %v2128
      %v2257 = vadd.f32 %v1988, %v2129
      %v2258 = vadd.f32 %v1989, %v2130
      %v2259 = vadd.f32 %v1990, %v2131
      %v2260 = vadd.f32 %v1991, %v2132
      %v2261 = vadd.f32 %v1992, %v2133
      %v2262 = vadd.f32 %v1993, %v2134
      %v2263 = vadd.f32 %v1994, %v2135
      %v2264 = vadd.f32 %v1995, %v2136
      %v2265 = vadd.f32 %v1996, %v2137
      %v2266 = vadd.f32 %v1997, %v2138
      %v2267 = vadd.f32 %v1998, %v2139
      %v2268 = vadd.f32 %v1999, %v2140
      %v2269 = vadd.f32 %v2000, %v2141
      %v2270 = vadd.f32 %v2001, %v2142
      %v2271 = vadd.f32 %v2002, %v2143
      %v2272 = vadd.f32 %v2003, %v2144
      %v2273 = vadd.f32 %v2004, %v2145
      %v2274 = vadd.f32 %v2005, %v2146
      %v2275 = vadd.f32 %v2006, %v2147
      %v2276 = vadd.f32 %v2007, %v2148
      %v2277 = vadd.f32 %v2008, %v2149
      %v2278 = vadd.f32 %v2009, %v2150
      %v2279 = vadd.f32 %v2010, %v2151
      %v2280 = vadd.f32 %v2011, %v2152
      %v2281 = vadd.f32 %v2012, %v2153
      %v2282 = vadd.f32 %v2013, %v2154
      %v2283 = vadd.f32 %v2014, %v2155
      %v2284 = vadd.f32 %v2015, %v2156
      %v2285 = vadd.f32 %v2016, %v2157
      %v2286 = vadd.f32 %v2017, %v2158
      %v2287 = vadd.f32 %v2018, %v2159
      %v2288 = vadd.f32 %v2019, %v2160
      %v2289 = vadd.f32 %v2020, %v2161
      %v2290 = vadd.f32 %v2021, %v2162
      %v2291 = vadd.f32 %v2022, %v2163
      %v2292 = vadd.f32 %v2023, %v2164
      %v2293 = vadd.f32 %v2024, %v2165
      %v2294 = vadd.f32 %v2025, %v2166
      %v2295 = vadd.f32 %v2026, %v2167
      %v2296 = vadd.f32 %v2027, %v2168
      %v2297 = vadd.f32 %v2028, %v2169
      %v2298 = vadd.f32 %v2029, %v2170
      %v2299 = vadd.f32 %v2030, %v2171
      %v2300 = vadd.f32 %v2031, %v2172
      %v2301 = vadd.f32 %v2032, %v2173
      %v2302 = vadd.f32 %v2033, %v2174
      %v2303 = vadd.f32 %v2034, %v2175
      %v2304 = vadd.f32 %v2035, %v2176
      %v2305 = vadd.f32 %v2036, %v2177
      %v2306 = vadd.f32 %v2037, %v2178
      %v2307 = vadd.f32 %v2038, %v2179
      %v2308 = vadd.f32 %v2039, %v2180
      %v2309 = vadd.f32 %v2040, %v2181
      %v2310 = vadd.f32 %v2041, %v2182
      %v2311 = vadd.f32 %v2042, %v2183
      %v2312 = vadd.f32 %v2043, %v2184
      %v2313 = vadd.f32 %v2044, %v2185
      %v2314 = vadd.f32 %v2045, %v2186
      %v2315 = vadd.f32 %v2046, %v2187
      %v2316 = vadd.f32 %v2047, %v2188
      %v2317 = vadd.f32 %v2048, %v2189
      %v2318 = vadd.f32 %v2049, %v2190
      %v2319 = vadd.f32 %v2050, %v2191
      %v2320 = vadd.f32 %v2051, %v2192
      %v2321 = vadd.f32 %v2052, %v2193
      %v2322 = vadd.f32 %v2053, %v2194
      %v2323 = vadd.f32 %v2054, %v2195
      %v2324 = vadd.f32 %v2055, %v2196
      %v2325 = vadd.f32 %v2056, %v2197
      %v2326 = vadd.f32 %v2057, %v2198
      %v2327 = vadd.f32 %v2058, %v2199
      %v2328 = vadd.f32 %v2059, %v2200
      %v2329 = vadd.f32 %v2060, %v2201
      %v2330 = vadd.f32 %v2061, %v2202
      %v2331 = vadd.f32 %v2062, %v2203
      %v2332 = vadd.f32 %v2063, %v2204
      %v2333 = vadd.f32 %v2064, %v2205
      %v2334 = vadd.f32 %v2065, %v2206
      %v2335 = vadd.f32 %v2066, %v2207
      %v2336 = vadd.f32 %v2067, %v2208
      %v2337 = vadd.f32 %v2068, %v2209
      %v2338 = vadd.f32 %v2069, %v2210
      %v2339 = vadd.f32 %v2070, %v2211
      %v2340 = vadd.f32 %v2071, %v2212
      %v2341 = vadd.f32 %v2072, %v2213
      %v2342 = vadd.f32 %v2073, %v2214
      %v2343 = vadd.f32 %v2074, %v2215
      %v2344 = vadd.f32 %v2075, %v2216
      %v2345 = vadd.f32 %v2076, %v2217
      %v2346 = vadd.f32 %v2077, %v2218
      %v2347 = vadd.f32 %v2078, %v2219
      %v2348 = vmax.f32 %v2220, 0.0
      %v2349 = vmax.f32 %v2221, 0.0
      %v2350 = vmax.f32 %v2222, 0.0
      %v2351 = vmax.f32 %v2223, 0.0
      %v2352 = vmax.f32 %v2224, 0.0
      %v2353 = vmax.f32 %v2225, 0.0
      %v2354 = vmax.f32 %v2226, 0.0
      %v2355 = vmax.f32 %v2227, 0.0
      %v2356 = vmax.f32 %v2228, 0.0
      %v2357 = vmax.f32 %v2229, 0.0
      %v2358 = vmax.f32 %v2230, 0.0
      %v2359 = vmax.f32 %v2231, 0.0
      %v2360 = vmax.f32 %v2232, 0.0
      %v2361 = vmax.f32 %v2233, 0.0
      %v2362 = vmax.f32 %v2234, 0.0
      %v2363 = vmax.f32 %v2235, 0.0
      %v2364 = vmax.f32 %v2236, 0.0
      %v2365 = vmax.f32 %v2237, 0.0
      %v2366 = vmax.f32 %v2238, 0.0
      %v2367 = vmax.f32 %v2239, 0.0
      %v2368 = vmax.f32 %v2240, 0.0
      %v2369 = vmax.f32 %v2241, 0.0
      %v2370 = vmax.f32 %v2242, 0.0
      %v2371 = vmax.f32 %v2243, 0.0
      %v2372 = vmax.f32 %v2244, 0.0
      %v2373 = vmax.f32 %v2245, 0.0
      %v2374 = vmax.f32 %v2246, 0.0
      %v2375 = vmax.f32 %v2247, 0.0
      %v2376 = vmax.f32 %v2248, 0.0
      %v2377 = vmax.f32 %v2249, 0.0
      %v2378 = vmax.f32 %v2250, 0.0
      %v2379 = vmax.f32 %v2251, 0.0
      %v2380 = vmax.f32 %v2252, 0.0
      %v2381 = vmax.f32 %v2253, 0.0
      %v2382 = vmax.f32 %v2254, 0.0
      %v2383 = vmax.f32 %v2255, 0.0
      %v2384 = vmax.f32 %v2256, 0.0
      %v2385 = vmax.f32 %v2257, 0.0
      %v2386 = vmax.f32 %v2258, 0.0
      %v2387 = vmax.f32 %v2259, 0.0
      %v2388 = vmax.f32 %v2260, 0.0
      %v2389 = vmax.f32 %v2261, 0.0
      %v2390 = vmax.f32 %v2262, 0.0
      %v2391 = vmax.f32 %v2263, 0.0
      %v2392 = vmax.f32 %v2264, 0.0
      %v2393 = vmax.f32 %v2265, 0.0
      %v2394 = vmax.f32 %v2266, 0.0
      %v2395 = vmax.f32 %v2267, 0.0
      %v2396 = vmax.f32 %v2268, 0.0
      %v2397 = vmax.f32 %v2269, 0.0
      %v2398 = vmax.f32 %v2270, 0.0
      %v2399 = vmax.f32 %v2271, 0.0
      %v2400 = vmax.f32 %v2272, 0.0
      %v2401 = vmax.f32 %v2273, 0.0
      %v2402 = vmax.f32 %v2274, 0.0
      %v2403 = vmax.f32 %v2275, 0.0
      %v2404 = vmax.f32 %v2276, 0.0
      %v2405 = vmax.f32 %v2277, 0.0
      %v2406 = vmax.f32 %v2278, 0.0
      %v2407 = vmax.f32 %v2279, 0.0
      %v2408 = vmax.f32 %v2280, 0.0
      %v2409 = vmax.f32 %v2281, 0.0
      %v2410 = vmax.f32 %v2282, 0.0
      %v2411 = vmax.f32 %v2283, 0.0
      %v2412 = vmax.f32 %v2284, 0.0
      %v2413 = vmax.f32 %v2285, 0.0
      %v2414 = vmax.f32 %v2286, 0.0
      %v2415 = vmax.f32 %v2287, 0.0
      %v2416 = vmax.f32 %v2288, 0.0
      %v2417 = vmax.f32 %v2289, 0.0
      %v2418 = vmax.f32 %v2290, 0.0
      %v2419 = vmax.f32 %v2291, 0.0
      %v2420 = vmax.f32 %v2292, 0.0
      %v2421 = vmax.f32 %v2293, 0.0
      %v2422 = vmax.f32 %v2294, 0.0
      %v2423 = vmax.f32 %v2295, 0.0
      %v2424 = vmax.f32 %v2296, 0.0
      %v2425 = vmax.f32 %v2297, 0.0
      %v2426 = vmax.f32 %v2298, 0.0
      %v2427 = vmax.f32 %v2299, 0.0
      %v2428 = vmax.f32 %v2300, 0.0
      %v2429 = vmax.f32 %v2301, 0.0
      %v2430 = vmax.f32 %v2302, 0.0
      %v2431 = vmax.f32 %v2303, 0.0
      %v2432 = vmax.f32 %v2304, 0.0
      %v2433 = vmax.f32 %v2305, 0.0
      %v2434 = vmax.f32 %v2306, 0.0
      %v2435 = vmax.f32 %v2307, 0.0
      %v2436 = vmax.f32 %v2308, 0.0
      %v2437 = vmax.f32 %v2309, 0.0
      %v2438 = vmax.f32 %v2310, 0.0
      %v2439 = vmax.f32 %v2311, 0.0
      %v2440 = vmax.f32 %v2312, 0.0
      %v2441 = vmax.f32 %v2313, 0.0
      %v2442 = vmax.f32 %v2314, 0.0
      %v2443 = vmax.f32 %v2315, 0.0
      %v2444 = vmax.f32 %v2316, 0.0
      %v2445 = vmax.f32 %v2317, 0.0
      %v2446 = vmax.f32 %v2318, 0.0
      %v2447 = vmax.f32 %v2319, 0.0
      %v2448 = vmax.f32 %v2320, 0.0
      %v2449 = vmax.f32 %v2321, 0.0
      %v2450 = vmax.f32 %v2322, 0.0
      %v2451 = vmax.f32 %v2323, 0.0
      %v2452 = vmax.f32 %v2324, 0.0
      %v2453 = vmax.f32 %v2325, 0.0
      %v2454 = vmax.f32 %v2326, 0.0
      %v2455 = vmax.f32 %v2327, 0.0
      %v2456 = vmax.f32 %v2328, 0.0
      %v2457 = vmax.f32 %v2329, 0.0
      %v2458 = vmax.f32 %v2330, 0.0
      %v2459 = vmax.f32 %v2331, 0.0
      %v2460 = vmax.f32 %v2332, 0.0
      %v2461 = vmax.f32 %v2333, 0.0
      %v2462 = vmax.f32 %v2334, 0.0
      %v2463 = vmax.f32 %v2335, 0.0
      %v2464 = vmax.f32 %v2336, 0.0
      %v2465 = vmax.f32 %v2337, 0.0
      %v2466 = vmax.f32 %v2338, 0.0
      %v2467 = vmax.f32 %v2339, 0.0
      %v2468 = vmax.f32 %v2340, 0.0
      %v2469 = vmax.f32 %v2341, 0.0
      %v2470 = vmax.f32 %v2342, 0.0
      %v2471 = vmax.f32 %v2343, 0.0
      %v2472 = vmax.f32 %v2344, 0.0
      %v2473 = vmax.f32 %v2345, 0.0
      %v2474 = vmax.f32 %v2346, 0.0
      %v2475 = vmax.f32 %v2347, 0.0
      %v2476 = vpack.c.bf16 %v2350, %v2348
      %v2477 = vpack.c.bf16 %v2351, %v2349
      %v2478 = vpack.c.bf16 %v2354, %v2352
      %v2479 = vpack.c.bf16 %v2355, %v2353
      %v2480 = vpack.c.bf16 %v2358, %v2356
      %v2481 = vpack.c.bf16 %v2359, %v2357
      %v2482 = vpack.c.bf16 %v2362, %v2360
      %v2483 = vpack.c.bf16 %v2363, %v2361
      %v2484 = vpack.c.bf16 %v2366, %v2364
      %v2485 = vpack.c.bf16 %v2367, %v2365
      %v2486 = vpack.c.bf16 %v2370, %v2368
      %v2487 = vpack.c.bf16 %v2371, %v2369
      %v2488 = vpack.c.bf16 %v2374, %v2372
      %v2489 = vpack.c.bf16 %v2375, %v2373
      %v2490 = vpack.c.bf16 %v2378, %v2376
      %v2491 = vpack.c.bf16 %v2379, %v2377
      %v2492 = vpack.c.bf16 %v2382, %v2380
      %v2493 = vpack.c.bf16 %v2383, %v2381
      %v2494 = vpack.c.bf16 %v2386, %v2384
      %v2495 = vpack.c.bf16 %v2387, %v2385
      %v2496 = vpack.c.bf16 %v2390, %v2388
      %v2497 = vpack.c.bf16 %v2391, %v2389
      %v2498 = vpack.c.bf16 %v2394, %v2392
      %v2499 = vpack.c.bf16 %v2395, %v2393
      %v2500 = vpack.c.bf16 %v2398, %v2396
      %v2501 = vpack.c.bf16 %v2399, %v2397
      %v2502 = vpack.c.bf16 %v2402, %v2400
      %v2503 = vpack.c.bf16 %v2403, %v2401
      %v2504 = vpack.c.bf16 %v2406, %v2404
      %v2505 = vpack.c.bf16 %v2407, %v2405
      %v2506 = vpack.c.bf16 %v2410, %v2408
      %v2507 = vpack.c.bf16 %v2411, %v2409
      %v2508 = vpack.c.bf16 %v2414, %v2412
      %v2509 = vpack.c.bf16 %v2415, %v2413
      %v2510 = vpack.c.bf16 %v2418, %v2416
      %v2511 = vpack.c.bf16 %v2419, %v2417
      %v2512 = vpack.c.bf16 %v2422, %v2420
      %v2513 = vpack.c.bf16 %v2423, %v2421
      %v2514 = vpack.c.bf16 %v2426, %v2424
      %v2515 = vpack.c.bf16 %v2427, %v2425
      %v2516 = vpack.c.bf16 %v2430, %v2428
      %v2517 = vpack.c.bf16 %v2431, %v2429
      %v2518 = vpack.c.bf16 %v2434, %v2432
      %v2519 = vpack.c.bf16 %v2435, %v2433
      %v2520 = vpack.c.bf16 %v2438, %v2436
      %v2521 = vpack.c.bf16 %v2439, %v2437
      %v2522 = vpack.c.bf16 %v2442, %v2440
      %v2523 = vpack.c.bf16 %v2443, %v2441
      %v2524 = vpack.c.bf16 %v2446, %v2444
      %v2525 = vpack.c.bf16 %v2447, %v2445
      %v2526 = vpack.c.bf16 %v2450, %v2448
      %v2527 = vpack.c.bf16 %v2451, %v2449
      %v2528 = vpack.c.bf16 %v2454, %v2452
      %v2529 = vpack.c.bf16 %v2455, %v2453
      %v2530 = vpack.c.bf16 %v2458, %v2456
      %v2531 = vpack.c.bf16 %v2459, %v2457
      %v2532 = vpack.c.bf16 %v2462, %v2460
      %v2533 = vpack.c.bf16 %v2463, %v2461
      %v2534 = vpack.c.bf16 %v2466, %v2464
      %v2535 = vpack.c.bf16 %v2467, %v2465
      %v2536 = vpack.c.bf16 %v2470, %v2468
      %v2537 = vpack.c.bf16 %v2471, %v2469
      %v2538 = vpack.c.bf16 %v2474, %v2472
      %v2539 = vpack.c.bf16 %v2475, %v2473
      %v2540 = vld [vmem:[%s3] sm:$0xff]
      %v2541 = vld [vmem:[%s3 + $0x8] sm:$0xff]
      %v2542 = vld [vmem:[%s3 + $0x10] sm:$0xff]
      %v2543 = vld [vmem:[%s3 + $0x18] sm:$0xff]
      %v2544 = vld [vmem:[%s3 + $0x20] sm:$0xff]
      %v2545 = vld [vmem:[%s3 + $0x28] sm:$0xff]
      %v2546 = vld [vmem:[%s3 + $0x30] sm:$0xff]
      %v2547 = vld [vmem:[%s3 + $0x38] sm:$0xff]
      %v2548 = vld [vmem:[%s3 + $0x40] sm:$0xff]
      %v2549 = vld [vmem:[%s3 + $0x48] sm:$0xff]
      %v2550 = vld [vmem:[%s3 + $0x50] sm:$0xff]
      %v2551 = vld [vmem:[%s3 + $0x58] sm:$0xff]
      %v2552 = vld [vmem:[%s3 + $0x60] sm:$0xff]
      %v2553 = vld [vmem:[%s3 + $0x68] sm:$0xff]
      %v2554 = vld [vmem:[%s3 + $0x70] sm:$0xff]
      %v2555 = vld [vmem:[%s3 + $0x78] sm:$0xff]
      %v2556 = vld [vmem:[%s3 + $0x80] sm:$0xff]
      %v2557 = vld [vmem:[%s3 + $0x88] sm:$0xff]
      %v2558 = vld [vmem:[%s3 + $0x90] sm:$0xff]
      %v2559 = vld [vmem:[%s3 + $0x98] sm:$0xff]
      %v2560 = vld [vmem:[%s3 + $0xa0] sm:$0xff]
      %v2561 = vld [vmem:[%s3 + $0xa8] sm:$0xff]
      %v2562 = vld [vmem:[%s3 + $0xb0] sm:$0xff]
      %v2563 = vld [vmem:[%s3 + $0xb8] sm:$0xff]
      %v2564 = vld [vmem:[%s3 + $0xc0] sm:$0xff]
      %v2565 = vld [vmem:[%s3 + $0xc8] sm:$0xff]
      %v2566 = vld [vmem:[%s3 + $0xd0] sm:$0xff]
      %v2567 = vld [vmem:[%s3 + $0xd8] sm:$0xff]
      %v2568 = vld [vmem:[%s3 + $0xe0] sm:$0xff]
      %v2569 = vld [vmem:[%s3 + $0xe8] sm:$0xff]
      %v2570 = vld [vmem:[%s3 + $0xf0] sm:$0xff]
      %v2571 = vld [vmem:[%s3 + $0xf8] sm:$0xff]
      %v2572 = vld [vmem:[%s4] sm:$0x3]
      %v2574 = vlaneseq
      %v2575 = vshrl.u32 %v2574, 7
      %v2576 = vsub.s32 0, %v2575
      %v2577 = vrot.slane %v2572, %v2576
      %v2578 = vlaneseq
      %v2579 = vshrl.u32 %v2578, 7
      %v2580 = vsub.s32 1, %v2579
      %v2581 = vrot.slane %v2572, %v2580
      %v2616 = vunpack.c.l.b16 %v2540
      %v2617 = vunpack.c.h.b16 %v2540
      %v2618 = vunpack.c.l.b16 %v2541
      %v2619 = vunpack.c.h.b16 %v2541
      %v2620 = vunpack.c.l.b16 %v2542
      %v2621 = vunpack.c.h.b16 %v2542
      %v2622 = vunpack.c.l.b16 %v2543
      %v2623 = vunpack.c.h.b16 %v2543
      %v2624 = vunpack.c.l.b16 %v2544
      %v2625 = vunpack.c.h.b16 %v2544
      %v2626 = vunpack.c.l.b16 %v2545
      %v2627 = vunpack.c.h.b16 %v2545
      %v2628 = vunpack.c.l.b16 %v2546
      %v2629 = vunpack.c.h.b16 %v2546
      %v2630 = vunpack.c.l.b16 %v2547
      %v2631 = vunpack.c.h.b16 %v2547
      %v2632 = vunpack.c.l.b16 %v2548
      %v2633 = vunpack.c.h.b16 %v2548
      %v2634 = vunpack.c.l.b16 %v2549
      %v2635 = vunpack.c.h.b16 %v2549
      %v2636 = vunpack.c.l.b16 %v2550
      %v2637 = vunpack.c.h.b16 %v2550
      %v2638 = vunpack.c.l.b16 %v2551
      %v2639 = vunpack.c.h.b16 %v2551
      %v2640 = vunpack.c.l.b16 %v2552
      %v2641 = vunpack.c.h.b16 %v2552
      %v2642 = vunpack.c.l.b16 %v2553
      %v2643 = vunpack.c.h.b16 %v2553
      %v2644 = vunpack.c.l.b16 %v2554
      %v2645 = vunpack.c.h.b16 %v2554
      %v2646 = vunpack.c.l.b16 %v2555
      %v2647 = vunpack.c.h.b16 %v2555
      %v2648 = vunpack.c.l.b16 %v2556
      %v2649 = vunpack.c.h.b16 %v2556
      %v2650 = vunpack.c.l.b16 %v2557
      %v2651 = vunpack.c.h.b16 %v2557
      %v2652 = vunpack.c.l.b16 %v2558
      %v2653 = vunpack.c.h.b16 %v2558
      %v2654 = vunpack.c.l.b16 %v2559
      %v2655 = vunpack.c.h.b16 %v2559
      %v2656 = vunpack.c.l.b16 %v2560
      %v2657 = vunpack.c.h.b16 %v2560
      %v2658 = vunpack.c.l.b16 %v2561
      %v2659 = vunpack.c.h.b16 %v2561
      %v2660 = vunpack.c.l.b16 %v2562
      %v2661 = vunpack.c.h.b16 %v2562
      %v2662 = vunpack.c.l.b16 %v2563
      %v2663 = vunpack.c.h.b16 %v2563
      %v2664 = vunpack.c.l.b16 %v2564
      %v2665 = vunpack.c.h.b16 %v2564
      %v2666 = vunpack.c.l.b16 %v2565
      %v2667 = vunpack.c.h.b16 %v2565
      %v2668 = vunpack.c.l.b16 %v2566
      %v2669 = vunpack.c.h.b16 %v2566
      %v2670 = vunpack.c.l.b16 %v2567
      %v2671 = vunpack.c.h.b16 %v2567
      %v2672 = vunpack.c.l.b16 %v2568
      %v2673 = vunpack.c.h.b16 %v2568
      %v2674 = vunpack.c.l.b16 %v2569
      %v2675 = vunpack.c.h.b16 %v2569
      %v2676 = vunpack.c.l.b16 %v2570
      %v2677 = vunpack.c.h.b16 %v2570
      %v2678 = vunpack.c.l.b16 %v2571
      %v2679 = vunpack.c.h.b16 %v2571
      %v2680 = vpack.c.b16 %v2618, %v2616
      %v2681 = vpack.c.b16 %v2619, %v2617
      %v2682 = vpack.c.b16 %v2622, %v2620
      %v2683 = vpack.c.b16 %v2623, %v2621
      %v2684 = vpack.c.b16 %v2626, %v2624
      %v2685 = vpack.c.b16 %v2627, %v2625
      %v2686 = vpack.c.b16 %v2630, %v2628
      %v2687 = vpack.c.b16 %v2631, %v2629
      %v2688 = vpack.c.b16 %v2634, %v2632
      %v2689 = vpack.c.b16 %v2635, %v2633
      %v2690 = vpack.c.b16 %v2638, %v2636
      %v2691 = vpack.c.b16 %v2639, %v2637
      %v2692 = vpack.c.b16 %v2642, %v2640
      %v2693 = vpack.c.b16 %v2643, %v2641
      %v2694 = vpack.c.b16 %v2646, %v2644
      %v2695 = vpack.c.b16 %v2647, %v2645
      %v2696 = vpack.c.b16 %v2650, %v2648
      %v2697 = vpack.c.b16 %v2651, %v2649
      %v2698 = vpack.c.b16 %v2654, %v2652
      %v2699 = vpack.c.b16 %v2655, %v2653
      %v2700 = vpack.c.b16 %v2658, %v2656
      %v2701 = vpack.c.b16 %v2659, %v2657
      %v2702 = vpack.c.b16 %v2662, %v2660
      %v2703 = vpack.c.b16 %v2663, %v2661
      %v2704 = vpack.c.b16 %v2666, %v2664
      %v2705 = vpack.c.b16 %v2667, %v2665
      %v2706 = vpack.c.b16 %v2670, %v2668
      %v2707 = vpack.c.b16 %v2671, %v2669
      %v2708 = vpack.c.b16 %v2674, %v2672
      %v2709 = vpack.c.b16 %v2675, %v2673
      %v2710 = vpack.c.b16 %v2678, %v2676
      %v2711 = vpack.c.b16 %v2679, %v2677
      %2744 = vmatprep.subr.bf16.mxu0 %v2681
      %2745 = vmatpush1.bf16.msra.mxu0 %v2680
      %2746 = vmatprep.subr.bf16.mxu0 %v2683
      %2747 = vmatpush1.bf16.msra.mxu0 %v2682
      %2748 = vmatprep.subr.bf16.mxu0 %v2685
      %2749 = vmatpush1.bf16.msra.mxu0 %v2684
      %2750 = vmatprep.subr.bf16.mxu0 %v2687
      %2751 = vmatpush1.bf16.msra.mxu0 %v2686
      %2752 = vmatprep.subr.bf16.mxu0 %v2689
      %2753 = vmatpush1.bf16.msra.mxu0 %v2688
      %2754 = vmatprep.subr.bf16.mxu0 %v2691
      %2755 = vmatpush1.bf16.msra.mxu0 %v2690
      %2756 = vmatprep.subr.bf16.mxu0 %v2693
      %2757 = vmatpush1.bf16.msra.mxu0 %v2692
      %2758 = vmatprep.subr.bf16.mxu0 %v2695
      %2759 = vmatpush1.bf16.msra.mxu0 %v2694
      %2760 = vmatprep.subr.bf16.mxu0 %v2697
      %2761 = vmatpush1.bf16.msra.mxu0 %v2696
      %2762 = vmatprep.subr.bf16.mxu0 %v2699
      %2763 = vmatpush1.bf16.msra.mxu0 %v2698
      %2764 = vmatprep.subr.bf16.mxu0 %v2701
      %2765 = vmatpush1.bf16.msra.mxu0 %v2700
      %2766 = vmatprep.subr.bf16.mxu0 %v2703
      %2767 = vmatpush1.bf16.msra.mxu0 %v2702
      %2768 = vmatprep.subr.bf16.mxu0 %v2705
      %2769 = vmatpush1.bf16.msra.mxu0 %v2704
      %2770 = vmatprep.subr.bf16.mxu0 %v2707
      %2771 = vmatpush1.bf16.msra.mxu0 %v2706
      %2772 = vmatprep.subr.bf16.mxu0 %v2709
      %2773 = vmatpush1.bf16.msra.mxu0 %v2708
      %2774 = vmatprep.subr.bf16.mxu0 %v2711
      %2775 = vmatpush1.bf16.msra.mxu0 %v2710
      %2776 = vmatprep.mubr.bf16.mxu0 %v2477
      %2777 = vmatmul.mubr.bf16.gmra.mrb[0].mxu0 %v2476
      %v2778 = vpop.f32.mrb[0].mxu0
      %v2779 = vadd.f32 %v2577, %v2778
      %v2780 = vpop.f32.mrb[0].mxu0
      %v2781 = vadd.f32 %v2581, %v2780
      %v2782 = vpop.f32.mrb[0].mxu0
      %v2783 = vadd.f32 %v2577, %v2782
      %v2784 = vpop.f32.mrb[0].mxu0
      %v2785 = vadd.f32 %v2581, %v2784
      %2786 = vmatprep.mubr.bf16.mxu0 %v2479
      %2787 = vmatmul.mubr.bf16.gmra.mrb[0].mxu0 %v2478
      %v2788 = vpop.f32.mrb[0].mxu0
      %v2789 = vadd.f32 %v2577, %v2788
      %v2790 = vpop.f32.mrb[0].mxu0
      %v2791 = vadd.f32 %v2581, %v2790
      %v2792 = vpop.f32.mrb[0].mxu0
      %v2793 = vadd.f32 %v2577, %v2792
      %v2794 = vpop.f32.mrb[0].mxu0
      %v2795 = vadd.f32 %v2581, %v2794
      %2796 = vmatprep.mubr.bf16.mxu0 %v2481
      %2797 = vmatmul.mubr.bf16.gmra.mrb[0].mxu0 %v2480
      %v2798 = vpop.f32.mrb[0].mxu0
      %v2799 = vadd.f32 %v2577, %v2798
      %v2800 = vpop.f32.mrb[0].mxu0
      %v2801 = vadd.f32 %v2581, %v2800
      %v2802 = vpop.f32.mrb[0].mxu0
      %v2803 = vadd.f32 %v2577, %v2802
      %v2804 = vpop.f32.mrb[0].mxu0
      %v2805 = vadd.f32 %v2581, %v2804
      %2806 = vmatprep.mubr.bf16.mxu0 %v2483
      %2807 = vmatmul.mubr.bf16.gmra.mrb[0].mxu0 %v2482
      %v2808 = vpop.f32.mrb[0].mxu0
      %v2809 = vadd.f32 %v2577, %v2808
      %v2810 = vpop.f32.mrb[0].mxu0
      %v2811 = vadd.f32 %v2581, %v2810
      %v2812 = vpop.f32.mrb[0].mxu0
      %v2813 = vadd.f32 %v2577, %v2812
      %v2814 = vpop.f32.mrb[0].mxu0
      %v2815 = vadd.f32 %v2581, %v2814
      %2816 = vmatprep.mubr.bf16.mxu0 %v2485
      %2817 = vmatmul.mubr.bf16.gmra.mrb[0].mxu0 %v2484
      %v2818 = vpop.f32.mrb[0].mxu0
      %v2819 = vadd.f32 %v2577, %v2818
      %v2820 = vpop.f32.mrb[0].mxu0
      %v2821 = vadd.f32 %v2581, %v2820
      %v2822 = vpop.f32.mrb[0].mxu0
      %v2823 = vadd.f32 %v2577, %v2822
      %v2824 = vpop.f32.mrb[0].mxu0
      %v2825 = vadd.f32 %v2581, %v2824
      %2826 = vmatprep.mubr.bf16.mxu0 %v2487
      %2827 = vmatmul.mubr.bf16.gmra.mrb[0].mxu0 %v2486
      %v2828 = vpop.f32.mrb[0].mxu0
      %v2829 = vadd.f32 %v2577, %v2828
      %v2830 = vpop.f32.mrb[0].mxu0
      %v2831 = vadd.f32 %v2581, %v2830
      %v2832 = vpop.f32.mrb[0].mxu0
      %v2833 = vadd.f32 %v2577, %v2832
      %v2834 = vpop.f32.mrb[0].mxu0
      %v2835 = vadd.f32 %v2581, %v2834
      %2836 = vmatprep.mubr.bf16.mxu0 %v2489
      %2837 = vmatmul.mubr.bf16.gmra.mrb[0].mxu0 %v2488
      %v2838 = vpop.f32.mrb[0].mxu0
      %v2839 = vadd.f32 %v2577, %v2838
      %v2840 = vpop.f32.mrb[0].mxu0
      %v2841 = vadd.f32 %v2581, %v2840
      %v2842 = vpop.f32.mrb[0].mxu0
      %v2843 = vadd.f32 %v2577, %v2842
      %v2844 = vpop.f32.mrb[0].mxu0
      %v2845 = vadd.f32 %v2581, %v2844
      %2846 = vmatprep.mubr.bf16.mxu0 %v2491
      %2847 = vmatmul.mubr.bf16.gmra.mrb[0].mxu0 %v2490
      %v2848 = vpop.f32.mrb[0].mxu0
      %v2849 = vadd.f32 %v2577, %v2848
      %v2850 = vpop.f32.mrb[0].mxu0
      %v2851 = vadd.f32 %v2581, %v2850
      %v2852 = vpop.f32.mrb[0].mxu0
      %v2853 = vadd.f32 %v2577, %v2852
      %v2854 = vpop.f32.mrb[0].mxu0
      %v2855 = vadd.f32 %v2581, %v2854
      %2856 = vmatprep.mubr.bf16.mxu0 %v2493
      %2857 = vmatmul.mubr.bf16.gmra.mrb[0].mxu0 %v2492
      %v2858 = vpop.f32.mrb[0].mxu0
      %v2859 = vadd.f32 %v2577, %v2858
      %v2860 = vpop.f32.mrb[0].mxu0
      %v2861 = vadd.f32 %v2581, %v2860
      %v2862 = vpop.f32.mrb[0].mxu0
      %v2863 = vadd.f32 %v2577, %v2862
      %v2864 = vpop.f32.mrb[0].mxu0
      %v2865 = vadd.f32 %v2581, %v2864
      %2866 = vmatprep.mubr.bf16.mxu0 %v2495
      %2867 = vmatmul.mubr.bf16.gmra.mrb[0].mxu0 %v2494
      %v2868 = vpop.f32.mrb[0].mxu0
      %v2869 = vadd.f32 %v2577, %v2868
      %v2870 = vpop.f32.mrb[0].mxu0
      %v2871 = vadd.f32 %v2581, %v2870
      %v2872 = vpop.f32.mrb[0].mxu0
      %v2873 = vadd.f32 %v2577, %v2872
      %v2874 = vpop.f32.mrb[0].mxu0
      %v2875 = vadd.f32 %v2581, %v2874
      %2876 = vmatprep.mubr.bf16.mxu0 %v2497
      %2877 = vmatmul.mubr.bf16.gmra.mrb[0].mxu0 %v2496
      %v2878 = vpop.f32.mrb[0].mxu0
      %v2879 = vadd.f32 %v2577, %v2878
      %v2880 = vpop.f32.mrb[0].mxu0
      %v2881 = vadd.f32 %v2581, %v2880
      %v2882 = vpop.f32.mrb[0].mxu0
      %v2883 = vadd.f32 %v2577, %v2882
      %v2884 = vpop.f32.mrb[0].mxu0
      %v2885 = vadd.f32 %v2581, %v2884
      %2886 = vmatprep.mubr.bf16.mxu0 %v2499
      %2887 = vmatmul.mubr.bf16.gmra.mrb[0].mxu0 %v2498
      %v2888 = vpop.f32.mrb[0].mxu0
      %v2889 = vadd.f32 %v2577, %v2888
      %v2890 = vpop.f32.mrb[0].mxu0
      %v2891 = vadd.f32 %v2581, %v2890
      %v2892 = vpop.f32.mrb[0].mxu0
      %v2893 = vadd.f32 %v2577, %v2892
      %v2894 = vpop.f32.mrb[0].mxu0
      %v2895 = vadd.f32 %v2581, %v2894
      %2896 = vmatprep.mubr.bf16.mxu0 %v2501
      %2897 = vmatmul.mubr.bf16.gmra.mrb[0].mxu0 %v2500
      %v2898 = vpop.f32.mrb[0].mxu0
      %v2899 = vadd.f32 %v2577, %v2898
      %v2900 = vpop.f32.mrb[0].mxu0
      %v2901 = vadd.f32 %v2581, %v2900
      %v2902 = vpop.f32.mrb[0].mxu0
      %v2903 = vadd.f32 %v2577, %v2902
      %v2904 = vpop.f32.mrb[0].mxu0
      %v2905 = vadd.f32 %v2581, %v2904
      %2906 = vmatprep.mubr.bf16.mxu0 %v2503
      %2907 = vmatmul.mubr.bf16.gmra.mrb[0].mxu0 %v2502
      %v2908 = vpop.f32.mrb[0].mxu0
      %v2909 = vadd.f32 %v2577, %v2908
      %v2910 = vpop.f32.mrb[0].mxu0
      %v2911 = vadd.f32 %v2581, %v2910
      %v2912 = vpop.f32.mrb[0].mxu0
      %v2913 = vadd.f32 %v2577, %v2912
      %v2914 = vpop.f32.mrb[0].mxu0
      %v2915 = vadd.f32 %v2581, %v2914
      %2916 = vmatprep.mubr.bf16.mxu0 %v2505
      %2917 = vmatmul.mubr.bf16.gmra.mrb[0].mxu0 %v2504
      %v2918 = vpop.f32.mrb[0].mxu0
      %v2919 = vadd.f32 %v2577, %v2918
      %v2920 = vpop.f32.mrb[0].mxu0
      %v2921 = vadd.f32 %v2581, %v2920
      %v2922 = vpop.f32.mrb[0].mxu0
      %v2923 = vadd.f32 %v2577, %v2922
      %v2924 = vpop.f32.mrb[0].mxu0
      %v2925 = vadd.f32 %v2581, %v2924
      %2926 = vmatprep.mubr.bf16.mxu0 %v2507
      %2927 = vmatmul.mubr.bf16.gmra.mrb[0].mxu0 %v2506
      %v2928 = vpop.f32.mrb[0].mxu0
      %v2929 = vadd.f32 %v2577, %v2928
      %v2930 = vpop.f32.mrb[0].mxu0
      %v2931 = vadd.f32 %v2581, %v2930
      %v2932 = vpop.f32.mrb[0].mxu0
      %v2933 = vadd.f32 %v2577, %v2932
      %v2934 = vpop.f32.mrb[0].mxu0
      %v2935 = vadd.f32 %v2581, %v2934
      %2936 = vmatprep.mubr.bf16.mxu0 %v2509
      %2937 = vmatmul.mubr.bf16.gmra.mrb[0].mxu0 %v2508
      %v2938 = vpop.f32.mrb[0].mxu0
      %v2939 = vadd.f32 %v2577, %v2938
      %v2940 = vpop.f32.mrb[0].mxu0
      %v2941 = vadd.f32 %v2581, %v2940
      %v2942 = vpop.f32.mrb[0].mxu0
      %v2943 = vadd.f32 %v2577, %v2942
      %v2944 = vpop.f32.mrb[0].mxu0
      %v2945 = vadd.f32 %v2581, %v2944
      %2946 = vmatprep.mubr.bf16.mxu0 %v2511
      %2947 = vmatmul.mubr.bf16.gmra.mrb[0].mxu0 %v2510
      %v2948 = vpop.f32.mrb[0].mxu0
      %v2949 = vadd.f32 %v2577, %v2948
      %v2950 = vpop.f32.mrb[0].mxu0
      %v2951 = vadd.f32 %v2581, %v2950
      %v2952 = vpop.f32.mrb[0].mxu0
      %v2953 = vadd.f32 %v2577, %v2952
      %v2954 = vpop.f32.mrb[0].mxu0
      %v2955 = vadd.f32 %v2581, %v2954
      %2956 = vmatprep.mubr.bf16.mxu0 %v2513
      %2957 = vmatmul.mubr.bf16.gmra.mrb[0].mxu0 %v2512
      %v2958 = vpop.f32.mrb[0].mxu0
      %v2959 = vadd.f32 %v2577, %v2958
      %v2960 = vpop.f32.mrb[0].mxu0
      %v2961 = vadd.f32 %v2581, %v2960
      %v2962 = vpop.f32.mrb[0].mxu0
      %v2963 = vadd.f32 %v2577, %v2962
      %v2964 = vpop.f32.mrb[0].mxu0
      %v2965 = vadd.f32 %v2581, %v2964
      %2966 = vmatprep.mubr.bf16.mxu0 %v2515
      %2967 = vmatmul.mubr.bf16.gmra.mrb[0].mxu0 %v2514
      %v2968 = vpop.f32.mrb[0].mxu0
      %v2969 = vadd.f32 %v2577, %v2968
      %v2970 = vpop.f32.mrb[0].mxu0
      %v2971 = vadd.f32 %v2581, %v2970
      %v2972 = vpop.f32.mrb[0].mxu0
      %v2973 = vadd.f32 %v2577, %v2972
      %v2974 = vpop.f32.mrb[0].mxu0
      %v2975 = vadd.f32 %v2581, %v2974
      %2976 = vmatprep.mubr.bf16.mxu0 %v2517
      %2977 = vmatmul.mubr.bf16.gmra.mrb[0].mxu0 %v2516
      %v2978 = vpop.f32.mrb[0].mxu0
      %v2979 = vadd.f32 %v2577, %v2978
      %v2980 = vpop.f32.mrb[0].mxu0
      %v2981 = vadd.f32 %v2581, %v2980
      %v2982 = vpop.f32.mrb[0].mxu0
      %v2983 = vadd.f32 %v2577, %v2982
      %v2984 = vpop.f32.mrb[0].mxu0
      %v2985 = vadd.f32 %v2581, %v2984
      %2986 = vmatprep.mubr.bf16.mxu0 %v2519
      %2987 = vmatmul.mubr.bf16.gmra.mrb[0].mxu0 %v2518
      %v2988 = vpop.f32.mrb[0].mxu0
      %v2989 = vadd.f32 %v2577, %v2988
      %v2990 = vpop.f32.mrb[0].mxu0
      %v2991 = vadd.f32 %v2581, %v2990
      %v2992 = vpop.f32.mrb[0].mxu0
      %v2993 = vadd.f32 %v2577, %v2992
      %v2994 = vpop.f32.mrb[0].mxu0
      %v2995 = vadd.f32 %v2581, %v2994
      %2996 = vmatprep.mubr.bf16.mxu0 %v2521
      %2997 = vmatmul.mubr.bf16.gmra.mrb[0].mxu0 %v2520
      %v2998 = vpop.f32.mrb[0].mxu0
      %v2999 = vadd.f32 %v2577, %v2998
      %v3000 = vpop.f32.mrb[0].mxu0
      %v3001 = vadd.f32 %v2581, %v3000
      %v3002 = vpop.f32.mrb[0].mxu0
      %v3003 = vadd.f32 %v2577, %v3002
      %v3004 = vpop.f32.mrb[0].mxu0
      %v3005 = vadd.f32 %v2581, %v3004
      %3006 = vmatprep.mubr.bf16.mxu0 %v2523
      %3007 = vmatmul.mubr.bf16.gmra.mrb[0].mxu0 %v2522
      %v3008 = vpop.f32.mrb[0].mxu0
      %v3009 = vadd.f32 %v2577, %v3008
      %v3010 = vpop.f32.mrb[0].mxu0
      %v3011 = vadd.f32 %v2581, %v3010
      %v3012 = vpop.f32.mrb[0].mxu0
      %v3013 = vadd.f32 %v2577, %v3012
      %v3014 = vpop.f32.mrb[0].mxu0
      %v3015 = vadd.f32 %v2581, %v3014
      %3016 = vmatprep.mubr.bf16.mxu0 %v2525
      %3017 = vmatmul.mubr.bf16.gmra.mrb[0].mxu0 %v2524
      %v3018 = vpop.f32.mrb[0].mxu0
      %v3019 = vadd.f32 %v2577, %v3018
      %v3020 = vpop.f32.mrb[0].mxu0
      %v3021 = vadd.f32 %v2581, %v3020
      %v3022 = vpop.f32.mrb[0].mxu0
      %v3023 = vadd.f32 %v2577, %v3022
      %v3024 = vpop.f32.mrb[0].mxu0
      %v3025 = vadd.f32 %v2581, %v3024
      %3026 = vmatprep.mubr.bf16.mxu0 %v2527
      %3027 = vmatmul.mubr.bf16.gmra.mrb[0].mxu0 %v2526
      %v3028 = vpop.f32.mrb[0].mxu0
      %v3029 = vadd.f32 %v2577, %v3028
      %v3030 = vpop.f32.mrb[0].mxu0
      %v3031 = vadd.f32 %v2581, %v3030
      %v3032 = vpop.f32.mrb[0].mxu0
      %v3033 = vadd.f32 %v2577, %v3032
      %v3034 = vpop.f32.mrb[0].mxu0
      %v3035 = vadd.f32 %v2581, %v3034
      %3036 = vmatprep.mubr.bf16.mxu0 %v2529
      %3037 = vmatmul.mubr.bf16.gmra.mrb[0].mxu0 %v2528
      %v3038 = vpop.f32.mrb[0].mxu0
      %v3039 = vadd.f32 %v2577, %v3038
      %v3040 = vpop.f32.mrb[0].mxu0
      %v3041 = vadd.f32 %v2581, %v3040
      %v3042 = vpop.f32.mrb[0].mxu0
      %v3043 = vadd.f32 %v2577, %v3042
      %v3044 = vpop.f32.mrb[0].mxu0
      %v3045 = vadd.f32 %v2581, %v3044
      %3046 = vmatprep.mubr.bf16.mxu0 %v2531
      %3047 = vmatmul.mubr.bf16.gmra.mrb[0].mxu0 %v2530
      %v3048 = vpop.f32.mrb[0].mxu0
      %v3049 = vadd.f32 %v2577, %v3048
      %v3050 = vpop.f32.mrb[0].mxu0
      %v3051 = vadd.f32 %v2581, %v3050
      %v3052 = vpop.f32.mrb[0].mxu0
      %v3053 = vadd.f32 %v2577, %v3052
      %v3054 = vpop.f32.mrb[0].mxu0
      %v3055 = vadd.f32 %v2581, %v3054
      %3056 = vmatprep.mubr.bf16.mxu0 %v2533
      %3057 = vmatmul.mubr.bf16.gmra.mrb[0].mxu0 %v2532
      %v3058 = vpop.f32.mrb[0].mxu0
      %v3059 = vadd.f32 %v2577, %v3058
      %v3060 = vpop.f32.mrb[0].mxu0
      %v3061 = vadd.f32 %v2581, %v3060
      %v3062 = vpop.f32.mrb[0].mxu0
      %v3063 = vadd.f32 %v2577, %v3062
      %v3064 = vpop.f32.mrb[0].mxu0
      %v3065 = vadd.f32 %v2581, %v3064
      %3066 = vmatprep.mubr.bf16.mxu0 %v2535
      %3067 = vmatmul.mubr.bf16.gmra.mrb[0].mxu0 %v2534
      %v3068 = vpop.f32.mrb[0].mxu0
      %v3069 = vadd.f32 %v2577, %v3068
      %v3070 = vpop.f32.mrb[0].mxu0
      %v3071 = vadd.f32 %v2581, %v3070
      %v3072 = vpop.f32.mrb[0].mxu0
      %v3073 = vadd.f32 %v2577, %v3072
      %v3074 = vpop.f32.mrb[0].mxu0
      %v3075 = vadd.f32 %v2581, %v3074
      %3076 = vmatprep.mubr.bf16.mxu0 %v2537
      %3077 = vmatmul.mubr.bf16.gmra.mrb[0].mxu0 %v2536
      %v3078 = vpop.f32.mrb[0].mxu0
      %v3079 = vadd.f32 %v2577, %v3078
      %v3080 = vpop.f32.mrb[0].mxu0
      %v3081 = vadd.f32 %v2581, %v3080
      %v3082 = vpop.f32.mrb[0].mxu0
      %v3083 = vadd.f32 %v2577, %v3082
      %v3084 = vpop.f32.mrb[0].mxu0
      %v3085 = vadd.f32 %v2581, %v3084
      %3086 = vmatprep.mubr.bf16.mxu0 %v2539
      %3087 = vmatmul.mubr.bf16.gmra.mrb[0].mxu0 %v2538
      %v3088 = vpop.f32.mrb[0].mxu0
      %v3089 = vadd.f32 %v2577, %v3088
      %v3090 = vpop.f32.mrb[0].mxu0
      %v3091 = vadd.f32 %v2581, %v3090
      %v3092 = vpop.f32.mrb[0].mxu0
      %v3093 = vadd.f32 %v2577, %v3092
      %v3094 = vpop.f32.mrb[0].mxu0
      %v3095 = vadd.f32 %v2581, %v3094
      %3096 = vdwg.mxu0
      %v3097 = vmax.f32 %v2779, 0.0
      %v3098 = vmax.f32 %v2781, 0.0
      %v3099 = vmax.f32 %v2783, 0.0
      %v3100 = vmax.f32 %v2785, 0.0
      %v3101 = vmax.f32 %v2789, 0.0
      %v3102 = vmax.f32 %v2791, 0.0
      %v3103 = vmax.f32 %v2793, 0.0
      %v3104 = vmax.f32 %v2795, 0.0
      %v3105 = vmax.f32 %v2799, 0.0
      %v3106 = vmax.f32 %v2801, 0.0
      %v3107 = vmax.f32 %v2803, 0.0
      %v3108 = vmax.f32 %v2805, 0.0
      %v3109 = vmax.f32 %v2809, 0.0
      %v3110 = vmax.f32 %v2811, 0.0
      %v3111 = vmax.f32 %v2813, 0.0
      %v3112 = vmax.f32 %v2815, 0.0
      %v3113 = vmax.f32 %v2819, 0.0
      %v3114 = vmax.f32 %v2821, 0.0
      %v3115 = vmax.f32 %v2823, 0.0
      %v3116 = vmax.f32 %v2825, 0.0
      %v3117 = vmax.f32 %v2829, 0.0
      %v3118 = vmax.f32 %v2831, 0.0
      %v3119 = vmax.f32 %v2833, 0.0
      %v3120 = vmax.f32 %v2835, 0.0
      %v3121 = vmax.f32 %v2839, 0.0
      %v3122 = vmax.f32 %v2841, 0.0
      %v3123 = vmax.f32 %v2843, 0.0
      %v3124 = vmax.f32 %v2845, 0.0
      %v3125 = vmax.f32 %v2849, 0.0
      %v3126 = vmax.f32 %v2851, 0.0
      %v3127 = vmax.f32 %v2853, 0.0
      %v3128 = vmax.f32 %v2855, 0.0
      %v3129 = vmax.f32 %v2859, 0.0
      %v3130 = vmax.f32 %v2861, 0.0
      %v3131 = vmax.f32 %v2863, 0.0
      %v3132 = vmax.f32 %v2865, 0.0
      %v3133 = vmax.f32 %v2869, 0.0
      %v3134 = vmax.f32 %v2871, 0.0
      %v3135 = vmax.f32 %v2873, 0.0
      %v3136 = vmax.f32 %v2875, 0.0
      %v3137 = vmax.f32 %v2879, 0.0
      %v3138 = vmax.f32 %v2881, 0.0
      %v3139 = vmax.f32 %v2883, 0.0
      %v3140 = vmax.f32 %v2885, 0.0
      %v3141 = vmax.f32 %v2889, 0.0
      %v3142 = vmax.f32 %v2891, 0.0
      %v3143 = vmax.f32 %v2893, 0.0
      %v3144 = vmax.f32 %v2895, 0.0
      %v3145 = vmax.f32 %v2899, 0.0
      %v3146 = vmax.f32 %v2901, 0.0
      %v3147 = vmax.f32 %v2903, 0.0
      %v3148 = vmax.f32 %v2905, 0.0
      %v3149 = vmax.f32 %v2909, 0.0
      %v3150 = vmax.f32 %v2911, 0.0
      %v3151 = vmax.f32 %v2913, 0.0
      %v3152 = vmax.f32 %v2915, 0.0
      %v3153 = vmax.f32 %v2919, 0.0
      %v3154 = vmax.f32 %v2921, 0.0
      %v3155 = vmax.f32 %v2923, 0.0
      %v3156 = vmax.f32 %v2925, 0.0
      %v3157 = vmax.f32 %v2929, 0.0
      %v3158 = vmax.f32 %v2931, 0.0
      %v3159 = vmax.f32 %v2933, 0.0
      %v3160 = vmax.f32 %v2935, 0.0
      %v3161 = vmax.f32 %v2939, 0.0
      %v3162 = vmax.f32 %v2941, 0.0
      %v3163 = vmax.f32 %v2943, 0.0
      %v3164 = vmax.f32 %v2945, 0.0
      %v3165 = vmax.f32 %v2949, 0.0
      %v3166 = vmax.f32 %v2951, 0.0
      %v3167 = vmax.f32 %v2953, 0.0
      %v3168 = vmax.f32 %v2955, 0.0
      %v3169 = vmax.f32 %v2959, 0.0
      %v3170 = vmax.f32 %v2961, 0.0
      %v3171 = vmax.f32 %v2963, 0.0
      %v3172 = vmax.f32 %v2965, 0.0
      %v3173 = vmax.f32 %v2969, 0.0
      %v3174 = vmax.f32 %v2971, 0.0
      %v3175 = vmax.f32 %v2973, 0.0
      %v3176 = vmax.f32 %v2975, 0.0
      %v3177 = vmax.f32 %v2979, 0.0
      %v3178 = vmax.f32 %v2981, 0.0
      %v3179 = vmax.f32 %v2983, 0.0
      %v3180 = vmax.f32 %v2985, 0.0
      %v3181 = vmax.f32 %v2989, 0.0
      %v3182 = vmax.f32 %v2991, 0.0
      %v3183 = vmax.f32 %v2993, 0.0
      %v3184 = vmax.f32 %v2995, 0.0
      %v3185 = vmax.f32 %v2999, 0.0
      %v3186 = vmax.f32 %v3001, 0.0
      %v3187 = vmax.f32 %v3003, 0.0
      %v3188 = vmax.f32 %v3005, 0.0
      %v3189 = vmax.f32 %v3009, 0.0
      %v3190 = vmax.f32 %v3011, 0.0
      %v3191 = vmax.f32 %v3013, 0.0
      %v3192 = vmax.f32 %v3015, 0.0
      %v3193 = vmax.f32 %v3019, 0.0
      %v3194 = vmax.f32 %v3021, 0.0
      %v3195 = vmax.f32 %v3023, 0.0
      %v3196 = vmax.f32 %v3025, 0.0
      %v3197 = vmax.f32 %v3029, 0.0
      %v3198 = vmax.f32 %v3031, 0.0
      %v3199 = vmax.f32 %v3033, 0.0
      %v3200 = vmax.f32 %v3035, 0.0
      %v3201 = vmax.f32 %v3039, 0.0
      %v3202 = vmax.f32 %v3041, 0.0
      %v3203 = vmax.f32 %v3043, 0.0
      %v3204 = vmax.f32 %v3045, 0.0
      %v3205 = vmax.f32 %v3049, 0.0
      %v3206 = vmax.f32 %v3051, 0.0
      %v3207 = vmax.f32 %v3053, 0.0
      %v3208 = vmax.f32 %v3055, 0.0
      %v3209 = vmax.f32 %v3059, 0.0
      %v3210 = vmax.f32 %v3061, 0.0
      %v3211 = vmax.f32 %v3063, 0.0
      %v3212 = vmax.f32 %v3065, 0.0
      %v3213 = vmax.f32 %v3069, 0.0
      %v3214 = vmax.f32 %v3071, 0.0
      %v3215 = vmax.f32 %v3073, 0.0
      %v3216 = vmax.f32 %v3075, 0.0
      %v3217 = vmax.f32 %v3079, 0.0
      %v3218 = vmax.f32 %v3081, 0.0
      %v3219 = vmax.f32 %v3083, 0.0
      %v3220 = vmax.f32 %v3085, 0.0
      %v3221 = vmax.f32 %v3089, 0.0
      %v3222 = vmax.f32 %v3091, 0.0
      %v3223 = vmax.f32 %v3093, 0.0
      %v3224 = vmax.f32 %v3095, 0.0
      %v3225 = vpack.c.bf16 %v3099, %v3097
      %v3226 = vpack.c.bf16 %v3100, %v3098
      %v3227 = vpack.c.bf16 %v3103, %v3101
      %v3228 = vpack.c.bf16 %v3104, %v3102
      %v3229 = vpack.c.bf16 %v3107, %v3105
      %v3230 = vpack.c.bf16 %v3108, %v3106
      %v3231 = vpack.c.bf16 %v3111, %v3109
      %v3232 = vpack.c.bf16 %v3112, %v3110
      %v3233 = vpack.c.bf16 %v3115, %v3113
      %v3234 = vpack.c.bf16 %v3116, %v3114
      %v3235 = vpack.c.bf16 %v3119, %v3117
      %v3236 = vpack.c.bf16 %v3120, %v3118
      %v3237 = vpack.c.bf16 %v3123, %v3121
      %v3238 = vpack.c.bf16 %v3124, %v3122
      %v3239 = vpack.c.bf16 %v3127, %v3125
      %v3240 = vpack.c.bf16 %v3128, %v3126
      %v3241 = vpack.c.bf16 %v3131, %v3129
      %v3242 = vpack.c.bf16 %v3132, %v3130
      %v3243 = vpack.c.bf16 %v3135, %v3133
      %v3244 = vpack.c.bf16 %v3136, %v3134
      %v3245 = vpack.c.bf16 %v3139, %v3137
      %v3246 = vpack.c.bf16 %v3140, %v3138
      %v3247 = vpack.c.bf16 %v3143, %v3141
      %v3248 = vpack.c.bf16 %v3144, %v3142
      %v3249 = vpack.c.bf16 %v3147, %v3145
      %v3250 = vpack.c.bf16 %v3148, %v3146
      %v3251 = vpack.c.bf16 %v3151, %v3149
      %v3252 = vpack.c.bf16 %v3152, %v3150
      %v3253 = vpack.c.bf16 %v3155, %v3153
      %v3254 = vpack.c.bf16 %v3156, %v3154
      %v3255 = vpack.c.bf16 %v3159, %v3157
      %v3256 = vpack.c.bf16 %v3160, %v3158
      %v3257 = vpack.c.bf16 %v3163, %v3161
      %v3258 = vpack.c.bf16 %v3164, %v3162
      %v3259 = vpack.c.bf16 %v3167, %v3165
      %v3260 = vpack.c.bf16 %v3168, %v3166
      %v3261 = vpack.c.bf16 %v3171, %v3169
      %v3262 = vpack.c.bf16 %v3172, %v3170
      %v3263 = vpack.c.bf16 %v3175, %v3173
      %v3264 = vpack.c.bf16 %v3176, %v3174
      %v3265 = vpack.c.bf16 %v3179, %v3177
      %v3266 = vpack.c.bf16 %v3180, %v3178
      %v3267 = vpack.c.bf16 %v3183, %v3181
      %v3268 = vpack.c.bf16 %v3184, %v3182
      %v3269 = vpack.c.bf16 %v3187, %v3185
      %v3270 = vpack.c.bf16 %v3188, %v3186
      %v3271 = vpack.c.bf16 %v3191, %v3189
      %v3272 = vpack.c.bf16 %v3192, %v3190
      %v3273 = vpack.c.bf16 %v3195, %v3193
      %v3274 = vpack.c.bf16 %v3196, %v3194
      %v3275 = vpack.c.bf16 %v3199, %v3197
      %v3276 = vpack.c.bf16 %v3200, %v3198
      %v3277 = vpack.c.bf16 %v3203, %v3201
      %v3278 = vpack.c.bf16 %v3204, %v3202
      %v3279 = vpack.c.bf16 %v3207, %v3205
      %v3280 = vpack.c.bf16 %v3208, %v3206
      %v3281 = vpack.c.bf16 %v3211, %v3209
      %v3282 = vpack.c.bf16 %v3212, %v3210
      %v3283 = vpack.c.bf16 %v3215, %v3213
      %v3284 = vpack.c.bf16 %v3216, %v3214
      %v3285 = vpack.c.bf16 %v3219, %v3217
      %v3286 = vpack.c.bf16 %v3220, %v3218
      %v3287 = vpack.c.bf16 %v3223, %v3221
      %v3288 = vpack.c.bf16 %v3224, %v3222
      %v3289 = vld [vmem:[%s5] sm:$0xff]
      %v3290 = vld [vmem:[%s5 + $0x8] sm:$0xff]
      %v3291 = vld [vmem:[%s5 + $0x10] sm:$0xff]
      %v3292 = vld [vmem:[%s5 + $0x18] sm:$0xff]
      %v3293 = vld [vmem:[%s5 + $0x20] sm:$0xff]
      %v3294 = vld [vmem:[%s5 + $0x28] sm:$0xff]
      %v3295 = vld [vmem:[%s5 + $0x30] sm:$0xff]
      %v3296 = vld [vmem:[%s5 + $0x38] sm:$0xff]
      %v3297 = vld [vmem:[%s5 + $0x40] sm:$0xff]
      %v3298 = vld [vmem:[%s5 + $0x48] sm:$0xff]
      %v3299 = vld [vmem:[%s5 + $0x50] sm:$0xff]
      %v3300 = vld [vmem:[%s5 + $0x58] sm:$0xff]
      %v3301 = vld [vmem:[%s5 + $0x60] sm:$0xff]
      %v3302 = vld [vmem:[%s5 + $0x68] sm:$0xff]
      %v3303 = vld [vmem:[%s5 + $0x70] sm:$0xff]
      %v3304 = vld [vmem:[%s5 + $0x78] sm:$0xff]
      %v3305 = vld [vmem:[%s5 + $0x80] sm:$0xff]
      %v3306 = vld [vmem:[%s5 + $0x88] sm:$0xff]
      %v3307 = vld [vmem:[%s5 + $0x90] sm:$0xff]
      %v3308 = vld [vmem:[%s5 + $0x98] sm:$0xff]
      %v3309 = vld [vmem:[%s5 + $0xa0] sm:$0xff]
      %v3310 = vld [vmem:[%s5 + $0xa8] sm:$0xff]
      %v3311 = vld [vmem:[%s5 + $0xb0] sm:$0xff]
      %v3312 = vld [vmem:[%s5 + $0xb8] sm:$0xff]
      %v3313 = vld [vmem:[%s5 + $0xc0] sm:$0xff]
      %v3314 = vld [vmem:[%s5 + $0xc8] sm:$0xff]
      %v3315 = vld [vmem:[%s5 + $0xd0] sm:$0xff]
      %v3316 = vld [vmem:[%s5 + $0xd8] sm:$0xff]
      %v3317 = vld [vmem:[%s5 + $0xe0] sm:$0xff]
      %v3318 = vld [vmem:[%s5 + $0xe8] sm:$0xff]
      %v3319 = vld [vmem:[%s5 + $0xf0] sm:$0xff]
      %v3320 = vld [vmem:[%s5 + $0xf8] sm:$0xff]
      %v3321 = vld [vmem:[%s6] sm:$0x3]
      %v3323 = vlaneseq
      %v3324 = vshrl.u32 %v3323, 7
      %v3325 = vsub.s32 0, %v3324
      %v3326 = vrot.slane %v3321, %v3325
      %v3327 = vlaneseq
      %v3328 = vshrl.u32 %v3327, 7
      %v3329 = vsub.s32 1, %v3328
      %v3330 = vrot.slane %v3321, %v3329
      %v3365 = vunpack.c.l.b16 %v3289
      %v3366 = vunpack.c.h.b16 %v3289
      %v3367 = vunpack.c.l.b16 %v3290
      %v3368 = vunpack.c.h.b16 %v3290
      %v3369 = vunpack.c.l.b16 %v3291
      %v3370 = vunpack.c.h.b16 %v3291
      %v3371 = vunpack.c.l.b16 %v3292
      %v3372 = vunpack.c.h.b16 %v3292
      %v3373 = vunpack.c.l.b16 %v3293
      %v3374 = vunpack.c.h.b16 %v3293
      %v3375 = vunpack.c.l.b16 %v3294
      %v3376 = vunpack.c.h.b16 %v3294
      %v3377 = vunpack.c.l.b16 %v3295
      %v3378 = vunpack.c.h.b16 %v3295
      %v3379 = vunpack.c.l.b16 %v3296
      %v3380 = vunpack.c.h.b16 %v3296
      %v3381 = vunpack.c.l.b16 %v3297
      %v3382 = vunpack.c.h.b16 %v3297
      %v3383 = vunpack.c.l.b16 %v3298
      %v3384 = vunpack.c.h.b16 %v3298
      %v3385 = vunpack.c.l.b16 %v3299
      %v3386 = vunpack.c.h.b16 %v3299
      %v3387 = vunpack.c.l.b16 %v3300
      %v3388 = vunpack.c.h.b16 %v3300
      %v3389 = vunpack.c.l.b16 %v3301
      %v3390 = vunpack.c.h.b16 %v3301
      %v3391 = vunpack.c.l.b16 %v3302
      %v3392 = vunpack.c.h.b16 %v3302
      %v3393 = vunpack.c.l.b16 %v3303
      %v3394 = vunpack.c.h.b16 %v3303
      %v3395 = vunpack.c.l.b16 %v3304
      %v3396 = vunpack.c.h.b16 %v3304
      %v3397 = vunpack.c.l.b16 %v3305
      %v3398 = vunpack.c.h.b16 %v3305
      %v3399 = vunpack.c.l.b16 %v3306
      %v3400 = vunpack.c.h.b16 %v3306
      %v3401 = vunpack.c.l.b16 %v3307
      %v3402 = vunpack.c.h.b16 %v3307
      %v3403 = vunpack.c.l.b16 %v3308
      %v3404 = vunpack.c.h.b16 %v3308
      %v3405 = vunpack.c.l.b16 %v3309
      %v3406 = vunpack.c.h.b16 %v3309
      %v3407 = vunpack.c.l.b16 %v3310
      %v3408 = vunpack.c.h.b16 %v3310
      %v3409 = vunpack.c.l.b16 %v3311
      %v3410 = vunpack.c.h.b16 %v3311
      %v3411 = vunpack.c.l.b16 %v3312
      %v3412 = vunpack.c.h.b16 %v3312
      %v3413 = vunpack.c.l.b16 %v3313
      %v3414 = vunpack.c.h.b16 %v3313
      %v3415 = vunpack.c.l.b16 %v3314
      %v3416 = vunpack.c.h.b16 %v3314
      %v3417 = vunpack.c.l.b16 %v3315
      %v3418 = vunpack.c.h.b16 %v3315
      %v3419 = vunpack.c.l.b16 %v3316
      %v3420 = vunpack.c.h.b16 %v3316
      %v3421 = vunpack.c.l.b16 %v3317
      %v3422 = vunpack.c.h.b16 %v3317
      %v3423 = vunpack.c.l.b16 %v3318
      %v3424 = vunpack.c.h.b16 %v3318
      %v3425 = vunpack.c.l.b16 %v3319
      %v3426 = vunpack.c.h.b16 %v3319
      %v3427 = vunpack.c.l.b16 %v3320
      %v3428 = vunpack.c.h.b16 %v3320
      %v3429 = vpack.c.b16 %v3367, %v3365
      %v3430 = vpack.c.b16 %v3368, %v3366
      %v3431 = vpack.c.b16 %v3371, %v3369
      %v3432 = vpack.c.b16 %v3372, %v3370
      %v3433 = vpack.c.b16 %v3375, %v3373
      %v3434 = vpack.c.b16 %v3376, %v3374
      %v3435 = vpack.c.b16 %v3379, %v3377
      %v3436 = vpack.c.b16 %v3380, %v3378
      %v3437 = vpack.c.b16 %v3383, %v3381
      %v3438 = vpack.c.b16 %v3384, %v3382
      %v3439 = vpack.c.b16 %v3387, %v3385
      %v3440 = vpack.c.b16 %v3388, %v3386
      %v3441 = vpack.c.b16 %v3391, %v3389
      %v3442 = vpack.c.b16 %v3392, %v3390
      %v3443 = vpack.c.b16 %v3395, %v3393
      %v3444 = vpack.c.b16 %v3396, %v3394
      %v3445 = vpack.c.b16 %v3399, %v3397
      %v3446 = vpack.c.b16 %v3400, %v3398
      %v3447 = vpack.c.b16 %v3403, %v3401
      %v3448 = vpack.c.b16 %v3404, %v3402
      %v3449 = vpack.c.b16 %v3407, %v3405
      %v3450 = vpack.c.b16 %v3408, %v3406
      %v3451 = vpack.c.b16 %v3411, %v3409
      %v3452 = vpack.c.b16 %v3412, %v3410
      %v3453 = vpack.c.b16 %v3415, %v3413
      %v3454 = vpack.c.b16 %v3416, %v3414
      %v3455 = vpack.c.b16 %v3419, %v3417
      %v3456 = vpack.c.b16 %v3420, %v3418
      %v3457 = vpack.c.b16 %v3423, %v3421
      %v3458 = vpack.c.b16 %v3424, %v3422
      %v3459 = vpack.c.b16 %v3427, %v3425
      %v3460 = vpack.c.b16 %v3428, %v3426
      %3493 = vmatprep.subr.bf16.mxu0 %v3430
      %3494 = vmatpush1.bf16.msra.mxu0 %v3429
      %3495 = vmatprep.subr.bf16.mxu0 %v3432
      %3496 = vmatpush1.bf16.msra.mxu0 %v3431
      %3497 = vmatprep.subr.bf16.mxu0 %v3434
      %3498 = vmatpush1.bf16.msra.mxu0 %v3433
      %3499 = vmatprep.subr.bf16.mxu0 %v3436
      %3500 = vmatpush1.bf16.msra.mxu0 %v3435
      %3501 = vmatprep.subr.bf16.mxu0 %v3438
      %3502 = vmatpush1.bf16.msra.mxu0 %v3437
      %3503 = vmatprep.subr.bf16.mxu0 %v3440
      %3504 = vmatpush1.bf16.msra.mxu0 %v3439
      %3505 = vmatprep.subr.bf16.mxu0 %v3442
      %3506 = vmatpush1.bf16.msra.mxu0 %v3441
      %3507 = vmatprep.subr.bf16.mxu0 %v3444
      %3508 = vmatpush1.bf16.msra.mxu0 %v3443
      %3509 = vmatprep.subr.bf16.mxu0 %v3446
      %3510 = vmatpush1.bf16.msra.mxu0 %v3445
      %3511 = vmatprep.subr.bf16.mxu0 %v3448
      %3512 = vmatpush1.bf16.msra.mxu0 %v3447
      %3513 = vmatprep.subr.bf16.mxu0 %v3450
      %3514 = vmatpush1.bf16.msra.mxu0 %v3449
      %3515 = vmatprep.subr.bf16.mxu0 %v3452
      %3516 = vmatpush1.bf16.msra.mxu0 %v3451
      %3517 = vmatprep.subr.bf16.mxu0 %v3454
      %3518 = vmatpush1.bf16.msra.mxu0 %v3453
      %3519 = vmatprep.subr.bf16.mxu0 %v3456
      %3520 = vmatpush1.bf16.msra.mxu0 %v3455
      %3521 = vmatprep.subr.bf16.mxu0 %v3458
      %3522 = vmatpush1.bf16.msra.mxu0 %v3457
      %3523 = vmatprep.subr.bf16.mxu0 %v3460
      %3524 = vmatpush1.bf16.msra.mxu0 %v3459
      %3525 = vmatprep.mubr.bf16.mxu0 %v3226
      %3526 = vmatmul.mubr.bf16.gmra.mrb[0].mxu0 %v3225
      %v3527 = vpop.f32.mrb[0].mxu0
      %v3528 = vadd.f32 %v3326, %v3527
      %v3529 = vpop.f32.mrb[0].mxu0
      %v3530 = vadd.f32 %v3330, %v3529
      %v3531 = vpop.f32.mrb[0].mxu0
      %v3532 = vadd.f32 %v3326, %v3531
      %v3533 = vpop.f32.mrb[0].mxu0
      %v3534 = vadd.f32 %v3330, %v3533
      %3535 = vmatprep.mubr.bf16.mxu0 %v3228
      %3536 = vmatmul.mubr.bf16.gmra.mrb[0].mxu0 %v3227
      %v3537 = vpop.f32.mrb[0].mxu0
      %v3538 = vadd.f32 %v3326, %v3537
      %v3539 = vpop.f32.mrb[0].mxu0
      %v3540 = vadd.f32 %v3330, %v3539
      %v3541 = vpop.f32.mrb[0].mxu0
      %v3542 = vadd.f32 %v3326, %v3541
      %v3543 = vpop.f32.mrb[0].mxu0
      %v3544 = vadd.f32 %v3330, %v3543
      %3545 = vmatprep.mubr.bf16.mxu0 %v3230
      %3546 = vmatmul.mubr.bf16.gmra.mrb[0].mxu0 %v3229
      %v3547 = vpop.f32.mrb[0].mxu0
      %v3548 = vadd.f32 %v3326, %v3547
      %v3549 = vpop.f32.mrb[0].mxu0
      %v3550 = vadd.f32 %v3330, %v3549
      %v3551 = vpop.f32.mrb[0].mxu0
      %v3552 = vadd.f32 %v3326, %v3551
      %v3553 = vpop.f32.mrb[0].mxu0
      %v3554 = vadd.f32 %v3330, %v3553
      %3555 = vmatprep.mubr.bf16.mxu0 %v3232
      %3556 = vmatmul.mubr.bf16.gmra.mrb[0].mxu0 %v3231
      %v3557 = vpop.f32.mrb[0].mxu0
      %v3558 = vadd.f32 %v3326, %v3557
      %v3559 = vpop.f32.mrb[0].mxu0
      %v3560 = vadd.f32 %v3330, %v3559
      %v3561 = vpop.f32.mrb[0].mxu0
      %v3562 = vadd.f32 %v3326, %v3561
      %v3563 = vpop.f32.mrb[0].mxu0
      %v3564 = vadd.f32 %v3330, %v3563
      %3565 = vmatprep.mubr.bf16.mxu0 %v3234
      %3566 = vmatmul.mubr.bf16.gmra.mrb[0].mxu0 %v3233
      %v3567 = vpop.f32.mrb[0].mxu0
      %v3568 = vadd.f32 %v3326, %v3567
      %v3569 = vpop.f32.mrb[0].mxu0
      %v3570 = vadd.f32 %v3330, %v3569
      %v3571 = vpop.f32.mrb[0].mxu0
      %v3572 = vadd.f32 %v3326, %v3571
      %v3573 = vpop.f32.mrb[0].mxu0
      %v3574 = vadd.f32 %v3330, %v3573
      %3575 = vmatprep.mubr.bf16.mxu0 %v3236
      %3576 = vmatmul.mubr.bf16.gmra.mrb[0].mxu0 %v3235
      %v3577 = vpop.f32.mrb[0].mxu0
      %v3578 = vadd.f32 %v3326, %v3577
      %v3579 = vpop.f32.mrb[0].mxu0
      %v3580 = vadd.f32 %v3330, %v3579
      %v3581 = vpop.f32.mrb[0].mxu0
      %v3582 = vadd.f32 %v3326, %v3581
      %v3583 = vpop.f32.mrb[0].mxu0
      %v3584 = vadd.f32 %v3330, %v3583
      %3585 = vmatprep.mubr.bf16.mxu0 %v3238
      %3586 = vmatmul.mubr.bf16.gmra.mrb[0].mxu0 %v3237
      %v3587 = vpop.f32.mrb[0].mxu0
      %v3588 = vadd.f32 %v3326, %v3587
      %v3589 = vpop.f32.mrb[0].mxu0
      %v3590 = vadd.f32 %v3330, %v3589
      %v3591 = vpop.f32.mrb[0].mxu0
      %v3592 = vadd.f32 %v3326, %v3591
      %v3593 = vpop.f32.mrb[0].mxu0
      %v3594 = vadd.f32 %v3330, %v3593
      %3595 = vmatprep.mubr.bf16.mxu0 %v3240
      %3596 = vmatmul.mubr.bf16.gmra.mrb[0].mxu0 %v3239
      %v3597 = vpop.f32.mrb[0].mxu0
      %v3598 = vadd.f32 %v3326, %v3597
      %v3599 = vpop.f32.mrb[0].mxu0
      %v3600 = vadd.f32 %v3330, %v3599
      %v3601 = vpop.f32.mrb[0].mxu0
      %v3602 = vadd.f32 %v3326, %v3601
      %v3603 = vpop.f32.mrb[0].mxu0
      %v3604 = vadd.f32 %v3330, %v3603
      %3605 = vmatprep.mubr.bf16.mxu0 %v3242
      %3606 = vmatmul.mubr.bf16.gmra.mrb[0].mxu0 %v3241
      %v3607 = vpop.f32.mrb[0].mxu0
      %v3608 = vadd.f32 %v3326, %v3607
      %v3609 = vpop.f32.mrb[0].mxu0
      %v3610 = vadd.f32 %v3330, %v3609
      %v3611 = vpop.f32.mrb[0].mxu0
      %v3612 = vadd.f32 %v3326, %v3611
      %v3613 = vpop.f32.mrb[0].mxu0
      %v3614 = vadd.f32 %v3330, %v3613
      %3615 = vmatprep.mubr.bf16.mxu0 %v3244
      %3616 = vmatmul.mubr.bf16.gmra.mrb[0].mxu0 %v3243
      %v3617 = vpop.f32.mrb[0].mxu0
      %v3618 = vadd.f32 %v3326, %v3617
      %v3619 = vpop.f32.mrb[0].mxu0
      %v3620 = vadd.f32 %v3330, %v3619
      %v3621 = vpop.f32.mrb[0].mxu0
      %v3622 = vadd.f32 %v3326, %v3621
      %v3623 = vpop.f32.mrb[0].mxu0
      %v3624 = vadd.f32 %v3330, %v3623
      %3625 = vmatprep.mubr.bf16.mxu0 %v3246
      %3626 = vmatmul.mubr.bf16.gmra.mrb[0].mxu0 %v3245
      %v3627 = vpop.f32.mrb[0].mxu0
      %v3628 = vadd.f32 %v3326, %v3627
      %v3629 = vpop.f32.mrb[0].mxu0
      %v3630 = vadd.f32 %v3330, %v3629
      %v3631 = vpop.f32.mrb[0].mxu0
      %v3632 = vadd.f32 %v3326, %v3631
      %v3633 = vpop.f32.mrb[0].mxu0
      %v3634 = vadd.f32 %v3330, %v3633
      %3635 = vmatprep.mubr.bf16.mxu0 %v3248
      %3636 = vmatmul.mubr.bf16.gmra.mrb[0].mxu0 %v3247
      %v3637 = vpop.f32.mrb[0].mxu0
      %v3638 = vadd.f32 %v3326, %v3637
      %v3639 = vpop.f32.mrb[0].mxu0
      %v3640 = vadd.f32 %v3330, %v3639
      %v3641 = vpop.f32.mrb[0].mxu0
      %v3642 = vadd.f32 %v3326, %v3641
      %v3643 = vpop.f32.mrb[0].mxu0
      %v3644 = vadd.f32 %v3330, %v3643
      %3645 = vmatprep.mubr.bf16.mxu0 %v3250
      %3646 = vmatmul.mubr.bf16.gmra.mrb[0].mxu0 %v3249
      %v3647 = vpop.f32.mrb[0].mxu0
      %v3648 = vadd.f32 %v3326, %v3647
      %v3649 = vpop.f32.mrb[0].mxu0
      %v3650 = vadd.f32 %v3330, %v3649
      %v3651 = vpop.f32.mrb[0].mxu0
      %v3652 = vadd.f32 %v3326, %v3651
      %v3653 = vpop.f32.mrb[0].mxu0
      %v3654 = vadd.f32 %v3330, %v3653
      %3655 = vmatprep.mubr.bf16.mxu0 %v3252
      %3656 = vmatmul.mubr.bf16.gmra.mrb[0].mxu0 %v3251
      %v3657 = vpop.f32.mrb[0].mxu0
      %v3658 = vadd.f32 %v3326, %v3657
      %v3659 = vpop.f32.mrb[0].mxu0
      %v3660 = vadd.f32 %v3330, %v3659
      %v3661 = vpop.f32.mrb[0].mxu0
      %v3662 = vadd.f32 %v3326, %v3661
      %v3663 = vpop.f32.mrb[0].mxu0
      %v3664 = vadd.f32 %v3330, %v3663
      %3665 = vmatprep.mubr.bf16.mxu0 %v3254
      %3666 = vmatmul.mubr.bf16.gmra.mrb[0].mxu0 %v3253
      %v3667 = vpop.f32.mrb[0].mxu0
      %v3668 = vadd.f32 %v3326, %v3667
      %v3669 = vpop.f32.mrb[0].mxu0
      %v3670 = vadd.f32 %v3330, %v3669
      %v3671 = vpop.f32.mrb[0].mxu0
      %v3672 = vadd.f32 %v3326, %v3671
      %v3673 = vpop.f32.mrb[0].mxu0
      %v3674 = vadd.f32 %v3330, %v3673
      %3675 = vmatprep.mubr.bf16.mxu0 %v3256
      %3676 = vmatmul.mubr.bf16.gmra.mrb[0].mxu0 %v3255
      %v3677 = vpop.f32.mrb[0].mxu0
      %v3678 = vadd.f32 %v3326, %v3677
      %v3679 = vpop.f32.mrb[0].mxu0
      %v3680 = vadd.f32 %v3330, %v3679
      %v3681 = vpop.f32.mrb[0].mxu0
      %v3682 = vadd.f32 %v3326, %v3681
      %v3683 = vpop.f32.mrb[0].mxu0
      %v3684 = vadd.f32 %v3330, %v3683
      %3685 = vmatprep.mubr.bf16.mxu0 %v3258
      %3686 = vmatmul.mubr.bf16.gmra.mrb[0].mxu0 %v3257
      %v3687 = vpop.f32.mrb[0].mxu0
      %v3688 = vadd.f32 %v3326, %v3687
      %v3689 = vpop.f32.mrb[0].mxu0
      %v3690 = vadd.f32 %v3330, %v3689
      %v3691 = vpop.f32.mrb[0].mxu0
      %v3692 = vadd.f32 %v3326, %v3691
      %v3693 = vpop.f32.mrb[0].mxu0
      %v3694 = vadd.f32 %v3330, %v3693
      %3695 = vmatprep.mubr.bf16.mxu0 %v3260
      %3696 = vmatmul.mubr.bf16.gmra.mrb[0].mxu0 %v3259
      %v3697 = vpop.f32.mrb[0].mxu0
      %v3698 = vadd.f32 %v3326, %v3697
      %v3699 = vpop.f32.mrb[0].mxu0
      %v3700 = vadd.f32 %v3330, %v3699
      %v3701 = vpop.f32.mrb[0].mxu0
      %v3702 = vadd.f32 %v3326, %v3701
      %v3703 = vpop.f32.mrb[0].mxu0
      %v3704 = vadd.f32 %v3330, %v3703
      %3705 = vmatprep.mubr.bf16.mxu0 %v3262
      %3706 = vmatmul.mubr.bf16.gmra.mrb[0].mxu0 %v3261
      %v3707 = vpop.f32.mrb[0].mxu0
      %v3708 = vadd.f32 %v3326, %v3707
      %v3709 = vpop.f32.mrb[0].mxu0
      %v3710 = vadd.f32 %v3330, %v3709
      %v3711 = vpop.f32.mrb[0].mxu0
      %v3712 = vadd.f32 %v3326, %v3711
      %v3713 = vpop.f32.mrb[0].mxu0
      %v3714 = vadd.f32 %v3330, %v3713
      %3715 = vmatprep.mubr.bf16.mxu0 %v3264
      %3716 = vmatmul.mubr.bf16.gmra.mrb[0].mxu0 %v3263
      %v3717 = vpop.f32.mrb[0].mxu0
      %v3718 = vadd.f32 %v3326, %v3717
      %v3719 = vpop.f32.mrb[0].mxu0
      %v3720 = vadd.f32 %v3330, %v3719
      %v3721 = vpop.f32.mrb[0].mxu0
      %v3722 = vadd.f32 %v3326, %v3721
      %v3723 = vpop.f32.mrb[0].mxu0
      %v3724 = vadd.f32 %v3330, %v3723
      %3725 = vmatprep.mubr.bf16.mxu0 %v3266
      %3726 = vmatmul.mubr.bf16.gmra.mrb[0].mxu0 %v3265
      %v3727 = vpop.f32.mrb[0].mxu0
      %v3728 = vadd.f32 %v3326, %v3727
      %v3729 = vpop.f32.mrb[0].mxu0
      %v3730 = vadd.f32 %v3330, %v3729
      %v3731 = vpop.f32.mrb[0].mxu0
      %v3732 = vadd.f32 %v3326, %v3731
      %v3733 = vpop.f32.mrb[0].mxu0
      %v3734 = vadd.f32 %v3330, %v3733
      %3735 = vmatprep.mubr.bf16.mxu0 %v3268
      %3736 = vmatmul.mubr.bf16.gmra.mrb[0].mxu0 %v3267
      %v3737 = vpop.f32.mrb[0].mxu0
      %v3738 = vadd.f32 %v3326, %v3737
      %v3739 = vpop.f32.mrb[0].mxu0
      %v3740 = vadd.f32 %v3330, %v3739
      %v3741 = vpop.f32.mrb[0].mxu0
      %v3742 = vadd.f32 %v3326, %v3741
      %v3743 = vpop.f32.mrb[0].mxu0
      %v3744 = vadd.f32 %v3330, %v3743
      %3745 = vmatprep.mubr.bf16.mxu0 %v3270
      %3746 = vmatmul.mubr.bf16.gmra.mrb[0].mxu0 %v3269
      %v3747 = vpop.f32.mrb[0].mxu0
      %v3748 = vadd.f32 %v3326, %v3747
      %v3749 = vpop.f32.mrb[0].mxu0
      %v3750 = vadd.f32 %v3330, %v3749
      %v3751 = vpop.f32.mrb[0].mxu0
      %v3752 = vadd.f32 %v3326, %v3751
      %v3753 = vpop.f32.mrb[0].mxu0
      %v3754 = vadd.f32 %v3330, %v3753
      %3755 = vmatprep.mubr.bf16.mxu0 %v3272
      %3756 = vmatmul.mubr.bf16.gmra.mrb[0].mxu0 %v3271
      %v3757 = vpop.f32.mrb[0].mxu0
      %v3758 = vadd.f32 %v3326, %v3757
      %v3759 = vpop.f32.mrb[0].mxu0
      %v3760 = vadd.f32 %v3330, %v3759
      %v3761 = vpop.f32.mrb[0].mxu0
      %v3762 = vadd.f32 %v3326, %v3761
      %v3763 = vpop.f32.mrb[0].mxu0
      %v3764 = vadd.f32 %v3330, %v3763
      %3765 = vmatprep.mubr.bf16.mxu0 %v3274
      %3766 = vmatmul.mubr.bf16.gmra.mrb[0].mxu0 %v3273
      %v3767 = vpop.f32.mrb[0].mxu0
      %v3768 = vadd.f32 %v3326, %v3767
      %v3769 = vpop.f32.mrb[0].mxu0
      %v3770 = vadd.f32 %v3330, %v3769
      %v3771 = vpop.f32.mrb[0].mxu0
      %v3772 = vadd.f32 %v3326, %v3771
      %v3773 = vpop.f32.mrb[0].mxu0
      %v3774 = vadd.f32 %v3330, %v3773
      %3775 = vmatprep.mubr.bf16.mxu0 %v3276
      %3776 = vmatmul.mubr.bf16.gmra.mrb[0].mxu0 %v3275
      %v3777 = vpop.f32.mrb[0].mxu0
      %v3778 = vadd.f32 %v3326, %v3777
      %v3779 = vpop.f32.mrb[0].mxu0
      %v3780 = vadd.f32 %v3330, %v3779
      %v3781 = vpop.f32.mrb[0].mxu0
      %v3782 = vadd.f32 %v3326, %v3781
      %v3783 = vpop.f32.mrb[0].mxu0
      %v3784 = vadd.f32 %v3330, %v3783
      %3785 = vmatprep.mubr.bf16.mxu0 %v3278
      %3786 = vmatmul.mubr.bf16.gmra.mrb[0].mxu0 %v3277
      %v3787 = vpop.f32.mrb[0].mxu0
      %v3788 = vadd.f32 %v3326, %v3787
      %v3789 = vpop.f32.mrb[0].mxu0
      %v3790 = vadd.f32 %v3330, %v3789
      %v3791 = vpop.f32.mrb[0].mxu0
      %v3792 = vadd.f32 %v3326, %v3791
      %v3793 = vpop.f32.mrb[0].mxu0
      %v3794 = vadd.f32 %v3330, %v3793
      %3795 = vmatprep.mubr.bf16.mxu0 %v3280
      %3796 = vmatmul.mubr.bf16.gmra.mrb[0].mxu0 %v3279
      %v3797 = vpop.f32.mrb[0].mxu0
      %v3798 = vadd.f32 %v3326, %v3797
      %v3799 = vpop.f32.mrb[0].mxu0
      %v3800 = vadd.f32 %v3330, %v3799
      %v3801 = vpop.f32.mrb[0].mxu0
      %v3802 = vadd.f32 %v3326, %v3801
      %v3803 = vpop.f32.mrb[0].mxu0
      %v3804 = vadd.f32 %v3330, %v3803
      %3805 = vmatprep.mubr.bf16.mxu0 %v3282
      %3806 = vmatmul.mubr.bf16.gmra.mrb[0].mxu0 %v3281
      %v3807 = vpop.f32.mrb[0].mxu0
      %v3808 = vadd.f32 %v3326, %v3807
      %v3809 = vpop.f32.mrb[0].mxu0
      %v3810 = vadd.f32 %v3330, %v3809
      %v3811 = vpop.f32.mrb[0].mxu0
      %v3812 = vadd.f32 %v3326, %v3811
      %v3813 = vpop.f32.mrb[0].mxu0
      %v3814 = vadd.f32 %v3330, %v3813
      %3815 = vmatprep.mubr.bf16.mxu0 %v3284
      %3816 = vmatmul.mubr.bf16.gmra.mrb[0].mxu0 %v3283
      %v3817 = vpop.f32.mrb[0].mxu0
      %v3818 = vadd.f32 %v3326, %v3817
      %v3819 = vpop.f32.mrb[0].mxu0
      %v3820 = vadd.f32 %v3330, %v3819
      %v3821 = vpop.f32.mrb[0].mxu0
      %v3822 = vadd.f32 %v3326, %v3821
      %v3823 = vpop.f32.mrb[0].mxu0
      %v3824 = vadd.f32 %v3330, %v3823
      %3825 = vmatprep.mubr.bf16.mxu0 %v3286
      %3826 = vmatmul.mubr.bf16.gmra.mrb[0].mxu0 %v3285
      %v3827 = vpop.f32.mrb[0].mxu0
      %v3828 = vadd.f32 %v3326, %v3827
      %v3829 = vpop.f32.mrb[0].mxu0
      %v3830 = vadd.f32 %v3330, %v3829
      %v3831 = vpop.f32.mrb[0].mxu0
      %v3832 = vadd.f32 %v3326, %v3831
      %v3833 = vpop.f32.mrb[0].mxu0
      %v3834 = vadd.f32 %v3330, %v3833
      %3835 = vmatprep.mubr.bf16.mxu0 %v3288
      %3836 = vmatmul.mubr.bf16.gmra.mrb[0].mxu0 %v3287
      %v3837 = vpop.f32.mrb[0].mxu0
      %v3838 = vadd.f32 %v3326, %v3837
      %v3839 = vpop.f32.mrb[0].mxu0
      %v3840 = vadd.f32 %v3330, %v3839
      %v3841 = vpop.f32.mrb[0].mxu0
      %v3842 = vadd.f32 %v3326, %v3841
      %v3843 = vpop.f32.mrb[0].mxu0
      %v3844 = vadd.f32 %v3330, %v3843
      %3845 = vdwg.mxu0
      %v3846 = vmax.f32 %v3528, 0.0
      %v3847 = vmax.f32 %v3530, 0.0
      %v3848 = vmax.f32 %v3532, 0.0
      %v3849 = vmax.f32 %v3534, 0.0
      %v3850 = vmax.f32 %v3538, 0.0
      %v3851 = vmax.f32 %v3540, 0.0
      %v3852 = vmax.f32 %v3542, 0.0
      %v3853 = vmax.f32 %v3544, 0.0
      %v3854 = vmax.f32 %v3548, 0.0
      %v3855 = vmax.f32 %v3550, 0.0
      %v3856 = vmax.f32 %v3552, 0.0
      %v3857 = vmax.f32 %v3554, 0.0
      %v3858 = vmax.f32 %v3558, 0.0
      %v3859 = vmax.f32 %v3560, 0.0
      %v3860 = vmax.f32 %v3562, 0.0
      %v3861 = vmax.f32 %v3564, 0.0
      %v3862 = vmax.f32 %v3568, 0.0
      %v3863 = vmax.f32 %v3570, 0.0
      %v3864 = vmax.f32 %v3572, 0.0
      %v3865 = vmax.f32 %v3574, 0.0
      %v3866 = vmax.f32 %v3578, 0.0
      %v3867 = vmax.f32 %v3580, 0.0
      %v3868 = vmax.f32 %v3582, 0.0
      %v3869 = vmax.f32 %v3584, 0.0
      %v3870 = vmax.f32 %v3588, 0.0
      %v3871 = vmax.f32 %v3590, 0.0
      %v3872 = vmax.f32 %v3592, 0.0
      %v3873 = vmax.f32 %v3594, 0.0
      %v3874 = vmax.f32 %v3598, 0.0
      %v3875 = vmax.f32 %v3600, 0.0
      %v3876 = vmax.f32 %v3602, 0.0
      %v3877 = vmax.f32 %v3604, 0.0
      %v3878 = vmax.f32 %v3608, 0.0
      %v3879 = vmax.f32 %v3610, 0.0
      %v3880 = vmax.f32 %v3612, 0.0
      %v3881 = vmax.f32 %v3614, 0.0
      %v3882 = vmax.f32 %v3618, 0.0
      %v3883 = vmax.f32 %v3620, 0.0
      %v3884 = vmax.f32 %v3622, 0.0
      %v3885 = vmax.f32 %v3624, 0.0
      %v3886 = vmax.f32 %v3628, 0.0
      %v3887 = vmax.f32 %v3630, 0.0
      %v3888 = vmax.f32 %v3632, 0.0
      %v3889 = vmax.f32 %v3634, 0.0
      %v3890 = vmax.f32 %v3638, 0.0
      %v3891 = vmax.f32 %v3640, 0.0
      %v3892 = vmax.f32 %v3642, 0.0
      %v3893 = vmax.f32 %v3644, 0.0
      %v3894 = vmax.f32 %v3648, 0.0
      %v3895 = vmax.f32 %v3650, 0.0
      %v3896 = vmax.f32 %v3652, 0.0
      %v3897 = vmax.f32 %v3654, 0.0
      %v3898 = vmax.f32 %v3658, 0.0
      %v3899 = vmax.f32 %v3660, 0.0
      %v3900 = vmax.f32 %v3662, 0.0
      %v3901 = vmax.f32 %v3664, 0.0
      %v3902 = vmax.f32 %v3668, 0.0
      %v3903 = vmax.f32 %v3670, 0.0
      %v3904 = vmax.f32 %v3672, 0.0
      %v3905 = vmax.f32 %v3674, 0.0
      %v3906 = vmax.f32 %v3678, 0.0
      %v3907 = vmax.f32 %v3680, 0.0
      %v3908 = vmax.f32 %v3682, 0.0
      %v3909 = vmax.f32 %v3684, 0.0
      %v3910 = vmax.f32 %v3688, 0.0
      %v3911 = vmax.f32 %v3690, 0.0
      %v3912 = vmax.f32 %v3692, 0.0
      %v3913 = vmax.f32 %v3694, 0.0
      %v3914 = vmax.f32 %v3698, 0.0
      %v3915 = vmax.f32 %v3700, 0.0
      %v3916 = vmax.f32 %v3702, 0.0
      %v3917 = vmax.f32 %v3704, 0.0
      %v3918 = vmax.f32 %v3708, 0.0
      %v3919 = vmax.f32 %v3710, 0.0
      %v3920 = vmax.f32 %v3712, 0.0
      %v3921 = vmax.f32 %v3714, 0.0
      %v3922 = vmax.f32 %v3718, 0.0
      %v3923 = vmax.f32 %v3720, 0.0
      %v3924 = vmax.f32 %v3722, 0.0
      %v3925 = vmax.f32 %v3724, 0.0
      %v3926 = vmax.f32 %v3728, 0.0
      %v3927 = vmax.f32 %v3730, 0.0
      %v3928 = vmax.f32 %v3732, 0.0
      %v3929 = vmax.f32 %v3734, 0.0
      %v3930 = vmax.f32 %v3738, 0.0
      %v3931 = vmax.f32 %v3740, 0.0
      %v3932 = vmax.f32 %v3742, 0.0
      %v3933 = vmax.f32 %v3744, 0.0
      %v3934 = vmax.f32 %v3748, 0.0
      %v3935 = vmax.f32 %v3750, 0.0
      %v3936 = vmax.f32 %v3752, 0.0
      %v3937 = vmax.f32 %v3754, 0.0
      %v3938 = vmax.f32 %v3758, 0.0
      %v3939 = vmax.f32 %v3760, 0.0
      %v3940 = vmax.f32 %v3762, 0.0
      %v3941 = vmax.f32 %v3764, 0.0
      %v3942 = vmax.f32 %v3768, 0.0
      %v3943 = vmax.f32 %v3770, 0.0
      %v3944 = vmax.f32 %v3772, 0.0
      %v3945 = vmax.f32 %v3774, 0.0
      %v3946 = vmax.f32 %v3778, 0.0
      %v3947 = vmax.f32 %v3780, 0.0
      %v3948 = vmax.f32 %v3782, 0.0
      %v3949 = vmax.f32 %v3784, 0.0
      %v3950 = vmax.f32 %v3788, 0.0
      %v3951 = vmax.f32 %v3790, 0.0
      %v3952 = vmax.f32 %v3792, 0.0
      %v3953 = vmax.f32 %v3794, 0.0
      %v3954 = vmax.f32 %v3798, 0.0
      %v3955 = vmax.f32 %v3800, 0.0
      %v3956 = vmax.f32 %v3802, 0.0
      %v3957 = vmax.f32 %v3804, 0.0
      %v3958 = vmax.f32 %v3808, 0.0
      %v3959 = vmax.f32 %v3810, 0.0
      %v3960 = vmax.f32 %v3812, 0.0
      %v3961 = vmax.f32 %v3814, 0.0
      %v3962 = vmax.f32 %v3818, 0.0
      %v3963 = vmax.f32 %v3820, 0.0
      %v3964 = vmax.f32 %v3822, 0.0
      %v3965 = vmax.f32 %v3824, 0.0
      %v3966 = vmax.f32 %v3828, 0.0
      %v3967 = vmax.f32 %v3830, 0.0
      %v3968 = vmax.f32 %v3832, 0.0
      %v3969 = vmax.f32 %v3834, 0.0
      %v3970 = vmax.f32 %v3838, 0.0
      %v3971 = vmax.f32 %v3840, 0.0
      %v3972 = vmax.f32 %v3842, 0.0
      %v3973 = vmax.f32 %v3844, 0.0
      %v3974 = vpack.c.bf16 %v3848, %v3846
      %v3975 = vpack.c.bf16 %v3849, %v3847
      %v3976 = vpack.c.bf16 %v3852, %v3850
      %v3977 = vpack.c.bf16 %v3853, %v3851
      %v3978 = vpack.c.bf16 %v3856, %v3854
      %v3979 = vpack.c.bf16 %v3857, %v3855
      %v3980 = vpack.c.bf16 %v3860, %v3858
      %v3981 = vpack.c.bf16 %v3861, %v3859
      %v3982 = vpack.c.bf16 %v3864, %v3862
      %v3983 = vpack.c.bf16 %v3865, %v3863
      %v3984 = vpack.c.bf16 %v3868, %v3866
      %v3985 = vpack.c.bf16 %v3869, %v3867
      %v3986 = vpack.c.bf16 %v3872, %v3870
      %v3987 = vpack.c.bf16 %v3873, %v3871
      %v3988 = vpack.c.bf16 %v3876, %v3874
      %v3989 = vpack.c.bf16 %v3877, %v3875
      %v3990 = vpack.c.bf16 %v3880, %v3878
      %v3991 = vpack.c.bf16 %v3881, %v3879
      %v3992 = vpack.c.bf16 %v3884, %v3882
      %v3993 = vpack.c.bf16 %v3885, %v3883
      %v3994 = vpack.c.bf16 %v3888, %v3886
      %v3995 = vpack.c.bf16 %v3889, %v3887
      %v3996 = vpack.c.bf16 %v3892, %v3890
      %v3997 = vpack.c.bf16 %v3893, %v3891
      %v3998 = vpack.c.bf16 %v3896, %v3894
      %v3999 = vpack.c.bf16 %v3897, %v3895
      %v4000 = vpack.c.bf16 %v3900, %v3898
      %v4001 = vpack.c.bf16 %v3901, %v3899
      %v4002 = vpack.c.bf16 %v3904, %v3902
      %v4003 = vpack.c.bf16 %v3905, %v3903
      %v4004 = vpack.c.bf16 %v3908, %v3906
      %v4005 = vpack.c.bf16 %v3909, %v3907
      %v4006 = vpack.c.bf16 %v3912, %v3910
      %v4007 = vpack.c.bf16 %v3913, %v3911
      %v4008 = vpack.c.bf16 %v3916, %v3914
      %v4009 = vpack.c.bf16 %v3917, %v3915
      %v4010 = vpack.c.bf16 %v3920, %v3918
      %v4011 = vpack.c.bf16 %v3921, %v3919
      %v4012 = vpack.c.bf16 %v3924, %v3922
      %v4013 = vpack.c.bf16 %v3925, %v3923
      %v4014 = vpack.c.bf16 %v3928, %v3926
      %v4015 = vpack.c.bf16 %v3929, %v3927
      %v4016 = vpack.c.bf16 %v3932, %v3930
      %v4017 = vpack.c.bf16 %v3933, %v3931
      %v4018 = vpack.c.bf16 %v3936, %v3934
      %v4019 = vpack.c.bf16 %v3937, %v3935
      %v4020 = vpack.c.bf16 %v3940, %v3938
      %v4021 = vpack.c.bf16 %v3941, %v3939
      %v4022 = vpack.c.bf16 %v3944, %v3942
      %v4023 = vpack.c.bf16 %v3945, %v3943
      %v4024 = vpack.c.bf16 %v3948, %v3946
      %v4025 = vpack.c.bf16 %v3949, %v3947
      %v4026 = vpack.c.bf16 %v3952, %v3950
      %v4027 = vpack.c.bf16 %v3953, %v3951
      %v4028 = vpack.c.bf16 %v3956, %v3954
      %v4029 = vpack.c.bf16 %v3957, %v3955
      %v4030 = vpack.c.bf16 %v3960, %v3958
      %v4031 = vpack.c.bf16 %v3961, %v3959
      %v4032 = vpack.c.bf16 %v3964, %v3962
      %v4033 = vpack.c.bf16 %v3965, %v3963
      %v4034 = vpack.c.bf16 %v3968, %v3966
      %v4035 = vpack.c.bf16 %v3969, %v3967
      %v4036 = vpack.c.bf16 %v3972, %v3970
      %v4037 = vpack.c.bf16 %v3973, %v3971
      %v4038 = vld [vmem:[%s7] sm:$0xff]
      %v4039 = vld [vmem:[%s7 + $0x8] sm:$0xff]
      %v4040 = vld [vmem:[%s7 + $0x10] sm:$0xff]
      %v4041 = vld [vmem:[%s7 + $0x18] sm:$0xff]
      %v4042 = vld [vmem:[%s7 + $0x20] sm:$0xff]
      %v4043 = vld [vmem:[%s7 + $0x28] sm:$0xff]
      %v4044 = vld [vmem:[%s7 + $0x30] sm:$0xff]
      %v4045 = vld [vmem:[%s7 + $0x38] sm:$0xff]
      %v4046 = vld [vmem:[%s7 + $0x40] sm:$0xff]
      %v4047 = vld [vmem:[%s7 + $0x48] sm:$0xff]
      %v4048 = vld [vmem:[%s7 + $0x50] sm:$0xff]
      %v4049 = vld [vmem:[%s7 + $0x58] sm:$0xff]
      %v4050 = vld [vmem:[%s7 + $0x60] sm:$0xff]
      %v4051 = vld [vmem:[%s7 + $0x68] sm:$0xff]
      %v4052 = vld [vmem:[%s7 + $0x70] sm:$0xff]
      %v4053 = vld [vmem:[%s7 + $0x78] sm:$0xff]
      %v4054 = vld [vmem:[%s7 + $0x80] sm:$0xff]
      %v4055 = vld [vmem:[%s7 + $0x88] sm:$0xff]
      %v4056 = vld [vmem:[%s7 + $0x90] sm:$0xff]
      %v4057 = vld [vmem:[%s7 + $0x98] sm:$0xff]
      %v4058 = vld [vmem:[%s7 + $0xa0] sm:$0xff]
      %v4059 = vld [vmem:[%s7 + $0xa8] sm:$0xff]
      %v4060 = vld [vmem:[%s7 + $0xb0] sm:$0xff]
      %v4061 = vld [vmem:[%s7 + $0xb8] sm:$0xff]
      %v4062 = vld [vmem:[%s7 + $0xc0] sm:$0xff]
      %v4063 = vld [vmem:[%s7 + $0xc8] sm:$0xff]
      %v4064 = vld [vmem:[%s7 + $0xd0] sm:$0xff]
      %v4065 = vld [vmem:[%s7 + $0xd8] sm:$0xff]
      %v4066 = vld [vmem:[%s7 + $0xe0] sm:$0xff]
      %v4067 = vld [vmem:[%s7 + $0xe8] sm:$0xff]
      %v4068 = vld [vmem:[%s7 + $0xf0] sm:$0xff]
      %v4069 = vld [vmem:[%s7 + $0xf8] sm:$0xff]
      %v4070 = vld [vmem:[%s8] sm:$0x3]
      %v4072 = vlaneseq
      %v4073 = vshrl.u32 %v4072, 7
      %v4074 = vsub.s32 0, %v4073
      %v4075 = vrot.slane %v4070, %v4074
      %v4076 = vlaneseq
      %v4077 = vshrl.u32 %v4076, 7
      %v4078 = vsub.s32 1, %v4077
      %v4079 = vrot.slane %v4070, %v4078
      %v4114 = vunpack.c.l.b16 %v4038
      %v4115 = vunpack.c.h.b16 %v4038
      %v4116 = vunpack.c.l.b16 %v4039
      %v4117 = vunpack.c.h.b16 %v4039
      %v4118 = vunpack.c.l.b16 %v4040
      %v4119 = vunpack.c.h.b16 %v4040
      %v4120 = vunpack.c.l.b16 %v4041
      %v4121 = vunpack.c.h.b16 %v4041
      %v4122 = vunpack.c.l.b16 %v4042
      %v4123 = vunpack.c.h.b16 %v4042
      %v4124 = vunpack.c.l.b16 %v4043
      %v4125 = vunpack.c.h.b16 %v4043
      %v4126 = vunpack.c.l.b16 %v4044
      %v4127 = vunpack.c.h.b16 %v4044
      %v4128 = vunpack.c.l.b16 %v4045
      %v4129 = vunpack.c.h.b16 %v4045
      %v4130 = vunpack.c.l.b16 %v4046
      %v4131 = vunpack.c.h.b16 %v4046
      %v4132 = vunpack.c.l.b16 %v4047
      %v4133 = vunpack.c.h.b16 %v4047
      %v4134 = vunpack.c.l.b16 %v4048
      %v4135 = vunpack.c.h.b16 %v4048
      %v4136 = vunpack.c.l.b16 %v4049
      %v4137 = vunpack.c.h.b16 %v4049
      %v4138 = vunpack.c.l.b16 %v4050
      %v4139 = vunpack.c.h.b16 %v4050
      %v4140 = vunpack.c.l.b16 %v4051
      %v4141 = vunpack.c.h.b16 %v4051
      %v4142 = vunpack.c.l.b16 %v4052
      %v4143 = vunpack.c.h.b16 %v4052
      %v4144 = vunpack.c.l.b16 %v4053
      %v4145 = vunpack.c.h.b16 %v4053
      %v4146 = vunpack.c.l.b16 %v4054
      %v4147 = vunpack.c.h.b16 %v4054
      %v4148 = vunpack.c.l.b16 %v4055
      %v4149 = vunpack.c.h.b16 %v4055
      %v4150 = vunpack.c.l.b16 %v4056
      %v4151 = vunpack.c.h.b16 %v4056
      %v4152 = vunpack.c.l.b16 %v4057
      %v4153 = vunpack.c.h.b16 %v4057
      %v4154 = vunpack.c.l.b16 %v4058
      %v4155 = vunpack.c.h.b16 %v4058
      %v4156 = vunpack.c.l.b16 %v4059
      %v4157 = vunpack.c.h.b16 %v4059
      %v4158 = vunpack.c.l.b16 %v4060
      %v4159 = vunpack.c.h.b16 %v4060
      %v4160 = vunpack.c.l.b16 %v4061
      %v4161 = vunpack.c.h.b16 %v4061
      %v4162 = vunpack.c.l.b16 %v4062
      %v4163 = vunpack.c.h.b16 %v4062
      %v4164 = vunpack.c.l.b16 %v4063
      %v4165 = vunpack.c.h.b16 %v4063
      %v4166 = vunpack.c.l.b16 %v4064
      %v4167 = vunpack.c.h.b16 %v4064
      %v4168 = vunpack.c.l.b16 %v4065
      %v4169 = vunpack.c.h.b16 %v4065
      %v4170 = vunpack.c.l.b16 %v4066
      %v4171 = vunpack.c.h.b16 %v4066
      %v4172 = vunpack.c.l.b16 %v4067
      %v4173 = vunpack.c.h.b16 %v4067
      %v4174 = vunpack.c.l.b16 %v4068
      %v4175 = vunpack.c.h.b16 %v4068
      %v4176 = vunpack.c.l.b16 %v4069
      %v4177 = vunpack.c.h.b16 %v4069
      %v4178 = vpack.c.b16 %v4116, %v4114
      %v4179 = vpack.c.b16 %v4117, %v4115
      %v4180 = vpack.c.b16 %v4120, %v4118
      %v4181 = vpack.c.b16 %v4121, %v4119
      %v4182 = vpack.c.b16 %v4124, %v4122
      %v4183 = vpack.c.b16 %v4125, %v4123
      %v4184 = vpack.c.b16 %v4128, %v4126
      %v4185 = vpack.c.b16 %v4129, %v4127
      %v4186 = vpack.c.b16 %v4132, %v4130
      %v4187 = vpack.c.b16 %v4133, %v4131
      %v4188 = vpack.c.b16 %v4136, %v4134
      %v4189 = vpack.c.b16 %v4137, %v4135
      %v4190 = vpack.c.b16 %v4140, %v4138
      %v4191 = vpack.c.b16 %v4141, %v4139
      %v4192 = vpack.c.b16 %v4144, %v4142
      %v4193 = vpack.c.b16 %v4145, %v4143
      %v4194 = vpack.c.b16 %v4148, %v4146
      %v4195 = vpack.c.b16 %v4149, %v4147
      %v4196 = vpack.c.b16 %v4152, %v4150
      %v4197 = vpack.c.b16 %v4153, %v4151
      %v4198 = vpack.c.b16 %v4156, %v4154
      %v4199 = vpack.c.b16 %v4157, %v4155
      %v4200 = vpack.c.b16 %v4160, %v4158
      %v4201 = vpack.c.b16 %v4161, %v4159
      %v4202 = vpack.c.b16 %v4164, %v4162
      %v4203 = vpack.c.b16 %v4165, %v4163
      %v4204 = vpack.c.b16 %v4168, %v4166
      %v4205 = vpack.c.b16 %v4169, %v4167
      %v4206 = vpack.c.b16 %v4172, %v4170
      %v4207 = vpack.c.b16 %v4173, %v4171
      %v4208 = vpack.c.b16 %v4176, %v4174
      %v4209 = vpack.c.b16 %v4177, %v4175
      %4242 = vmatprep.subr.bf16.mxu0 %v4179
      %4243 = vmatpush1.bf16.msra.mxu0 %v4178
      %4244 = vmatprep.subr.bf16.mxu0 %v4181
      %4245 = vmatpush1.bf16.msra.mxu0 %v4180
      %4246 = vmatprep.subr.bf16.mxu0 %v4183
      %4247 = vmatpush1.bf16.msra.mxu0 %v4182
      %4248 = vmatprep.subr.bf16.mxu0 %v4185
      %4249 = vmatpush1.bf16.msra.mxu0 %v4184
      %4250 = vmatprep.subr.bf16.mxu0 %v4187
      %4251 = vmatpush1.bf16.msra.mxu0 %v4186
      %4252 = vmatprep.subr.bf16.mxu0 %v4189
      %4253 = vmatpush1.bf16.msra.mxu0 %v4188
      %4254 = vmatprep.subr.bf16.mxu0 %v4191
      %4255 = vmatpush1.bf16.msra.mxu0 %v4190
      %4256 = vmatprep.subr.bf16.mxu0 %v4193
      %4257 = vmatpush1.bf16.msra.mxu0 %v4192
      %4258 = vmatprep.subr.bf16.mxu0 %v4195
      %4259 = vmatpush1.bf16.msra.mxu0 %v4194
      %4260 = vmatprep.subr.bf16.mxu0 %v4197
      %4261 = vmatpush1.bf16.msra.mxu0 %v4196
      %4262 = vmatprep.subr.bf16.mxu0 %v4199
      %4263 = vmatpush1.bf16.msra.mxu0 %v4198
      %4264 = vmatprep.subr.bf16.mxu0 %v4201
      %4265 = vmatpush1.bf16.msra.mxu0 %v4200
      %4266 = vmatprep.subr.bf16.mxu0 %v4203
      %4267 = vmatpush1.bf16.msra.mxu0 %v4202
      %4268 = vmatprep.subr.bf16.mxu0 %v4205
      %4269 = vmatpush1.bf16.msra.mxu0 %v4204
      %4270 = vmatprep.subr.bf16.mxu0 %v4207
      %4271 = vmatpush1.bf16.msra.mxu0 %v4206
      %4272 = vmatprep.subr.bf16.mxu0 %v4209
      %4273 = vmatpush1.bf16.msra.mxu0 %v4208
      %4274 = vmatprep.mubr.bf16.mxu0 %v3975
      %4275 = vmatmul.mubr.bf16.gmra.mrb[0].mxu0 %v3974
      %v4276 = vpop.f32.mrb[0].mxu0
      %v4277 = vadd.f32 %v4075, %v4276
      %v4278 = vpop.f32.mrb[0].mxu0
      %v4279 = vadd.f32 %v4079, %v4278
      %v4280 = vpop.f32.mrb[0].mxu0
      %v4281 = vadd.f32 %v4075, %v4280
      %v4282 = vpop.f32.mrb[0].mxu0
      %v4283 = vadd.f32 %v4079, %v4282
      %4284 = vmatprep.mubr.bf16.mxu0 %v3977
      %4285 = vmatmul.mubr.bf16.gmra.mrb[0].mxu0 %v3976
      %v4286 = vpop.f32.mrb[0].mxu0
      %v4287 = vadd.f32 %v4075, %v4286
      %v4288 = vpop.f32.mrb[0].mxu0
      %v4289 = vadd.f32 %v4079, %v4288
      %v4290 = vpop.f32.mrb[0].mxu0
      %v4291 = vadd.f32 %v4075, %v4290
      %v4292 = vpop.f32.mrb[0].mxu0
      %v4293 = vadd.f32 %v4079, %v4292
      %4294 = vmatprep.mubr.bf16.mxu0 %v3979
      %4295 = vmatmul.mubr.bf16.gmra.mrb[0].mxu0 %v3978
      %v4296 = vpop.f32.mrb[0].mxu0
      %v4297 = vadd.f32 %v4075, %v4296
      %v4298 = vpop.f32.mrb[0].mxu0
      %v4299 = vadd.f32 %v4079, %v4298
      %v4300 = vpop.f32.mrb[0].mxu0
      %v4301 = vadd.f32 %v4075, %v4300
      %v4302 = vpop.f32.mrb[0].mxu0
      %v4303 = vadd.f32 %v4079, %v4302
      %4304 = vmatprep.mubr.bf16.mxu0 %v3981
      %4305 = vmatmul.mubr.bf16.gmra.mrb[0].mxu0 %v3980
      %v4306 = vpop.f32.mrb[0].mxu0
      %v4307 = vadd.f32 %v4075, %v4306
      %v4308 = vpop.f32.mrb[0].mxu0
      %v4309 = vadd.f32 %v4079, %v4308
      %v4310 = vpop.f32.mrb[0].mxu0
      %v4311 = vadd.f32 %v4075, %v4310
      %v4312 = vpop.f32.mrb[0].mxu0
      %v4313 = vadd.f32 %v4079, %v4312
      %4314 = vmatprep.mubr.bf16.mxu0 %v3983
      %4315 = vmatmul.mubr.bf16.gmra.mrb[0].mxu0 %v3982
      %v4316 = vpop.f32.mrb[0].mxu0
      %v4317 = vadd.f32 %v4075, %v4316
      %v4318 = vpop.f32.mrb[0].mxu0
      %v4319 = vadd.f32 %v4079, %v4318
      %v4320 = vpop.f32.mrb[0].mxu0
      %v4321 = vadd.f32 %v4075, %v4320
      %v4322 = vpop.f32.mrb[0].mxu0
      %v4323 = vadd.f32 %v4079, %v4322
      %4324 = vmatprep.mubr.bf16.mxu0 %v3985
      %4325 = vmatmul.mubr.bf16.gmra.mrb[0].mxu0 %v3984
      %v4326 = vpop.f32.mrb[0].mxu0
      %v4327 = vadd.f32 %v4075, %v4326
      %v4328 = vpop.f32.mrb[0].mxu0
      %v4329 = vadd.f32 %v4079, %v4328
      %v4330 = vpop.f32.mrb[0].mxu0
      %v4331 = vadd.f32 %v4075, %v4330
      %v4332 = vpop.f32.mrb[0].mxu0
      %v4333 = vadd.f32 %v4079, %v4332
      %4334 = vmatprep.mubr.bf16.mxu0 %v3987
      %4335 = vmatmul.mubr.bf16.gmra.mrb[0].mxu0 %v3986
      %v4336 = vpop.f32.mrb[0].mxu0
      %v4337 = vadd.f32 %v4075, %v4336
      %v4338 = vpop.f32.mrb[0].mxu0
      %v4339 = vadd.f32 %v4079, %v4338
      %v4340 = vpop.f32.mrb[0].mxu0
      %v4341 = vadd.f32 %v4075, %v4340
      %v4342 = vpop.f32.mrb[0].mxu0
      %v4343 = vadd.f32 %v4079, %v4342
      %4344 = vmatprep.mubr.bf16.mxu0 %v3989
      %4345 = vmatmul.mubr.bf16.gmra.mrb[0].mxu0 %v3988
      %v4346 = vpop.f32.mrb[0].mxu0
      %v4347 = vadd.f32 %v4075, %v4346
      %v4348 = vpop.f32.mrb[0].mxu0
      %v4349 = vadd.f32 %v4079, %v4348
      %v4350 = vpop.f32.mrb[0].mxu0
      %v4351 = vadd.f32 %v4075, %v4350
      %v4352 = vpop.f32.mrb[0].mxu0
      %v4353 = vadd.f32 %v4079, %v4352
      %4354 = vmatprep.mubr.bf16.mxu0 %v3991
      %4355 = vmatmul.mubr.bf16.gmra.mrb[0].mxu0 %v3990
      %v4356 = vpop.f32.mrb[0].mxu0
      %v4357 = vadd.f32 %v4075, %v4356
      %v4358 = vpop.f32.mrb[0].mxu0
      %v4359 = vadd.f32 %v4079, %v4358
      %v4360 = vpop.f32.mrb[0].mxu0
      %v4361 = vadd.f32 %v4075, %v4360
      %v4362 = vpop.f32.mrb[0].mxu0
      %v4363 = vadd.f32 %v4079, %v4362
      %4364 = vmatprep.mubr.bf16.mxu0 %v3993
      %4365 = vmatmul.mubr.bf16.gmra.mrb[0].mxu0 %v3992
      %v4366 = vpop.f32.mrb[0].mxu0
      %v4367 = vadd.f32 %v4075, %v4366
      %v4368 = vpop.f32.mrb[0].mxu0
      %v4369 = vadd.f32 %v4079, %v4368
      %v4370 = vpop.f32.mrb[0].mxu0
      %v4371 = vadd.f32 %v4075, %v4370
      %v4372 = vpop.f32.mrb[0].mxu0
      %v4373 = vadd.f32 %v4079, %v4372
      %4374 = vmatprep.mubr.bf16.mxu0 %v3995
      %4375 = vmatmul.mubr.bf16.gmra.mrb[0].mxu0 %v3994
      %v4376 = vpop.f32.mrb[0].mxu0
      %v4377 = vadd.f32 %v4075, %v4376
      %v4378 = vpop.f32.mrb[0].mxu0
      %v4379 = vadd.f32 %v4079, %v4378
      %v4380 = vpop.f32.mrb[0].mxu0
      %v4381 = vadd.f32 %v4075, %v4380
      %v4382 = vpop.f32.mrb[0].mxu0
      %v4383 = vadd.f32 %v4079, %v4382
      %4384 = vmatprep.mubr.bf16.mxu0 %v3997
      %4385 = vmatmul.mubr.bf16.gmra.mrb[0].mxu0 %v3996
      %v4386 = vpop.f32.mrb[0].mxu0
      %v4387 = vadd.f32 %v4075, %v4386
      %v4388 = vpop.f32.mrb[0].mxu0
      %v4389 = vadd.f32 %v4079, %v4388
      %v4390 = vpop.f32.mrb[0].mxu0
      %v4391 = vadd.f32 %v4075, %v4390
      %v4392 = vpop.f32.mrb[0].mxu0
      %v4393 = vadd.f32 %v4079, %v4392
      %4394 = vmatprep.mubr.bf16.mxu0 %v3999
      %4395 = vmatmul.mubr.bf16.gmra.mrb[0].mxu0 %v3998
      %v4396 = vpop.f32.mrb[0].mxu0
      %v4397 = vadd.f32 %v4075, %v4396
      %v4398 = vpop.f32.mrb[0].mxu0
      %v4399 = vadd.f32 %v4079, %v4398
      %v4400 = vpop.f32.mrb[0].mxu0
      %v4401 = vadd.f32 %v4075, %v4400
      %v4402 = vpop.f32.mrb[0].mxu0
      %v4403 = vadd.f32 %v4079, %v4402
      %4404 = vmatprep.mubr.bf16.mxu0 %v4001
      %4405 = vmatmul.mubr.bf16.gmra.mrb[0].mxu0 %v4000
      %v4406 = vpop.f32.mrb[0].mxu0
      %v4407 = vadd.f32 %v4075, %v4406
      %v4408 = vpop.f32.mrb[0].mxu0
      %v4409 = vadd.f32 %v4079, %v4408
      %v4410 = vpop.f32.mrb[0].mxu0
      %v4411 = vadd.f32 %v4075, %v4410
      %v4412 = vpop.f32.mrb[0].mxu0
      %v4413 = vadd.f32 %v4079, %v4412
      %4414 = vmatprep.mubr.bf16.mxu0 %v4003
      %4415 = vmatmul.mubr.bf16.gmra.mrb[0].mxu0 %v4002
      %v4416 = vpop.f32.mrb[0].mxu0
      %v4417 = vadd.f32 %v4075, %v4416
      %v4418 = vpop.f32.mrb[0].mxu0
      %v4419 = vadd.f32 %v4079, %v4418
      %v4420 = vpop.f32.mrb[0].mxu0
      %v4421 = vadd.f32 %v4075, %v4420
      %v4422 = vpop.f32.mrb[0].mxu0
      %v4423 = vadd.f32 %v4079, %v4422
      %4424 = vmatprep.mubr.bf16.mxu0 %v4005
      %4425 = vmatmul.mubr.bf16.gmra.mrb[0].mxu0 %v4004
      %v4426 = vpop.f32.mrb[0].mxu0
      %v4427 = vadd.f32 %v4075, %v4426
      %v4428 = vpop.f32.mrb[0].mxu0
      %v4429 = vadd.f32 %v4079, %v4428
      %v4430 = vpop.f32.mrb[0].mxu0
      %v4431 = vadd.f32 %v4075, %v4430
      %v4432 = vpop.f32.mrb[0].mxu0
      %v4433 = vadd.f32 %v4079, %v4432
      %4434 = vmatprep.mubr.bf16.mxu0 %v4007
      %4435 = vmatmul.mubr.bf16.gmra.mrb[0].mxu0 %v4006
      %v4436 = vpop.f32.mrb[0].mxu0
      %v4437 = vadd.f32 %v4075, %v4436
      %v4438 = vpop.f32.mrb[0].mxu0
      %v4439 = vadd.f32 %v4079, %v4438
      %v4440 = vpop.f32.mrb[0].mxu0
      %v4441 = vadd.f32 %v4075, %v4440
      %v4442 = vpop.f32.mrb[0].mxu0
      %v4443 = vadd.f32 %v4079, %v4442
      %4444 = vmatprep.mubr.bf16.mxu0 %v4009
      %4445 = vmatmul.mubr.bf16.gmra.mrb[0].mxu0 %v4008
      %v4446 = vpop.f32.mrb[0].mxu0
      %v4447 = vadd.f32 %v4075, %v4446
      %v4448 = vpop.f32.mrb[0].mxu0
      %v4449 = vadd.f32 %v4079, %v4448
      %v4450 = vpop.f32.mrb[0].mxu0
      %v4451 = vadd.f32 %v4075, %v4450
      %v4452 = vpop.f32.mrb[0].mxu0
      %v4453 = vadd.f32 %v4079, %v4452
      %4454 = vmatprep.mubr.bf16.mxu0 %v4011
      %4455 = vmatmul.mubr.bf16.gmra.mrb[0].mxu0 %v4010
      %v4456 = vpop.f32.mrb[0].mxu0
      %v4457 = vadd.f32 %v4075, %v4456
      %v4458 = vpop.f32.mrb[0].mxu0
      %v4459 = vadd.f32 %v4079, %v4458
      %v4460 = vpop.f32.mrb[0].mxu0
      %v4461 = vadd.f32 %v4075, %v4460
      %v4462 = vpop.f32.mrb[0].mxu0
      %v4463 = vadd.f32 %v4079, %v4462
      %4464 = vmatprep.mubr.bf16.mxu0 %v4013
      %4465 = vmatmul.mubr.bf16.gmra.mrb[0].mxu0 %v4012
      %v4466 = vpop.f32.mrb[0].mxu0
      %v4467 = vadd.f32 %v4075, %v4466
      %v4468 = vpop.f32.mrb[0].mxu0
      %v4469 = vadd.f32 %v4079, %v4468
      %v4470 = vpop.f32.mrb[0].mxu0
      %v4471 = vadd.f32 %v4075, %v4470
      %v4472 = vpop.f32.mrb[0].mxu0
      %v4473 = vadd.f32 %v4079, %v4472
      %4474 = vmatprep.mubr.bf16.mxu0 %v4015
      %4475 = vmatmul.mubr.bf16.gmra.mrb[0].mxu0 %v4014
      %v4476 = vpop.f32.mrb[0].mxu0
      %v4477 = vadd.f32 %v4075, %v4476
      %v4478 = vpop.f32.mrb[0].mxu0
      %v4479 = vadd.f32 %v4079, %v4478
      %v4480 = vpop.f32.mrb[0].mxu0
      %v4481 = vadd.f32 %v4075, %v4480
      %v4482 = vpop.f32.mrb[0].mxu0
      %v4483 = vadd.f32 %v4079, %v4482
      %4484 = vmatprep.mubr.bf16.mxu0 %v4017
      %4485 = vmatmul.mubr.bf16.gmra.mrb[0].mxu0 %v4016
      %v4486 = vpop.f32.mrb[0].mxu0
      %v4487 = vadd.f32 %v4075, %v4486
      %v4488 = vpop.f32.mrb[0].mxu0
      %v4489 = vadd.f32 %v4079, %v4488
      %v4490 = vpop.f32.mrb[0].mxu0
      %v4491 = vadd.f32 %v4075, %v4490
      %v4492 = vpop.f32.mrb[0].mxu0
      %v4493 = vadd.f32 %v4079, %v4492
      %4494 = vmatprep.mubr.bf16.mxu0 %v4019
      %4495 = vmatmul.mubr.bf16.gmra.mrb[0].mxu0 %v4018
      %v4496 = vpop.f32.mrb[0].mxu0
      %v4497 = vadd.f32 %v4075, %v4496
      %v4498 = vpop.f32.mrb[0].mxu0
      %v4499 = vadd.f32 %v4079, %v4498
      %v4500 = vpop.f32.mrb[0].mxu0
      %v4501 = vadd.f32 %v4075, %v4500
      %v4502 = vpop.f32.mrb[0].mxu0
      %v4503 = vadd.f32 %v4079, %v4502
      %4504 = vmatprep.mubr.bf16.mxu0 %v4021
      %4505 = vmatmul.mubr.bf16.gmra.mrb[0].mxu0 %v4020
      %v4506 = vpop.f32.mrb[0].mxu0
      %v4507 = vadd.f32 %v4075, %v4506
      %v4508 = vpop.f32.mrb[0].mxu0
      %v4509 = vadd.f32 %v4079, %v4508
      %v4510 = vpop.f32.mrb[0].mxu0
      %v4511 = vadd.f32 %v4075, %v4510
      %v4512 = vpop.f32.mrb[0].mxu0
      %v4513 = vadd.f32 %v4079, %v4512
      %4514 = vmatprep.mubr.bf16.mxu0 %v4023
      %4515 = vmatmul.mubr.bf16.gmra.mrb[0].mxu0 %v4022
      %v4516 = vpop.f32.mrb[0].mxu0
      %v4517 = vadd.f32 %v4075, %v4516
      %v4518 = vpop.f32.mrb[0].mxu0
      %v4519 = vadd.f32 %v4079, %v4518
      %v4520 = vpop.f32.mrb[0].mxu0
      %v4521 = vadd.f32 %v4075, %v4520
      %v4522 = vpop.f32.mrb[0].mxu0
      %v4523 = vadd.f32 %v4079, %v4522
      %4524 = vmatprep.mubr.bf16.mxu0 %v4025
      %4525 = vmatmul.mubr.bf16.gmra.mrb[0].mxu0 %v4024
      %v4526 = vpop.f32.mrb[0].mxu0
      %v4527 = vadd.f32 %v4075, %v4526
      %v4528 = vpop.f32.mrb[0].mxu0
      %v4529 = vadd.f32 %v4079, %v4528
      %v4530 = vpop.f32.mrb[0].mxu0
      %v4531 = vadd.f32 %v4075, %v4530
      %v4532 = vpop.f32.mrb[0].mxu0
      %v4533 = vadd.f32 %v4079, %v4532
      %4534 = vmatprep.mubr.bf16.mxu0 %v4027
      %4535 = vmatmul.mubr.bf16.gmra.mrb[0].mxu0 %v4026
      %v4536 = vpop.f32.mrb[0].mxu0
      %v4537 = vadd.f32 %v4075, %v4536
      %v4538 = vpop.f32.mrb[0].mxu0
      %v4539 = vadd.f32 %v4079, %v4538
      %v4540 = vpop.f32.mrb[0].mxu0
      %v4541 = vadd.f32 %v4075, %v4540
      %v4542 = vpop.f32.mrb[0].mxu0
      %v4543 = vadd.f32 %v4079, %v4542
      %4544 = vmatprep.mubr.bf16.mxu0 %v4029
      %4545 = vmatmul.mubr.bf16.gmra.mrb[0].mxu0 %v4028
      %v4546 = vpop.f32.mrb[0].mxu0
      %v4547 = vadd.f32 %v4075, %v4546
      %v4548 = vpop.f32.mrb[0].mxu0
      %v4549 = vadd.f32 %v4079, %v4548
      %v4550 = vpop.f32.mrb[0].mxu0
      %v4551 = vadd.f32 %v4075, %v4550
      %v4552 = vpop.f32.mrb[0].mxu0
      %v4553 = vadd.f32 %v4079, %v4552
      %4554 = vmatprep.mubr.bf16.mxu0 %v4031
      %4555 = vmatmul.mubr.bf16.gmra.mrb[0].mxu0 %v4030
      %v4556 = vpop.f32.mrb[0].mxu0
      %v4557 = vadd.f32 %v4075, %v4556
      %v4558 = vpop.f32.mrb[0].mxu0
      %v4559 = vadd.f32 %v4079, %v4558
      %v4560 = vpop.f32.mrb[0].mxu0
      %v4561 = vadd.f32 %v4075, %v4560
      %v4562 = vpop.f32.mrb[0].mxu0
      %v4563 = vadd.f32 %v4079, %v4562
      %4564 = vmatprep.mubr.bf16.mxu0 %v4033
      %4565 = vmatmul.mubr.bf16.gmra.mrb[0].mxu0 %v4032
      %v4566 = vpop.f32.mrb[0].mxu0
      %v4567 = vadd.f32 %v4075, %v4566
      %v4568 = vpop.f32.mrb[0].mxu0
      %v4569 = vadd.f32 %v4079, %v4568
      %v4570 = vpop.f32.mrb[0].mxu0
      %v4571 = vadd.f32 %v4075, %v4570
      %v4572 = vpop.f32.mrb[0].mxu0
      %v4573 = vadd.f32 %v4079, %v4572
      %4574 = vmatprep.mubr.bf16.mxu0 %v4035
      %4575 = vmatmul.mubr.bf16.gmra.mrb[0].mxu0 %v4034
      %v4576 = vpop.f32.mrb[0].mxu0
      %v4577 = vadd.f32 %v4075, %v4576
      %v4578 = vpop.f32.mrb[0].mxu0
      %v4579 = vadd.f32 %v4079, %v4578
      %v4580 = vpop.f32.mrb[0].mxu0
      %v4581 = vadd.f32 %v4075, %v4580
      %v4582 = vpop.f32.mrb[0].mxu0
      %v4583 = vadd.f32 %v4079, %v4582
      %4584 = vmatprep.mubr.bf16.mxu0 %v4037
      %4585 = vmatmul.mubr.bf16.gmra.mrb[0].mxu0 %v4036
      %v4586 = vpop.f32.mrb[0].mxu0
      %v4587 = vadd.f32 %v4075, %v4586
      %v4588 = vpop.f32.mrb[0].mxu0
      %v4589 = vadd.f32 %v4079, %v4588
      %v4590 = vpop.f32.mrb[0].mxu0
      %v4591 = vadd.f32 %v4075, %v4590
      %v4592 = vpop.f32.mrb[0].mxu0
      %v4593 = vadd.f32 %v4079, %v4592
      %4594 = vdwg.mxu0
      %v4595 = vmax.f32 %v4277, 0.0
      %v4596 = vmax.f32 %v4279, 0.0
      %v4597 = vmax.f32 %v4281, 0.0
      %v4598 = vmax.f32 %v4283, 0.0
      %v4599 = vmax.f32 %v4287, 0.0
      %v4600 = vmax.f32 %v4289, 0.0
      %v4601 = vmax.f32 %v4291, 0.0
      %v4602 = vmax.f32 %v4293, 0.0
      %v4603 = vmax.f32 %v4297, 0.0
      %v4604 = vmax.f32 %v4299, 0.0
      %v4605 = vmax.f32 %v4301, 0.0
      %v4606 = vmax.f32 %v4303, 0.0
      %v4607 = vmax.f32 %v4307, 0.0
      %v4608 = vmax.f32 %v4309, 0.0
      %v4609 = vmax.f32 %v4311, 0.0
      %v4610 = vmax.f32 %v4313, 0.0
      %v4611 = vmax.f32 %v4317, 0.0
      %v4612 = vmax.f32 %v4319, 0.0
      %v4613 = vmax.f32 %v4321, 0.0
      %v4614 = vmax.f32 %v4323, 0.0
      %v4615 = vmax.f32 %v4327, 0.0
      %v4616 = vmax.f32 %v4329, 0.0
      %v4617 = vmax.f32 %v4331, 0.0
      %v4618 = vmax.f32 %v4333, 0.0
      %v4619 = vmax.f32 %v4337, 0.0
      %v4620 = vmax.f32 %v4339, 0.0
      %v4621 = vmax.f32 %v4341, 0.0
      %v4622 = vmax.f32 %v4343, 0.0
      %v4623 = vmax.f32 %v4347, 0.0
      %v4624 = vmax.f32 %v4349, 0.0
      %v4625 = vmax.f32 %v4351, 0.0
      %v4626 = vmax.f32 %v4353, 0.0
      %v4627 = vmax.f32 %v4357, 0.0
      %v4628 = vmax.f32 %v4359, 0.0
      %v4629 = vmax.f32 %v4361, 0.0
      %v4630 = vmax.f32 %v4363, 0.0
      %v4631 = vmax.f32 %v4367, 0.0
      %v4632 = vmax.f32 %v4369, 0.0
      %v4633 = vmax.f32 %v4371, 0.0
      %v4634 = vmax.f32 %v4373, 0.0
      %v4635 = vmax.f32 %v4377, 0.0
      %v4636 = vmax.f32 %v4379, 0.0
      %v4637 = vmax.f32 %v4381, 0.0
      %v4638 = vmax.f32 %v4383, 0.0
      %v4639 = vmax.f32 %v4387, 0.0
      %v4640 = vmax.f32 %v4389, 0.0
      %v4641 = vmax.f32 %v4391, 0.0
      %v4642 = vmax.f32 %v4393, 0.0
      %v4643 = vmax.f32 %v4397, 0.0
      %v4644 = vmax.f32 %v4399, 0.0
      %v4645 = vmax.f32 %v4401, 0.0
      %v4646 = vmax.f32 %v4403, 0.0
      %v4647 = vmax.f32 %v4407, 0.0
      %v4648 = vmax.f32 %v4409, 0.0
      %v4649 = vmax.f32 %v4411, 0.0
      %v4650 = vmax.f32 %v4413, 0.0
      %v4651 = vmax.f32 %v4417, 0.0
      %v4652 = vmax.f32 %v4419, 0.0
      %v4653 = vmax.f32 %v4421, 0.0
      %v4654 = vmax.f32 %v4423, 0.0
      %v4655 = vmax.f32 %v4427, 0.0
      %v4656 = vmax.f32 %v4429, 0.0
      %v4657 = vmax.f32 %v4431, 0.0
      %v4658 = vmax.f32 %v4433, 0.0
      %v4659 = vmax.f32 %v4437, 0.0
      %v4660 = vmax.f32 %v4439, 0.0
      %v4661 = vmax.f32 %v4441, 0.0
      %v4662 = vmax.f32 %v4443, 0.0
      %v4663 = vmax.f32 %v4447, 0.0
      %v4664 = vmax.f32 %v4449, 0.0
      %v4665 = vmax.f32 %v4451, 0.0
      %v4666 = vmax.f32 %v4453, 0.0
      %v4667 = vmax.f32 %v4457, 0.0
      %v4668 = vmax.f32 %v4459, 0.0
      %v4669 = vmax.f32 %v4461, 0.0
      %v4670 = vmax.f32 %v4463, 0.0
      %v4671 = vmax.f32 %v4467, 0.0
      %v4672 = vmax.f32 %v4469, 0.0
      %v4673 = vmax.f32 %v4471, 0.0
      %v4674 = vmax.f32 %v4473, 0.0
      %v4675 = vmax.f32 %v4477, 0.0
      %v4676 = vmax.f32 %v4479, 0.0
      %v4677 = vmax.f32 %v4481, 0.0
      %v4678 = vmax.f32 %v4483, 0.0
      %v4679 = vmax.f32 %v4487, 0.0
      %v4680 = vmax.f32 %v4489, 0.0
      %v4681 = vmax.f32 %v4491, 0.0
      %v4682 = vmax.f32 %v4493, 0.0
      %v4683 = vmax.f32 %v4497, 0.0
      %v4684 = vmax.f32 %v4499, 0.0
      %v4685 = vmax.f32 %v4501, 0.0
      %v4686 = vmax.f32 %v4503, 0.0
      %v4687 = vmax.f32 %v4507, 0.0
      %v4688 = vmax.f32 %v4509, 0.0
      %v4689 = vmax.f32 %v4511, 0.0
      %v4690 = vmax.f32 %v4513, 0.0
      %v4691 = vmax.f32 %v4517, 0.0
      %v4692 = vmax.f32 %v4519, 0.0
      %v4693 = vmax.f32 %v4521, 0.0
      %v4694 = vmax.f32 %v4523, 0.0
      %v4695 = vmax.f32 %v4527, 0.0
      %v4696 = vmax.f32 %v4529, 0.0
      %v4697 = vmax.f32 %v4531, 0.0
      %v4698 = vmax.f32 %v4533, 0.0
      %v4699 = vmax.f32 %v4537, 0.0
      %v4700 = vmax.f32 %v4539, 0.0
      %v4701 = vmax.f32 %v4541, 0.0
      %v4702 = vmax.f32 %v4543, 0.0
      %v4703 = vmax.f32 %v4547, 0.0
      %v4704 = vmax.f32 %v4549, 0.0
      %v4705 = vmax.f32 %v4551, 0.0
      %v4706 = vmax.f32 %v4553, 0.0
      %v4707 = vmax.f32 %v4557, 0.0
      %v4708 = vmax.f32 %v4559, 0.0
      %v4709 = vmax.f32 %v4561, 0.0
      %v4710 = vmax.f32 %v4563, 0.0
      %v4711 = vmax.f32 %v4567, 0.0
      %v4712 = vmax.f32 %v4569, 0.0
      %v4713 = vmax.f32 %v4571, 0.0
      %v4714 = vmax.f32 %v4573, 0.0
      %v4715 = vmax.f32 %v4577, 0.0
      %v4716 = vmax.f32 %v4579, 0.0
      %v4717 = vmax.f32 %v4581, 0.0
      %v4718 = vmax.f32 %v4583, 0.0
      %v4719 = vmax.f32 %v4587, 0.0
      %v4720 = vmax.f32 %v4589, 0.0
      %v4721 = vmax.f32 %v4591, 0.0
      %v4722 = vmax.f32 %v4593, 0.0
      %v4723 = vpack.c.bf16 %v4597, %v4595
      %v4724 = vpack.c.bf16 %v4598, %v4596
      %v4725 = vpack.c.bf16 %v4601, %v4599
      %v4726 = vpack.c.bf16 %v4602, %v4600
      %v4727 = vpack.c.bf16 %v4605, %v4603
      %v4728 = vpack.c.bf16 %v4606, %v4604
      %v4729 = vpack.c.bf16 %v4609, %v4607
      %v4730 = vpack.c.bf16 %v4610, %v4608
      %v4731 = vpack.c.bf16 %v4613, %v4611
      %v4732 = vpack.c.bf16 %v4614, %v4612
      %v4733 = vpack.c.bf16 %v4617, %v4615
      %v4734 = vpack.c.bf16 %v4618, %v4616
      %v4735 = vpack.c.bf16 %v4621, %v4619
      %v4736 = vpack.c.bf16 %v4622, %v4620
      %v4737 = vpack.c.bf16 %v4625, %v4623
      %v4738 = vpack.c.bf16 %v4626, %v4624
      %v4739 = vpack.c.bf16 %v4629, %v4627
      %v4740 = vpack.c.bf16 %v4630, %v4628
      %v4741 = vpack.c.bf16 %v4633, %v4631
      %v4742 = vpack.c.bf16 %v4634, %v4632
      %v4743 = vpack.c.bf16 %v4637, %v4635
      %v4744 = vpack.c.bf16 %v4638, %v4636
      %v4745 = vpack.c.bf16 %v4641, %v4639
      %v4746 = vpack.c.bf16 %v4642, %v4640
      %v4747 = vpack.c.bf16 %v4645, %v4643
      %v4748 = vpack.c.bf16 %v4646, %v4644
      %v4749 = vpack.c.bf16 %v4649, %v4647
      %v4750 = vpack.c.bf16 %v4650, %v4648
      %v4751 = vpack.c.bf16 %v4653, %v4651
      %v4752 = vpack.c.bf16 %v4654, %v4652
      %v4753 = vpack.c.bf16 %v4657, %v4655
      %v4754 = vpack.c.bf16 %v4658, %v4656
      %v4755 = vpack.c.bf16 %v4661, %v4659
      %v4756 = vpack.c.bf16 %v4662, %v4660
      %v4757 = vpack.c.bf16 %v4665, %v4663
      %v4758 = vpack.c.bf16 %v4666, %v4664
      %v4759 = vpack.c.bf16 %v4669, %v4667
      %v4760 = vpack.c.bf16 %v4670, %v4668
      %v4761 = vpack.c.bf16 %v4673, %v4671
      %v4762 = vpack.c.bf16 %v4674, %v4672
      %v4763 = vpack.c.bf16 %v4677, %v4675
      %v4764 = vpack.c.bf16 %v4678, %v4676
      %v4765 = vpack.c.bf16 %v4681, %v4679
      %v4766 = vpack.c.bf16 %v4682, %v4680
      %v4767 = vpack.c.bf16 %v4685, %v4683
      %v4768 = vpack.c.bf16 %v4686, %v4684
      %v4769 = vpack.c.bf16 %v4689, %v4687
      %v4770 = vpack.c.bf16 %v4690, %v4688
      %v4771 = vpack.c.bf16 %v4693, %v4691
      %v4772 = vpack.c.bf16 %v4694, %v4692
      %v4773 = vpack.c.bf16 %v4697, %v4695
      %v4774 = vpack.c.bf16 %v4698, %v4696
      %v4775 = vpack.c.bf16 %v4701, %v4699
      %v4776 = vpack.c.bf16 %v4702, %v4700
      %v4777 = vpack.c.bf16 %v4705, %v4703
      %v4778 = vpack.c.bf16 %v4706, %v4704
      %v4779 = vpack.c.bf16 %v4709, %v4707
      %v4780 = vpack.c.bf16 %v4710, %v4708
      %v4781 = vpack.c.bf16 %v4713, %v4711
      %v4782 = vpack.c.bf16 %v4714, %v4712
      %v4783 = vpack.c.bf16 %v4717, %v4715
      %v4784 = vpack.c.bf16 %v4718, %v4716
      %v4785 = vpack.c.bf16 %v4721, %v4719
      %v4786 = vpack.c.bf16 %v4722, %v4720
      %v4787 = vld [vmem:[%s9] sm:$0xff]
      %v4788 = vld [vmem:[%s9 + $0x8] sm:$0xff]
      %v4789 = vld [vmem:[%s9 + $0x10] sm:$0xff]
      %v4790 = vld [vmem:[%s9 + $0x18] sm:$0xff]
      %v4791 = vld [vmem:[%s9 + $0x20] sm:$0xff]
      %v4792 = vld [vmem:[%s9 + $0x28] sm:$0xff]
      %v4793 = vld [vmem:[%s9 + $0x30] sm:$0xff]
      %v4794 = vld [vmem:[%s9 + $0x38] sm:$0xff]
      %v4795 = vld [vmem:[%s9 + $0x40] sm:$0xff]
      %v4796 = vld [vmem:[%s9 + $0x48] sm:$0xff]
      %v4797 = vld [vmem:[%s9 + $0x50] sm:$0xff]
      %v4798 = vld [vmem:[%s9 + $0x58] sm:$0xff]
      %v4799 = vld [vmem:[%s9 + $0x60] sm:$0xff]
      %v4800 = vld [vmem:[%s9 + $0x68] sm:$0xff]
      %v4801 = vld [vmem:[%s9 + $0x70] sm:$0xff]
      %v4802 = vld [vmem:[%s9 + $0x78] sm:$0xff]
      %v4803 = vld [vmem:[%s9 + $0x80] sm:$0xff]
      %v4804 = vld [vmem:[%s9 + $0x88] sm:$0xff]
      %v4805 = vld [vmem:[%s9 + $0x90] sm:$0xff]
      %v4806 = vld [vmem:[%s9 + $0x98] sm:$0xff]
      %v4807 = vld [vmem:[%s9 + $0xa0] sm:$0xff]
      %v4808 = vld [vmem:[%s9 + $0xa8] sm:$0xff]
      %v4809 = vld [vmem:[%s9 + $0xb0] sm:$0xff]
      %v4810 = vld [vmem:[%s9 + $0xb8] sm:$0xff]
      %v4811 = vld [vmem:[%s9 + $0xc0] sm:$0xff]
      %v4812 = vld [vmem:[%s9 + $0xc8] sm:$0xff]
      %v4813 = vld [vmem:[%s9 + $0xd0] sm:$0xff]
      %v4814 = vld [vmem:[%s9 + $0xd8] sm:$0xff]
      %v4815 = vld [vmem:[%s9 + $0xe0] sm:$0xff]
      %v4816 = vld [vmem:[%s9 + $0xe8] sm:$0xff]
      %v4817 = vld [vmem:[%s9 + $0xf0] sm:$0xff]
      %v4818 = vld [vmem:[%s9 + $0xf8] sm:$0xff]
      %v4819 = vld [vmem:[%s10] sm:$0x3]
      %v4821 = vlaneseq
      %v4822 = vshrl.u32 %v4821, 7
      %v4823 = vsub.s32 0, %v4822
      %v4824 = vrot.slane %v4819, %v4823
      %v4825 = vlaneseq
      %v4826 = vshrl.u32 %v4825, 7
      %v4827 = vsub.s32 1, %v4826
      %v4828 = vrot.slane %v4819, %v4827
      %v4863 = vunpack.c.l.b16 %v4787
      %v4864 = vunpack.c.h.b16 %v4787
      %v4865 = vunpack.c.l.b16 %v4788
      %v4866 = vunpack.c.h.b16 %v4788
      %v4867 = vunpack.c.l.b16 %v4789
      %v4868 = vunpack.c.h.b16 %v4789
      %v4869 = vunpack.c.l.b16 %v4790
      %v4870 = vunpack.c.h.b16 %v4790
      %v4871 = vunpack.c.l.b16 %v4791
      %v4872 = vunpack.c.h.b16 %v4791
      %v4873 = vunpack.c.l.b16 %v4792
      %v4874 = vunpack.c.h.b16 %v4792
      %v4875 = vunpack.c.l.b16 %v4793
      %v4876 = vunpack.c.h.b16 %v4793
      %v4877 = vunpack.c.l.b16 %v4794
      %v4878 = vunpack.c.h.b16 %v4794
      %v4879 = vunpack.c.l.b16 %v4795
      %v4880 = vunpack.c.h.b16 %v4795
      %v4881 = vunpack.c.l.b16 %v4796
      %v4882 = vunpack.c.h.b16 %v4796
      %v4883 = vunpack.c.l.b16 %v4797
      %v4884 = vunpack.c.h.b16 %v4797
      %v4885 = vunpack.c.l.b16 %v4798
      %v4886 = vunpack.c.h.b16 %v4798
      %v4887 = vunpack.c.l.b16 %v4799
      %v4888 = vunpack.c.h.b16 %v4799
      %v4889 = vunpack.c.l.b16 %v4800
      %v4890 = vunpack.c.h.b16 %v4800
      %v4891 = vunpack.c.l.b16 %v4801
      %v4892 = vunpack.c.h.b16 %v4801
      %v4893 = vunpack.c.l.b16 %v4802
      %v4894 = vunpack.c.h.b16 %v4802
      %v4895 = vunpack.c.l.b16 %v4803
      %v4896 = vunpack.c.h.b16 %v4803
      %v4897 = vunpack.c.l.b16 %v4804
      %v4898 = vunpack.c.h.b16 %v4804
      %v4899 = vunpack.c.l.b16 %v4805
      %v4900 = vunpack.c.h.b16 %v4805
      %v4901 = vunpack.c.l.b16 %v4806
      %v4902 = vunpack.c.h.b16 %v4806
      %v4903 = vunpack.c.l.b16 %v4807
      %v4904 = vunpack.c.h.b16 %v4807
      %v4905 = vunpack.c.l.b16 %v4808
      %v4906 = vunpack.c.h.b16 %v4808
      %v4907 = vunpack.c.l.b16 %v4809
      %v4908 = vunpack.c.h.b16 %v4809
      %v4909 = vunpack.c.l.b16 %v4810
      %v4910 = vunpack.c.h.b16 %v4810
      %v4911 = vunpack.c.l.b16 %v4811
      %v4912 = vunpack.c.h.b16 %v4811
      %v4913 = vunpack.c.l.b16 %v4812
      %v4914 = vunpack.c.h.b16 %v4812
      %v4915 = vunpack.c.l.b16 %v4813
      %v4916 = vunpack.c.h.b16 %v4813
      %v4917 = vunpack.c.l.b16 %v4814
      %v4918 = vunpack.c.h.b16 %v4814
      %v4919 = vunpack.c.l.b16 %v4815
      %v4920 = vunpack.c.h.b16 %v4815
      %v4921 = vunpack.c.l.b16 %v4816
      %v4922 = vunpack.c.h.b16 %v4816
      %v4923 = vunpack.c.l.b16 %v4817
      %v4924 = vunpack.c.h.b16 %v4817
      %v4925 = vunpack.c.l.b16 %v4818
      %v4926 = vunpack.c.h.b16 %v4818
      %v4927 = vpack.c.b16 %v4865, %v4863
      %v4928 = vpack.c.b16 %v4866, %v4864
      %v4929 = vpack.c.b16 %v4869, %v4867
      %v4930 = vpack.c.b16 %v4870, %v4868
      %v4931 = vpack.c.b16 %v4873, %v4871
      %v4932 = vpack.c.b16 %v4874, %v4872
      %v4933 = vpack.c.b16 %v4877, %v4875
      %v4934 = vpack.c.b16 %v4878, %v4876
      %v4935 = vpack.c.b16 %v4881, %v4879
      %v4936 = vpack.c.b16 %v4882, %v4880
      %v4937 = vpack.c.b16 %v4885, %v4883
      %v4938 = vpack.c.b16 %v4886, %v4884
      %v4939 = vpack.c.b16 %v4889, %v4887
      %v4940 = vpack.c.b16 %v4890, %v4888
      %v4941 = vpack.c.b16 %v4893, %v4891
      %v4942 = vpack.c.b16 %v4894, %v4892
      %v4943 = vpack.c.b16 %v4897, %v4895
      %v4944 = vpack.c.b16 %v4898, %v4896
      %v4945 = vpack.c.b16 %v4901, %v4899
      %v4946 = vpack.c.b16 %v4902, %v4900
      %v4947 = vpack.c.b16 %v4905, %v4903
      %v4948 = vpack.c.b16 %v4906, %v4904
      %v4949 = vpack.c.b16 %v4909, %v4907
      %v4950 = vpack.c.b16 %v4910, %v4908
      %v4951 = vpack.c.b16 %v4913, %v4911
      %v4952 = vpack.c.b16 %v4914, %v4912
      %v4953 = vpack.c.b16 %v4917, %v4915
      %v4954 = vpack.c.b16 %v4918, %v4916
      %v4955 = vpack.c.b16 %v4921, %v4919
      %v4956 = vpack.c.b16 %v4922, %v4920
      %v4957 = vpack.c.b16 %v4925, %v4923
      %v4958 = vpack.c.b16 %v4926, %v4924
      %4991 = vmatprep.subr.bf16.mxu0 %v4928
      %4992 = vmatpush1.bf16.msra.mxu0 %v4927
      %4993 = vmatprep.subr.bf16.mxu0 %v4930
      %4994 = vmatpush1.bf16.msra.mxu0 %v4929
      %4995 = vmatprep.subr.bf16.mxu0 %v4932
      %4996 = vmatpush1.bf16.msra.mxu0 %v4931
      %4997 = vmatprep.subr.bf16.mxu0 %v4934
      %4998 = vmatpush1.bf16.msra.mxu0 %v4933
      %4999 = vmatprep.subr.bf16.mxu0 %v4936
      %5000 = vmatpush1.bf16.msra.mxu0 %v4935
      %5001 = vmatprep.subr.bf16.mxu0 %v4938
      %5002 = vmatpush1.bf16.msra.mxu0 %v4937
      %5003 = vmatprep.subr.bf16.mxu0 %v4940
      %5004 = vmatpush1.bf16.msra.mxu0 %v4939
      %5005 = vmatprep.subr.bf16.mxu0 %v4942
      %5006 = vmatpush1.bf16.msra.mxu0 %v4941
      %5007 = vmatprep.subr.bf16.mxu0 %v4944
      %5008 = vmatpush1.bf16.msra.mxu0 %v4943
      %5009 = vmatprep.subr.bf16.mxu0 %v4946
      %5010 = vmatpush1.bf16.msra.mxu0 %v4945
      %5011 = vmatprep.subr.bf16.mxu0 %v4948
      %5012 = vmatpush1.bf16.msra.mxu0 %v4947
      %5013 = vmatprep.subr.bf16.mxu0 %v4950
      %5014 = vmatpush1.bf16.msra.mxu0 %v4949
      %5015 = vmatprep.subr.bf16.mxu0 %v4952
      %5016 = vmatpush1.bf16.msra.mxu0 %v4951
      %5017 = vmatprep.subr.bf16.mxu0 %v4954
      %5018 = vmatpush1.bf16.msra.mxu0 %v4953
      %5019 = vmatprep.subr.bf16.mxu0 %v4956
      %5020 = vmatpush1.bf16.msra.mxu0 %v4955
      %5021 = vmatprep.subr.bf16.mxu0 %v4958
      %5022 = vmatpush1.bf16.msra.mxu0 %v4957
      %5023 = vmatprep.mubr.bf16.mxu0 %v4724
      %5024 = vmatmul.mubr.bf16.gmra.mrb[0].mxu0 %v4723
      %v5025 = vpop.f32.mrb[0].mxu0
      %v5026 = vadd.f32 %v4824, %v5025
      %v5027 = vpop.f32.mrb[0].mxu0
      %v5028 = vadd.f32 %v4828, %v5027
      %v5029 = vpop.f32.mrb[0].mxu0
      %v5030 = vadd.f32 %v4824, %v5029
      %v5031 = vpop.f32.mrb[0].mxu0
      %v5032 = vadd.f32 %v4828, %v5031
      %5033 = vmatprep.mubr.bf16.mxu0 %v4726
      %5034 = vmatmul.mubr.bf16.gmra.mrb[0].mxu0 %v4725
      %v5035 = vpop.f32.mrb[0].mxu0
      %v5036 = vadd.f32 %v4824, %v5035
      %v5037 = vpop.f32.mrb[0].mxu0
      %v5038 = vadd.f32 %v4828, %v5037
      %v5039 = vpop.f32.mrb[0].mxu0
      %v5040 = vadd.f32 %v4824, %v5039
      %v5041 = vpop.f32.mrb[0].mxu0
      %v5042 = vadd.f32 %v4828, %v5041
      %5043 = vmatprep.mubr.bf16.mxu0 %v4728
      %5044 = vmatmul.mubr.bf16.gmra.mrb[0].mxu0 %v4727
      %v5045 = vpop.f32.mrb[0].mxu0
      %v5046 = vadd.f32 %v4824, %v5045
      %v5047 = vpop.f32.mrb[0].mxu0
      %v5048 = vadd.f32 %v4828, %v5047
      %v5049 = vpop.f32.mrb[0].mxu0
      %v5050 = vadd.f32 %v4824, %v5049
      %v5051 = vpop.f32.mrb[0].mxu0
      %v5052 = vadd.f32 %v4828, %v5051
      %5053 = vmatprep.mubr.bf16.mxu0 %v4730
      %5054 = vmatmul.mubr.bf16.gmra.mrb[0].mxu0 %v4729
      %v5055 = vpop.f32.mrb[0].mxu0
      %v5056 = vadd.f32 %v4824, %v5055
      %v5057 = vpop.f32.mrb[0].mxu0
      %v5058 = vadd.f32 %v4828, %v5057
      %v5059 = vpop.f32.mrb[0].mxu0
      %v5060 = vadd.f32 %v4824, %v5059
      %v5061 = vpop.f32.mrb[0].mxu0
      %v5062 = vadd.f32 %v4828, %v5061
      %5063 = vmatprep.mubr.bf16.mxu0 %v4732
      %5064 = vmatmul.mubr.bf16.gmra.mrb[0].mxu0 %v4731
      %v5065 = vpop.f32.mrb[0].mxu0
      %v5066 = vadd.f32 %v4824, %v5065
      %v5067 = vpop.f32.mrb[0].mxu0
      %v5068 = vadd.f32 %v4828, %v5067
      %v5069 = vpop.f32.mrb[0].mxu0
      %v5070 = vadd.f32 %v4824, %v5069
      %v5071 = vpop.f32.mrb[0].mxu0
      %v5072 = vadd.f32 %v4828, %v5071
      %5073 = vmatprep.mubr.bf16.mxu0 %v4734
      %5074 = vmatmul.mubr.bf16.gmra.mrb[0].mxu0 %v4733
      %v5075 = vpop.f32.mrb[0].mxu0
      %v5076 = vadd.f32 %v4824, %v5075
      %v5077 = vpop.f32.mrb[0].mxu0
      %v5078 = vadd.f32 %v4828, %v5077
      %v5079 = vpop.f32.mrb[0].mxu0
      %v5080 = vadd.f32 %v4824, %v5079
      %v5081 = vpop.f32.mrb[0].mxu0
      %v5082 = vadd.f32 %v4828, %v5081
      %5083 = vmatprep.mubr.bf16.mxu0 %v4736
      %5084 = vmatmul.mubr.bf16.gmra.mrb[0].mxu0 %v4735
      %v5085 = vpop.f32.mrb[0].mxu0
      %v5086 = vadd.f32 %v4824, %v5085
      %v5087 = vpop.f32.mrb[0].mxu0
      %v5088 = vadd.f32 %v4828, %v5087
      %v5089 = vpop.f32.mrb[0].mxu0
      %v5090 = vadd.f32 %v4824, %v5089
      %v5091 = vpop.f32.mrb[0].mxu0
      %v5092 = vadd.f32 %v4828, %v5091
      %5093 = vmatprep.mubr.bf16.mxu0 %v4738
      %5094 = vmatmul.mubr.bf16.gmra.mrb[0].mxu0 %v4737
      %v5095 = vpop.f32.mrb[0].mxu0
      %v5096 = vadd.f32 %v4824, %v5095
      %v5097 = vpop.f32.mrb[0].mxu0
      %v5098 = vadd.f32 %v4828, %v5097
      %v5099 = vpop.f32.mrb[0].mxu0
      %v5100 = vadd.f32 %v4824, %v5099
      %v5101 = vpop.f32.mrb[0].mxu0
      %v5102 = vadd.f32 %v4828, %v5101
      %5103 = vmatprep.mubr.bf16.mxu0 %v4740
      %5104 = vmatmul.mubr.bf16.gmra.mrb[0].mxu0 %v4739
      %v5105 = vpop.f32.mrb[0].mxu0
      %v5106 = vadd.f32 %v4824, %v5105
      %v5107 = vpop.f32.mrb[0].mxu0
      %v5108 = vadd.f32 %v4828, %v5107
      %v5109 = vpop.f32.mrb[0].mxu0
      %v5110 = vadd.f32 %v4824, %v5109
      %v5111 = vpop.f32.mrb[0].mxu0
      %v5112 = vadd.f32 %v4828, %v5111
      %5113 = vmatprep.mubr.bf16.mxu0 %v4742
      %5114 = vmatmul.mubr.bf16.gmra.mrb[0].mxu0 %v4741
      %v5115 = vpop.f32.mrb[0].mxu0
      %v5116 = vadd.f32 %v4824, %v5115
      %v5117 = vpop.f32.mrb[0].mxu0
      %v5118 = vadd.f32 %v4828, %v5117
      %v5119 = vpop.f32.mrb[0].mxu0
      %v5120 = vadd.f32 %v4824, %v5119
      %v5121 = vpop.f32.mrb[0].mxu0
      %v5122 = vadd.f32 %v4828, %v5121
      %5123 = vmatprep.mubr.bf16.mxu0 %v4744
      %5124 = vmatmul.mubr.bf16.gmra.mrb[0].mxu0 %v4743
      %v5125 = vpop.f32.mrb[0].mxu0
      %v5126 = vadd.f32 %v4824, %v5125
      %v5127 = vpop.f32.mrb[0].mxu0
      %v5128 = vadd.f32 %v4828, %v5127
      %v5129 = vpop.f32.mrb[0].mxu0
      %v5130 = vadd.f32 %v4824, %v5129
      %v5131 = vpop.f32.mrb[0].mxu0
      %v5132 = vadd.f32 %v4828, %v5131
      %5133 = vmatprep.mubr.bf16.mxu0 %v4746
      %5134 = vmatmul.mubr.bf16.gmra.mrb[0].mxu0 %v4745
      %v5135 = vpop.f32.mrb[0].mxu0
      %v5136 = vadd.f32 %v4824, %v5135
      %v5137 = vpop.f32.mrb[0].mxu0
      %v5138 = vadd.f32 %v4828, %v5137
      %v5139 = vpop.f32.mrb[0].mxu0
      %v5140 = vadd.f32 %v4824, %v5139
      %v5141 = vpop.f32.mrb[0].mxu0
      %v5142 = vadd.f32 %v4828, %v5141
      %5143 = vmatprep.mubr.bf16.mxu0 %v4748
      %5144 = vmatmul.mubr.bf16.gmra.mrb[0].mxu0 %v4747
      %v5145 = vpop.f32.mrb[0].mxu0
      %v5146 = vadd.f32 %v4824, %v5145
      %v5147 = vpop.f32.mrb[0].mxu0
      %v5148 = vadd.f32 %v4828, %v5147
      %v5149 = vpop.f32.mrb[0].mxu0
      %v5150 = vadd.f32 %v4824, %v5149
      %v5151 = vpop.f32.mrb[0].mxu0
      %v5152 = vadd.f32 %v4828, %v5151
      %5153 = vmatprep.mubr.bf16.mxu0 %v4750
      %5154 = vmatmul.mubr.bf16.gmra.mrb[0].mxu0 %v4749
      %v5155 = vpop.f32.mrb[0].mxu0
      %v5156 = vadd.f32 %v4824, %v5155
      %v5157 = vpop.f32.mrb[0].mxu0
      %v5158 = vadd.f32 %v4828, %v5157
      %v5159 = vpop.f32.mrb[0].mxu0
      %v5160 = vadd.f32 %v4824, %v5159
      %v5161 = vpop.f32.mrb[0].mxu0
      %v5162 = vadd.f32 %v4828, %v5161
      %5163 = vmatprep.mubr.bf16.mxu0 %v4752
      %5164 = vmatmul.mubr.bf16.gmra.mrb[0].mxu0 %v4751
      %v5165 = vpop.f32.mrb[0].mxu0
      %v5166 = vadd.f32 %v4824, %v5165
      %v5167 = vpop.f32.mrb[0].mxu0
      %v5168 = vadd.f32 %v4828, %v5167
      %v5169 = vpop.f32.mrb[0].mxu0
      %v5170 = vadd.f32 %v4824, %v5169
      %v5171 = vpop.f32.mrb[0].mxu0
      %v5172 = vadd.f32 %v4828, %v5171
      %5173 = vmatprep.mubr.bf16.mxu0 %v4754
      %5174 = vmatmul.mubr.bf16.gmra.mrb[0].mxu0 %v4753
      %v5175 = vpop.f32.mrb[0].mxu0
      %v5176 = vadd.f32 %v4824, %v5175
      %v5177 = vpop.f32.mrb[0].mxu0
      %v5178 = vadd.f32 %v4828, %v5177
      %v5179 = vpop.f32.mrb[0].mxu0
      %v5180 = vadd.f32 %v4824, %v5179
      %v5181 = vpop.f32.mrb[0].mxu0
      %v5182 = vadd.f32 %v4828, %v5181
      %5183 = vmatprep.mubr.bf16.mxu0 %v4756
      %5184 = vmatmul.mubr.bf16.gmra.mrb[0].mxu0 %v4755
      %v5185 = vpop.f32.mrb[0].mxu0
      %v5186 = vadd.f32 %v4824, %v5185
      %v5187 = vpop.f32.mrb[0].mxu0
      %v5188 = vadd.f32 %v4828, %v5187
      %v5189 = vpop.f32.mrb[0].mxu0
      %v5190 = vadd.f32 %v4824, %v5189
      %v5191 = vpop.f32.mrb[0].mxu0
      %v5192 = vadd.f32 %v4828, %v5191
      %5193 = vmatprep.mubr.bf16.mxu0 %v4758
      %5194 = vmatmul.mubr.bf16.gmra.mrb[0].mxu0 %v4757
      %v5195 = vpop.f32.mrb[0].mxu0
      %v5196 = vadd.f32 %v4824, %v5195
      %v5197 = vpop.f32.mrb[0].mxu0
      %v5198 = vadd.f32 %v4828, %v5197
      %v5199 = vpop.f32.mrb[0].mxu0
      %v5200 = vadd.f32 %v4824, %v5199
      %v5201 = vpop.f32.mrb[0].mxu0
      %v5202 = vadd.f32 %v4828, %v5201
      %5203 = vmatprep.mubr.bf16.mxu0 %v4760
      %5204 = vmatmul.mubr.bf16.gmra.mrb[0].mxu0 %v4759
      %v5205 = vpop.f32.mrb[0].mxu0
      %v5206 = vadd.f32 %v4824, %v5205
      %v5207 = vpop.f32.mrb[0].mxu0
      %v5208 = vadd.f32 %v4828, %v5207
      %v5209 = vpop.f32.mrb[0].mxu0
      %v5210 = vadd.f32 %v4824, %v5209
      %v5211 = vpop.f32.mrb[0].mxu0
      %v5212 = vadd.f32 %v4828, %v5211
      %5213 = vmatprep.mubr.bf16.mxu0 %v4762
      %5214 = vmatmul.mubr.bf16.gmra.mrb[0].mxu0 %v4761
      %v5215 = vpop.f32.mrb[0].mxu0
      %v5216 = vadd.f32 %v4824, %v5215
      %v5217 = vpop.f32.mrb[0].mxu0
      %v5218 = vadd.f32 %v4828, %v5217
      %v5219 = vpop.f32.mrb[0].mxu0
      %v5220 = vadd.f32 %v4824, %v5219
      %v5221 = vpop.f32.mrb[0].mxu0
      %v5222 = vadd.f32 %v4828, %v5221
      %5223 = vmatprep.mubr.bf16.mxu0 %v4764
      %5224 = vmatmul.mubr.bf16.gmra.mrb[0].mxu0 %v4763
      %v5225 = vpop.f32.mrb[0].mxu0
      %v5226 = vadd.f32 %v4824, %v5225
      %v5227 = vpop.f32.mrb[0].mxu0
      %v5228 = vadd.f32 %v4828, %v5227
      %v5229 = vpop.f32.mrb[0].mxu0
      %v5230 = vadd.f32 %v4824, %v5229
      %v5231 = vpop.f32.mrb[0].mxu0
      %v5232 = vadd.f32 %v4828, %v5231
      %5233 = vmatprep.mubr.bf16.mxu0 %v4766
      %5234 = vmatmul.mubr.bf16.gmra.mrb[0].mxu0 %v4765
      %v5235 = vpop.f32.mrb[0].mxu0
      %v5236 = vadd.f32 %v4824, %v5235
      %v5237 = vpop.f32.mrb[0].mxu0
      %v5238 = vadd.f32 %v4828, %v5237
      %v5239 = vpop.f32.mrb[0].mxu0
      %v5240 = vadd.f32 %v4824, %v5239
      %v5241 = vpop.f32.mrb[0].mxu0
      %v5242 = vadd.f32 %v4828, %v5241
      %5243 = vmatprep.mubr.bf16.mxu0 %v4768
      %5244 = vmatmul.mubr.bf16.gmra.mrb[0].mxu0 %v4767
      %v5245 = vpop.f32.mrb[0].mxu0
      %v5246 = vadd.f32 %v4824, %v5245
      %v5247 = vpop.f32.mrb[0].mxu0
      %v5248 = vadd.f32 %v4828, %v5247
      %v5249 = vpop.f32.mrb[0].mxu0
      %v5250 = vadd.f32 %v4824, %v5249
      %v5251 = vpop.f32.mrb[0].mxu0
      %v5252 = vadd.f32 %v4828, %v5251
      %5253 = vmatprep.mubr.bf16.mxu0 %v4770
      %5254 = vmatmul.mubr.bf16.gmra.mrb[0].mxu0 %v4769
      %v5255 = vpop.f32.mrb[0].mxu0
      %v5256 = vadd.f32 %v4824, %v5255
      %v5257 = vpop.f32.mrb[0].mxu0
      %v5258 = vadd.f32 %v4828, %v5257
      %v5259 = vpop.f32.mrb[0].mxu0
      %v5260 = vadd.f32 %v4824, %v5259
      %v5261 = vpop.f32.mrb[0].mxu0
      %v5262 = vadd.f32 %v4828, %v5261
      %5263 = vmatprep.mubr.bf16.mxu0 %v4772
      %5264 = vmatmul.mubr.bf16.gmra.mrb[0].mxu0 %v4771
      %v5265 = vpop.f32.mrb[0].mxu0
      %v5266 = vadd.f32 %v4824, %v5265
      %v5267 = vpop.f32.mrb[0].mxu0
      %v5268 = vadd.f32 %v4828, %v5267
      %v5269 = vpop.f32.mrb[0].mxu0
      %v5270 = vadd.f32 %v4824, %v5269
      %v5271 = vpop.f32.mrb[0].mxu0
      %v5272 = vadd.f32 %v4828, %v5271
      %5273 = vmatprep.mubr.bf16.mxu0 %v4774
      %5274 = vmatmul.mubr.bf16.gmra.mrb[0].mxu0 %v4773
      %v5275 = vpop.f32.mrb[0].mxu0
      %v5276 = vadd.f32 %v4824, %v5275
      %v5277 = vpop.f32.mrb[0].mxu0
      %v5278 = vadd.f32 %v4828, %v5277
      %v5279 = vpop.f32.mrb[0].mxu0
      %v5280 = vadd.f32 %v4824, %v5279
      %v5281 = vpop.f32.mrb[0].mxu0
      %v5282 = vadd.f32 %v4828, %v5281
      %5283 = vmatprep.mubr.bf16.mxu0 %v4776
      %5284 = vmatmul.mubr.bf16.gmra.mrb[0].mxu0 %v4775
      %v5285 = vpop.f32.mrb[0].mxu0
      %v5286 = vadd.f32 %v4824, %v5285
      %v5287 = vpop.f32.mrb[0].mxu0
      %v5288 = vadd.f32 %v4828, %v5287
      %v5289 = vpop.f32.mrb[0].mxu0
      %v5290 = vadd.f32 %v4824, %v5289
      %v5291 = vpop.f32.mrb[0].mxu0
      %v5292 = vadd.f32 %v4828, %v5291
      %5293 = vmatprep.mubr.bf16.mxu0 %v4778
      %5294 = vmatmul.mubr.bf16.gmra.mrb[0].mxu0 %v4777
      %v5295 = vpop.f32.mrb[0].mxu0
      %v5296 = vadd.f32 %v4824, %v5295
      %v5297 = vpop.f32.mrb[0].mxu0
      %v5298 = vadd.f32 %v4828, %v5297
      %v5299 = vpop.f32.mrb[0].mxu0
      %v5300 = vadd.f32 %v4824, %v5299
      %v5301 = vpop.f32.mrb[0].mxu0
      %v5302 = vadd.f32 %v4828, %v5301
      %5303 = vmatprep.mubr.bf16.mxu0 %v4780
      %5304 = vmatmul.mubr.bf16.gmra.mrb[0].mxu0 %v4779
      %v5305 = vpop.f32.mrb[0].mxu0
      %v5306 = vadd.f32 %v4824, %v5305
      %v5307 = vpop.f32.mrb[0].mxu0
      %v5308 = vadd.f32 %v4828, %v5307
      %v5309 = vpop.f32.mrb[0].mxu0
      %v5310 = vadd.f32 %v4824, %v5309
      %v5311 = vpop.f32.mrb[0].mxu0
      %v5312 = vadd.f32 %v4828, %v5311
      %5313 = vmatprep.mubr.bf16.mxu0 %v4782
      %5314 = vmatmul.mubr.bf16.gmra.mrb[0].mxu0 %v4781
      %v5315 = vpop.f32.mrb[0].mxu0
      %v5316 = vadd.f32 %v4824, %v5315
      %v5317 = vpop.f32.mrb[0].mxu0
      %v5318 = vadd.f32 %v4828, %v5317
      %v5319 = vpop.f32.mrb[0].mxu0
      %v5320 = vadd.f32 %v4824, %v5319
      %v5321 = vpop.f32.mrb[0].mxu0
      %v5322 = vadd.f32 %v4828, %v5321
      %5323 = vmatprep.mubr.bf16.mxu0 %v4784
      %5324 = vmatmul.mubr.bf16.gmra.mrb[0].mxu0 %v4783
      %v5325 = vpop.f32.mrb[0].mxu0
      %v5326 = vadd.f32 %v4824, %v5325
      %v5327 = vpop.f32.mrb[0].mxu0
      %v5328 = vadd.f32 %v4828, %v5327
      %v5329 = vpop.f32.mrb[0].mxu0
      %v5330 = vadd.f32 %v4824, %v5329
      %v5331 = vpop.f32.mrb[0].mxu0
      %v5332 = vadd.f32 %v4828, %v5331
      %5333 = vmatprep.mubr.bf16.mxu0 %v4786
      %5334 = vmatmul.mubr.bf16.gmra.mrb[0].mxu0 %v4785
      %v5335 = vpop.f32.mrb[0].mxu0
      %v5336 = vadd.f32 %v4824, %v5335
      %v5337 = vpop.f32.mrb[0].mxu0
      %v5338 = vadd.f32 %v4828, %v5337
      %v5339 = vpop.f32.mrb[0].mxu0
      %v5340 = vadd.f32 %v4824, %v5339
      %v5341 = vpop.f32.mrb[0].mxu0
      %v5342 = vadd.f32 %v4828, %v5341
      %5343 = vdwg.mxu0
      %v5344 = vmax.f32 %v5026, 0.0
      %v5345 = vmax.f32 %v5028, 0.0
      %v5346 = vmax.f32 %v5030, 0.0
      %v5347 = vmax.f32 %v5032, 0.0
      %v5348 = vmax.f32 %v5036, 0.0
      %v5349 = vmax.f32 %v5038, 0.0
      %v5350 = vmax.f32 %v5040, 0.0
      %v5351 = vmax.f32 %v5042, 0.0
      %v5352 = vmax.f32 %v5046, 0.0
      %v5353 = vmax.f32 %v5048, 0.0
      %v5354 = vmax.f32 %v5050, 0.0
      %v5355 = vmax.f32 %v5052, 0.0
      %v5356 = vmax.f32 %v5056, 0.0
      %v5357 = vmax.f32 %v5058, 0.0
      %v5358 = vmax.f32 %v5060, 0.0
      %v5359 = vmax.f32 %v5062, 0.0
      %v5360 = vmax.f32 %v5066, 0.0
      %v5361 = vmax.f32 %v5068, 0.0
      %v5362 = vmax.f32 %v5070, 0.0
      %v5363 = vmax.f32 %v5072, 0.0
      %v5364 = vmax.f32 %v5076, 0.0
      %v5365 = vmax.f32 %v5078, 0.0
      %v5366 = vmax.f32 %v5080, 0.0
      %v5367 = vmax.f32 %v5082, 0.0
      %v5368 = vmax.f32 %v5086, 0.0
      %v5369 = vmax.f32 %v5088, 0.0
      %v5370 = vmax.f32 %v5090, 0.0
      %v5371 = vmax.f32 %v5092, 0.0
      %v5372 = vmax.f32 %v5096, 0.0
      %v5373 = vmax.f32 %v5098, 0.0
      %v5374 = vmax.f32 %v5100, 0.0
      %v5375 = vmax.f32 %v5102, 0.0
      %v5376 = vmax.f32 %v5106, 0.0
      %v5377 = vmax.f32 %v5108, 0.0
      %v5378 = vmax.f32 %v5110, 0.0
      %v5379 = vmax.f32 %v5112, 0.0
      %v5380 = vmax.f32 %v5116, 0.0
      %v5381 = vmax.f32 %v5118, 0.0
      %v5382 = vmax.f32 %v5120, 0.0
      %v5383 = vmax.f32 %v5122, 0.0
      %v5384 = vmax.f32 %v5126, 0.0
      %v5385 = vmax.f32 %v5128, 0.0
      %v5386 = vmax.f32 %v5130, 0.0
      %v5387 = vmax.f32 %v5132, 0.0
      %v5388 = vmax.f32 %v5136, 0.0
      %v5389 = vmax.f32 %v5138, 0.0
      %v5390 = vmax.f32 %v5140, 0.0
      %v5391 = vmax.f32 %v5142, 0.0
      %v5392 = vmax.f32 %v5146, 0.0
      %v5393 = vmax.f32 %v5148, 0.0
      %v5394 = vmax.f32 %v5150, 0.0
      %v5395 = vmax.f32 %v5152, 0.0
      %v5396 = vmax.f32 %v5156, 0.0
      %v5397 = vmax.f32 %v5158, 0.0
      %v5398 = vmax.f32 %v5160, 0.0
      %v5399 = vmax.f32 %v5162, 0.0
      %v5400 = vmax.f32 %v5166, 0.0
      %v5401 = vmax.f32 %v5168, 0.0
      %v5402 = vmax.f32 %v5170, 0.0
      %v5403 = vmax.f32 %v5172, 0.0
      %v5404 = vmax.f32 %v5176, 0.0
      %v5405 = vmax.f32 %v5178, 0.0
      %v5406 = vmax.f32 %v5180, 0.0
      %v5407 = vmax.f32 %v5182, 0.0
      %v5408 = vmax.f32 %v5186, 0.0
      %v5409 = vmax.f32 %v5188, 0.0
      %v5410 = vmax.f32 %v5190, 0.0
      %v5411 = vmax.f32 %v5192, 0.0
      %v5412 = vmax.f32 %v5196, 0.0
      %v5413 = vmax.f32 %v5198, 0.0
      %v5414 = vmax.f32 %v5200, 0.0
      %v5415 = vmax.f32 %v5202, 0.0
      %v5416 = vmax.f32 %v5206, 0.0
      %v5417 = vmax.f32 %v5208, 0.0
      %v5418 = vmax.f32 %v5210, 0.0
      %v5419 = vmax.f32 %v5212, 0.0
      %v5420 = vmax.f32 %v5216, 0.0
      %v5421 = vmax.f32 %v5218, 0.0
      %v5422 = vmax.f32 %v5220, 0.0
      %v5423 = vmax.f32 %v5222, 0.0
      %v5424 = vmax.f32 %v5226, 0.0
      %v5425 = vmax.f32 %v5228, 0.0
      %v5426 = vmax.f32 %v5230, 0.0
      %v5427 = vmax.f32 %v5232, 0.0
      %v5428 = vmax.f32 %v5236, 0.0
      %v5429 = vmax.f32 %v5238, 0.0
      %v5430 = vmax.f32 %v5240, 0.0
      %v5431 = vmax.f32 %v5242, 0.0
      %v5432 = vmax.f32 %v5246, 0.0
      %v5433 = vmax.f32 %v5248, 0.0
      %v5434 = vmax.f32 %v5250, 0.0
      %v5435 = vmax.f32 %v5252, 0.0
      %v5436 = vmax.f32 %v5256, 0.0
      %v5437 = vmax.f32 %v5258, 0.0
      %v5438 = vmax.f32 %v5260, 0.0
      %v5439 = vmax.f32 %v5262, 0.0
      %v5440 = vmax.f32 %v5266, 0.0
      %v5441 = vmax.f32 %v5268, 0.0
      %v5442 = vmax.f32 %v5270, 0.0
      %v5443 = vmax.f32 %v5272, 0.0
      %v5444 = vmax.f32 %v5276, 0.0
      %v5445 = vmax.f32 %v5278, 0.0
      %v5446 = vmax.f32 %v5280, 0.0
      %v5447 = vmax.f32 %v5282, 0.0
      %v5448 = vmax.f32 %v5286, 0.0
      %v5449 = vmax.f32 %v5288, 0.0
      %v5450 = vmax.f32 %v5290, 0.0
      %v5451 = vmax.f32 %v5292, 0.0
      %v5452 = vmax.f32 %v5296, 0.0
      %v5453 = vmax.f32 %v5298, 0.0
      %v5454 = vmax.f32 %v5300, 0.0
      %v5455 = vmax.f32 %v5302, 0.0
      %v5456 = vmax.f32 %v5306, 0.0
      %v5457 = vmax.f32 %v5308, 0.0
      %v5458 = vmax.f32 %v5310, 0.0
      %v5459 = vmax.f32 %v5312, 0.0
      %v5460 = vmax.f32 %v5316, 0.0
      %v5461 = vmax.f32 %v5318, 0.0
      %v5462 = vmax.f32 %v5320, 0.0
      %v5463 = vmax.f32 %v5322, 0.0
      %v5464 = vmax.f32 %v5326, 0.0
      %v5465 = vmax.f32 %v5328, 0.0
      %v5466 = vmax.f32 %v5330, 0.0
      %v5467 = vmax.f32 %v5332, 0.0
      %v5468 = vmax.f32 %v5336, 0.0
      %v5469 = vmax.f32 %v5338, 0.0
      %v5470 = vmax.f32 %v5340, 0.0
      %v5471 = vmax.f32 %v5342, 0.0
      %v5472 = vld [vmem:[%s13] sm:$0x3]
      %v5473 = vld [vmem:[%s11] ss:$4 sm:$0x3]
      %v5475 = vlaneseq
      %v5476 = vshrl.u32 %v5475, 7
      %v5477 = vsub.s32 0, %v5476
      %v5478 = vrot.slane %v5473, %v5477
      %v5479 = vlaneseq
      %v5480 = vshrl.u32 %v5479, 7
      %v5481 = vsub.s32 1, %v5480
      %v5482 = vrot.slane %v5473, %v5481
      %v5485 = vmul.f32 %v701, %v5478
      %v5486 = vmul.f32 %v701, %v5482
      %v5487 = vmul.f32 %v706, %v5478
      %v5488 = vmul.f32 %v706, %v5482
      %v5489 = vmul.f32 %v711, %v5478
      %v5490 = vmul.f32 %v711, %v5482
      %v5491 = vmul.f32 %v716, %v5478
      %v5492 = vmul.f32 %v716, %v5482
      %v5493 = vmul.f32 %v721, %v5478
      %v5494 = vmul.f32 %v721, %v5482
      %v5495 = vmul.f32 %v726, %v5478
      %v5496 = vmul.f32 %v726, %v5482
      %v5497 = vmul.f32 %v731, %v5478
      %v5498 = vmul.f32 %v731, %v5482
      %v5499 = vmul.f32 %v736, %v5478
      %v5500 = vmul.f32 %v736, %v5482
      %v5501 = vmul.f32 %v741, %v5478
      %v5502 = vmul.f32 %v741, %v5482
      %v5503 = vmul.f32 %v746, %v5478
      %v5504 = vmul.f32 %v746, %v5482
      %v5505 = vmul.f32 %v751, %v5478
      %v5506 = vmul.f32 %v751, %v5482
      %v5507 = vmul.f32 %v756, %v5478
      %v5508 = vmul.f32 %v756, %v5482
      %v5509 = vmul.f32 %v761, %v5478
      %v5510 = vmul.f32 %v761, %v5482
      %v5511 = vmul.f32 %v766, %v5478
      %v5512 = vmul.f32 %v766, %v5482
      %v5513 = vmul.f32 %v771, %v5478
      %v5514 = vmul.f32 %v771, %v5482
      %v5515 = vmul.f32 %v776, %v5478
      %v5516 = vmul.f32 %v776, %v5482
      %v5517 = vmul.f32 %v781, %v5478
      %v5518 = vmul.f32 %v781, %v5482
      %v5519 = vmul.f32 %v786, %v5478
      %v5520 = vmul.f32 %v786, %v5482
      %v5521 = vmul.f32 %v791, %v5478
      %v5522 = vmul.f32 %v791, %v5482
      %v5523 = vmul.f32 %v796, %v5478
      %v5524 = vmul.f32 %v796, %v5482
      %v5525 = vmul.f32 %v801, %v5478
      %v5526 = vmul.f32 %v801, %v5482
      %v5527 = vmul.f32 %v806, %v5478
      %v5528 = vmul.f32 %v806, %v5482
      %v5529 = vmul.f32 %v811, %v5478
      %v5530 = vmul.f32 %v811, %v5482
      %v5531 = vmul.f32 %v816, %v5478
      %v5532 = vmul.f32 %v816, %v5482
      %v5533 = vmul.f32 %v821, %v5478
      %v5534 = vmul.f32 %v821, %v5482
      %v5535 = vmul.f32 %v826, %v5478
      %v5536 = vmul.f32 %v826, %v5482
      %v5537 = vmul.f32 %v831, %v5478
      %v5538 = vmul.f32 %v831, %v5482
      %v5539 = vmul.f32 %v836, %v5478
      %v5540 = vmul.f32 %v836, %v5482
      %v5541 = vmul.f32 %v841, %v5478
      %v5542 = vmul.f32 %v841, %v5482
      %v5543 = vmul.f32 %v846, %v5478
      %v5544 = vmul.f32 %v846, %v5482
      %v5545 = vmul.f32 %v851, %v5478
      %v5546 = vmul.f32 %v851, %v5482
      %v5547 = vmul.f32 %v856, %v5478
      %v5548 = vmul.f32 %v856, %v5482
      %v5549 = vmul.f32 %v861, %v5478
      %v5550 = vmul.f32 %v861, %v5482
      %v5551 = vmul.f32 %v866, %v5478
      %v5552 = vmul.f32 %v866, %v5482
      %v5553 = vmul.f32 %v871, %v5478
      %v5554 = vmul.f32 %v871, %v5482
      %v5555 = vmul.f32 %v876, %v5478
      %v5556 = vmul.f32 %v876, %v5482
      %v5557 = vmul.f32 %v881, %v5478
      %v5558 = vmul.f32 %v881, %v5482
      %v5559 = vmul.f32 %v886, %v5478
      %v5560 = vmul.f32 %v886, %v5482
      %v5561 = vmul.f32 %v891, %v5478
      %v5562 = vmul.f32 %v891, %v5482
      %v5563 = vmul.f32 %v896, %v5478
      %v5564 = vmul.f32 %v896, %v5482
      %v5565 = vmul.f32 %v901, %v5478
      %v5566 = vmul.f32 %v901, %v5482
      %v5567 = vmul.f32 %v906, %v5478
      %v5568 = vmul.f32 %v906, %v5482
      %v5569 = vmul.f32 %v911, %v5478
      %v5570 = vmul.f32 %v911, %v5482
      %v5571 = vmul.f32 %v916, %v5478
      %v5572 = vmul.f32 %v916, %v5482
      %v5573 = vmul.f32 %v921, %v5478
      %v5574 = vmul.f32 %v921, %v5482
      %v5575 = vmul.f32 %v926, %v5478
      %v5576 = vmul.f32 %v926, %v5482
      %v5577 = vmul.f32 %v931, %v5478
      %v5578 = vmul.f32 %v931, %v5482
      %v5579 = vmul.f32 %v936, %v5478
      %v5580 = vmul.f32 %v936, %v5482
      %v5581 = vmul.f32 %v941, %v5478
      %v5582 = vmul.f32 %v941, %v5482
      %v5583 = vmul.f32 %v946, %v5478
      %v5584 = vmul.f32 %v946, %v5482
      %v5585 = vmul.f32 %v951, %v5478
      %v5586 = vmul.f32 %v951, %v5482
      %v5587 = vmul.f32 %v956, %v5478
      %v5588 = vmul.f32 %v956, %v5482
      %v5589 = vmul.f32 %v961, %v5478
      %v5590 = vmul.f32 %v961, %v5482
      %v5591 = vmul.f32 %v966, %v5478
      %v5592 = vmul.f32 %v966, %v5482
      %v5593 = vmul.f32 %v971, %v5478
      %v5594 = vmul.f32 %v971, %v5482
      %v5595 = vmul.f32 %v976, %v5478
      %v5596 = vmul.f32 %v976, %v5482
      %v5597 = vmul.f32 %v981, %v5478
      %v5598 = vmul.f32 %v981, %v5482
      %v5599 = vmul.f32 %v986, %v5478
      %v5600 = vmul.f32 %v986, %v5482
      %v5601 = vmul.f32 %v991, %v5478
      %v5602 = vmul.f32 %v991, %v5482
      %v5603 = vmul.f32 %v996, %v5478
      %v5604 = vmul.f32 %v996, %v5482
      %v5605 = vmul.f32 %v1001, %v5478
      %v5606 = vmul.f32 %v1001, %v5482
      %v5607 = vmul.f32 %v1006, %v5478
      %v5608 = vmul.f32 %v1006, %v5482
      %v5609 = vmul.f32 %v1011, %v5478
      %v5610 = vmul.f32 %v1011, %v5482
      %v5611 = vmul.f32 %v1016, %v5478
      %v5612 = vmul.f32 %v1016, %v5482
      %v5614 = vlaneseq
      %v5615 = vshrl.u32 %v5614, 7
      %v5616 = vsub.s32 0, %v5615
      %v5617 = vrot.slane %v5472, %v5616
      %v5618 = vlaneseq
      %v5619 = vshrl.u32 %v5618, 7
      %v5620 = vsub.s32 1, %v5619
      %v5621 = vrot.slane %v5472, %v5620
      %v5624 = vadd.f32 %v5617, %v5485
      %v5625 = vadd.f32 %v5621, %v5486
      %v5626 = vadd.f32 %v5617, %v5487
      %v5627 = vadd.f32 %v5621, %v5488
      %v5628 = vadd.f32 %v5617, %v5489
      %v5629 = vadd.f32 %v5621, %v5490
      %v5630 = vadd.f32 %v5617, %v5491
      %v5631 = vadd.f32 %v5621, %v5492
      %v5632 = vadd.f32 %v5617, %v5493
      %v5633 = vadd.f32 %v5621, %v5494
      %v5634 = vadd.f32 %v5617, %v5495
      %v5635 = vadd.f32 %v5621, %v5496
      %v5636 = vadd.f32 %v5617, %v5497
      %v5637 = vadd.f32 %v5621, %v5498
      %v5638 = vadd.f32 %v5617, %v5499
      %v5639 = vadd.f32 %v5621, %v5500
      %v5640 = vadd.f32 %v5617, %v5501
      %v5641 = vadd.f32 %v5621, %v5502
      %v5642 = vadd.f32 %v5617, %v5503
      %v5643 = vadd.f32 %v5621, %v5504
      %v5644 = vadd.f32 %v5617, %v5505
      %v5645 = vadd.f32 %v5621, %v5506
      %v5646 = vadd.f32 %v5617, %v5507
      %v5647 = vadd.f32 %v5621, %v5508
      %v5648 = vadd.f32 %v5617, %v5509
      %v5649 = vadd.f32 %v5621, %v5510
      %v5650 = vadd.f32 %v5617, %v5511
      %v5651 = vadd.f32 %v5621, %v5512
      %v5652 = vadd.f32 %v5617, %v5513
      %v5653 = vadd.f32 %v5621, %v5514
      %v5654 = vadd.f32 %v5617, %v5515
      %v5655 = vadd.f32 %v5621, %v5516
      %v5656 = vadd.f32 %v5617, %v5517
      %v5657 = vadd.f32 %v5621, %v5518
      %v5658 = vadd.f32 %v5617, %v5519
      %v5659 = vadd.f32 %v5621, %v5520
      %v5660 = vadd.f32 %v5617, %v5521
      %v5661 = vadd.f32 %v5621, %v5522
      %v5662 = vadd.f32 %v5617, %v5523
      %v5663 = vadd.f32 %v5621, %v5524
      %v5664 = vadd.f32 %v5617, %v5525
      %v5665 = vadd.f32 %v5621, %v5526
      %v5666 = vadd.f32 %v5617, %v5527
      %v5667 = vadd.f32 %v5621, %v5528
      %v5668 = vadd.f32 %v5617, %v5529
      %v5669 = vadd.f32 %v5621, %v5530
      %v5670 = vadd.f32 %v5617, %v5531
      %v5671 = vadd.f32 %v5621, %v5532
      %v5672 = vadd.f32 %v5617, %v5533
      %v5673 = vadd.f32 %v5621, %v5534
      %v5674 = vadd.f32 %v5617, %v5535
      %v5675 = vadd.f32 %v5621, %v5536
      %v5676 = vadd.f32 %v5617, %v5537
      %v5677 = vadd.f32 %v5621, %v5538
      %v5678 = vadd.f32 %v5617, %v5539
      %v5679 = vadd.f32 %v5621, %v5540
      %v5680 = vadd.f32 %v5617, %v5541
      %v5681 = vadd.f32 %v5621, %v5542
      %v5682 = vadd.f32 %v5617, %v5543
      %v5683 = vadd.f32 %v5621, %v5544
      %v5684 = vadd.f32 %v5617, %v5545
      %v5685 = vadd.f32 %v5621, %v5546
      %v5686 = vadd.f32 %v5617, %v5547
      %v5687 = vadd.f32 %v5621, %v5548
      %v5688 = vadd.f32 %v5617, %v5549
      %v5689 = vadd.f32 %v5621, %v5550
      %v5690 = vadd.f32 %v5617, %v5551
      %v5691 = vadd.f32 %v5621, %v5552
      %v5692 = vadd.f32 %v5617, %v5553
      %v5693 = vadd.f32 %v5621, %v5554
      %v5694 = vadd.f32 %v5617, %v5555
      %v5695 = vadd.f32 %v5621, %v5556
      %v5696 = vadd.f32 %v5617, %v5557
      %v5697 = vadd.f32 %v5621, %v5558
      %v5698 = vadd.f32 %v5617, %v5559
      %v5699 = vadd.f32 %v5621, %v5560
      %v5700 = vadd.f32 %v5617, %v5561
      %v5701 = vadd.f32 %v5621, %v5562
      %v5702 = vadd.f32 %v5617, %v5563
      %v5703 = vadd.f32 %v5621, %v5564
      %v5704 = vadd.f32 %v5617, %v5565
      %v5705 = vadd.f32 %v5621, %v5566
      %v5706 = vadd.f32 %v5617, %v5567
      %v5707 = vadd.f32 %v5621, %v5568
      %v5708 = vadd.f32 %v5617, %v5569
      %v5709 = vadd.f32 %v5621, %v5570
      %v5710 = vadd.f32 %v5617, %v5571
      %v5711 = vadd.f32 %v5621, %v5572
      %v5712 = vadd.f32 %v5617, %v5573
      %v5713 = vadd.f32 %v5621, %v5574
      %v5714 = vadd.f32 %v5617, %v5575
      %v5715 = vadd.f32 %v5621, %v5576
      %v5716 = vadd.f32 %v5617, %v5577
      %v5717 = vadd.f32 %v5621, %v5578
      %v5718 = vadd.f32 %v5617, %v5579
      %v5719 = vadd.f32 %v5621, %v5580
      %v5720 = vadd.f32 %v5617, %v5581
      %v5721 = vadd.f32 %v5621, %v5582
      %v5722 = vadd.f32 %v5617, %v5583
      %v5723 = vadd.f32 %v5621, %v5584
      %v5724 = vadd.f32 %v5617, %v5585
      %v5725 = vadd.f32 %v5621, %v5586
      %v5726 = vadd.f32 %v5617, %v5587
      %v5727 = vadd.f32 %v5621, %v5588
      %v5728 = vadd.f32 %v5617, %v5589
      %v5729 = vadd.f32 %v5621, %v5590
      %v5730 = vadd.f32 %v5617, %v5591
      %v5731 = vadd.f32 %v5621, %v5592
      %v5732 = vadd.f32 %v5617, %v5593
      %v5733 = vadd.f32 %v5621, %v5594
      %v5734 = vadd.f32 %v5617, %v5595
      %v5735 = vadd.f32 %v5621, %v5596
      %v5736 = vadd.f32 %v5617, %v5597
      %v5737 = vadd.f32 %v5621, %v5598
      %v5738 = vadd.f32 %v5617, %v5599
      %v5739 = vadd.f32 %v5621, %v5600
      %v5740 = vadd.f32 %v5617, %v5601
      %v5741 = vadd.f32 %v5621, %v5602
      %v5742 = vadd.f32 %v5617, %v5603
      %v5743 = vadd.f32 %v5621, %v5604
      %v5744 = vadd.f32 %v5617, %v5605
      %v5745 = vadd.f32 %v5621, %v5606
      %v5746 = vadd.f32 %v5617, %v5607
      %v5747 = vadd.f32 %v5621, %v5608
      %v5748 = vadd.f32 %v5617, %v5609
      %v5749 = vadd.f32 %v5621, %v5610
      %v5750 = vadd.f32 %v5617, %v5611
      %v5751 = vadd.f32 %v5621, %v5612
      %s5752 = scalar_lea.vmem %s11, 1
      %v5753 = vld [vmem:[%s5752] ss:$4 sm:$0x3]
      %v5755 = vlaneseq
      %v5756 = vshrl.u32 %v5755, 7
      %v5757 = vsub.s32 0, %v5756
      %v5758 = vrot.slane %v5753, %v5757
      %v5759 = vlaneseq
      %v5760 = vshrl.u32 %v5759, 7
      %v5761 = vsub.s32 1, %v5760
      %v5762 = vrot.slane %v5753, %v5761
      %v5765 = vmul.f32 %v1020, %v5758
      %v5766 = vmul.f32 %v1020, %v5762
      %v5767 = vmul.f32 %v1024, %v5758
      %v5768 = vmul.f32 %v1024, %v5762
      %v5769 = vmul.f32 %v1028, %v5758
      %v5770 = vmul.f32 %v1028, %v5762
      %v5771 = vmul.f32 %v1032, %v5758
      %v5772 = vmul.f32 %v1032, %v5762
      %v5773 = vmul.f32 %v1036, %v5758
      %v5774 = vmul.f32 %v1036, %v5762
      %v5775 = vmul.f32 %v1040, %v5758
      %v5776 = vmul.f32 %v1040, %v5762
      %v5777 = vmul.f32 %v1044, %v5758
      %v5778 = vmul.f32 %v1044, %v5762
      %v5779 = vmul.f32 %v1048, %v5758
      %v5780 = vmul.f32 %v1048, %v5762
      %v5781 = vmul.f32 %v1052, %v5758
      %v5782 = vmul.f32 %v1052, %v5762
      %v5783 = vmul.f32 %v1056, %v5758
      %v5784 = vmul.f32 %v1056, %v5762
      %v5785 = vmul.f32 %v1060, %v5758
      %v5786 = vmul.f32 %v1060, %v5762
      %v5787 = vmul.f32 %v1064, %v5758
      %v5788 = vmul.f32 %v1064, %v5762
      %v5789 = vmul.f32 %v1068, %v5758
      %v5790 = vmul.f32 %v1068, %v5762
      %v5791 = vmul.f32 %v1072, %v5758
      %v5792 = vmul.f32 %v1072, %v5762
      %v5793 = vmul.f32 %v1076, %v5758
      %v5794 = vmul.f32 %v1076, %v5762
      %v5795 = vmul.f32 %v1080, %v5758
      %v5796 = vmul.f32 %v1080, %v5762
      %v5797 = vmul.f32 %v1084, %v5758
      %v5798 = vmul.f32 %v1084, %v5762
      %v5799 = vmul.f32 %v1088, %v5758
      %v5800 = vmul.f32 %v1088, %v5762
      %v5801 = vmul.f32 %v1092, %v5758
      %v5802 = vmul.f32 %v1092, %v5762
      %v5803 = vmul.f32 %v1096, %v5758
      %v5804 = vmul.f32 %v1096, %v5762
      %v5805 = vmul.f32 %v1100, %v5758
      %v5806 = vmul.f32 %v1100, %v5762
      %v5807 = vmul.f32 %v1104, %v5758
      %v5808 = vmul.f32 %v1104, %v5762
      %v5809 = vmul.f32 %v1108, %v5758
      %v5810 = vmul.f32 %v1108, %v5762
      %v5811 = vmul.f32 %v1112, %v5758
      %v5812 = vmul.f32 %v1112, %v5762
      %v5813 = vmul.f32 %v1116, %v5758
      %v5814 = vmul.f32 %v1116, %v5762
      %v5815 = vmul.f32 %v1120, %v5758
      %v5816 = vmul.f32 %v1120, %v5762
      %v5817 = vmul.f32 %v1124, %v5758
      %v5818 = vmul.f32 %v1124, %v5762
      %v5819 = vmul.f32 %v1128, %v5758
      %v5820 = vmul.f32 %v1128, %v5762
      %v5821 = vmul.f32 %v1132, %v5758
      %v5822 = vmul.f32 %v1132, %v5762
      %v5823 = vmul.f32 %v1136, %v5758
      %v5824 = vmul.f32 %v1136, %v5762
      %v5825 = vmul.f32 %v1140, %v5758
      %v5826 = vmul.f32 %v1140, %v5762
      %v5827 = vmul.f32 %v1144, %v5758
      %v5828 = vmul.f32 %v1144, %v5762
      %v5829 = vmul.f32 %v1148, %v5758
      %v5830 = vmul.f32 %v1148, %v5762
      %v5831 = vmul.f32 %v1152, %v5758
      %v5832 = vmul.f32 %v1152, %v5762
      %v5833 = vmul.f32 %v1156, %v5758
      %v5834 = vmul.f32 %v1156, %v5762
      %v5835 = vmul.f32 %v1160, %v5758
      %v5836 = vmul.f32 %v1160, %v5762
      %v5837 = vmul.f32 %v1164, %v5758
      %v5838 = vmul.f32 %v1164, %v5762
      %v5839 = vmul.f32 %v1168, %v5758
      %v5840 = vmul.f32 %v1168, %v5762
      %v5841 = vmul.f32 %v1172, %v5758
      %v5842 = vmul.f32 %v1172, %v5762
      %v5843 = vmul.f32 %v1176, %v5758
      %v5844 = vmul.f32 %v1176, %v5762
      %v5845 = vmul.f32 %v1180, %v5758
      %v5846 = vmul.f32 %v1180, %v5762
      %v5847 = vmul.f32 %v1184, %v5758
      %v5848 = vmul.f32 %v1184, %v5762
      %v5849 = vmul.f32 %v1188, %v5758
      %v5850 = vmul.f32 %v1188, %v5762
      %v5851 = vmul.f32 %v1192, %v5758
      %v5852 = vmul.f32 %v1192, %v5762
      %v5853 = vmul.f32 %v1196, %v5758
      %v5854 = vmul.f32 %v1196, %v5762
      %v5855 = vmul.f32 %v1200, %v5758
      %v5856 = vmul.f32 %v1200, %v5762
      %v5857 = vmul.f32 %v1204, %v5758
      %v5858 = vmul.f32 %v1204, %v5762
      %v5859 = vmul.f32 %v1208, %v5758
      %v5860 = vmul.f32 %v1208, %v5762
      %v5861 = vmul.f32 %v1212, %v5758
      %v5862 = vmul.f32 %v1212, %v5762
      %v5863 = vmul.f32 %v1216, %v5758
      %v5864 = vmul.f32 %v1216, %v5762
      %v5865 = vmul.f32 %v1220, %v5758
      %v5866 = vmul.f32 %v1220, %v5762
      %v5867 = vmul.f32 %v1224, %v5758
      %v5868 = vmul.f32 %v1224, %v5762
      %v5869 = vmul.f32 %v1228, %v5758
      %v5870 = vmul.f32 %v1228, %v5762
      %v5871 = vmul.f32 %v1232, %v5758
      %v5872 = vmul.f32 %v1232, %v5762
      %v5873 = vmul.f32 %v1236, %v5758
      %v5874 = vmul.f32 %v1236, %v5762
      %v5875 = vmul.f32 %v1240, %v5758
      %v5876 = vmul.f32 %v1240, %v5762
      %v5877 = vmul.f32 %v1244, %v5758
      %v5878 = vmul.f32 %v1244, %v5762
      %v5879 = vmul.f32 %v1248, %v5758
      %v5880 = vmul.f32 %v1248, %v5762
      %v5881 = vmul.f32 %v1252, %v5758
      %v5882 = vmul.f32 %v1252, %v5762
      %v5883 = vmul.f32 %v1256, %v5758
      %v5884 = vmul.f32 %v1256, %v5762
      %v5885 = vmul.f32 %v1260, %v5758
      %v5886 = vmul.f32 %v1260, %v5762
      %v5887 = vmul.f32 %v1264, %v5758
      %v5888 = vmul.f32 %v1264, %v5762
      %v5889 = vmul.f32 %v1268, %v5758
      %v5890 = vmul.f32 %v1268, %v5762
      %v5891 = vmul.f32 %v1272, %v5758
      %v5892 = vmul.f32 %v1272, %v5762
      %v5893 = vadd.f32 %v5624, %v5765
      %v5894 = vadd.f32 %v5625, %v5766
      %v5895 = vadd.f32 %v5626, %v5767
      %v5896 = vadd.f32 %v5627, %v5768
      %v5897 = vadd.f32 %v5628, %v5769
      %v5898 = vadd.f32 %v5629, %v5770
      %v5899 = vadd.f32 %v5630, %v5771
      %v5900 = vadd.f32 %v5631, %v5772
      %v5901 = vadd.f32 %v5632, %v5773
      %v5902 = vadd.f32 %v5633, %v5774
      %v5903 = vadd.f32 %v5634, %v5775
      %v5904 = vadd.f32 %v5635, %v5776
      %v5905 = vadd.f32 %v5636, %v5777
      %v5906 = vadd.f32 %v5637, %v5778
      %v5907 = vadd.f32 %v5638, %v5779
      %v5908 = vadd.f32 %v5639, %v5780
      %v5909 = vadd.f32 %v5640, %v5781
      %v5910 = vadd.f32 %v5641, %v5782
      %v5911 = vadd.f32 %v5642, %v5783
      %v5912 = vadd.f32 %v5643, %v5784
      %v5913 = vadd.f32 %v5644, %v5785
      %v5914 = vadd.f32 %v5645, %v5786
      %v5915 = vadd.f32 %v5646, %v5787
      %v5916 = vadd.f32 %v5647, %v5788
      %v5917 = vadd.f32 %v5648, %v5789
      %v5918 = vadd.f32 %v5649, %v5790
      %v5919 = vadd.f32 %v5650, %v5791
      %v5920 = vadd.f32 %v5651, %v5792
      %v5921 = vadd.f32 %v5652, %v5793
      %v5922 = vadd.f32 %v5653, %v5794
      %v5923 = vadd.f32 %v5654, %v5795
      %v5924 = vadd.f32 %v5655, %v5796
      %v5925 = vadd.f32 %v5656, %v5797
      %v5926 = vadd.f32 %v5657, %v5798
      %v5927 = vadd.f32 %v5658, %v5799
      %v5928 = vadd.f32 %v5659, %v5800
      %v5929 = vadd.f32 %v5660, %v5801
      %v5930 = vadd.f32 %v5661, %v5802
      %v5931 = vadd.f32 %v5662, %v5803
      %v5932 = vadd.f32 %v5663, %v5804
      %v5933 = vadd.f32 %v5664, %v5805
      %v5934 = vadd.f32 %v5665, %v5806
      %v5935 = vadd.f32 %v5666, %v5807
      %v5936 = vadd.f32 %v5667, %v5808
      %v5937 = vadd.f32 %v5668, %v5809
      %v5938 = vadd.f32 %v5669, %v5810
      %v5939 = vadd.f32 %v5670, %v5811
      %v5940 = vadd.f32 %v5671, %v5812
      %v5941 = vadd.f32 %v5672, %v5813
      %v5942 = vadd.f32 %v5673, %v5814
      %v5943 = vadd.f32 %v5674, %v5815
      %v5944 = vadd.f32 %v5675, %v5816
      %v5945 = vadd.f32 %v5676, %v5817
      %v5946 = vadd.f32 %v5677, %v5818
      %v5947 = vadd.f32 %v5678, %v5819
      %v5948 = vadd.f32 %v5679, %v5820
      %v5949 = vadd.f32 %v5680, %v5821
      %v5950 = vadd.f32 %v5681, %v5822
      %v5951 = vadd.f32 %v5682, %v5823
      %v5952 = vadd.f32 %v5683, %v5824
      %v5953 = vadd.f32 %v5684, %v5825
      %v5954 = vadd.f32 %v5685, %v5826
      %v5955 = vadd.f32 %v5686, %v5827
      %v5956 = vadd.f32 %v5687, %v5828
      %v5957 = vadd.f32 %v5688, %v5829
      %v5958 = vadd.f32 %v5689, %v5830
      %v5959 = vadd.f32 %v5690, %v5831
      %v5960 = vadd.f32 %v5691, %v5832
      %v5961 = vadd.f32 %v5692, %v5833
      %v5962 = vadd.f32 %v5693, %v5834
      %v5963 = vadd.f32 %v5694, %v5835
      %v5964 = vadd.f32 %v5695, %v5836
      %v5965 = vadd.f32 %v5696, %v5837
      %v5966 = vadd.f32 %v5697, %v5838
      %v5967 = vadd.f32 %v5698, %v5839
      %v5968 = vadd.f32 %v5699, %v5840
      %v5969 = vadd.f32 %v5700, %v5841
      %v5970 = vadd.f32 %v5701, %v5842
      %v5971 = vadd.f32 %v5702, %v5843
      %v5972 = vadd.f32 %v5703, %v5844
      %v5973 = vadd.f32 %v5704, %v5845
      %v5974 = vadd.f32 %v5705, %v5846
      %v5975 = vadd.f32 %v5706, %v5847
      %v5976 = vadd.f32 %v5707, %v5848
      %v5977 = vadd.f32 %v5708, %v5849
      %v5978 = vadd.f32 %v5709, %v5850
      %v5979 = vadd.f32 %v5710, %v5851
      %v5980 = vadd.f32 %v5711, %v5852
      %v5981 = vadd.f32 %v5712, %v5853
      %v5982 = vadd.f32 %v5713, %v5854
      %v5983 = vadd.f32 %v5714, %v5855
      %v5984 = vadd.f32 %v5715, %v5856
      %v5985 = vadd.f32 %v5716, %v5857
      %v5986 = vadd.f32 %v5717, %v5858
      %v5987 = vadd.f32 %v5718, %v5859
      %v5988 = vadd.f32 %v5719, %v5860
      %v5989 = vadd.f32 %v5720, %v5861
      %v5990 = vadd.f32 %v5721, %v5862
      %v5991 = vadd.f32 %v5722, %v5863
      %v5992 = vadd.f32 %v5723, %v5864
      %v5993 = vadd.f32 %v5724, %v5865
      %v5994 = vadd.f32 %v5725, %v5866
      %v5995 = vadd.f32 %v5726, %v5867
      %v5996 = vadd.f32 %v5727, %v5868
      %v5997 = vadd.f32 %v5728, %v5869
      %v5998 = vadd.f32 %v5729, %v5870
      %v5999 = vadd.f32 %v5730, %v5871
      %v6000 = vadd.f32 %v5731, %v5872
      %v6001 = vadd.f32 %v5732, %v5873
      %v6002 = vadd.f32 %v5733, %v5874
      %v6003 = vadd.f32 %v5734, %v5875
      %v6004 = vadd.f32 %v5735, %v5876
      %v6005 = vadd.f32 %v5736, %v5877
      %v6006 = vadd.f32 %v5737, %v5878
      %v6007 = vadd.f32 %v5738, %v5879
      %v6008 = vadd.f32 %v5739, %v5880
      %v6009 = vadd.f32 %v5740, %v5881
      %v6010 = vadd.f32 %v5741, %v5882
      %v6011 = vadd.f32 %v5742, %v5883
      %v6012 = vadd.f32 %v5743, %v5884
      %v6013 = vadd.f32 %v5744, %v5885
      %v6014 = vadd.f32 %v5745, %v5886
      %v6015 = vadd.f32 %v5746, %v5887
      %v6016 = vadd.f32 %v5747, %v5888
      %v6017 = vadd.f32 %v5748, %v5889
      %v6018 = vadd.f32 %v5749, %v5890
      %v6019 = vadd.f32 %v5750, %v5891
      %v6020 = vadd.f32 %v5751, %v5892
      %s6021 = scalar_lea.vmem %s11, 2
      %v6022 = vld [vmem:[%s6021] ss:$4 sm:$0x3]
      %v6024 = vlaneseq
      %v6025 = vshrl.u32 %v6024, 7
      %v6026 = vsub.s32 0, %v6025
      %v6027 = vrot.slane %v6022, %v6026
      %v6028 = vlaneseq
      %v6029 = vshrl.u32 %v6028, 7
      %v6030 = vsub.s32 1, %v6029
      %v6031 = vrot.slane %v6022, %v6030
      %v6034 = vmul.f32 %v1276, %v6027
      %v6035 = vmul.f32 %v1276, %v6031
      %v6036 = vmul.f32 %v1280, %v6027
      %v6037 = vmul.f32 %v1280, %v6031
      %v6038 = vmul.f32 %v1284, %v6027
      %v6039 = vmul.f32 %v1284, %v6031
      %v6040 = vmul.f32 %v1288, %v6027
      %v6041 = vmul.f32 %v1288, %v6031
      %v6042 = vmul.f32 %v1292, %v6027
      %v6043 = vmul.f32 %v1292, %v6031
      %v6044 = vmul.f32 %v1296, %v6027
      %v6045 = vmul.f32 %v1296, %v6031
      %v6046 = vmul.f32 %v1300, %v6027
      %v6047 = vmul.f32 %v1300, %v6031
      %v6048 = vmul.f32 %v1304, %v6027
      %v6049 = vmul.f32 %v1304, %v6031
      %v6050 = vmul.f32 %v1308, %v6027
      %v6051 = vmul.f32 %v1308, %v6031
      %v6052 = vmul.f32 %v1312, %v6027
      %v6053 = vmul.f32 %v1312, %v6031
      %v6054 = vmul.f32 %v1316, %v6027
      %v6055 = vmul.f32 %v1316, %v6031
      %v6056 = vmul.f32 %v1320, %v6027
      %v6057 = vmul.f32 %v1320, %v6031
      %v6058 = vmul.f32 %v1324, %v6027
      %v6059 = vmul.f32 %v1324, %v6031
      %v6060 = vmul.f32 %v1328, %v6027
      %v6061 = vmul.f32 %v1328, %v6031
      %v6062 = vmul.f32 %v1332, %v6027
      %v6063 = vmul.f32 %v1332, %v6031
      %v6064 = vmul.f32 %v1336, %v6027
      %v6065 = vmul.f32 %v1336, %v6031
      %v6066 = vmul.f32 %v1340, %v6027
      %v6067 = vmul.f32 %v1340, %v6031
      %v6068 = vmul.f32 %v1344, %v6027
      %v6069 = vmul.f32 %v1344, %v6031
      %v6070 = vmul.f32 %v1348, %v6027
      %v6071 = vmul.f32 %v1348, %v6031
      %v6072 = vmul.f32 %v1352, %v6027
      %v6073 = vmul.f32 %v1352, %v6031
      %v6074 = vmul.f32 %v1356, %v6027
      %v6075 = vmul.f32 %v1356, %v6031
      %v6076 = vmul.f32 %v1360, %v6027
      %v6077 = vmul.f32 %v1360, %v6031
      %v6078 = vmul.f32 %v1364, %v6027
      %v6079 = vmul.f32 %v1364, %v6031
      %v6080 = vmul.f32 %v1368, %v6027
      %v6081 = vmul.f32 %v1368, %v6031
      %v6082 = vmul.f32 %v1372, %v6027
      %v6083 = vmul.f32 %v1372, %v6031
      %v6084 = vmul.f32 %v1376, %v6027
      %v6085 = vmul.f32 %v1376, %v6031
      %v6086 = vmul.f32 %v1380, %v6027
      %v6087 = vmul.f32 %v1380, %v6031
      %v6088 = vmul.f32 %v1384, %v6027
      %v6089 = vmul.f32 %v1384, %v6031
      %v6090 = vmul.f32 %v1388, %v6027
      %v6091 = vmul.f32 %v1388, %v6031
      %v6092 = vmul.f32 %v1392, %v6027
      %v6093 = vmul.f32 %v1392, %v6031
      %v6094 = vmul.f32 %v1396, %v6027
      %v6095 = vmul.f32 %v1396, %v6031
      %v6096 = vmul.f32 %v1400, %v6027
      %v6097 = vmul.f32 %v1400, %v6031
      %v6098 = vmul.f32 %v1404, %v6027
      %v6099 = vmul.f32 %v1404, %v6031
      %v6100 = vmul.f32 %v1408, %v6027
      %v6101 = vmul.f32 %v1408, %v6031
      %v6102 = vmul.f32 %v1412, %v6027
      %v6103 = vmul.f32 %v1412, %v6031
      %v6104 = vmul.f32 %v1416, %v6027
      %v6105 = vmul.f32 %v1416, %v6031
      %v6106 = vmul.f32 %v1420, %v6027
      %v6107 = vmul.f32 %v1420, %v6031
      %v6108 = vmul.f32 %v1424, %v6027
      %v6109 = vmul.f32 %v1424, %v6031
      %v6110 = vmul.f32 %v1428, %v6027
      %v6111 = vmul.f32 %v1428, %v6031
      %v6112 = vmul.f32 %v1432, %v6027
      %v6113 = vmul.f32 %v1432, %v6031
      %v6114 = vmul.f32 %v1436, %v6027
      %v6115 = vmul.f32 %v1436, %v6031
      %v6116 = vmul.f32 %v1440, %v6027
      %v6117 = vmul.f32 %v1440, %v6031
      %v6118 = vmul.f32 %v1444, %v6027
      %v6119 = vmul.f32 %v1444, %v6031
      %v6120 = vmul.f32 %v1448, %v6027
      %v6121 = vmul.f32 %v1448, %v6031
      %v6122 = vmul.f32 %v1452, %v6027
      %v6123 = vmul.f32 %v1452, %v6031
      %v6124 = vmul.f32 %v1456, %v6027
      %v6125 = vmul.f32 %v1456, %v6031
      %v6126 = vmul.f32 %v1460, %v6027
      %v6127 = vmul.f32 %v1460, %v6031
      %v6128 = vmul.f32 %v1464, %v6027
      %v6129 = vmul.f32 %v1464, %v6031
      %v6130 = vmul.f32 %v1468, %v6027
      %v6131 = vmul.f32 %v1468, %v6031
      %v6132 = vmul.f32 %v1472, %v6027
      %v6133 = vmul.f32 %v1472, %v6031
      %v6134 = vmul.f32 %v1476, %v6027
      %v6135 = vmul.f32 %v1476, %v6031
      %v6136 = vmul.f32 %v1480, %v6027
      %v6137 = vmul.f32 %v1480, %v6031
      %v6138 = vmul.f32 %v1484, %v6027
      %v6139 = vmul.f32 %v1484, %v6031
      %v6140 = vmul.f32 %v1488, %v6027
      %v6141 = vmul.f32 %v1488, %v6031
      %v6142 = vmul.f32 %v1492, %v6027
      %v6143 = vmul.f32 %v1492, %v6031
      %v6144 = vmul.f32 %v1496, %v6027
      %v6145 = vmul.f32 %v1496, %v6031
      %v6146 = vmul.f32 %v1500, %v6027
      %v6147 = vmul.f32 %v1500, %v6031
      %v6148 = vmul.f32 %v1504, %v6027
      %v6149 = vmul.f32 %v1504, %v6031
      %v6150 = vmul.f32 %v1508, %v6027
      %v6151 = vmul.f32 %v1508, %v6031
      %v6152 = vmul.f32 %v1512, %v6027
      %v6153 = vmul.f32 %v1512, %v6031
      %v6154 = vmul.f32 %v1516, %v6027
      %v6155 = vmul.f32 %v1516, %v6031
      %v6156 = vmul.f32 %v1520, %v6027
      %v6157 = vmul.f32 %v1520, %v6031
      %v6158 = vmul.f32 %v1524, %v6027
      %v6159 = vmul.f32 %v1524, %v6031
      %v6160 = vmul.f32 %v1528, %v6027
      %v6161 = vmul.f32 %v1528, %v6031
      %v6162 = vadd.f32 %v5893, %v6034
      %v6163 = vadd.f32 %v5894, %v6035
      %v6164 = vadd.f32 %v5895, %v6036
      %v6165 = vadd.f32 %v5896, %v6037
      %v6166 = vadd.f32 %v5897, %v6038
      %v6167 = vadd.f32 %v5898, %v6039
      %v6168 = vadd.f32 %v5899, %v6040
      %v6169 = vadd.f32 %v5900, %v6041
      %v6170 = vadd.f32 %v5901, %v6042
      %v6171 = vadd.f32 %v5902, %v6043
      %v6172 = vadd.f32 %v5903, %v6044
      %v6173 = vadd.f32 %v5904, %v6045
      %v6174 = vadd.f32 %v5905, %v6046
      %v6175 = vadd.f32 %v5906, %v6047
      %v6176 = vadd.f32 %v5907, %v6048
      %v6177 = vadd.f32 %v5908, %v6049
      %v6178 = vadd.f32 %v5909, %v6050
      %v6179 = vadd.f32 %v5910, %v6051
      %v6180 = vadd.f32 %v5911, %v6052
      %v6181 = vadd.f32 %v5912, %v6053
      %v6182 = vadd.f32 %v5913, %v6054
      %v6183 = vadd.f32 %v5914, %v6055
      %v6184 = vadd.f32 %v5915, %v6056
      %v6185 = vadd.f32 %v5916, %v6057
      %v6186 = vadd.f32 %v5917, %v6058
      %v6187 = vadd.f32 %v5918, %v6059
      %v6188 = vadd.f32 %v5919, %v6060
      %v6189 = vadd.f32 %v5920, %v6061
      %v6190 = vadd.f32 %v5921, %v6062
      %v6191 = vadd.f32 %v5922, %v6063
      %v6192 = vadd.f32 %v5923, %v6064
      %v6193 = vadd.f32 %v5924, %v6065
      %v6194 = vadd.f32 %v5925, %v6066
      %v6195 = vadd.f32 %v5926, %v6067
      %v6196 = vadd.f32 %v5927, %v6068
      %v6197 = vadd.f32 %v5928, %v6069
      %v6198 = vadd.f32 %v5929, %v6070
      %v6199 = vadd.f32 %v5930, %v6071
      %v6200 = vadd.f32 %v5931, %v6072
      %v6201 = vadd.f32 %v5932, %v6073
      %v6202 = vadd.f32 %v5933, %v6074
      %v6203 = vadd.f32 %v5934, %v6075
      %v6204 = vadd.f32 %v5935, %v6076
      %v6205 = vadd.f32 %v5936, %v6077
      %v6206 = vadd.f32 %v5937, %v6078
      %v6207 = vadd.f32 %v5938, %v6079
      %v6208 = vadd.f32 %v5939, %v6080
      %v6209 = vadd.f32 %v5940, %v6081
      %v6210 = vadd.f32 %v5941, %v6082
      %v6211 = vadd.f32 %v5942, %v6083
      %v6212 = vadd.f32 %v5943, %v6084
      %v6213 = vadd.f32 %v5944, %v6085
      %v6214 = vadd.f32 %v5945, %v6086
      %v6215 = vadd.f32 %v5946, %v6087
      %v6216 = vadd.f32 %v5947, %v6088
      %v6217 = vadd.f32 %v5948, %v6089
      %v6218 = vadd.f32 %v5949, %v6090
      %v6219 = vadd.f32 %v5950, %v6091
      %v6220 = vadd.f32 %v5951, %v6092
      %v6221 = vadd.f32 %v5952, %v6093
      %v6222 = vadd.f32 %v5953, %v6094
      %v6223 = vadd.f32 %v5954, %v6095
      %v6224 = vadd.f32 %v5955, %v6096
      %v6225 = vadd.f32 %v5956, %v6097
      %v6226 = vadd.f32 %v5957, %v6098
      %v6227 = vadd.f32 %v5958, %v6099
      %v6228 = vadd.f32 %v5959, %v6100
      %v6229 = vadd.f32 %v5960, %v6101
      %v6230 = vadd.f32 %v5961, %v6102
      %v6231 = vadd.f32 %v5962, %v6103
      %v6232 = vadd.f32 %v5963, %v6104
      %v6233 = vadd.f32 %v5964, %v6105
      %v6234 = vadd.f32 %v5965, %v6106
      %v6235 = vadd.f32 %v5966, %v6107
      %v6236 = vadd.f32 %v5967, %v6108
      %v6237 = vadd.f32 %v5968, %v6109
      %v6238 = vadd.f32 %v5969, %v6110
      %v6239 = vadd.f32 %v5970, %v6111
      %v6240 = vadd.f32 %v5971, %v6112
      %v6241 = vadd.f32 %v5972, %v6113
      %v6242 = vadd.f32 %v5973, %v6114
      %v6243 = vadd.f32 %v5974, %v6115
      %v6244 = vadd.f32 %v5975, %v6116
      %v6245 = vadd.f32 %v5976, %v6117
      %v6246 = vadd.f32 %v5977, %v6118
      %v6247 = vadd.f32 %v5978, %v6119
      %v6248 = vadd.f32 %v5979, %v6120
      %v6249 = vadd.f32 %v5980, %v6121
      %v6250 = vadd.f32 %v5981, %v6122
      %v6251 = vadd.f32 %v5982, %v6123
      %v6252 = vadd.f32 %v5983, %v6124
      %v6253 = vadd.f32 %v5984, %v6125
      %v6254 = vadd.f32 %v5985, %v6126
      %v6255 = vadd.f32 %v5986, %v6127
      %v6256 = vadd.f32 %v5987, %v6128
      %v6257 = vadd.f32 %v5988, %v6129
      %v6258 = vadd.f32 %v5989, %v6130
      %v6259 = vadd.f32 %v5990, %v6131
      %v6260 = vadd.f32 %v5991, %v6132
      %v6261 = vadd.f32 %v5992, %v6133
      %v6262 = vadd.f32 %v5993, %v6134
      %v6263 = vadd.f32 %v5994, %v6135
      %v6264 = vadd.f32 %v5995, %v6136
      %v6265 = vadd.f32 %v5996, %v6137
      %v6266 = vadd.f32 %v5997, %v6138
      %v6267 = vadd.f32 %v5998, %v6139
      %v6268 = vadd.f32 %v5999, %v6140
      %v6269 = vadd.f32 %v6000, %v6141
      %v6270 = vadd.f32 %v6001, %v6142
      %v6271 = vadd.f32 %v6002, %v6143
      %v6272 = vadd.f32 %v6003, %v6144
      %v6273 = vadd.f32 %v6004, %v6145
      %v6274 = vadd.f32 %v6005, %v6146
      %v6275 = vadd.f32 %v6006, %v6147
      %v6276 = vadd.f32 %v6007, %v6148
      %v6277 = vadd.f32 %v6008, %v6149
      %v6278 = vadd.f32 %v6009, %v6150
      %v6279 = vadd.f32 %v6010, %v6151
      %v6280 = vadd.f32 %v6011, %v6152
      %v6281 = vadd.f32 %v6012, %v6153
      %v6282 = vadd.f32 %v6013, %v6154
      %v6283 = vadd.f32 %v6014, %v6155
      %v6284 = vadd.f32 %v6015, %v6156
      %v6285 = vadd.f32 %v6016, %v6157
      %v6286 = vadd.f32 %v6017, %v6158
      %v6287 = vadd.f32 %v6018, %v6159
      %v6288 = vadd.f32 %v6019, %v6160
      %v6289 = vadd.f32 %v6020, %v6161
      %v6290 = vpack.c.bf16 %v5346, %v5344
      %v6291 = vpack.c.bf16 %v5347, %v5345
      %v6292 = vpack.c.bf16 %v5350, %v5348
      %v6293 = vpack.c.bf16 %v5351, %v5349
      %v6294 = vpack.c.bf16 %v5354, %v5352
      %v6295 = vpack.c.bf16 %v5355, %v5353
      %v6296 = vpack.c.bf16 %v5358, %v5356
      %v6297 = vpack.c.bf16 %v5359, %v5357
      %v6298 = vpack.c.bf16 %v5362, %v5360
      %v6299 = vpack.c.bf16 %v5363, %v5361
      %v6300 = vpack.c.bf16 %v5366, %v5364
      %v6301 = vpack.c.bf16 %v5367, %v5365
      %v6302 = vpack.c.bf16 %v5370, %v5368
      %v6303 = vpack.c.bf16 %v5371, %v5369
      %v6304 = vpack.c.bf16 %v5374, %v5372
      %v6305 = vpack.c.bf16 %v5375, %v5373
      %v6306 = vpack.c.bf16 %v5378, %v5376
      %v6307 = vpack.c.bf16 %v5379, %v5377
      %v6308 = vpack.c.bf16 %v5382, %v5380
      %v6309 = vpack.c.bf16 %v5383, %v5381
      %v6310 = vpack.c.bf16 %v5386, %v5384
      %v6311 = vpack.c.bf16 %v5387, %v5385
      %v6312 = vpack.c.bf16 %v5390, %v5388
      %v6313 = vpack.c.bf16 %v5391, %v5389
      %v6314 = vpack.c.bf16 %v5394, %v5392
      %v6315 = vpack.c.bf16 %v5395, %v5393
      %v6316 = vpack.c.bf16 %v5398, %v5396
      %v6317 = vpack.c.bf16 %v5399, %v5397
      %v6318 = vpack.c.bf16 %v5402, %v5400
      %v6319 = vpack.c.bf16 %v5403, %v5401
      %v6320 = vpack.c.bf16 %v5406, %v5404
      %v6321 = vpack.c.bf16 %v5407, %v5405
      %v6322 = vpack.c.bf16 %v5410, %v5408
      %v6323 = vpack.c.bf16 %v5411, %v5409
      %v6324 = vpack.c.bf16 %v5414, %v5412
      %v6325 = vpack.c.bf16 %v5415, %v5413
      %v6326 = vpack.c.bf16 %v5418, %v5416
      %v6327 = vpack.c.bf16 %v5419, %v5417
      %v6328 = vpack.c.bf16 %v5422, %v5420
      %v6329 = vpack.c.bf16 %v5423, %v5421
      %v6330 = vpack.c.bf16 %v5426, %v5424
      %v6331 = vpack.c.bf16 %v5427, %v5425
      %v6332 = vpack.c.bf16 %v5430, %v5428
      %v6333 = vpack.c.bf16 %v5431, %v5429
      %v6334 = vpack.c.bf16 %v5434, %v5432
      %v6335 = vpack.c.bf16 %v5435, %v5433
      %v6336 = vpack.c.bf16 %v5438, %v5436
      %v6337 = vpack.c.bf16 %v5439, %v5437
      %v6338 = vpack.c.bf16 %v5442, %v5440
      %v6339 = vpack.c.bf16 %v5443, %v5441
      %v6340 = vpack.c.bf16 %v5446, %v5444
      %v6341 = vpack.c.bf16 %v5447, %v5445
      %v6342 = vpack.c.bf16 %v5450, %v5448
      %v6343 = vpack.c.bf16 %v5451, %v5449
      %v6344 = vpack.c.bf16 %v5454, %v5452
      %v6345 = vpack.c.bf16 %v5455, %v5453
      %v6346 = vpack.c.bf16 %v5458, %v5456
      %v6347 = vpack.c.bf16 %v5459, %v5457
      %v6348 = vpack.c.bf16 %v5462, %v5460
      %v6349 = vpack.c.bf16 %v5463, %v5461
      %v6350 = vpack.c.bf16 %v5466, %v5464
      %v6351 = vpack.c.bf16 %v5467, %v5465
      %v6352 = vpack.c.bf16 %v5470, %v5468
      %v6353 = vpack.c.bf16 %v5471, %v5469
      %v6354 = vld [vmem:[%s12] sm:$0xff]
      %v6355 = vld [vmem:[%s12 + $0x8] sm:$0xff]
      %v6356 = vld [vmem:[%s12 + $0x10] sm:$0xff]
      %v6357 = vld [vmem:[%s12 + $0x18] sm:$0xff]
      %v6358 = vld [vmem:[%s12 + $0x20] sm:$0xff]
      %v6359 = vld [vmem:[%s12 + $0x28] sm:$0xff]
      %v6360 = vld [vmem:[%s12 + $0x30] sm:$0xff]
      %v6361 = vld [vmem:[%s12 + $0x38] sm:$0xff]
      %v6362 = vld [vmem:[%s12 + $0x40] sm:$0xff]
      %v6363 = vld [vmem:[%s12 + $0x48] sm:$0xff]
      %v6364 = vld [vmem:[%s12 + $0x50] sm:$0xff]
      %v6365 = vld [vmem:[%s12 + $0x58] sm:$0xff]
      %v6366 = vld [vmem:[%s12 + $0x60] sm:$0xff]
      %v6367 = vld [vmem:[%s12 + $0x68] sm:$0xff]
      %v6368 = vld [vmem:[%s12 + $0x70] sm:$0xff]
      %v6369 = vld [vmem:[%s12 + $0x78] sm:$0xff]
      %v6370 = vld [vmem:[%s12 + $0x80] sm:$0xff]
      %v6371 = vld [vmem:[%s12 + $0x88] sm:$0xff]
      %v6372 = vld [vmem:[%s12 + $0x90] sm:$0xff]
      %v6373 = vld [vmem:[%s12 + $0x98] sm:$0xff]
      %v6374 = vld [vmem:[%s12 + $0xa0] sm:$0xff]
      %v6375 = vld [vmem:[%s12 + $0xa8] sm:$0xff]
      %v6376 = vld [vmem:[%s12 + $0xb0] sm:$0xff]
      %v6377 = vld [vmem:[%s12 + $0xb8] sm:$0xff]
      %v6378 = vld [vmem:[%s12 + $0xc0] sm:$0xff]
      %v6379 = vld [vmem:[%s12 + $0xc8] sm:$0xff]
      %v6380 = vld [vmem:[%s12 + $0xd0] sm:$0xff]
      %v6381 = vld [vmem:[%s12 + $0xd8] sm:$0xff]
      %v6382 = vld [vmem:[%s12 + $0xe0] sm:$0xff]
      %v6383 = vld [vmem:[%s12 + $0xe8] sm:$0xff]
      %v6384 = vld [vmem:[%s12 + $0xf0] sm:$0xff]
      %v6385 = vld [vmem:[%s12 + $0xf8] sm:$0xff]
      %v6418 = vunpack.c.l.b16 %v6354
      %v6419 = vunpack.c.h.b16 %v6354
      %v6420 = vunpack.c.l.b16 %v6355
      %v6421 = vunpack.c.h.b16 %v6355
      %v6422 = vunpack.c.l.b16 %v6356
      %v6423 = vunpack.c.h.b16 %v6356
      %v6424 = vunpack.c.l.b16 %v6357
      %v6425 = vunpack.c.h.b16 %v6357
      %v6426 = vunpack.c.l.b16 %v6358
      %v6427 = vunpack.c.h.b16 %v6358
      %v6428 = vunpack.c.l.b16 %v6359
      %v6429 = vunpack.c.h.b16 %v6359
      %v6430 = vunpack.c.l.b16 %v6360
      %v6431 = vunpack.c.h.b16 %v6360
      %v6432 = vunpack.c.l.b16 %v6361
      %v6433 = vunpack.c.h.b16 %v6361
      %v6434 = vunpack.c.l.b16 %v6362
      %v6435 = vunpack.c.h.b16 %v6362
      %v6436 = vunpack.c.l.b16 %v6363
      %v6437 = vunpack.c.h.b16 %v6363
      %v6438 = vunpack.c.l.b16 %v6364
      %v6439 = vunpack.c.h.b16 %v6364
      %v6440 = vunpack.c.l.b16 %v6365
      %v6441 = vunpack.c.h.b16 %v6365
      %v6442 = vunpack.c.l.b16 %v6366
      %v6443 = vunpack.c.h.b16 %v6366
      %v6444 = vunpack.c.l.b16 %v6367
      %v6445 = vunpack.c.h.b16 %v6367
      %v6446 = vunpack.c.l.b16 %v6368
      %v6447 = vunpack.c.h.b16 %v6368
      %v6448 = vunpack.c.l.b16 %v6369
      %v6449 = vunpack.c.h.b16 %v6369
      %v6450 = vunpack.c.l.b16 %v6370
      %v6451 = vunpack.c.h.b16 %v6370
      %v6452 = vunpack.c.l.b16 %v6371
      %v6453 = vunpack.c.h.b16 %v6371
      %v6454 = vunpack.c.l.b16 %v6372
      %v6455 = vunpack.c.h.b16 %v6372
      %v6456 = vunpack.c.l.b16 %v6373
      %v6457 = vunpack.c.h.b16 %v6373
      %v6458 = vunpack.c.l.b16 %v6374
      %v6459 = vunpack.c.h.b16 %v6374
      %v6460 = vunpack.c.l.b16 %v6375
      %v6461 = vunpack.c.h.b16 %v6375
      %v6462 = vunpack.c.l.b16 %v6376
      %v6463 = vunpack.c.h.b16 %v6376
      %v6464 = vunpack.c.l.b16 %v6377
      %v6465 = vunpack.c.h.b16 %v6377
      %v6466 = vunpack.c.l.b16 %v6378
      %v6467 = vunpack.c.h.b16 %v6378
      %v6468 = vunpack.c.l.b16 %v6379
      %v6469 = vunpack.c.h.b16 %v6379
      %v6470 = vunpack.c.l.b16 %v6380
      %v6471 = vunpack.c.h.b16 %v6380
      %v6472 = vunpack.c.l.b16 %v6381
      %v6473 = vunpack.c.h.b16 %v6381
      %v6474 = vunpack.c.l.b16 %v6382
      %v6475 = vunpack.c.h.b16 %v6382
      %v6476 = vunpack.c.l.b16 %v6383
      %v6477 = vunpack.c.h.b16 %v6383
      %v6478 = vunpack.c.l.b16 %v6384
      %v6479 = vunpack.c.h.b16 %v6384
      %v6480 = vunpack.c.l.b16 %v6385
      %v6481 = vunpack.c.h.b16 %v6385
      %v6482 = vpack.c.b16 %v6420, %v6418
      %v6483 = vpack.c.b16 %v6421, %v6419
      %v6484 = vpack.c.b16 %v6424, %v6422
      %v6485 = vpack.c.b16 %v6425, %v6423
      %v6486 = vpack.c.b16 %v6428, %v6426
      %v6487 = vpack.c.b16 %v6429, %v6427
      %v6488 = vpack.c.b16 %v6432, %v6430
      %v6489 = vpack.c.b16 %v6433, %v6431
      %v6490 = vpack.c.b16 %v6436, %v6434
      %v6491 = vpack.c.b16 %v6437, %v6435
      %v6492 = vpack.c.b16 %v6440, %v6438
      %v6493 = vpack.c.b16 %v6441, %v6439
      %v6494 = vpack.c.b16 %v6444, %v6442
      %v6495 = vpack.c.b16 %v6445, %v6443
      %v6496 = vpack.c.b16 %v6448, %v6446
      %v6497 = vpack.c.b16 %v6449, %v6447
      %v6498 = vpack.c.b16 %v6452, %v6450
      %v6499 = vpack.c.b16 %v6453, %v6451
      %v6500 = vpack.c.b16 %v6456, %v6454
      %v6501 = vpack.c.b16 %v6457, %v6455
      %v6502 = vpack.c.b16 %v6460, %v6458
      %v6503 = vpack.c.b16 %v6461, %v6459
      %v6504 = vpack.c.b16 %v6464, %v6462
      %v6505 = vpack.c.b16 %v6465, %v6463
      %v6506 = vpack.c.b16 %v6468, %v6466
      %v6507 = vpack.c.b16 %v6469, %v6467
      %v6508 = vpack.c.b16 %v6472, %v6470
      %v6509 = vpack.c.b16 %v6473, %v6471
      %v6510 = vpack.c.b16 %v6476, %v6474
      %v6511 = vpack.c.b16 %v6477, %v6475
      %v6512 = vpack.c.b16 %v6480, %v6478
      %v6513 = vpack.c.b16 %v6481, %v6479
      %6546 = vmatprep.subr.bf16.mxu0 %v6483
      %6547 = vmatpush1.bf16.msra.mxu0 %v6482
      %6548 = vmatprep.subr.bf16.mxu0 %v6485
      %6549 = vmatpush1.bf16.msra.mxu0 %v6484
      %6550 = vmatprep.subr.bf16.mxu0 %v6487
      %6551 = vmatpush1.bf16.msra.mxu0 %v6486
      %6552 = vmatprep.subr.bf16.mxu0 %v6489
      %6553 = vmatpush1.bf16.msra.mxu0 %v6488
      %6554 = vmatprep.subr.bf16.mxu0 %v6491
      %6555 = vmatpush1.bf16.msra.mxu0 %v6490
      %6556 = vmatprep.subr.bf16.mxu0 %v6493
      %6557 = vmatpush1.bf16.msra.mxu0 %v6492
      %6558 = vmatprep.subr.bf16.mxu0 %v6495
      %6559 = vmatpush1.bf16.msra.mxu0 %v6494
      %6560 = vmatprep.subr.bf16.mxu0 %v6497
      %6561 = vmatpush1.bf16.msra.mxu0 %v6496
      %6562 = vmatprep.subr.bf16.mxu0 %v6499
      %6563 = vmatpush1.bf16.msra.mxu0 %v6498
      %6564 = vmatprep.subr.bf16.mxu0 %v6501
      %6565 = vmatpush1.bf16.msra.mxu0 %v6500
      %6566 = vmatprep.subr.bf16.mxu0 %v6503
      %6567 = vmatpush1.bf16.msra.mxu0 %v6502
      %6568 = vmatprep.subr.bf16.mxu0 %v6505
      %6569 = vmatpush1.bf16.msra.mxu0 %v6504
      %6570 = vmatprep.subr.bf16.mxu0 %v6507
      %6571 = vmatpush1.bf16.msra.mxu0 %v6506
      %6572 = vmatprep.subr.bf16.mxu0 %v6509
      %6573 = vmatpush1.bf16.msra.mxu0 %v6508
      %6574 = vmatprep.subr.bf16.mxu0 %v6511
      %6575 = vmatpush1.bf16.msra.mxu0 %v6510
      %6576 = vmatprep.subr.bf16.mxu0 %v6513
      %6577 = vmatpush1.bf16.msra.mxu0 %v6512
      %6578 = vmatprep.mubr.bf16.mxu0 %v6291
      %6579 = vmatmul.mubr.bf16.gmra.mrb[0].mxu0 %v6290
      %v6580 = vpop.f32.mrb[0].mxu0
      %v6581 = vadd.f32 0.0, %v6580
      %v6582 = vpop.f32.mrb[0].mxu0
      %v6583 = vadd.f32 0.0, %v6582
      %v6584 = vpop.f32.mrb[0].mxu0
      %v6585 = vadd.f32 0.0, %v6584
      %v6586 = vpop.f32.mrb[0].mxu0
      %v6587 = vadd.f32 0.0, %v6586
      %6588 = vmatprep.mubr.bf16.mxu0 %v6293
      %6589 = vmatmul.mubr.bf16.gmra.mrb[0].mxu0 %v6292
      %v6590 = vpop.f32.mrb[0].mxu0
      %v6591 = vadd.f32 0.0, %v6590
      %v6592 = vpop.f32.mrb[0].mxu0
      %v6593 = vadd.f32 0.0, %v6592
      %v6594 = vpop.f32.mrb[0].mxu0
      %v6595 = vadd.f32 0.0, %v6594
      %v6596 = vpop.f32.mrb[0].mxu0
      %v6597 = vadd.f32 0.0, %v6596
      %6598 = vmatprep.mubr.bf16.mxu0 %v6295
      %6599 = vmatmul.mubr.bf16.gmra.mrb[0].mxu0 %v6294
      %v6600 = vpop.f32.mrb[0].mxu0
      %v6601 = vadd.f32 0.0, %v6600
      %v6602 = vpop.f32.mrb[0].mxu0
      %v6603 = vadd.f32 0.0, %v6602
      %v6604 = vpop.f32.mrb[0].mxu0
      %v6605 = vadd.f32 0.0, %v6604
      %v6606 = vpop.f32.mrb[0].mxu0
      %v6607 = vadd.f32 0.0, %v6606
      %6608 = vmatprep.mubr.bf16.mxu0 %v6297
      %6609 = vmatmul.mubr.bf16.gmra.mrb[0].mxu0 %v6296
      %v6610 = vpop.f32.mrb[0].mxu0
      %v6611 = vadd.f32 0.0, %v6610
      %v6612 = vpop.f32.mrb[0].mxu0
      %v6613 = vadd.f32 0.0, %v6612
      %v6614 = vpop.f32.mrb[0].mxu0
      %v6615 = vadd.f32 0.0, %v6614
      %v6616 = vpop.f32.mrb[0].mxu0
      %v6617 = vadd.f32 0.0, %v6616
      %6618 = vmatprep.mubr.bf16.mxu0 %v6299
      %6619 = vmatmul.mubr.bf16.gmra.mrb[0].mxu0 %v6298
      %v6620 = vpop.f32.mrb[0].mxu0
      %v6621 = vadd.f32 0.0, %v6620
      %v6622 = vpop.f32.mrb[0].mxu0
      %v6623 = vadd.f32 0.0, %v6622
      %v6624 = vpop.f32.mrb[0].mxu0
      %v6625 = vadd.f32 0.0, %v6624
      %v6626 = vpop.f32.mrb[0].mxu0
      %v6627 = vadd.f32 0.0, %v6626
      %6628 = vmatprep.mubr.bf16.mxu0 %v6301
      %6629 = vmatmul.mubr.bf16.gmra.mrb[0].mxu0 %v6300
      %v6630 = vpop.f32.mrb[0].mxu0
      %v6631 = vadd.f32 0.0, %v6630
      %v6632 = vpop.f32.mrb[0].mxu0
      %v6633 = vadd.f32 0.0, %v6632
      %v6634 = vpop.f32.mrb[0].mxu0
      %v6635 = vadd.f32 0.0, %v6634
      %v6636 = vpop.f32.mrb[0].mxu0
      %v6637 = vadd.f32 0.0, %v6636
      %6638 = vmatprep.mubr.bf16.mxu0 %v6303
      %6639 = vmatmul.mubr.bf16.gmra.mrb[0].mxu0 %v6302
      %v6640 = vpop.f32.mrb[0].mxu0
      %v6641 = vadd.f32 0.0, %v6640
      %v6642 = vpop.f32.mrb[0].mxu0
      %v6643 = vadd.f32 0.0, %v6642
      %v6644 = vpop.f32.mrb[0].mxu0
      %v6645 = vadd.f32 0.0, %v6644
      %v6646 = vpop.f32.mrb[0].mxu0
      %v6647 = vadd.f32 0.0, %v6646
      %6648 = vmatprep.mubr.bf16.mxu0 %v6305
      %6649 = vmatmul.mubr.bf16.gmra.mrb[0].mxu0 %v6304
      %v6650 = vpop.f32.mrb[0].mxu0
      %v6651 = vadd.f32 0.0, %v6650
      %v6652 = vpop.f32.mrb[0].mxu0
      %v6653 = vadd.f32 0.0, %v6652
      %v6654 = vpop.f32.mrb[0].mxu0
      %v6655 = vadd.f32 0.0, %v6654
      %v6656 = vpop.f32.mrb[0].mxu0
      %v6657 = vadd.f32 0.0, %v6656
      %6658 = vmatprep.mubr.bf16.mxu0 %v6307
      %6659 = vmatmul.mubr.bf16.gmra.mrb[0].mxu0 %v6306
      %v6660 = vpop.f32.mrb[0].mxu0
      %v6661 = vadd.f32 0.0, %v6660
      %v6662 = vpop.f32.mrb[0].mxu0
      %v6663 = vadd.f32 0.0, %v6662
      %v6664 = vpop.f32.mrb[0].mxu0
      %v6665 = vadd.f32 0.0, %v6664
      %v6666 = vpop.f32.mrb[0].mxu0
      %v6667 = vadd.f32 0.0, %v6666
      %6668 = vmatprep.mubr.bf16.mxu0 %v6309
      %6669 = vmatmul.mubr.bf16.gmra.mrb[0].mxu0 %v6308
      %v6670 = vpop.f32.mrb[0].mxu0
      %v6671 = vadd.f32 0.0, %v6670
      %v6672 = vpop.f32.mrb[0].mxu0
      %v6673 = vadd.f32 0.0, %v6672
      %v6674 = vpop.f32.mrb[0].mxu0
      %v6675 = vadd.f32 0.0, %v6674
      %v6676 = vpop.f32.mrb[0].mxu0
      %v6677 = vadd.f32 0.0, %v6676
      %6678 = vmatprep.mubr.bf16.mxu0 %v6311
      %6679 = vmatmul.mubr.bf16.gmra.mrb[0].mxu0 %v6310
      %v6680 = vpop.f32.mrb[0].mxu0
      %v6681 = vadd.f32 0.0, %v6680
      %v6682 = vpop.f32.mrb[0].mxu0
      %v6683 = vadd.f32 0.0, %v6682
      %v6684 = vpop.f32.mrb[0].mxu0
      %v6685 = vadd.f32 0.0, %v6684
      %v6686 = vpop.f32.mrb[0].mxu0
      %v6687 = vadd.f32 0.0, %v6686
      %6688 = vmatprep.mubr.bf16.mxu0 %v6313
      %6689 = vmatmul.mubr.bf16.gmra.mrb[0].mxu0 %v6312
      %v6690 = vpop.f32.mrb[0].mxu0
      %v6691 = vadd.f32 0.0, %v6690
      %v6692 = vpop.f32.mrb[0].mxu0
      %v6693 = vadd.f32 0.0, %v6692
      %v6694 = vpop.f32.mrb[0].mxu0
      %v6695 = vadd.f32 0.0, %v6694
      %v6696 = vpop.f32.mrb[0].mxu0
      %v6697 = vadd.f32 0.0, %v6696
      %6698 = vmatprep.mubr.bf16.mxu0 %v6315
      %6699 = vmatmul.mubr.bf16.gmra.mrb[0].mxu0 %v6314
      %v6700 = vpop.f32.mrb[0].mxu0
      %v6701 = vadd.f32 0.0, %v6700
      %v6702 = vpop.f32.mrb[0].mxu0
      %v6703 = vadd.f32 0.0, %v6702
      %v6704 = vpop.f32.mrb[0].mxu0
      %v6705 = vadd.f32 0.0, %v6704
      %v6706 = vpop.f32.mrb[0].mxu0
      %v6707 = vadd.f32 0.0, %v6706
      %6708 = vmatprep.mubr.bf16.mxu0 %v6317
      %6709 = vmatmul.mubr.bf16.gmra.mrb[0].mxu0 %v6316
      %v6710 = vpop.f32.mrb[0].mxu0
      %v6711 = vadd.f32 0.0, %v6710
      %v6712 = vpop.f32.mrb[0].mxu0
      %v6713 = vadd.f32 0.0, %v6712
      %v6714 = vpop.f32.mrb[0].mxu0
      %v6715 = vadd.f32 0.0, %v6714
      %v6716 = vpop.f32.mrb[0].mxu0
      %v6717 = vadd.f32 0.0, %v6716
      %6718 = vmatprep.mubr.bf16.mxu0 %v6319
      %6719 = vmatmul.mubr.bf16.gmra.mrb[0].mxu0 %v6318
      %v6720 = vpop.f32.mrb[0].mxu0
      %v6721 = vadd.f32 0.0, %v6720
      %v6722 = vpop.f32.mrb[0].mxu0
      %v6723 = vadd.f32 0.0, %v6722
      %v6724 = vpop.f32.mrb[0].mxu0
      %v6725 = vadd.f32 0.0, %v6724
      %v6726 = vpop.f32.mrb[0].mxu0
      %v6727 = vadd.f32 0.0, %v6726
      %6728 = vmatprep.mubr.bf16.mxu0 %v6321
      %6729 = vmatmul.mubr.bf16.gmra.mrb[0].mxu0 %v6320
      %v6730 = vpop.f32.mrb[0].mxu0
      %v6731 = vadd.f32 0.0, %v6730
      %v6732 = vpop.f32.mrb[0].mxu0
      %v6733 = vadd.f32 0.0, %v6732
      %v6734 = vpop.f32.mrb[0].mxu0
      %v6735 = vadd.f32 0.0, %v6734
      %v6736 = vpop.f32.mrb[0].mxu0
      %v6737 = vadd.f32 0.0, %v6736
      %6738 = vmatprep.mubr.bf16.mxu0 %v6323
      %6739 = vmatmul.mubr.bf16.gmra.mrb[0].mxu0 %v6322
      %v6740 = vpop.f32.mrb[0].mxu0
      %v6741 = vadd.f32 0.0, %v6740
      %v6742 = vpop.f32.mrb[0].mxu0
      %v6743 = vadd.f32 0.0, %v6742
      %v6744 = vpop.f32.mrb[0].mxu0
      %v6745 = vadd.f32 0.0, %v6744
      %v6746 = vpop.f32.mrb[0].mxu0
      %v6747 = vadd.f32 0.0, %v6746
      %6748 = vmatprep.mubr.bf16.mxu0 %v6325
      %6749 = vmatmul.mubr.bf16.gmra.mrb[0].mxu0 %v6324
      %v6750 = vpop.f32.mrb[0].mxu0
      %v6751 = vadd.f32 0.0, %v6750
      %v6752 = vpop.f32.mrb[0].mxu0
      %v6753 = vadd.f32 0.0, %v6752
      %v6754 = vpop.f32.mrb[0].mxu0
      %v6755 = vadd.f32 0.0, %v6754
      %v6756 = vpop.f32.mrb[0].mxu0
      %v6757 = vadd.f32 0.0, %v6756
      %6758 = vmatprep.mubr.bf16.mxu0 %v6327
      %6759 = vmatmul.mubr.bf16.gmra.mrb[0].mxu0 %v6326
      %v6760 = vpop.f32.mrb[0].mxu0
      %v6761 = vadd.f32 0.0, %v6760
      %v6762 = vpop.f32.mrb[0].mxu0
      %v6763 = vadd.f32 0.0, %v6762
      %v6764 = vpop.f32.mrb[0].mxu0
      %v6765 = vadd.f32 0.0, %v6764
      %v6766 = vpop.f32.mrb[0].mxu0
      %v6767 = vadd.f32 0.0, %v6766
      %6768 = vmatprep.mubr.bf16.mxu0 %v6329
      %6769 = vmatmul.mubr.bf16.gmra.mrb[0].mxu0 %v6328
      %v6770 = vpop.f32.mrb[0].mxu0
      %v6771 = vadd.f32 0.0, %v6770
      %v6772 = vpop.f32.mrb[0].mxu0
      %v6773 = vadd.f32 0.0, %v6772
      %v6774 = vpop.f32.mrb[0].mxu0
      %v6775 = vadd.f32 0.0, %v6774
      %v6776 = vpop.f32.mrb[0].mxu0
      %v6777 = vadd.f32 0.0, %v6776
      %6778 = vmatprep.mubr.bf16.mxu0 %v6331
      %6779 = vmatmul.mubr.bf16.gmra.mrb[0].mxu0 %v6330
      %v6780 = vpop.f32.mrb[0].mxu0
      %v6781 = vadd.f32 0.0, %v6780
      %v6782 = vpop.f32.mrb[0].mxu0
      %v6783 = vadd.f32 0.0, %v6782
      %v6784 = vpop.f32.mrb[0].mxu0
      %v6785 = vadd.f32 0.0, %v6784
      %v6786 = vpop.f32.mrb[0].mxu0
      %v6787 = vadd.f32 0.0, %v6786
      %6788 = vmatprep.mubr.bf16.mxu0 %v6333
      %6789 = vmatmul.mubr.bf16.gmra.mrb[0].mxu0 %v6332
      %v6790 = vpop.f32.mrb[0].mxu0
      %v6791 = vadd.f32 0.0, %v6790
      %v6792 = vpop.f32.mrb[0].mxu0
      %v6793 = vadd.f32 0.0, %v6792
      %v6794 = vpop.f32.mrb[0].mxu0
      %v6795 = vadd.f32 0.0, %v6794
      %v6796 = vpop.f32.mrb[0].mxu0
      %v6797 = vadd.f32 0.0, %v6796
      %6798 = vmatprep.mubr.bf16.mxu0 %v6335
      %6799 = vmatmul.mubr.bf16.gmra.mrb[0].mxu0 %v6334
      %v6800 = vpop.f32.mrb[0].mxu0
      %v6801 = vadd.f32 0.0, %v6800
      %v6802 = vpop.f32.mrb[0].mxu0
      %v6803 = vadd.f32 0.0, %v6802
      %v6804 = vpop.f32.mrb[0].mxu0
      %v6805 = vadd.f32 0.0, %v6804
      %v6806 = vpop.f32.mrb[0].mxu0
      %v6807 = vadd.f32 0.0, %v6806
      %6808 = vmatprep.mubr.bf16.mxu0 %v6337
      %6809 = vmatmul.mubr.bf16.gmra.mrb[0].mxu0 %v6336
      %v6810 = vpop.f32.mrb[0].mxu0
      %v6811 = vadd.f32 0.0, %v6810
      %v6812 = vpop.f32.mrb[0].mxu0
      %v6813 = vadd.f32 0.0, %v6812
      %v6814 = vpop.f32.mrb[0].mxu0
      %v6815 = vadd.f32 0.0, %v6814
      %v6816 = vpop.f32.mrb[0].mxu0
      %v6817 = vadd.f32 0.0, %v6816
      %6818 = vmatprep.mubr.bf16.mxu0 %v6339
      %6819 = vmatmul.mubr.bf16.gmra.mrb[0].mxu0 %v6338
      %v6820 = vpop.f32.mrb[0].mxu0
      %v6821 = vadd.f32 0.0, %v6820
      %v6822 = vpop.f32.mrb[0].mxu0
      %v6823 = vadd.f32 0.0, %v6822
      %v6824 = vpop.f32.mrb[0].mxu0
      %v6825 = vadd.f32 0.0, %v6824
      %v6826 = vpop.f32.mrb[0].mxu0
      %v6827 = vadd.f32 0.0, %v6826
      %6828 = vmatprep.mubr.bf16.mxu0 %v6341
      %6829 = vmatmul.mubr.bf16.gmra.mrb[0].mxu0 %v6340
      %v6830 = vpop.f32.mrb[0].mxu0
      %v6831 = vadd.f32 0.0, %v6830
      %v6832 = vpop.f32.mrb[0].mxu0
      %v6833 = vadd.f32 0.0, %v6832
      %v6834 = vpop.f32.mrb[0].mxu0
      %v6835 = vadd.f32 0.0, %v6834
      %v6836 = vpop.f32.mrb[0].mxu0
      %v6837 = vadd.f32 0.0, %v6836
      %6838 = vmatprep.mubr.bf16.mxu0 %v6343
      %6839 = vmatmul.mubr.bf16.gmra.mrb[0].mxu0 %v6342
      %v6840 = vpop.f32.mrb[0].mxu0
      %v6841 = vadd.f32 0.0, %v6840
      %v6842 = vpop.f32.mrb[0].mxu0
      %v6843 = vadd.f32 0.0, %v6842
      %v6844 = vpop.f32.mrb[0].mxu0
      %v6845 = vadd.f32 0.0, %v6844
      %v6846 = vpop.f32.mrb[0].mxu0
      %v6847 = vadd.f32 0.0, %v6846
      %6848 = vmatprep.mubr.bf16.mxu0 %v6345
      %6849 = vmatmul.mubr.bf16.gmra.mrb[0].mxu0 %v6344
      %v6850 = vpop.f32.mrb[0].mxu0
      %v6851 = vadd.f32 0.0, %v6850
      %v6852 = vpop.f32.mrb[0].mxu0
      %v6853 = vadd.f32 0.0, %v6852
      %v6854 = vpop.f32.mrb[0].mxu0
      %v6855 = vadd.f32 0.0, %v6854
      %v6856 = vpop.f32.mrb[0].mxu0
      %v6857 = vadd.f32 0.0, %v6856
      %6858 = vmatprep.mubr.bf16.mxu0 %v6347
      %6859 = vmatmul.mubr.bf16.gmra.mrb[0].mxu0 %v6346
      %v6860 = vpop.f32.mrb[0].mxu0
      %v6861 = vadd.f32 0.0, %v6860
      %v6862 = vpop.f32.mrb[0].mxu0
      %v6863 = vadd.f32 0.0, %v6862
      %v6864 = vpop.f32.mrb[0].mxu0
      %v6865 = vadd.f32 0.0, %v6864
      %v6866 = vpop.f32.mrb[0].mxu0
      %v6867 = vadd.f32 0.0, %v6866
      %6868 = vmatprep.mubr.bf16.mxu0 %v6349
      %6869 = vmatmul.mubr.bf16.gmra.mrb[0].mxu0 %v6348
      %v6870 = vpop.f32.mrb[0].mxu0
      %v6871 = vadd.f32 0.0, %v6870
      %v6872 = vpop.f32.mrb[0].mxu0
      %v6873 = vadd.f32 0.0, %v6872
      %v6874 = vpop.f32.mrb[0].mxu0
      %v6875 = vadd.f32 0.0, %v6874
      %v6876 = vpop.f32.mrb[0].mxu0
      %v6877 = vadd.f32 0.0, %v6876
      %6878 = vmatprep.mubr.bf16.mxu0 %v6351
      %6879 = vmatmul.mubr.bf16.gmra.mrb[0].mxu0 %v6350
      %v6880 = vpop.f32.mrb[0].mxu0
      %v6881 = vadd.f32 0.0, %v6880
      %v6882 = vpop.f32.mrb[0].mxu0
      %v6883 = vadd.f32 0.0, %v6882
      %v6884 = vpop.f32.mrb[0].mxu0
      %v6885 = vadd.f32 0.0, %v6884
      %v6886 = vpop.f32.mrb[0].mxu0
      %v6887 = vadd.f32 0.0, %v6886
      %6888 = vmatprep.mubr.bf16.mxu0 %v6353
      %6889 = vmatmul.mubr.bf16.gmra.mrb[0].mxu0 %v6352
      %v6890 = vpop.f32.mrb[0].mxu0
      %v6891 = vadd.f32 0.0, %v6890
      %v6892 = vpop.f32.mrb[0].mxu0
      %v6893 = vadd.f32 0.0, %v6892
      %v6894 = vpop.f32.mrb[0].mxu0
      %v6895 = vadd.f32 0.0, %v6894
      %v6896 = vpop.f32.mrb[0].mxu0
      %v6897 = vadd.f32 0.0, %v6896
      %6898 = vdwg.mxu0
      %v6899 = vadd.f32 %v6162, %v6581
      %v6900 = vadd.f32 %v6163, %v6583
      %v6901 = vadd.f32 %v6164, %v6585
      %v6902 = vadd.f32 %v6165, %v6587
      %v6903 = vadd.f32 %v6166, %v6591
      %v6904 = vadd.f32 %v6167, %v6593
      %v6905 = vadd.f32 %v6168, %v6595
      %v6906 = vadd.f32 %v6169, %v6597
      %v6907 = vadd.f32 %v6170, %v6601
      %v6908 = vadd.f32 %v6171, %v6603
      %v6909 = vadd.f32 %v6172, %v6605
      %v6910 = vadd.f32 %v6173, %v6607
      %v6911 = vadd.f32 %v6174, %v6611
      %v6912 = vadd.f32 %v6175, %v6613
      %v6913 = vadd.f32 %v6176, %v6615
      %v6914 = vadd.f32 %v6177, %v6617
      %v6915 = vadd.f32 %v6178, %v6621
      %v6916 = vadd.f32 %v6179, %v6623
      %v6917 = vadd.f32 %v6180, %v6625
      %v6918 = vadd.f32 %v6181, %v6627
      %v6919 = vadd.f32 %v6182, %v6631
      %v6920 = vadd.f32 %v6183, %v6633
      %v6921 = vadd.f32 %v6184, %v6635
      %v6922 = vadd.f32 %v6185, %v6637
      %v6923 = vadd.f32 %v6186, %v6641
      %v6924 = vadd.f32 %v6187, %v6643
      %v6925 = vadd.f32 %v6188, %v6645
      %v6926 = vadd.f32 %v6189, %v6647
      %v6927 = vadd.f32 %v6190, %v6651
      %v6928 = vadd.f32 %v6191, %v6653
      %v6929 = vadd.f32 %v6192, %v6655
      %v6930 = vadd.f32 %v6193, %v6657
      %v6931 = vadd.f32 %v6194, %v6661
      %v6932 = vadd.f32 %v6195, %v6663
      %v6933 = vadd.f32 %v6196, %v6665
      %v6934 = vadd.f32 %v6197, %v6667
      %v6935 = vadd.f32 %v6198, %v6671
      %v6936 = vadd.f32 %v6199, %v6673
      %v6937 = vadd.f32 %v6200, %v6675
      %v6938 = vadd.f32 %v6201, %v6677
      %v6939 = vadd.f32 %v6202, %v6681
      %v6940 = vadd.f32 %v6203, %v6683
      %v6941 = vadd.f32 %v6204, %v6685
      %v6942 = vadd.f32 %v6205, %v6687
      %v6943 = vadd.f32 %v6206, %v6691
      %v6944 = vadd.f32 %v6207, %v6693
      %v6945 = vadd.f32 %v6208, %v6695
      %v6946 = vadd.f32 %v6209, %v6697
      %v6947 = vadd.f32 %v6210, %v6701
      %v6948 = vadd.f32 %v6211, %v6703
      %v6949 = vadd.f32 %v6212, %v6705
      %v6950 = vadd.f32 %v6213, %v6707
      %v6951 = vadd.f32 %v6214, %v6711
      %v6952 = vadd.f32 %v6215, %v6713
      %v6953 = vadd.f32 %v6216, %v6715
      %v6954 = vadd.f32 %v6217, %v6717
      %v6955 = vadd.f32 %v6218, %v6721
      %v6956 = vadd.f32 %v6219, %v6723
      %v6957 = vadd.f32 %v6220, %v6725
      %v6958 = vadd.f32 %v6221, %v6727
      %v6959 = vadd.f32 %v6222, %v6731
      %v6960 = vadd.f32 %v6223, %v6733
      %v6961 = vadd.f32 %v6224, %v6735
      %v6962 = vadd.f32 %v6225, %v6737
      %v6963 = vadd.f32 %v6226, %v6741
      %v6964 = vadd.f32 %v6227, %v6743
      %v6965 = vadd.f32 %v6228, %v6745
      %v6966 = vadd.f32 %v6229, %v6747
      %v6967 = vadd.f32 %v6230, %v6751
      %v6968 = vadd.f32 %v6231, %v6753
      %v6969 = vadd.f32 %v6232, %v6755
      %v6970 = vadd.f32 %v6233, %v6757
      %v6971 = vadd.f32 %v6234, %v6761
      %v6972 = vadd.f32 %v6235, %v6763
      %v6973 = vadd.f32 %v6236, %v6765
      %v6974 = vadd.f32 %v6237, %v6767
      %v6975 = vadd.f32 %v6238, %v6771
      %v6976 = vadd.f32 %v6239, %v6773
      %v6977 = vadd.f32 %v6240, %v6775
      %v6978 = vadd.f32 %v6241, %v6777
      %v6979 = vadd.f32 %v6242, %v6781
      %v6980 = vadd.f32 %v6243, %v6783
      %v6981 = vadd.f32 %v6244, %v6785
      %v6982 = vadd.f32 %v6245, %v6787
      %v6983 = vadd.f32 %v6246, %v6791
      %v6984 = vadd.f32 %v6247, %v6793
      %v6985 = vadd.f32 %v6248, %v6795
      %v6986 = vadd.f32 %v6249, %v6797
      %v6987 = vadd.f32 %v6250, %v6801
      %v6988 = vadd.f32 %v6251, %v6803
      %v6989 = vadd.f32 %v6252, %v6805
      %v6990 = vadd.f32 %v6253, %v6807
      %v6991 = vadd.f32 %v6254, %v6811
      %v6992 = vadd.f32 %v6255, %v6813
      %v6993 = vadd.f32 %v6256, %v6815
      %v6994 = vadd.f32 %v6257, %v6817
      %v6995 = vadd.f32 %v6258, %v6821
      %v6996 = vadd.f32 %v6259, %v6823
      %v6997 = vadd.f32 %v6260, %v6825
      %v6998 = vadd.f32 %v6261, %v6827
      %v6999 = vadd.f32 %v6262, %v6831
      %v7000 = vadd.f32 %v6263, %v6833
      %v7001 = vadd.f32 %v6264, %v6835
      %v7002 = vadd.f32 %v6265, %v6837
      %v7003 = vadd.f32 %v6266, %v6841
      %v7004 = vadd.f32 %v6267, %v6843
      %v7005 = vadd.f32 %v6268, %v6845
      %v7006 = vadd.f32 %v6269, %v6847
      %v7007 = vadd.f32 %v6270, %v6851
      %v7008 = vadd.f32 %v6271, %v6853
      %v7009 = vadd.f32 %v6272, %v6855
      %v7010 = vadd.f32 %v6273, %v6857
      %v7011 = vadd.f32 %v6274, %v6861
      %v7012 = vadd.f32 %v6275, %v6863
      %v7013 = vadd.f32 %v6276, %v6865
      %v7014 = vadd.f32 %v6277, %v6867
      %v7015 = vadd.f32 %v6278, %v6871
      %v7016 = vadd.f32 %v6279, %v6873
      %v7017 = vadd.f32 %v6280, %v6875
      %v7018 = vadd.f32 %v6281, %v6877
      %v7019 = vadd.f32 %v6282, %v6881
      %v7020 = vadd.f32 %v6283, %v6883
      %v7021 = vadd.f32 %v6284, %v6885
      %v7022 = vadd.f32 %v6285, %v6887
      %v7023 = vadd.f32 %v6286, %v6891
      %v7024 = vadd.f32 %v6287, %v6893
      %v7025 = vadd.f32 %v6288, %v6895
      %v7026 = vadd.f32 %v6289, %v6897
      %v7027 = vmax.f32 %v6899, 0.0
      %v7028 = vmax.f32 %v6900, 0.0
      %v7029 = vmax.f32 %v6901, 0.0
      %v7030 = vmax.f32 %v6902, 0.0
      %v7031 = vmax.f32 %v6903, 0.0
      %v7032 = vmax.f32 %v6904, 0.0
      %v7033 = vmax.f32 %v6905, 0.0
      %v7034 = vmax.f32 %v6906, 0.0
      %v7035 = vmax.f32 %v6907, 0.0
      %v7036 = vmax.f32 %v6908, 0.0
      %v7037 = vmax.f32 %v6909, 0.0
      %v7038 = vmax.f32 %v6910, 0.0
      %v7039 = vmax.f32 %v6911, 0.0
      %v7040 = vmax.f32 %v6912, 0.0
      %v7041 = vmax.f32 %v6913, 0.0
      %v7042 = vmax.f32 %v6914, 0.0
      %v7043 = vmax.f32 %v6915, 0.0
      %v7044 = vmax.f32 %v6916, 0.0
      %v7045 = vmax.f32 %v6917, 0.0
      %v7046 = vmax.f32 %v6918, 0.0
      %v7047 = vmax.f32 %v6919, 0.0
      %v7048 = vmax.f32 %v6920, 0.0
      %v7049 = vmax.f32 %v6921, 0.0
      %v7050 = vmax.f32 %v6922, 0.0
      %v7051 = vmax.f32 %v6923, 0.0
      %v7052 = vmax.f32 %v6924, 0.0
      %v7053 = vmax.f32 %v6925, 0.0
      %v7054 = vmax.f32 %v6926, 0.0
      %v7055 = vmax.f32 %v6927, 0.0
      %v7056 = vmax.f32 %v6928, 0.0
      %v7057 = vmax.f32 %v6929, 0.0
      %v7058 = vmax.f32 %v6930, 0.0
      %v7059 = vmax.f32 %v6931, 0.0
      %v7060 = vmax.f32 %v6932, 0.0
      %v7061 = vmax.f32 %v6933, 0.0
      %v7062 = vmax.f32 %v6934, 0.0
      %v7063 = vmax.f32 %v6935, 0.0
      %v7064 = vmax.f32 %v6936, 0.0
      %v7065 = vmax.f32 %v6937, 0.0
      %v7066 = vmax.f32 %v6938, 0.0
      %v7067 = vmax.f32 %v6939, 0.0
      %v7068 = vmax.f32 %v6940, 0.0
      %v7069 = vmax.f32 %v6941, 0.0
      %v7070 = vmax.f32 %v6942, 0.0
      %v7071 = vmax.f32 %v6943, 0.0
      %v7072 = vmax.f32 %v6944, 0.0
      %v7073 = vmax.f32 %v6945, 0.0
      %v7074 = vmax.f32 %v6946, 0.0
      %v7075 = vmax.f32 %v6947, 0.0
      %v7076 = vmax.f32 %v6948, 0.0
      %v7077 = vmax.f32 %v6949, 0.0
      %v7078 = vmax.f32 %v6950, 0.0
      %v7079 = vmax.f32 %v6951, 0.0
      %v7080 = vmax.f32 %v6952, 0.0
      %v7081 = vmax.f32 %v6953, 0.0
      %v7082 = vmax.f32 %v6954, 0.0
      %v7083 = vmax.f32 %v6955, 0.0
      %v7084 = vmax.f32 %v6956, 0.0
      %v7085 = vmax.f32 %v6957, 0.0
      %v7086 = vmax.f32 %v6958, 0.0
      %v7087 = vmax.f32 %v6959, 0.0
      %v7088 = vmax.f32 %v6960, 0.0
      %v7089 = vmax.f32 %v6961, 0.0
      %v7090 = vmax.f32 %v6962, 0.0
      %v7091 = vmax.f32 %v6963, 0.0
      %v7092 = vmax.f32 %v6964, 0.0
      %v7093 = vmax.f32 %v6965, 0.0
      %v7094 = vmax.f32 %v6966, 0.0
      %v7095 = vmax.f32 %v6967, 0.0
      %v7096 = vmax.f32 %v6968, 0.0
      %v7097 = vmax.f32 %v6969, 0.0
      %v7098 = vmax.f32 %v6970, 0.0
      %v7099 = vmax.f32 %v6971, 0.0
      %v7100 = vmax.f32 %v6972, 0.0
      %v7101 = vmax.f32 %v6973, 0.0
      %v7102 = vmax.f32 %v6974, 0.0
      %v7103 = vmax.f32 %v6975, 0.0
      %v7104 = vmax.f32 %v6976, 0.0
      %v7105 = vmax.f32 %v6977, 0.0
      %v7106 = vmax.f32 %v6978, 0.0
      %v7107 = vmax.f32 %v6979, 0.0
      %v7108 = vmax.f32 %v6980, 0.0
      %v7109 = vmax.f32 %v6981, 0.0
      %v7110 = vmax.f32 %v6982, 0.0
      %v7111 = vmax.f32 %v6983, 0.0
      %v7112 = vmax.f32 %v6984, 0.0
      %v7113 = vmax.f32 %v6985, 0.0
      %v7114 = vmax.f32 %v6986, 0.0
      %v7115 = vmax.f32 %v6987, 0.0
      %v7116 = vmax.f32 %v6988, 0.0
      %v7117 = vmax.f32 %v6989, 0.0
      %v7118 = vmax.f32 %v6990, 0.0
      %v7119 = vmax.f32 %v6991, 0.0
      %v7120 = vmax.f32 %v6992, 0.0
      %v7121 = vmax.f32 %v6993, 0.0
      %v7122 = vmax.f32 %v6994, 0.0
      %v7123 = vmax.f32 %v6995, 0.0
      %v7124 = vmax.f32 %v6996, 0.0
      %v7125 = vmax.f32 %v6997, 0.0
      %v7126 = vmax.f32 %v6998, 0.0
      %v7127 = vmax.f32 %v6999, 0.0
      %v7128 = vmax.f32 %v7000, 0.0
      %v7129 = vmax.f32 %v7001, 0.0
      %v7130 = vmax.f32 %v7002, 0.0
      %v7131 = vmax.f32 %v7003, 0.0
      %v7132 = vmax.f32 %v7004, 0.0
      %v7133 = vmax.f32 %v7005, 0.0
      %v7134 = vmax.f32 %v7006, 0.0
      %v7135 = vmax.f32 %v7007, 0.0
      %v7136 = vmax.f32 %v7008, 0.0
      %v7137 = vmax.f32 %v7009, 0.0
      %v7138 = vmax.f32 %v7010, 0.0
      %v7139 = vmax.f32 %v7011, 0.0
      %v7140 = vmax.f32 %v7012, 0.0
      %v7141 = vmax.f32 %v7013, 0.0
      %v7142 = vmax.f32 %v7014, 0.0
      %v7143 = vmax.f32 %v7015, 0.0
      %v7144 = vmax.f32 %v7016, 0.0
      %v7145 = vmax.f32 %v7017, 0.0
      %v7146 = vmax.f32 %v7018, 0.0
      %v7147 = vmax.f32 %v7019, 0.0
      %v7148 = vmax.f32 %v7020, 0.0
      %v7149 = vmax.f32 %v7021, 0.0
      %v7150 = vmax.f32 %v7022, 0.0
      %v7151 = vmax.f32 %v7023, 0.0
      %v7152 = vmax.f32 %v7024, 0.0
      %v7153 = vmax.f32 %v7025, 0.0
      %v7154 = vmax.f32 %v7026, 0.0
      %v7155 = vpack.c.bf16 %v7029, %v7027
      %v7156 = vpack.c.bf16 %v7030, %v7028
      %v7157 = vpack.c.bf16 %v7033, %v7031
      %v7158 = vpack.c.bf16 %v7034, %v7032
      %v7159 = vpack.c.bf16 %v7037, %v7035
      %v7160 = vpack.c.bf16 %v7038, %v7036
      %v7161 = vpack.c.bf16 %v7041, %v7039
      %v7162 = vpack.c.bf16 %v7042, %v7040
      %v7163 = vpack.c.bf16 %v7045, %v7043
      %v7164 = vpack.c.bf16 %v7046, %v7044
      %v7165 = vpack.c.bf16 %v7049, %v7047
      %v7166 = vpack.c.bf16 %v7050, %v7048
      %v7167 = vpack.c.bf16 %v7053, %v7051
      %v7168 = vpack.c.bf16 %v7054, %v7052
      %v7169 = vpack.c.bf16 %v7057, %v7055
      %v7170 = vpack.c.bf16 %v7058, %v7056
      %v7171 = vpack.c.bf16 %v7061, %v7059
      %v7172 = vpack.c.bf16 %v7062, %v7060
      %v7173 = vpack.c.bf16 %v7065, %v7063
      %v7174 = vpack.c.bf16 %v7066, %v7064
      %v7175 = vpack.c.bf16 %v7069, %v7067
      %v7176 = vpack.c.bf16 %v7070, %v7068
      %v7177 = vpack.c.bf16 %v7073, %v7071
      %v7178 = vpack.c.bf16 %v7074, %v7072
      %v7179 = vpack.c.bf16 %v7077, %v7075
      %v7180 = vpack.c.bf16 %v7078, %v7076
      %v7181 = vpack.c.bf16 %v7081, %v7079
      %v7182 = vpack.c.bf16 %v7082, %v7080
      %v7183 = vpack.c.bf16 %v7085, %v7083
      %v7184 = vpack.c.bf16 %v7086, %v7084
      %v7185 = vpack.c.bf16 %v7089, %v7087
      %v7186 = vpack.c.bf16 %v7090, %v7088
      %v7187 = vpack.c.bf16 %v7093, %v7091
      %v7188 = vpack.c.bf16 %v7094, %v7092
      %v7189 = vpack.c.bf16 %v7097, %v7095
      %v7190 = vpack.c.bf16 %v7098, %v7096
      %v7191 = vpack.c.bf16 %v7101, %v7099
      %v7192 = vpack.c.bf16 %v7102, %v7100
      %v7193 = vpack.c.bf16 %v7105, %v7103
      %v7194 = vpack.c.bf16 %v7106, %v7104
      %v7195 = vpack.c.bf16 %v7109, %v7107
      %v7196 = vpack.c.bf16 %v7110, %v7108
      %v7197 = vpack.c.bf16 %v7113, %v7111
      %v7198 = vpack.c.bf16 %v7114, %v7112
      %v7199 = vpack.c.bf16 %v7117, %v7115
      %v7200 = vpack.c.bf16 %v7118, %v7116
      %v7201 = vpack.c.bf16 %v7121, %v7119
      %v7202 = vpack.c.bf16 %v7122, %v7120
      %v7203 = vpack.c.bf16 %v7125, %v7123
      %v7204 = vpack.c.bf16 %v7126, %v7124
      %v7205 = vpack.c.bf16 %v7129, %v7127
      %v7206 = vpack.c.bf16 %v7130, %v7128
      %v7207 = vpack.c.bf16 %v7133, %v7131
      %v7208 = vpack.c.bf16 %v7134, %v7132
      %v7209 = vpack.c.bf16 %v7137, %v7135
      %v7210 = vpack.c.bf16 %v7138, %v7136
      %v7211 = vpack.c.bf16 %v7141, %v7139
      %v7212 = vpack.c.bf16 %v7142, %v7140
      %v7213 = vpack.c.bf16 %v7145, %v7143
      %v7214 = vpack.c.bf16 %v7146, %v7144
      %v7215 = vpack.c.bf16 %v7149, %v7147
      %v7216 = vpack.c.bf16 %v7150, %v7148
      %v7217 = vpack.c.bf16 %v7153, %v7151
      %v7218 = vpack.c.bf16 %v7154, %v7152
      %v7219 = vld [vmem:[%s14] sm:$0xff]
      %v7220 = vld [vmem:[%s14 + $0x8] sm:$0xff]
      %v7221 = vld [vmem:[%s14 + $0x10] sm:$0xff]
      %v7222 = vld [vmem:[%s14 + $0x18] sm:$0xff]
      %v7223 = vld [vmem:[%s14 + $0x20] sm:$0xff]
      %v7224 = vld [vmem:[%s14 + $0x28] sm:$0xff]
      %v7225 = vld [vmem:[%s14 + $0x30] sm:$0xff]
      %v7226 = vld [vmem:[%s14 + $0x38] sm:$0xff]
      %v7227 = vld [vmem:[%s14 + $0x40] sm:$0xff]
      %v7228 = vld [vmem:[%s14 + $0x48] sm:$0xff]
      %v7229 = vld [vmem:[%s14 + $0x50] sm:$0xff]
      %v7230 = vld [vmem:[%s14 + $0x58] sm:$0xff]
      %v7231 = vld [vmem:[%s14 + $0x60] sm:$0xff]
      %v7232 = vld [vmem:[%s14 + $0x68] sm:$0xff]
      %v7233 = vld [vmem:[%s14 + $0x70] sm:$0xff]
      %v7234 = vld [vmem:[%s14 + $0x78] sm:$0xff]
      %v7235 = vld [vmem:[%s14 + $0x80] sm:$0xff]
      %v7236 = vld [vmem:[%s14 + $0x88] sm:$0xff]
      %v7237 = vld [vmem:[%s14 + $0x90] sm:$0xff]
      %v7238 = vld [vmem:[%s14 + $0x98] sm:$0xff]
      %v7239 = vld [vmem:[%s14 + $0xa0] sm:$0xff]
      %v7240 = vld [vmem:[%s14 + $0xa8] sm:$0xff]
      %v7241 = vld [vmem:[%s14 + $0xb0] sm:$0xff]
      %v7242 = vld [vmem:[%s14 + $0xb8] sm:$0xff]
      %v7243 = vld [vmem:[%s14 + $0xc0] sm:$0xff]
      %v7244 = vld [vmem:[%s14 + $0xc8] sm:$0xff]
      %v7245 = vld [vmem:[%s14 + $0xd0] sm:$0xff]
      %v7246 = vld [vmem:[%s14 + $0xd8] sm:$0xff]
      %v7247 = vld [vmem:[%s14 + $0xe0] sm:$0xff]
      %v7248 = vld [vmem:[%s14 + $0xe8] sm:$0xff]
      %v7249 = vld [vmem:[%s14 + $0xf0] sm:$0xff]
      %v7250 = vld [vmem:[%s14 + $0xf8] sm:$0xff]
      %v7251 = vld [vmem:[%s15] sm:$0x3]
      %v7253 = vlaneseq
      %v7254 = vshrl.u32 %v7253, 7
      %v7255 = vsub.s32 0, %v7254
      %v7256 = vrot.slane %v7251, %v7255
      %v7257 = vlaneseq
      %v7258 = vshrl.u32 %v7257, 7
      %v7259 = vsub.s32 1, %v7258
      %v7260 = vrot.slane %v7251, %v7259
      %v7295 = vunpack.c.l.b16 %v7219
      %v7296 = vunpack.c.h.b16 %v7219
      %v7297 = vunpack.c.l.b16 %v7220
      %v7298 = vunpack.c.h.b16 %v7220
      %v7299 = vunpack.c.l.b16 %v7221
      %v7300 = vunpack.c.h.b16 %v7221
      %v7301 = vunpack.c.l.b16 %v7222
      %v7302 = vunpack.c.h.b16 %v7222
      %v7303 = vunpack.c.l.b16 %v7223
      %v7304 = vunpack.c.h.b16 %v7223
      %v7305 = vunpack.c.l.b16 %v7224
      %v7306 = vunpack.c.h.b16 %v7224
      %v7307 = vunpack.c.l.b16 %v7225
      %v7308 = vunpack.c.h.b16 %v7225
      %v7309 = vunpack.c.l.b16 %v7226
      %v7310 = vunpack.c.h.b16 %v7226
      %v7311 = vunpack.c.l.b16 %v7227
      %v7312 = vunpack.c.h.b16 %v7227
      %v7313 = vunpack.c.l.b16 %v7228
      %v7314 = vunpack.c.h.b16 %v7228
      %v7315 = vunpack.c.l.b16 %v7229
      %v7316 = vunpack.c.h.b16 %v7229
      %v7317 = vunpack.c.l.b16 %v7230
      %v7318 = vunpack.c.h.b16 %v7230
      %v7319 = vunpack.c.l.b16 %v7231
      %v7320 = vunpack.c.h.b16 %v7231
      %v7321 = vunpack.c.l.b16 %v7232
      %v7322 = vunpack.c.h.b16 %v7232
      %v7323 = vunpack.c.l.b16 %v7233
      %v7324 = vunpack.c.h.b16 %v7233
      %v7325 = vunpack.c.l.b16 %v7234
      %v7326 = vunpack.c.h.b16 %v7234
      %v7327 = vunpack.c.l.b16 %v7235
      %v7328 = vunpack.c.h.b16 %v7235
      %v7329 = vunpack.c.l.b16 %v7236
      %v7330 = vunpack.c.h.b16 %v7236
      %v7331 = vunpack.c.l.b16 %v7237
      %v7332 = vunpack.c.h.b16 %v7237
      %v7333 = vunpack.c.l.b16 %v7238
      %v7334 = vunpack.c.h.b16 %v7238
      %v7335 = vunpack.c.l.b16 %v7239
      %v7336 = vunpack.c.h.b16 %v7239
      %v7337 = vunpack.c.l.b16 %v7240
      %v7338 = vunpack.c.h.b16 %v7240
      %v7339 = vunpack.c.l.b16 %v7241
      %v7340 = vunpack.c.h.b16 %v7241
      %v7341 = vunpack.c.l.b16 %v7242
      %v7342 = vunpack.c.h.b16 %v7242
      %v7343 = vunpack.c.l.b16 %v7243
      %v7344 = vunpack.c.h.b16 %v7243
      %v7345 = vunpack.c.l.b16 %v7244
      %v7346 = vunpack.c.h.b16 %v7244
      %v7347 = vunpack.c.l.b16 %v7245
      %v7348 = vunpack.c.h.b16 %v7245
      %v7349 = vunpack.c.l.b16 %v7246
      %v7350 = vunpack.c.h.b16 %v7246
      %v7351 = vunpack.c.l.b16 %v7247
      %v7352 = vunpack.c.h.b16 %v7247
      %v7353 = vunpack.c.l.b16 %v7248
      %v7354 = vunpack.c.h.b16 %v7248
      %v7355 = vunpack.c.l.b16 %v7249
      %v7356 = vunpack.c.h.b16 %v7249
      %v7357 = vunpack.c.l.b16 %v7250
      %v7358 = vunpack.c.h.b16 %v7250
      %v7359 = vpack.c.b16 %v7297, %v7295
      %v7360 = vpack.c.b16 %v7298, %v7296
      %v7361 = vpack.c.b16 %v7301, %v7299
      %v7362 = vpack.c.b16 %v7302, %v7300
      %v7363 = vpack.c.b16 %v7305, %v7303
      %v7364 = vpack.c.b16 %v7306, %v7304
      %v7365 = vpack.c.b16 %v7309, %v7307
      %v7366 = vpack.c.b16 %v7310, %v7308
      %v7367 = vpack.c.b16 %v7313, %v7311
      %v7368 = vpack.c.b16 %v7314, %v7312
      %v7369 = vpack.c.b16 %v7317, %v7315
      %v7370 = vpack.c.b16 %v7318, %v7316
      %v7371 = vpack.c.b16 %v7321, %v7319
      %v7372 = vpack.c.b16 %v7322, %v7320
      %v7373 = vpack.c.b16 %v7325, %v7323
      %v7374 = vpack.c.b16 %v7326, %v7324
      %v7375 = vpack.c.b16 %v7329, %v7327
      %v7376 = vpack.c.b16 %v7330, %v7328
      %v7377 = vpack.c.b16 %v7333, %v7331
      %v7378 = vpack.c.b16 %v7334, %v7332
      %v7379 = vpack.c.b16 %v7337, %v7335
      %v7380 = vpack.c.b16 %v7338, %v7336
      %v7381 = vpack.c.b16 %v7341, %v7339
      %v7382 = vpack.c.b16 %v7342, %v7340
      %v7383 = vpack.c.b16 %v7345, %v7343
      %v7384 = vpack.c.b16 %v7346, %v7344
      %v7385 = vpack.c.b16 %v7349, %v7347
      %v7386 = vpack.c.b16 %v7350, %v7348
      %v7387 = vpack.c.b16 %v7353, %v7351
      %v7388 = vpack.c.b16 %v7354, %v7352
      %v7389 = vpack.c.b16 %v7357, %v7355
      %v7390 = vpack.c.b16 %v7358, %v7356
      %7423 = vmatprep.subr.bf16.mxu0 %v7360
      %7424 = vmatpush1.bf16.msra.mxu0 %v7359
      %7425 = vmatprep.subr.bf16.mxu0 %v7362
      %7426 = vmatpush1.bf16.msra.mxu0 %v7361
      %7427 = vmatprep.subr.bf16.mxu0 %v7364
      %7428 = vmatpush1.bf16.msra.mxu0 %v7363
      %7429 = vmatprep.subr.bf16.mxu0 %v7366
      %7430 = vmatpush1.bf16.msra.mxu0 %v7365
      %7431 = vmatprep.subr.bf16.mxu0 %v7368
      %7432 = vmatpush1.bf16.msra.mxu0 %v7367
      %7433 = vmatprep.subr.bf16.mxu0 %v7370
      %7434 = vmatpush1.bf16.msra.mxu0 %v7369
      %7435 = vmatprep.subr.bf16.mxu0 %v7372
      %7436 = vmatpush1.bf16.msra.mxu0 %v7371
      %7437 = vmatprep.subr.bf16.mxu0 %v7374
      %7438 = vmatpush1.bf16.msra.mxu0 %v7373
      %7439 = vmatprep.subr.bf16.mxu0 %v7376
      %7440 = vmatpush1.bf16.msra.mxu0 %v7375
      %7441 = vmatprep.subr.bf16.mxu0 %v7378
      %7442 = vmatpush1.bf16.msra.mxu0 %v7377
      %7443 = vmatprep.subr.bf16.mxu0 %v7380
      %7444 = vmatpush1.bf16.msra.mxu0 %v7379
      %7445 = vmatprep.subr.bf16.mxu0 %v7382
      %7446 = vmatpush1.bf16.msra.mxu0 %v7381
      %7447 = vmatprep.subr.bf16.mxu0 %v7384
      %7448 = vmatpush1.bf16.msra.mxu0 %v7383
      %7449 = vmatprep.subr.bf16.mxu0 %v7386
      %7450 = vmatpush1.bf16.msra.mxu0 %v7385
      %7451 = vmatprep.subr.bf16.mxu0 %v7388
      %7452 = vmatpush1.bf16.msra.mxu0 %v7387
      %7453 = vmatprep.subr.bf16.mxu0 %v7390
      %7454 = vmatpush1.bf16.msra.mxu0 %v7389
      %7455 = vmatprep.mubr.bf16.mxu0 %v7156
      %7456 = vmatmul.mubr.bf16.gmra.mrb[0].mxu0 %v7155
      %v7457 = vpop.f32.mrb[0].mxu0
      %v7458 = vadd.f32 %v7256, %v7457
      %v7459 = vpop.f32.mrb[0].mxu0
      %v7460 = vadd.f32 %v7260, %v7459
      %v7461 = vpop.f32.mrb[0].mxu0
      %v7462 = vadd.f32 %v7256, %v7461
      %v7463 = vpop.f32.mrb[0].mxu0
      %v7464 = vadd.f32 %v7260, %v7463
      %7465 = vmatprep.mubr.bf16.mxu0 %v7158
      %7466 = vmatmul.mubr.bf16.gmra.mrb[0].mxu0 %v7157
      %v7467 = vpop.f32.mrb[0].mxu0
      %v7468 = vadd.f32 %v7256, %v7467
      %v7469 = vpop.f32.mrb[0].mxu0
      %v7470 = vadd.f32 %v7260, %v7469
      %v7471 = vpop.f32.mrb[0].mxu0
      %v7472 = vadd.f32 %v7256, %v7471
      %v7473 = vpop.f32.mrb[0].mxu0
      %v7474 = vadd.f32 %v7260, %v7473
      %7475 = vmatprep.mubr.bf16.mxu0 %v7160
      %7476 = vmatmul.mubr.bf16.gmra.mrb[0].mxu0 %v7159
      %v7477 = vpop.f32.mrb[0].mxu0
      %v7478 = vadd.f32 %v7256, %v7477
      %v7479 = vpop.f32.mrb[0].mxu0
      %v7480 = vadd.f32 %v7260, %v7479
      %v7481 = vpop.f32.mrb[0].mxu0
      %v7482 = vadd.f32 %v7256, %v7481
      %v7483 = vpop.f32.mrb[0].mxu0
      %v7484 = vadd.f32 %v7260, %v7483
      %7485 = vmatprep.mubr.bf16.mxu0 %v7162
      %7486 = vmatmul.mubr.bf16.gmra.mrb[0].mxu0 %v7161
      %v7487 = vpop.f32.mrb[0].mxu0
      %v7488 = vadd.f32 %v7256, %v7487
      %v7489 = vpop.f32.mrb[0].mxu0
      %v7490 = vadd.f32 %v7260, %v7489
      %v7491 = vpop.f32.mrb[0].mxu0
      %v7492 = vadd.f32 %v7256, %v7491
      %v7493 = vpop.f32.mrb[0].mxu0
      %v7494 = vadd.f32 %v7260, %v7493
      %7495 = vmatprep.mubr.bf16.mxu0 %v7164
      %7496 = vmatmul.mubr.bf16.gmra.mrb[0].mxu0 %v7163
      %v7497 = vpop.f32.mrb[0].mxu0
      %v7498 = vadd.f32 %v7256, %v7497
      %v7499 = vpop.f32.mrb[0].mxu0
      %v7500 = vadd.f32 %v7260, %v7499
      %v7501 = vpop.f32.mrb[0].mxu0
      %v7502 = vadd.f32 %v7256, %v7501
      %v7503 = vpop.f32.mrb[0].mxu0
      %v7504 = vadd.f32 %v7260, %v7503
      %7505 = vmatprep.mubr.bf16.mxu0 %v7166
      %7506 = vmatmul.mubr.bf16.gmra.mrb[0].mxu0 %v7165
      %v7507 = vpop.f32.mrb[0].mxu0
      %v7508 = vadd.f32 %v7256, %v7507
      %v7509 = vpop.f32.mrb[0].mxu0
      %v7510 = vadd.f32 %v7260, %v7509
      %v7511 = vpop.f32.mrb[0].mxu0
      %v7512 = vadd.f32 %v7256, %v7511
      %v7513 = vpop.f32.mrb[0].mxu0
      %v7514 = vadd.f32 %v7260, %v7513
      %7515 = vmatprep.mubr.bf16.mxu0 %v7168
      %7516 = vmatmul.mubr.bf16.gmra.mrb[0].mxu0 %v7167
      %v7517 = vpop.f32.mrb[0].mxu0
      %v7518 = vadd.f32 %v7256, %v7517
      %v7519 = vpop.f32.mrb[0].mxu0
      %v7520 = vadd.f32 %v7260, %v7519
      %v7521 = vpop.f32.mrb[0].mxu0
      %v7522 = vadd.f32 %v7256, %v7521
      %v7523 = vpop.f32.mrb[0].mxu0
      %v7524 = vadd.f32 %v7260, %v7523
      %7525 = vmatprep.mubr.bf16.mxu0 %v7170
      %7526 = vmatmul.mubr.bf16.gmra.mrb[0].mxu0 %v7169
      %v7527 = vpop.f32.mrb[0].mxu0
      %v7528 = vadd.f32 %v7256, %v7527
      %v7529 = vpop.f32.mrb[0].mxu0
      %v7530 = vadd.f32 %v7260, %v7529
      %v7531 = vpop.f32.mrb[0].mxu0
      %v7532 = vadd.f32 %v7256, %v7531
      %v7533 = vpop.f32.mrb[0].mxu0
      %v7534 = vadd.f32 %v7260, %v7533
      %7535 = vmatprep.mubr.bf16.mxu0 %v7172
      %7536 = vmatmul.mubr.bf16.gmra.mrb[0].mxu0 %v7171
      %v7537 = vpop.f32.mrb[0].mxu0
      %v7538 = vadd.f32 %v7256, %v7537
      %v7539 = vpop.f32.mrb[0].mxu0
      %v7540 = vadd.f32 %v7260, %v7539
      %v7541 = vpop.f32.mrb[0].mxu0
      %v7542 = vadd.f32 %v7256, %v7541
      %v7543 = vpop.f32.mrb[0].mxu0
      %v7544 = vadd.f32 %v7260, %v7543
      %7545 = vmatprep.mubr.bf16.mxu0 %v7174
      %7546 = vmatmul.mubr.bf16.gmra.mrb[0].mxu0 %v7173
      %v7547 = vpop.f32.mrb[0].mxu0
      %v7548 = vadd.f32 %v7256, %v7547
      %v7549 = vpop.f32.mrb[0].mxu0
      %v7550 = vadd.f32 %v7260, %v7549
      %v7551 = vpop.f32.mrb[0].mxu0
      %v7552 = vadd.f32 %v7256, %v7551
      %v7553 = vpop.f32.mrb[0].mxu0
      %v7554 = vadd.f32 %v7260, %v7553
      %7555 = vmatprep.mubr.bf16.mxu0 %v7176
      %7556 = vmatmul.mubr.bf16.gmra.mrb[0].mxu0 %v7175
      %v7557 = vpop.f32.mrb[0].mxu0
      %v7558 = vadd.f32 %v7256, %v7557
      %v7559 = vpop.f32.mrb[0].mxu0
      %v7560 = vadd.f32 %v7260, %v7559
      %v7561 = vpop.f32.mrb[0].mxu0
      %v7562 = vadd.f32 %v7256, %v7561
      %v7563 = vpop.f32.mrb[0].mxu0
      %v7564 = vadd.f32 %v7260, %v7563
      %7565 = vmatprep.mubr.bf16.mxu0 %v7178
      %7566 = vmatmul.mubr.bf16.gmra.mrb[0].mxu0 %v7177
      %v7567 = vpop.f32.mrb[0].mxu0
      %v7568 = vadd.f32 %v7256, %v7567
      %v7569 = vpop.f32.mrb[0].mxu0
      %v7570 = vadd.f32 %v7260, %v7569
      %v7571 = vpop.f32.mrb[0].mxu0
      %v7572 = vadd.f32 %v7256, %v7571
      %v7573 = vpop.f32.mrb[0].mxu0
      %v7574 = vadd.f32 %v7260, %v7573
      %7575 = vmatprep.mubr.bf16.mxu0 %v7180
      %7576 = vmatmul.mubr.bf16.gmra.mrb[0].mxu0 %v7179
      %v7577 = vpop.f32.mrb[0].mxu0
      %v7578 = vadd.f32 %v7256, %v7577
      %v7579 = vpop.f32.mrb[0].mxu0
      %v7580 = vadd.f32 %v7260, %v7579
      %v7581 = vpop.f32.mrb[0].mxu0
      %v7582 = vadd.f32 %v7256, %v7581
      %v7583 = vpop.f32.mrb[0].mxu0
      %v7584 = vadd.f32 %v7260, %v7583
      %7585 = vmatprep.mubr.bf16.mxu0 %v7182
      %7586 = vmatmul.mubr.bf16.gmra.mrb[0].mxu0 %v7181
      %v7587 = vpop.f32.mrb[0].mxu0
      %v7588 = vadd.f32 %v7256, %v7587
      %v7589 = vpop.f32.mrb[0].mxu0
      %v7590 = vadd.f32 %v7260, %v7589
      %v7591 = vpop.f32.mrb[0].mxu0
      %v7592 = vadd.f32 %v7256, %v7591
      %v7593 = vpop.f32.mrb[0].mxu0
      %v7594 = vadd.f32 %v7260, %v7593
      %7595 = vmatprep.mubr.bf16.mxu0 %v7184
      %7596 = vmatmul.mubr.bf16.gmra.mrb[0].mxu0 %v7183
      %v7597 = vpop.f32.mrb[0].mxu0
      %v7598 = vadd.f32 %v7256, %v7597
      %v7599 = vpop.f32.mrb[0].mxu0
      %v7600 = vadd.f32 %v7260, %v7599
      %v7601 = vpop.f32.mrb[0].mxu0
      %v7602 = vadd.f32 %v7256, %v7601
      %v7603 = vpop.f32.mrb[0].mxu0
      %v7604 = vadd.f32 %v7260, %v7603
      %7605 = vmatprep.mubr.bf16.mxu0 %v7186
      %7606 = vmatmul.mubr.bf16.gmra.mrb[0].mxu0 %v7185
      %v7607 = vpop.f32.mrb[0].mxu0
      %v7608 = vadd.f32 %v7256, %v7607
      %v7609 = vpop.f32.mrb[0].mxu0
      %v7610 = vadd.f32 %v7260, %v7609
      %v7611 = vpop.f32.mrb[0].mxu0
      %v7612 = vadd.f32 %v7256, %v7611
      %v7613 = vpop.f32.mrb[0].mxu0
      %v7614 = vadd.f32 %v7260, %v7613
      %7615 = vmatprep.mubr.bf16.mxu0 %v7188
      %7616 = vmatmul.mubr.bf16.gmra.mrb[0].mxu0 %v7187
      %v7617 = vpop.f32.mrb[0].mxu0
      %v7618 = vadd.f32 %v7256, %v7617
      %v7619 = vpop.f32.mrb[0].mxu0
      %v7620 = vadd.f32 %v7260, %v7619
      %v7621 = vpop.f32.mrb[0].mxu0
      %v7622 = vadd.f32 %v7256, %v7621
      %v7623 = vpop.f32.mrb[0].mxu0
      %v7624 = vadd.f32 %v7260, %v7623
      %7625 = vmatprep.mubr.bf16.mxu0 %v7190
      %7626 = vmatmul.mubr.bf16.gmra.mrb[0].mxu0 %v7189
      %v7627 = vpop.f32.mrb[0].mxu0
      %v7628 = vadd.f32 %v7256, %v7627
      %v7629 = vpop.f32.mrb[0].mxu0
      %v7630 = vadd.f32 %v7260, %v7629
      %v7631 = vpop.f32.mrb[0].mxu0
      %v7632 = vadd.f32 %v7256, %v7631
      %v7633 = vpop.f32.mrb[0].mxu0
      %v7634 = vadd.f32 %v7260, %v7633
      %7635 = vmatprep.mubr.bf16.mxu0 %v7192
      %7636 = vmatmul.mubr.bf16.gmra.mrb[0].mxu0 %v7191
      %v7637 = vpop.f32.mrb[0].mxu0
      %v7638 = vadd.f32 %v7256, %v7637
      %v7639 = vpop.f32.mrb[0].mxu0
      %v7640 = vadd.f32 %v7260, %v7639
      %v7641 = vpop.f32.mrb[0].mxu0
      %v7642 = vadd.f32 %v7256, %v7641
      %v7643 = vpop.f32.mrb[0].mxu0
      %v7644 = vadd.f32 %v7260, %v7643
      %7645 = vmatprep.mubr.bf16.mxu0 %v7194
      %7646 = vmatmul.mubr.bf16.gmra.mrb[0].mxu0 %v7193
      %v7647 = vpop.f32.mrb[0].mxu0
      %v7648 = vadd.f32 %v7256, %v7647
      %v7649 = vpop.f32.mrb[0].mxu0
      %v7650 = vadd.f32 %v7260, %v7649
      %v7651 = vpop.f32.mrb[0].mxu0
      %v7652 = vadd.f32 %v7256, %v7651
      %v7653 = vpop.f32.mrb[0].mxu0
      %v7654 = vadd.f32 %v7260, %v7653
      %7655 = vmatprep.mubr.bf16.mxu0 %v7196
      %7656 = vmatmul.mubr.bf16.gmra.mrb[0].mxu0 %v7195
      %v7657 = vpop.f32.mrb[0].mxu0
      %v7658 = vadd.f32 %v7256, %v7657
      %v7659 = vpop.f32.mrb[0].mxu0
      %v7660 = vadd.f32 %v7260, %v7659
      %v7661 = vpop.f32.mrb[0].mxu0
      %v7662 = vadd.f32 %v7256, %v7661
      %v7663 = vpop.f32.mrb[0].mxu0
      %v7664 = vadd.f32 %v7260, %v7663
      %7665 = vmatprep.mubr.bf16.mxu0 %v7198
      %7666 = vmatmul.mubr.bf16.gmra.mrb[0].mxu0 %v7197
      %v7667 = vpop.f32.mrb[0].mxu0
      %v7668 = vadd.f32 %v7256, %v7667
      %v7669 = vpop.f32.mrb[0].mxu0
      %v7670 = vadd.f32 %v7260, %v7669
      %v7671 = vpop.f32.mrb[0].mxu0
      %v7672 = vadd.f32 %v7256, %v7671
      %v7673 = vpop.f32.mrb[0].mxu0
      %v7674 = vadd.f32 %v7260, %v7673
      %7675 = vmatprep.mubr.bf16.mxu0 %v7200
      %7676 = vmatmul.mubr.bf16.gmra.mrb[0].mxu0 %v7199
      %v7677 = vpop.f32.mrb[0].mxu0
      %v7678 = vadd.f32 %v7256, %v7677
      %v7679 = vpop.f32.mrb[0].mxu0
      %v7680 = vadd.f32 %v7260, %v7679
      %v7681 = vpop.f32.mrb[0].mxu0
      %v7682 = vadd.f32 %v7256, %v7681
      %v7683 = vpop.f32.mrb[0].mxu0
      %v7684 = vadd.f32 %v7260, %v7683
      %7685 = vmatprep.mubr.bf16.mxu0 %v7202
      %7686 = vmatmul.mubr.bf16.gmra.mrb[0].mxu0 %v7201
      %v7687 = vpop.f32.mrb[0].mxu0
      %v7688 = vadd.f32 %v7256, %v7687
      %v7689 = vpop.f32.mrb[0].mxu0
      %v7690 = vadd.f32 %v7260, %v7689
      %v7691 = vpop.f32.mrb[0].mxu0
      %v7692 = vadd.f32 %v7256, %v7691
      %v7693 = vpop.f32.mrb[0].mxu0
      %v7694 = vadd.f32 %v7260, %v7693
      %7695 = vmatprep.mubr.bf16.mxu0 %v7204
      %7696 = vmatmul.mubr.bf16.gmra.mrb[0].mxu0 %v7203
      %v7697 = vpop.f32.mrb[0].mxu0
      %v7698 = vadd.f32 %v7256, %v7697
      %v7699 = vpop.f32.mrb[0].mxu0
      %v7700 = vadd.f32 %v7260, %v7699
      %v7701 = vpop.f32.mrb[0].mxu0
      %v7702 = vadd.f32 %v7256, %v7701
      %v7703 = vpop.f32.mrb[0].mxu0
      %v7704 = vadd.f32 %v7260, %v7703
      %7705 = vmatprep.mubr.bf16.mxu0 %v7206
      %7706 = vmatmul.mubr.bf16.gmra.mrb[0].mxu0 %v7205
      %v7707 = vpop.f32.mrb[0].mxu0
      %v7708 = vadd.f32 %v7256, %v7707
      %v7709 = vpop.f32.mrb[0].mxu0
      %v7710 = vadd.f32 %v7260, %v7709
      %v7711 = vpop.f32.mrb[0].mxu0
      %v7712 = vadd.f32 %v7256, %v7711
      %v7713 = vpop.f32.mrb[0].mxu0
      %v7714 = vadd.f32 %v7260, %v7713
      %7715 = vmatprep.mubr.bf16.mxu0 %v7208
      %7716 = vmatmul.mubr.bf16.gmra.mrb[0].mxu0 %v7207
      %v7717 = vpop.f32.mrb[0].mxu0
      %v7718 = vadd.f32 %v7256, %v7717
      %v7719 = vpop.f32.mrb[0].mxu0
      %v7720 = vadd.f32 %v7260, %v7719
      %v7721 = vpop.f32.mrb[0].mxu0
      %v7722 = vadd.f32 %v7256, %v7721
      %v7723 = vpop.f32.mrb[0].mxu0
      %v7724 = vadd.f32 %v7260, %v7723
      %7725 = vmatprep.mubr.bf16.mxu0 %v7210
      %7726 = vmatmul.mubr.bf16.gmra.mrb[0].mxu0 %v7209
      %v7727 = vpop.f32.mrb[0].mxu0
      %v7728 = vadd.f32 %v7256, %v7727
      %v7729 = vpop.f32.mrb[0].mxu0
      %v7730 = vadd.f32 %v7260, %v7729
      %v7731 = vpop.f32.mrb[0].mxu0
      %v7732 = vadd.f32 %v7256, %v7731
      %v7733 = vpop.f32.mrb[0].mxu0
      %v7734 = vadd.f32 %v7260, %v7733
      %7735 = vmatprep.mubr.bf16.mxu0 %v7212
      %7736 = vmatmul.mubr.bf16.gmra.mrb[0].mxu0 %v7211
      %v7737 = vpop.f32.mrb[0].mxu0
      %v7738 = vadd.f32 %v7256, %v7737
      %v7739 = vpop.f32.mrb[0].mxu0
      %v7740 = vadd.f32 %v7260, %v7739
      %v7741 = vpop.f32.mrb[0].mxu0
      %v7742 = vadd.f32 %v7256, %v7741
      %v7743 = vpop.f32.mrb[0].mxu0
      %v7744 = vadd.f32 %v7260, %v7743
      %7745 = vmatprep.mubr.bf16.mxu0 %v7214
      %7746 = vmatmul.mubr.bf16.gmra.mrb[0].mxu0 %v7213
      %v7747 = vpop.f32.mrb[0].mxu0
      %v7748 = vadd.f32 %v7256, %v7747
      %v7749 = vpop.f32.mrb[0].mxu0
      %v7750 = vadd.f32 %v7260, %v7749
      %v7751 = vpop.f32.mrb[0].mxu0
      %v7752 = vadd.f32 %v7256, %v7751
      %v7753 = vpop.f32.mrb[0].mxu0
      %v7754 = vadd.f32 %v7260, %v7753
      %7755 = vmatprep.mubr.bf16.mxu0 %v7216
      %7756 = vmatmul.mubr.bf16.gmra.mrb[0].mxu0 %v7215
      %v7757 = vpop.f32.mrb[0].mxu0
      %v7758 = vadd.f32 %v7256, %v7757
      %v7759 = vpop.f32.mrb[0].mxu0
      %v7760 = vadd.f32 %v7260, %v7759
      %v7761 = vpop.f32.mrb[0].mxu0
      %v7762 = vadd.f32 %v7256, %v7761
      %v7763 = vpop.f32.mrb[0].mxu0
      %v7764 = vadd.f32 %v7260, %v7763
      %7765 = vmatprep.mubr.bf16.mxu0 %v7218
      %7766 = vmatmul.mubr.bf16.gmra.mrb[0].mxu0 %v7217
      %v7767 = vpop.f32.mrb[0].mxu0
      %v7768 = vadd.f32 %v7256, %v7767
      %v7769 = vpop.f32.mrb[0].mxu0
      %v7770 = vadd.f32 %v7260, %v7769
      %v7771 = vpop.f32.mrb[0].mxu0
      %v7772 = vadd.f32 %v7256, %v7771
      %v7773 = vpop.f32.mrb[0].mxu0
      %v7774 = vadd.f32 %v7260, %v7773
      %7775 = vdwg.mxu0
      %v7776 = vmax.f32 %v7458, 0.0
      %v7777 = vmax.f32 %v7460, 0.0
      %v7778 = vmax.f32 %v7462, 0.0
      %v7779 = vmax.f32 %v7464, 0.0
      %v7780 = vmax.f32 %v7468, 0.0
      %v7781 = vmax.f32 %v7470, 0.0
      %v7782 = vmax.f32 %v7472, 0.0
      %v7783 = vmax.f32 %v7474, 0.0
      %v7784 = vmax.f32 %v7478, 0.0
      %v7785 = vmax.f32 %v7480, 0.0
      %v7786 = vmax.f32 %v7482, 0.0
      %v7787 = vmax.f32 %v7484, 0.0
      %v7788 = vmax.f32 %v7488, 0.0
      %v7789 = vmax.f32 %v7490, 0.0
      %v7790 = vmax.f32 %v7492, 0.0
      %v7791 = vmax.f32 %v7494, 0.0
      %v7792 = vmax.f32 %v7498, 0.0
      %v7793 = vmax.f32 %v7500, 0.0
      %v7794 = vmax.f32 %v7502, 0.0
      %v7795 = vmax.f32 %v7504, 0.0
      %v7796 = vmax.f32 %v7508, 0.0
      %v7797 = vmax.f32 %v7510, 0.0
      %v7798 = vmax.f32 %v7512, 0.0
      %v7799 = vmax.f32 %v7514, 0.0
      %v7800 = vmax.f32 %v7518, 0.0
      %v7801 = vmax.f32 %v7520, 0.0
      %v7802 = vmax.f32 %v7522, 0.0
      %v7803 = vmax.f32 %v7524, 0.0
      %v7804 = vmax.f32 %v7528, 0.0
      %v7805 = vmax.f32 %v7530, 0.0
      %v7806 = vmax.f32 %v7532, 0.0
      %v7807 = vmax.f32 %v7534, 0.0
      %v7808 = vmax.f32 %v7538, 0.0
      %v7809 = vmax.f32 %v7540, 0.0
      %v7810 = vmax.f32 %v7542, 0.0
      %v7811 = vmax.f32 %v7544, 0.0
      %v7812 = vmax.f32 %v7548, 0.0
      %v7813 = vmax.f32 %v7550, 0.0
      %v7814 = vmax.f32 %v7552, 0.0
      %v7815 = vmax.f32 %v7554, 0.0
      %v7816 = vmax.f32 %v7558, 0.0
      %v7817 = vmax.f32 %v7560, 0.0
      %v7818 = vmax.f32 %v7562, 0.0
      %v7819 = vmax.f32 %v7564, 0.0
      %v7820 = vmax.f32 %v7568, 0.0
      %v7821 = vmax.f32 %v7570, 0.0
      %v7822 = vmax.f32 %v7572, 0.0
      %v7823 = vmax.f32 %v7574, 0.0
      %v7824 = vmax.f32 %v7578, 0.0
      %v7825 = vmax.f32 %v7580, 0.0
      %v7826 = vmax.f32 %v7582, 0.0
      %v7827 = vmax.f32 %v7584, 0.0
      %v7828 = vmax.f32 %v7588, 0.0
      %v7829 = vmax.f32 %v7590, 0.0
      %v7830 = vmax.f32 %v7592, 0.0
      %v7831 = vmax.f32 %v7594, 0.0
      %v7832 = vmax.f32 %v7598, 0.0
      %v7833 = vmax.f32 %v7600, 0.0
      %v7834 = vmax.f32 %v7602, 0.0
      %v7835 = vmax.f32 %v7604, 0.0
      %v7836 = vmax.f32 %v7608, 0.0
      %v7837 = vmax.f32 %v7610, 0.0
      %v7838 = vmax.f32 %v7612, 0.0
      %v7839 = vmax.f32 %v7614, 0.0
      %v7840 = vmax.f32 %v7618, 0.0
      %v7841 = vmax.f32 %v7620, 0.0
      %v7842 = vmax.f32 %v7622, 0.0
      %v7843 = vmax.f32 %v7624, 0.0
      %v7844 = vmax.f32 %v7628, 0.0
      %v7845 = vmax.f32 %v7630, 0.0
      %v7846 = vmax.f32 %v7632, 0.0
      %v7847 = vmax.f32 %v7634, 0.0
      %v7848 = vmax.f32 %v7638, 0.0
      %v7849 = vmax.f32 %v7640, 0.0
      %v7850 = vmax.f32 %v7642, 0.0
      %v7851 = vmax.f32 %v7644, 0.0
      %v7852 = vmax.f32 %v7648, 0.0
      %v7853 = vmax.f32 %v7650, 0.0
      %v7854 = vmax.f32 %v7652, 0.0
      %v7855 = vmax.f32 %v7654, 0.0
      %v7856 = vmax.f32 %v7658, 0.0
      %v7857 = vmax.f32 %v7660, 0.0
      %v7858 = vmax.f32 %v7662, 0.0
      %v7859 = vmax.f32 %v7664, 0.0
      %v7860 = vmax.f32 %v7668, 0.0
      %v7861 = vmax.f32 %v7670, 0.0
      %v7862 = vmax.f32 %v7672, 0.0
      %v7863 = vmax.f32 %v7674, 0.0
      %v7864 = vmax.f32 %v7678, 0.0
      %v7865 = vmax.f32 %v7680, 0.0
      %v7866 = vmax.f32 %v7682, 0.0
      %v7867 = vmax.f32 %v7684, 0.0
      %v7868 = vmax.f32 %v7688, 0.0
      %v7869 = vmax.f32 %v7690, 0.0
      %v7870 = vmax.f32 %v7692, 0.0
      %v7871 = vmax.f32 %v7694, 0.0
      %v7872 = vmax.f32 %v7698, 0.0
      %v7873 = vmax.f32 %v7700, 0.0
      %v7874 = vmax.f32 %v7702, 0.0
      %v7875 = vmax.f32 %v7704, 0.0
      %v7876 = vmax.f32 %v7708, 0.0
      %v7877 = vmax.f32 %v7710, 0.0
      %v7878 = vmax.f32 %v7712, 0.0
      %v7879 = vmax.f32 %v7714, 0.0
      %v7880 = vmax.f32 %v7718, 0.0
      %v7881 = vmax.f32 %v7720, 0.0
      %v7882 = vmax.f32 %v7722, 0.0
      %v7883 = vmax.f32 %v7724, 0.0
      %v7884 = vmax.f32 %v7728, 0.0
      %v7885 = vmax.f32 %v7730, 0.0
      %v7886 = vmax.f32 %v7732, 0.0
      %v7887 = vmax.f32 %v7734, 0.0
      %v7888 = vmax.f32 %v7738, 0.0
      %v7889 = vmax.f32 %v7740, 0.0
      %v7890 = vmax.f32 %v7742, 0.0
      %v7891 = vmax.f32 %v7744, 0.0
      %v7892 = vmax.f32 %v7748, 0.0
      %v7893 = vmax.f32 %v7750, 0.0
      %v7894 = vmax.f32 %v7752, 0.0
      %v7895 = vmax.f32 %v7754, 0.0
      %v7896 = vmax.f32 %v7758, 0.0
      %v7897 = vmax.f32 %v7760, 0.0
      %v7898 = vmax.f32 %v7762, 0.0
      %v7899 = vmax.f32 %v7764, 0.0
      %v7900 = vmax.f32 %v7768, 0.0
      %v7901 = vmax.f32 %v7770, 0.0
      %v7902 = vmax.f32 %v7772, 0.0
      %v7903 = vmax.f32 %v7774, 0.0
      %v7904 = vpack.c.bf16 %v7778, %v7776
      %v7905 = vpack.c.bf16 %v7779, %v7777
      %v7906 = vpack.c.bf16 %v7782, %v7780
      %v7907 = vpack.c.bf16 %v7783, %v7781
      %v7908 = vpack.c.bf16 %v7786, %v7784
      %v7909 = vpack.c.bf16 %v7787, %v7785
      %v7910 = vpack.c.bf16 %v7790, %v7788
      %v7911 = vpack.c.bf16 %v7791, %v7789
      %v7912 = vpack.c.bf16 %v7794, %v7792
      %v7913 = vpack.c.bf16 %v7795, %v7793
      %v7914 = vpack.c.bf16 %v7798, %v7796
      %v7915 = vpack.c.bf16 %v7799, %v7797
      %v7916 = vpack.c.bf16 %v7802, %v7800
      %v7917 = vpack.c.bf16 %v7803, %v7801
      %v7918 = vpack.c.bf16 %v7806, %v7804
      %v7919 = vpack.c.bf16 %v7807, %v7805
      %v7920 = vpack.c.bf16 %v7810, %v7808
      %v7921 = vpack.c.bf16 %v7811, %v7809
      %v7922 = vpack.c.bf16 %v7814, %v7812
      %v7923 = vpack.c.bf16 %v7815, %v7813
      %v7924 = vpack.c.bf16 %v7818, %v7816
      %v7925 = vpack.c.bf16 %v7819, %v7817
      %v7926 = vpack.c.bf16 %v7822, %v7820
      %v7927 = vpack.c.bf16 %v7823, %v7821
      %v7928 = vpack.c.bf16 %v7826, %v7824
      %v7929 = vpack.c.bf16 %v7827, %v7825
      %v7930 = vpack.c.bf16 %v7830, %v7828
      %v7931 = vpack.c.bf16 %v7831, %v7829
      %v7932 = vpack.c.bf16 %v7834, %v7832
      %v7933 = vpack.c.bf16 %v7835, %v7833
      %v7934 = vpack.c.bf16 %v7838, %v7836
      %v7935 = vpack.c.bf16 %v7839, %v7837
      %v7936 = vpack.c.bf16 %v7842, %v7840
      %v7937 = vpack.c.bf16 %v7843, %v7841
      %v7938 = vpack.c.bf16 %v7846, %v7844
      %v7939 = vpack.c.bf16 %v7847, %v7845
      %v7940 = vpack.c.bf16 %v7850, %v7848
      %v7941 = vpack.c.bf16 %v7851, %v7849
      %v7942 = vpack.c.bf16 %v7854, %v7852
      %v7943 = vpack.c.bf16 %v7855, %v7853
      %v7944 = vpack.c.bf16 %v7858, %v7856
      %v7945 = vpack.c.bf16 %v7859, %v7857
      %v7946 = vpack.c.bf16 %v7862, %v7860
      %v7947 = vpack.c.bf16 %v7863, %v7861
      %v7948 = vpack.c.bf16 %v7866, %v7864
      %v7949 = vpack.c.bf16 %v7867, %v7865
      %v7950 = vpack.c.bf16 %v7870, %v7868
      %v7951 = vpack.c.bf16 %v7871, %v7869
      %v7952 = vpack.c.bf16 %v7874, %v7872
      %v7953 = vpack.c.bf16 %v7875, %v7873
      %v7954 = vpack.c.bf16 %v7878, %v7876
      %v7955 = vpack.c.bf16 %v7879, %v7877
      %v7956 = vpack.c.bf16 %v7882, %v7880
      %v7957 = vpack.c.bf16 %v7883, %v7881
      %v7958 = vpack.c.bf16 %v7886, %v7884
      %v7959 = vpack.c.bf16 %v7887, %v7885
      %v7960 = vpack.c.bf16 %v7890, %v7888
      %v7961 = vpack.c.bf16 %v7891, %v7889
      %v7962 = vpack.c.bf16 %v7894, %v7892
      %v7963 = vpack.c.bf16 %v7895, %v7893
      %v7964 = vpack.c.bf16 %v7898, %v7896
      %v7965 = vpack.c.bf16 %v7899, %v7897
      %v7966 = vpack.c.bf16 %v7902, %v7900
      %v7967 = vpack.c.bf16 %v7903, %v7901
      %v7968 = vld [vmem:[%s16] sm:$0xff]
      %v7969 = vld [vmem:[%s16 + $0x8] sm:$0xff]
      %v7970 = vld [vmem:[%s16 + $0x10] sm:$0xff]
      %v7971 = vld [vmem:[%s16 + $0x18] sm:$0xff]
      %v7972 = vld [vmem:[%s16 + $0x20] sm:$0xff]
      %v7973 = vld [vmem:[%s16 + $0x28] sm:$0xff]
      %v7974 = vld [vmem:[%s16 + $0x30] sm:$0xff]
      %v7975 = vld [vmem:[%s16 + $0x38] sm:$0xff]
      %v7976 = vld [vmem:[%s16 + $0x40] sm:$0xff]
      %v7977 = vld [vmem:[%s16 + $0x48] sm:$0xff]
      %v7978 = vld [vmem:[%s16 + $0x50] sm:$0xff]
      %v7979 = vld [vmem:[%s16 + $0x58] sm:$0xff]
      %v7980 = vld [vmem:[%s16 + $0x60] sm:$0xff]
      %v7981 = vld [vmem:[%s16 + $0x68] sm:$0xff]
      %v7982 = vld [vmem:[%s16 + $0x70] sm:$0xff]
      %v7983 = vld [vmem:[%s16 + $0x78] sm:$0xff]
      %v7984 = vld [vmem:[%s16 + $0x80] sm:$0xff]
      %v7985 = vld [vmem:[%s16 + $0x88] sm:$0xff]
      %v7986 = vld [vmem:[%s16 + $0x90] sm:$0xff]
      %v7987 = vld [vmem:[%s16 + $0x98] sm:$0xff]
      %v7988 = vld [vmem:[%s16 + $0xa0] sm:$0xff]
      %v7989 = vld [vmem:[%s16 + $0xa8] sm:$0xff]
      %v7990 = vld [vmem:[%s16 + $0xb0] sm:$0xff]
      %v7991 = vld [vmem:[%s16 + $0xb8] sm:$0xff]
      %v7992 = vld [vmem:[%s16 + $0xc0] sm:$0xff]
      %v7993 = vld [vmem:[%s16 + $0xc8] sm:$0xff]
      %v7994 = vld [vmem:[%s16 + $0xd0] sm:$0xff]
      %v7995 = vld [vmem:[%s16 + $0xd8] sm:$0xff]
      %v7996 = vld [vmem:[%s16 + $0xe0] sm:$0xff]
      %v7997 = vld [vmem:[%s16 + $0xe8] sm:$0xff]
      %v7998 = vld [vmem:[%s16 + $0xf0] sm:$0xff]
      %v7999 = vld [vmem:[%s16 + $0xf8] sm:$0xff]
      %v8000 = vld [vmem:[%s17] sm:$0x3]
      %v8002 = vlaneseq
      %v8003 = vshrl.u32 %v8002, 7
      %v8004 = vsub.s32 0, %v8003
      %v8005 = vrot.slane %v8000, %v8004
      %v8006 = vlaneseq
      %v8007 = vshrl.u32 %v8006, 7
      %v8008 = vsub.s32 1, %v8007
      %v8009 = vrot.slane %v8000, %v8008
      %v8044 = vunpack.c.l.b16 %v7968
      %v8045 = vunpack.c.h.b16 %v7968
      %v8046 = vunpack.c.l.b16 %v7969
      %v8047 = vunpack.c.h.b16 %v7969
      %v8048 = vunpack.c.l.b16 %v7970
      %v8049 = vunpack.c.h.b16 %v7970
      %v8050 = vunpack.c.l.b16 %v7971
      %v8051 = vunpack.c.h.b16 %v7971
      %v8052 = vunpack.c.l.b16 %v7972
      %v8053 = vunpack.c.h.b16 %v7972
      %v8054 = vunpack.c.l.b16 %v7973
      %v8055 = vunpack.c.h.b16 %v7973
      %v8056 = vunpack.c.l.b16 %v7974
      %v8057 = vunpack.c.h.b16 %v7974
      %v8058 = vunpack.c.l.b16 %v7975
      %v8059 = vunpack.c.h.b16 %v7975
      %v8060 = vunpack.c.l.b16 %v7976
      %v8061 = vunpack.c.h.b16 %v7976
      %v8062 = vunpack.c.l.b16 %v7977
      %v8063 = vunpack.c.h.b16 %v7977
      %v8064 = vunpack.c.l.b16 %v7978
      %v8065 = vunpack.c.h.b16 %v7978
      %v8066 = vunpack.c.l.b16 %v7979
      %v8067 = vunpack.c.h.b16 %v7979
      %v8068 = vunpack.c.l.b16 %v7980
      %v8069 = vunpack.c.h.b16 %v7980
      %v8070 = vunpack.c.l.b16 %v7981
      %v8071 = vunpack.c.h.b16 %v7981
      %v8072 = vunpack.c.l.b16 %v7982
      %v8073 = vunpack.c.h.b16 %v7982
      %v8074 = vunpack.c.l.b16 %v7983
      %v8075 = vunpack.c.h.b16 %v7983
      %v8076 = vunpack.c.l.b16 %v7984
      %v8077 = vunpack.c.h.b16 %v7984
      %v8078 = vunpack.c.l.b16 %v7985
      %v8079 = vunpack.c.h.b16 %v7985
      %v8080 = vunpack.c.l.b16 %v7986
      %v8081 = vunpack.c.h.b16 %v7986
      %v8082 = vunpack.c.l.b16 %v7987
      %v8083 = vunpack.c.h.b16 %v7987
      %v8084 = vunpack.c.l.b16 %v7988
      %v8085 = vunpack.c.h.b16 %v7988
      %v8086 = vunpack.c.l.b16 %v7989
      %v8087 = vunpack.c.h.b16 %v7989
      %v8088 = vunpack.c.l.b16 %v7990
      %v8089 = vunpack.c.h.b16 %v7990
      %v8090 = vunpack.c.l.b16 %v7991
      %v8091 = vunpack.c.h.b16 %v7991
      %v8092 = vunpack.c.l.b16 %v7992
      %v8093 = vunpack.c.h.b16 %v7992
      %v8094 = vunpack.c.l.b16 %v7993
      %v8095 = vunpack.c.h.b16 %v7993
      %v8096 = vunpack.c.l.b16 %v7994
      %v8097 = vunpack.c.h.b16 %v7994
      %v8098 = vunpack.c.l.b16 %v7995
      %v8099 = vunpack.c.h.b16 %v7995
      %v8100 = vunpack.c.l.b16 %v7996
      %v8101 = vunpack.c.h.b16 %v7996
      %v8102 = vunpack.c.l.b16 %v7997
      %v8103 = vunpack.c.h.b16 %v7997
      %v8104 = vunpack.c.l.b16 %v7998
      %v8105 = vunpack.c.h.b16 %v7998
      %v8106 = vunpack.c.l.b16 %v7999
      %v8107 = vunpack.c.h.b16 %v7999
      %v8108 = vpack.c.b16 %v8046, %v8044
      %v8109 = vpack.c.b16 %v8047, %v8045
      %v8110 = vpack.c.b16 %v8050, %v8048
      %v8111 = vpack.c.b16 %v8051, %v8049
      %v8112 = vpack.c.b16 %v8054, %v8052
      %v8113 = vpack.c.b16 %v8055, %v8053
      %v8114 = vpack.c.b16 %v8058, %v8056
      %v8115 = vpack.c.b16 %v8059, %v8057
      %v8116 = vpack.c.b16 %v8062, %v8060
      %v8117 = vpack.c.b16 %v8063, %v8061
      %v8118 = vpack.c.b16 %v8066, %v8064
      %v8119 = vpack.c.b16 %v8067, %v8065
      %v8120 = vpack.c.b16 %v8070, %v8068
      %v8121 = vpack.c.b16 %v8071, %v8069
      %v8122 = vpack.c.b16 %v8074, %v8072
      %v8123 = vpack.c.b16 %v8075, %v8073
      %v8124 = vpack.c.b16 %v8078, %v8076
      %v8125 = vpack.c.b16 %v8079, %v8077
      %v8126 = vpack.c.b16 %v8082, %v8080
      %v8127 = vpack.c.b16 %v8083, %v8081
      %v8128 = vpack.c.b16 %v8086, %v8084
      %v8129 = vpack.c.b16 %v8087, %v8085
      %v8130 = vpack.c.b16 %v8090, %v8088
      %v8131 = vpack.c.b16 %v8091, %v8089
      %v8132 = vpack.c.b16 %v8094, %v8092
      %v8133 = vpack.c.b16 %v8095, %v8093
      %v8134 = vpack.c.b16 %v8098, %v8096
      %v8135 = vpack.c.b16 %v8099, %v8097
      %v8136 = vpack.c.b16 %v8102, %v8100
      %v8137 = vpack.c.b16 %v8103, %v8101
      %v8138 = vpack.c.b16 %v8106, %v8104
      %v8139 = vpack.c.b16 %v8107, %v8105
      %8172 = vmatprep.subr.bf16.mxu0 %v8109
      %8173 = vmatpush1.bf16.msra.mxu0 %v8108
      %8174 = vmatprep.subr.bf16.mxu0 %v8111
      %8175 = vmatpush1.bf16.msra.mxu0 %v8110
      %8176 = vmatprep.subr.bf16.mxu0 %v8113
      %8177 = vmatpush1.bf16.msra.mxu0 %v8112
      %8178 = vmatprep.subr.bf16.mxu0 %v8115
      %8179 = vmatpush1.bf16.msra.mxu0 %v8114
      %8180 = vmatprep.subr.bf16.mxu0 %v8117
      %8181 = vmatpush1.bf16.msra.mxu0 %v8116
      %8182 = vmatprep.subr.bf16.mxu0 %v8119
      %8183 = vmatpush1.bf16.msra.mxu0 %v8118
      %8184 = vmatprep.subr.bf16.mxu0 %v8121
      %8185 = vmatpush1.bf16.msra.mxu0 %v8120
      %8186 = vmatprep.subr.bf16.mxu0 %v8123
      %8187 = vmatpush1.bf16.msra.mxu0 %v8122
      %8188 = vmatprep.subr.bf16.mxu0 %v8125
      %8189 = vmatpush1.bf16.msra.mxu0 %v8124
      %8190 = vmatprep.subr.bf16.mxu0 %v8127
      %8191 = vmatpush1.bf16.msra.mxu0 %v8126
      %8192 = vmatprep.subr.bf16.mxu0 %v8129
      %8193 = vmatpush1.bf16.msra.mxu0 %v8128
      %8194 = vmatprep.subr.bf16.mxu0 %v8131
      %8195 = vmatpush1.bf16.msra.mxu0 %v8130
      %8196 = vmatprep.subr.bf16.mxu0 %v8133
      %8197 = vmatpush1.bf16.msra.mxu0 %v8132
      %8198 = vmatprep.subr.bf16.mxu0 %v8135
      %8199 = vmatpush1.bf16.msra.mxu0 %v8134
      %8200 = vmatprep.subr.bf16.mxu0 %v8137
      %8201 = vmatpush1.bf16.msra.mxu0 %v8136
      %8202 = vmatprep.subr.bf16.mxu0 %v8139
      %8203 = vmatpush1.bf16.msra.mxu0 %v8138
      %8204 = vmatprep.mubr.bf16.mxu0 %v7905
      %8205 = vmatmul.mubr.bf16.gmra.mrb[0].mxu0 %v7904
      %v8206 = vpop.f32.mrb[0].mxu0
      %v8207 = vadd.f32 %v8005, %v8206
      %v8208 = vpop.f32.mrb[0].mxu0
      %v8209 = vadd.f32 %v8009, %v8208
      %v8210 = vpop.f32.mrb[0].mxu0
      %v8211 = vadd.f32 %v8005, %v8210
      %v8212 = vpop.f32.mrb[0].mxu0
      %v8213 = vadd.f32 %v8009, %v8212
      %8214 = vmatprep.mubr.bf16.mxu0 %v7907
      %8215 = vmatmul.mubr.bf16.gmra.mrb[0].mxu0 %v7906
      %v8216 = vpop.f32.mrb[0].mxu0
      %v8217 = vadd.f32 %v8005, %v8216
      %v8218 = vpop.f32.mrb[0].mxu0
      %v8219 = vadd.f32 %v8009, %v8218
      %v8220 = vpop.f32.mrb[0].mxu0
      %v8221 = vadd.f32 %v8005, %v8220
      %v8222 = vpop.f32.mrb[0].mxu0
      %v8223 = vadd.f32 %v8009, %v8222
      %8224 = vmatprep.mubr.bf16.mxu0 %v7909
      %8225 = vmatmul.mubr.bf16.gmra.mrb[0].mxu0 %v7908
      %v8226 = vpop.f32.mrb[0].mxu0
      %v8227 = vadd.f32 %v8005, %v8226
      %v8228 = vpop.f32.mrb[0].mxu0
      %v8229 = vadd.f32 %v8009, %v8228
      %v8230 = vpop.f32.mrb[0].mxu0
      %v8231 = vadd.f32 %v8005, %v8230
      %v8232 = vpop.f32.mrb[0].mxu0
      %v8233 = vadd.f32 %v8009, %v8232
      %8234 = vmatprep.mubr.bf16.mxu0 %v7911
      %8235 = vmatmul.mubr.bf16.gmra.mrb[0].mxu0 %v7910
      %v8236 = vpop.f32.mrb[0].mxu0
      %v8237 = vadd.f32 %v8005, %v8236
      %v8238 = vpop.f32.mrb[0].mxu0
      %v8239 = vadd.f32 %v8009, %v8238
      %v8240 = vpop.f32.mrb[0].mxu0
      %v8241 = vadd.f32 %v8005, %v8240
      %v8242 = vpop.f32.mrb[0].mxu0
      %v8243 = vadd.f32 %v8009, %v8242
      %8244 = vmatprep.mubr.bf16.mxu0 %v7913
      %8245 = vmatmul.mubr.bf16.gmra.mrb[0].mxu0 %v7912
      %v8246 = vpop.f32.mrb[0].mxu0
      %v8247 = vadd.f32 %v8005, %v8246
      %v8248 = vpop.f32.mrb[0].mxu0
      %v8249 = vadd.f32 %v8009, %v8248
      %v8250 = vpop.f32.mrb[0].mxu0
      %v8251 = vadd.f32 %v8005, %v8250
      %v8252 = vpop.f32.mrb[0].mxu0
      %v8253 = vadd.f32 %v8009, %v8252
      %8254 = vmatprep.mubr.bf16.mxu0 %v7915
      %8255 = vmatmul.mubr.bf16.gmra.mrb[0].mxu0 %v7914
      %v8256 = vpop.f32.mrb[0].mxu0
      %v8257 = vadd.f32 %v8005, %v8256
      %v8258 = vpop.f32.mrb[0].mxu0
      %v8259 = vadd.f32 %v8009, %v8258
      %v8260 = vpop.f32.mrb[0].mxu0
      %v8261 = vadd.f32 %v8005, %v8260
      %v8262 = vpop.f32.mrb[0].mxu0
      %v8263 = vadd.f32 %v8009, %v8262
      %8264 = vmatprep.mubr.bf16.mxu0 %v7917
      %8265 = vmatmul.mubr.bf16.gmra.mrb[0].mxu0 %v7916
      %v8266 = vpop.f32.mrb[0].mxu0
      %v8267 = vadd.f32 %v8005, %v8266
      %v8268 = vpop.f32.mrb[0].mxu0
      %v8269 = vadd.f32 %v8009, %v8268
      %v8270 = vpop.f32.mrb[0].mxu0
      %v8271 = vadd.f32 %v8005, %v8270
      %v8272 = vpop.f32.mrb[0].mxu0
      %v8273 = vadd.f32 %v8009, %v8272
      %8274 = vmatprep.mubr.bf16.mxu0 %v7919
      %8275 = vmatmul.mubr.bf16.gmra.mrb[0].mxu0 %v7918
      %v8276 = vpop.f32.mrb[0].mxu0
      %v8277 = vadd.f32 %v8005, %v8276
      %v8278 = vpop.f32.mrb[0].mxu0
      %v8279 = vadd.f32 %v8009, %v8278
      %v8280 = vpop.f32.mrb[0].mxu0
      %v8281 = vadd.f32 %v8005, %v8280
      %v8282 = vpop.f32.mrb[0].mxu0
      %v8283 = vadd.f32 %v8009, %v8282
      %8284 = vmatprep.mubr.bf16.mxu0 %v7921
      %8285 = vmatmul.mubr.bf16.gmra.mrb[0].mxu0 %v7920
      %v8286 = vpop.f32.mrb[0].mxu0
      %v8287 = vadd.f32 %v8005, %v8286
      %v8288 = vpop.f32.mrb[0].mxu0
      %v8289 = vadd.f32 %v8009, %v8288
      %v8290 = vpop.f32.mrb[0].mxu0
      %v8291 = vadd.f32 %v8005, %v8290
      %v8292 = vpop.f32.mrb[0].mxu0
      %v8293 = vadd.f32 %v8009, %v8292
      %8294 = vmatprep.mubr.bf16.mxu0 %v7923
      %8295 = vmatmul.mubr.bf16.gmra.mrb[0].mxu0 %v7922
      %v8296 = vpop.f32.mrb[0].mxu0
      %v8297 = vadd.f32 %v8005, %v8296
      %v8298 = vpop.f32.mrb[0].mxu0
      %v8299 = vadd.f32 %v8009, %v8298
      %v8300 = vpop.f32.mrb[0].mxu0
      %v8301 = vadd.f32 %v8005, %v8300
      %v8302 = vpop.f32.mrb[0].mxu0
      %v8303 = vadd.f32 %v8009, %v8302
      %8304 = vmatprep.mubr.bf16.mxu0 %v7925
      %8305 = vmatmul.mubr.bf16.gmra.mrb[0].mxu0 %v7924
      %v8306 = vpop.f32.mrb[0].mxu0
      %v8307 = vadd.f32 %v8005, %v8306
      %v8308 = vpop.f32.mrb[0].mxu0
      %v8309 = vadd.f32 %v8009, %v8308
      %v8310 = vpop.f32.mrb[0].mxu0
      %v8311 = vadd.f32 %v8005, %v8310
      %v8312 = vpop.f32.mrb[0].mxu0
      %v8313 = vadd.f32 %v8009, %v8312
      %8314 = vmatprep.mubr.bf16.mxu0 %v7927
      %8315 = vmatmul.mubr.bf16.gmra.mrb[0].mxu0 %v7926
      %v8316 = vpop.f32.mrb[0].mxu0
      %v8317 = vadd.f32 %v8005, %v8316
      %v8318 = vpop.f32.mrb[0].mxu0
      %v8319 = vadd.f32 %v8009, %v8318
      %v8320 = vpop.f32.mrb[0].mxu0
      %v8321 = vadd.f32 %v8005, %v8320
      %v8322 = vpop.f32.mrb[0].mxu0
      %v8323 = vadd.f32 %v8009, %v8322
      %8324 = vmatprep.mubr.bf16.mxu0 %v7929
      %8325 = vmatmul.mubr.bf16.gmra.mrb[0].mxu0 %v7928
      %v8326 = vpop.f32.mrb[0].mxu0
      %v8327 = vadd.f32 %v8005, %v8326
      %v8328 = vpop.f32.mrb[0].mxu0
      %v8329 = vadd.f32 %v8009, %v8328
      %v8330 = vpop.f32.mrb[0].mxu0
      %v8331 = vadd.f32 %v8005, %v8330
      %v8332 = vpop.f32.mrb[0].mxu0
      %v8333 = vadd.f32 %v8009, %v8332
      %8334 = vmatprep.mubr.bf16.mxu0 %v7931
      %8335 = vmatmul.mubr.bf16.gmra.mrb[0].mxu0 %v7930
      %v8336 = vpop.f32.mrb[0].mxu0
      %v8337 = vadd.f32 %v8005, %v8336
      %v8338 = vpop.f32.mrb[0].mxu0
      %v8339 = vadd.f32 %v8009, %v8338
      %v8340 = vpop.f32.mrb[0].mxu0
      %v8341 = vadd.f32 %v8005, %v8340
      %v8342 = vpop.f32.mrb[0].mxu0
      %v8343 = vadd.f32 %v8009, %v8342
      %8344 = vmatprep.mubr.bf16.mxu0 %v7933
      %8345 = vmatmul.mubr.bf16.gmra.mrb[0].mxu0 %v7932
      %v8346 = vpop.f32.mrb[0].mxu0
      %v8347 = vadd.f32 %v8005, %v8346
      %v8348 = vpop.f32.mrb[0].mxu0
      %v8349 = vadd.f32 %v8009, %v8348
      %v8350 = vpop.f32.mrb[0].mxu0
      %v8351 = vadd.f32 %v8005, %v8350
      %v8352 = vpop.f32.mrb[0].mxu0
      %v8353 = vadd.f32 %v8009, %v8352
      %8354 = vmatprep.mubr.bf16.mxu0 %v7935
      %8355 = vmatmul.mubr.bf16.gmra.mrb[0].mxu0 %v7934
      %v8356 = vpop.f32.mrb[0].mxu0
      %v8357 = vadd.f32 %v8005, %v8356
      %v8358 = vpop.f32.mrb[0].mxu0
      %v8359 = vadd.f32 %v8009, %v8358
      %v8360 = vpop.f32.mrb[0].mxu0
      %v8361 = vadd.f32 %v8005, %v8360
      %v8362 = vpop.f32.mrb[0].mxu0
      %v8363 = vadd.f32 %v8009, %v8362
      %8364 = vmatprep.mubr.bf16.mxu0 %v7937
      %8365 = vmatmul.mubr.bf16.gmra.mrb[0].mxu0 %v7936
      %v8366 = vpop.f32.mrb[0].mxu0
      %v8367 = vadd.f32 %v8005, %v8366
      %v8368 = vpop.f32.mrb[0].mxu0
      %v8369 = vadd.f32 %v8009, %v8368
      %v8370 = vpop.f32.mrb[0].mxu0
      %v8371 = vadd.f32 %v8005, %v8370
      %v8372 = vpop.f32.mrb[0].mxu0
      %v8373 = vadd.f32 %v8009, %v8372
      %8374 = vmatprep.mubr.bf16.mxu0 %v7939
      %8375 = vmatmul.mubr.bf16.gmra.mrb[0].mxu0 %v7938
      %v8376 = vpop.f32.mrb[0].mxu0
      %v8377 = vadd.f32 %v8005, %v8376
      %v8378 = vpop.f32.mrb[0].mxu0
      %v8379 = vadd.f32 %v8009, %v8378
      %v8380 = vpop.f32.mrb[0].mxu0
      %v8381 = vadd.f32 %v8005, %v8380
      %v8382 = vpop.f32.mrb[0].mxu0
      %v8383 = vadd.f32 %v8009, %v8382
      %8384 = vmatprep.mubr.bf16.mxu0 %v7941
      %8385 = vmatmul.mubr.bf16.gmra.mrb[0].mxu0 %v7940
      %v8386 = vpop.f32.mrb[0].mxu0
      %v8387 = vadd.f32 %v8005, %v8386
      %v8388 = vpop.f32.mrb[0].mxu0
      %v8389 = vadd.f32 %v8009, %v8388
      %v8390 = vpop.f32.mrb[0].mxu0
      %v8391 = vadd.f32 %v8005, %v8390
      %v8392 = vpop.f32.mrb[0].mxu0
      %v8393 = vadd.f32 %v8009, %v8392
      %8394 = vmatprep.mubr.bf16.mxu0 %v7943
      %8395 = vmatmul.mubr.bf16.gmra.mrb[0].mxu0 %v7942
      %v8396 = vpop.f32.mrb[0].mxu0
      %v8397 = vadd.f32 %v8005, %v8396
      %v8398 = vpop.f32.mrb[0].mxu0
      %v8399 = vadd.f32 %v8009, %v8398
      %v8400 = vpop.f32.mrb[0].mxu0
      %v8401 = vadd.f32 %v8005, %v8400
      %v8402 = vpop.f32.mrb[0].mxu0
      %v8403 = vadd.f32 %v8009, %v8402
      %8404 = vmatprep.mubr.bf16.mxu0 %v7945
      %8405 = vmatmul.mubr.bf16.gmra.mrb[0].mxu0 %v7944
      %v8406 = vpop.f32.mrb[0].mxu0
      %v8407 = vadd.f32 %v8005, %v8406
      %v8408 = vpop.f32.mrb[0].mxu0
      %v8409 = vadd.f32 %v8009, %v8408
      %v8410 = vpop.f32.mrb[0].mxu0
      %v8411 = vadd.f32 %v8005, %v8410
      %v8412 = vpop.f32.mrb[0].mxu0
      %v8413 = vadd.f32 %v8009, %v8412
      %8414 = vmatprep.mubr.bf16.mxu0 %v7947
      %8415 = vmatmul.mubr.bf16.gmra.mrb[0].mxu0 %v7946
      %v8416 = vpop.f32.mrb[0].mxu0
      %v8417 = vadd.f32 %v8005, %v8416
      %v8418 = vpop.f32.mrb[0].mxu0
      %v8419 = vadd.f32 %v8009, %v8418
      %v8420 = vpop.f32.mrb[0].mxu0
      %v8421 = vadd.f32 %v8005, %v8420
      %v8422 = vpop.f32.mrb[0].mxu0
      %v8423 = vadd.f32 %v8009, %v8422
      %8424 = vmatprep.mubr.bf16.mxu0 %v7949
      %8425 = vmatmul.mubr.bf16.gmra.mrb[0].mxu0 %v7948
      %v8426 = vpop.f32.mrb[0].mxu0
      %v8427 = vadd.f32 %v8005, %v8426
      %v8428 = vpop.f32.mrb[0].mxu0
      %v8429 = vadd.f32 %v8009, %v8428
      %v8430 = vpop.f32.mrb[0].mxu0
      %v8431 = vadd.f32 %v8005, %v8430
      %v8432 = vpop.f32.mrb[0].mxu0
      %v8433 = vadd.f32 %v8009, %v8432
      %8434 = vmatprep.mubr.bf16.mxu0 %v7951
      %8435 = vmatmul.mubr.bf16.gmra.mrb[0].mxu0 %v7950
      %v8436 = vpop.f32.mrb[0].mxu0
      %v8437 = vadd.f32 %v8005, %v8436
      %v8438 = vpop.f32.mrb[0].mxu0
      %v8439 = vadd.f32 %v8009, %v8438
      %v8440 = vpop.f32.mrb[0].mxu0
      %v8441 = vadd.f32 %v8005, %v8440
      %v8442 = vpop.f32.mrb[0].mxu0
      %v8443 = vadd.f32 %v8009, %v8442
      %8444 = vmatprep.mubr.bf16.mxu0 %v7953
      %8445 = vmatmul.mubr.bf16.gmra.mrb[0].mxu0 %v7952
      %v8446 = vpop.f32.mrb[0].mxu0
      %v8447 = vadd.f32 %v8005, %v8446
      %v8448 = vpop.f32.mrb[0].mxu0
      %v8449 = vadd.f32 %v8009, %v8448
      %v8450 = vpop.f32.mrb[0].mxu0
      %v8451 = vadd.f32 %v8005, %v8450
      %v8452 = vpop.f32.mrb[0].mxu0
      %v8453 = vadd.f32 %v8009, %v8452
      %8454 = vmatprep.mubr.bf16.mxu0 %v7955
      %8455 = vmatmul.mubr.bf16.gmra.mrb[0].mxu0 %v7954
      %v8456 = vpop.f32.mrb[0].mxu0
      %v8457 = vadd.f32 %v8005, %v8456
      %v8458 = vpop.f32.mrb[0].mxu0
      %v8459 = vadd.f32 %v8009, %v8458
      %v8460 = vpop.f32.mrb[0].mxu0
      %v8461 = vadd.f32 %v8005, %v8460
      %v8462 = vpop.f32.mrb[0].mxu0
      %v8463 = vadd.f32 %v8009, %v8462
      %8464 = vmatprep.mubr.bf16.mxu0 %v7957
      %8465 = vmatmul.mubr.bf16.gmra.mrb[0].mxu0 %v7956
      %v8466 = vpop.f32.mrb[0].mxu0
      %v8467 = vadd.f32 %v8005, %v8466
      %v8468 = vpop.f32.mrb[0].mxu0
      %v8469 = vadd.f32 %v8009, %v8468
      %v8470 = vpop.f32.mrb[0].mxu0
      %v8471 = vadd.f32 %v8005, %v8470
      %v8472 = vpop.f32.mrb[0].mxu0
      %v8473 = vadd.f32 %v8009, %v8472
      %8474 = vmatprep.mubr.bf16.mxu0 %v7959
      %8475 = vmatmul.mubr.bf16.gmra.mrb[0].mxu0 %v7958
      %v8476 = vpop.f32.mrb[0].mxu0
      %v8477 = vadd.f32 %v8005, %v8476
      %v8478 = vpop.f32.mrb[0].mxu0
      %v8479 = vadd.f32 %v8009, %v8478
      %v8480 = vpop.f32.mrb[0].mxu0
      %v8481 = vadd.f32 %v8005, %v8480
      %v8482 = vpop.f32.mrb[0].mxu0
      %v8483 = vadd.f32 %v8009, %v8482
      %8484 = vmatprep.mubr.bf16.mxu0 %v7961
      %8485 = vmatmul.mubr.bf16.gmra.mrb[0].mxu0 %v7960
      %v8486 = vpop.f32.mrb[0].mxu0
      %v8487 = vadd.f32 %v8005, %v8486
      %v8488 = vpop.f32.mrb[0].mxu0
      %v8489 = vadd.f32 %v8009, %v8488
      %v8490 = vpop.f32.mrb[0].mxu0
      %v8491 = vadd.f32 %v8005, %v8490
      %v8492 = vpop.f32.mrb[0].mxu0
      %v8493 = vadd.f32 %v8009, %v8492
      %8494 = vmatprep.mubr.bf16.mxu0 %v7963
      %8495 = vmatmul.mubr.bf16.gmra.mrb[0].mxu0 %v7962
      %v8496 = vpop.f32.mrb[0].mxu0
      %v8497 = vadd.f32 %v8005, %v8496
      %v8498 = vpop.f32.mrb[0].mxu0
      %v8499 = vadd.f32 %v8009, %v8498
      %v8500 = vpop.f32.mrb[0].mxu0
      %v8501 = vadd.f32 %v8005, %v8500
      %v8502 = vpop.f32.mrb[0].mxu0
      %v8503 = vadd.f32 %v8009, %v8502
      %8504 = vmatprep.mubr.bf16.mxu0 %v7965
      %8505 = vmatmul.mubr.bf16.gmra.mrb[0].mxu0 %v7964
      %v8506 = vpop.f32.mrb[0].mxu0
      %v8507 = vadd.f32 %v8005, %v8506
      %v8508 = vpop.f32.mrb[0].mxu0
      %v8509 = vadd.f32 %v8009, %v8508
      %v8510 = vpop.f32.mrb[0].mxu0
      %v8511 = vadd.f32 %v8005, %v8510
      %v8512 = vpop.f32.mrb[0].mxu0
      %v8513 = vadd.f32 %v8009, %v8512
      %8514 = vmatprep.mubr.bf16.mxu0 %v7967
      %8515 = vmatmul.mubr.bf16.gmra.mrb[0].mxu0 %v7966
      %v8516 = vpop.f32.mrb[0].mxu0
      %v8517 = vadd.f32 %v8005, %v8516
      %v8518 = vpop.f32.mrb[0].mxu0
      %v8519 = vadd.f32 %v8009, %v8518
      %v8520 = vpop.f32.mrb[0].mxu0
      %v8521 = vadd.f32 %v8005, %v8520
      %v8522 = vpop.f32.mrb[0].mxu0
      %v8523 = vadd.f32 %v8009, %v8522
      %8524 = vdwg.mxu0
      %v8525 = vmax.f32 %v8207, 0.0
      %v8526 = vmax.f32 %v8209, 0.0
      %v8527 = vmax.f32 %v8211, 0.0
      %v8528 = vmax.f32 %v8213, 0.0
      %v8529 = vmax.f32 %v8217, 0.0
      %v8530 = vmax.f32 %v8219, 0.0
      %v8531 = vmax.f32 %v8221, 0.0
      %v8532 = vmax.f32 %v8223, 0.0
      %v8533 = vmax.f32 %v8227, 0.0
      %v8534 = vmax.f32 %v8229, 0.0
      %v8535 = vmax.f32 %v8231, 0.0
      %v8536 = vmax.f32 %v8233, 0.0
      %v8537 = vmax.f32 %v8237, 0.0
      %v8538 = vmax.f32 %v8239, 0.0
      %v8539 = vmax.f32 %v8241, 0.0
      %v8540 = vmax.f32 %v8243, 0.0
      %v8541 = vmax.f32 %v8247, 0.0
      %v8542 = vmax.f32 %v8249, 0.0
      %v8543 = vmax.f32 %v8251, 0.0
      %v8544 = vmax.f32 %v8253, 0.0
      %v8545 = vmax.f32 %v8257, 0.0
      %v8546 = vmax.f32 %v8259, 0.0
      %v8547 = vmax.f32 %v8261, 0.0
      %v8548 = vmax.f32 %v8263, 0.0
      %v8549 = vmax.f32 %v8267, 0.0
      %v8550 = vmax.f32 %v8269, 0.0
      %v8551 = vmax.f32 %v8271, 0.0
      %v8552 = vmax.f32 %v8273, 0.0
      %v8553 = vmax.f32 %v8277, 0.0
      %v8554 = vmax.f32 %v8279, 0.0
      %v8555 = vmax.f32 %v8281, 0.0
      %v8556 = vmax.f32 %v8283, 0.0
      %v8557 = vmax.f32 %v8287, 0.0
      %v8558 = vmax.f32 %v8289, 0.0
      %v8559 = vmax.f32 %v8291, 0.0
      %v8560 = vmax.f32 %v8293, 0.0
      %v8561 = vmax.f32 %v8297, 0.0
      %v8562 = vmax.f32 %v8299, 0.0
      %v8563 = vmax.f32 %v8301, 0.0
      %v8564 = vmax.f32 %v8303, 0.0
      %v8565 = vmax.f32 %v8307, 0.0
      %v8566 = vmax.f32 %v8309, 0.0
      %v8567 = vmax.f32 %v8311, 0.0
      %v8568 = vmax.f32 %v8313, 0.0
      %v8569 = vmax.f32 %v8317, 0.0
      %v8570 = vmax.f32 %v8319, 0.0
      %v8571 = vmax.f32 %v8321, 0.0
      %v8572 = vmax.f32 %v8323, 0.0
      %v8573 = vmax.f32 %v8327, 0.0
      %v8574 = vmax.f32 %v8329, 0.0
      %v8575 = vmax.f32 %v8331, 0.0
      %v8576 = vmax.f32 %v8333, 0.0
      %v8577 = vmax.f32 %v8337, 0.0
      %v8578 = vmax.f32 %v8339, 0.0
      %v8579 = vmax.f32 %v8341, 0.0
      %v8580 = vmax.f32 %v8343, 0.0
      %v8581 = vmax.f32 %v8347, 0.0
      %v8582 = vmax.f32 %v8349, 0.0
      %v8583 = vmax.f32 %v8351, 0.0
      %v8584 = vmax.f32 %v8353, 0.0
      %v8585 = vmax.f32 %v8357, 0.0
      %v8586 = vmax.f32 %v8359, 0.0
      %v8587 = vmax.f32 %v8361, 0.0
      %v8588 = vmax.f32 %v8363, 0.0
      %v8589 = vmax.f32 %v8367, 0.0
      %v8590 = vmax.f32 %v8369, 0.0
      %v8591 = vmax.f32 %v8371, 0.0
      %v8592 = vmax.f32 %v8373, 0.0
      %v8593 = vmax.f32 %v8377, 0.0
      %v8594 = vmax.f32 %v8379, 0.0
      %v8595 = vmax.f32 %v8381, 0.0
      %v8596 = vmax.f32 %v8383, 0.0
      %v8597 = vmax.f32 %v8387, 0.0
      %v8598 = vmax.f32 %v8389, 0.0
      %v8599 = vmax.f32 %v8391, 0.0
      %v8600 = vmax.f32 %v8393, 0.0
      %v8601 = vmax.f32 %v8397, 0.0
      %v8602 = vmax.f32 %v8399, 0.0
      %v8603 = vmax.f32 %v8401, 0.0
      %v8604 = vmax.f32 %v8403, 0.0
      %v8605 = vmax.f32 %v8407, 0.0
      %v8606 = vmax.f32 %v8409, 0.0
      %v8607 = vmax.f32 %v8411, 0.0
      %v8608 = vmax.f32 %v8413, 0.0
      %v8609 = vmax.f32 %v8417, 0.0
      %v8610 = vmax.f32 %v8419, 0.0
      %v8611 = vmax.f32 %v8421, 0.0
      %v8612 = vmax.f32 %v8423, 0.0
      %v8613 = vmax.f32 %v8427, 0.0
      %v8614 = vmax.f32 %v8429, 0.0
      %v8615 = vmax.f32 %v8431, 0.0
      %v8616 = vmax.f32 %v8433, 0.0
      %v8617 = vmax.f32 %v8437, 0.0
      %v8618 = vmax.f32 %v8439, 0.0
      %v8619 = vmax.f32 %v8441, 0.0
      %v8620 = vmax.f32 %v8443, 0.0
      %v8621 = vmax.f32 %v8447, 0.0
      %v8622 = vmax.f32 %v8449, 0.0
      %v8623 = vmax.f32 %v8451, 0.0
      %v8624 = vmax.f32 %v8453, 0.0
      %v8625 = vmax.f32 %v8457, 0.0
      %v8626 = vmax.f32 %v8459, 0.0
      %v8627 = vmax.f32 %v8461, 0.0
      %v8628 = vmax.f32 %v8463, 0.0
      %v8629 = vmax.f32 %v8467, 0.0
      %v8630 = vmax.f32 %v8469, 0.0
      %v8631 = vmax.f32 %v8471, 0.0
      %v8632 = vmax.f32 %v8473, 0.0
      %v8633 = vmax.f32 %v8477, 0.0
      %v8634 = vmax.f32 %v8479, 0.0
      %v8635 = vmax.f32 %v8481, 0.0
      %v8636 = vmax.f32 %v8483, 0.0
      %v8637 = vmax.f32 %v8487, 0.0
      %v8638 = vmax.f32 %v8489, 0.0
      %v8639 = vmax.f32 %v8491, 0.0
      %v8640 = vmax.f32 %v8493, 0.0
      %v8641 = vmax.f32 %v8497, 0.0
      %v8642 = vmax.f32 %v8499, 0.0
      %v8643 = vmax.f32 %v8501, 0.0
      %v8644 = vmax.f32 %v8503, 0.0
      %v8645 = vmax.f32 %v8507, 0.0
      %v8646 = vmax.f32 %v8509, 0.0
      %v8647 = vmax.f32 %v8511, 0.0
      %v8648 = vmax.f32 %v8513, 0.0
      %v8649 = vmax.f32 %v8517, 0.0
      %v8650 = vmax.f32 %v8519, 0.0
      %v8651 = vmax.f32 %v8521, 0.0
      %v8652 = vmax.f32 %v8523, 0.0
      %v8653 = vpack.c.bf16 %v8527, %v8525
      %v8654 = vpack.c.bf16 %v8528, %v8526
      %v8655 = vpack.c.bf16 %v8531, %v8529
      %v8656 = vpack.c.bf16 %v8532, %v8530
      %v8657 = vpack.c.bf16 %v8535, %v8533
      %v8658 = vpack.c.bf16 %v8536, %v8534
      %v8659 = vpack.c.bf16 %v8539, %v8537
      %v8660 = vpack.c.bf16 %v8540, %v8538
      %v8661 = vpack.c.bf16 %v8543, %v8541
      %v8662 = vpack.c.bf16 %v8544, %v8542
      %v8663 = vpack.c.bf16 %v8547, %v8545
      %v8664 = vpack.c.bf16 %v8548, %v8546
      %v8665 = vpack.c.bf16 %v8551, %v8549
      %v8666 = vpack.c.bf16 %v8552, %v8550
      %v8667 = vpack.c.bf16 %v8555, %v8553
      %v8668 = vpack.c.bf16 %v8556, %v8554
      %v8669 = vpack.c.bf16 %v8559, %v8557
      %v8670 = vpack.c.bf16 %v8560, %v8558
      %v8671 = vpack.c.bf16 %v8563, %v8561
      %v8672 = vpack.c.bf16 %v8564, %v8562
      %v8673 = vpack.c.bf16 %v8567, %v8565
      %v8674 = vpack.c.bf16 %v8568, %v8566
      %v8675 = vpack.c.bf16 %v8571, %v8569
      %v8676 = vpack.c.bf16 %v8572, %v8570
      %v8677 = vpack.c.bf16 %v8575, %v8573
      %v8678 = vpack.c.bf16 %v8576, %v8574
      %v8679 = vpack.c.bf16 %v8579, %v8577
      %v8680 = vpack.c.bf16 %v8580, %v8578
      %v8681 = vpack.c.bf16 %v8583, %v8581
      %v8682 = vpack.c.bf16 %v8584, %v8582
      %v8683 = vpack.c.bf16 %v8587, %v8585
      %v8684 = vpack.c.bf16 %v8588, %v8586
      %v8685 = vpack.c.bf16 %v8591, %v8589
      %v8686 = vpack.c.bf16 %v8592, %v8590
      %v8687 = vpack.c.bf16 %v8595, %v8593
      %v8688 = vpack.c.bf16 %v8596, %v8594
      %v8689 = vpack.c.bf16 %v8599, %v8597
      %v8690 = vpack.c.bf16 %v8600, %v8598
      %v8691 = vpack.c.bf16 %v8603, %v8601
      %v8692 = vpack.c.bf16 %v8604, %v8602
      %v8693 = vpack.c.bf16 %v8607, %v8605
      %v8694 = vpack.c.bf16 %v8608, %v8606
      %v8695 = vpack.c.bf16 %v8611, %v8609
      %v8696 = vpack.c.bf16 %v8612, %v8610
      %v8697 = vpack.c.bf16 %v8615, %v8613
      %v8698 = vpack.c.bf16 %v8616, %v8614
      %v8699 = vpack.c.bf16 %v8619, %v8617
      %v8700 = vpack.c.bf16 %v8620, %v8618
      %v8701 = vpack.c.bf16 %v8623, %v8621
      %v8702 = vpack.c.bf16 %v8624, %v8622
      %v8703 = vpack.c.bf16 %v8627, %v8625
      %v8704 = vpack.c.bf16 %v8628, %v8626
      %v8705 = vpack.c.bf16 %v8631, %v8629
      %v8706 = vpack.c.bf16 %v8632, %v8630
      %v8707 = vpack.c.bf16 %v8635, %v8633
      %v8708 = vpack.c.bf16 %v8636, %v8634
      %v8709 = vpack.c.bf16 %v8639, %v8637
      %v8710 = vpack.c.bf16 %v8640, %v8638
      %v8711 = vpack.c.bf16 %v8643, %v8641
      %v8712 = vpack.c.bf16 %v8644, %v8642
      %v8713 = vpack.c.bf16 %v8647, %v8645
      %v8714 = vpack.c.bf16 %v8648, %v8646
      %v8715 = vpack.c.bf16 %v8651, %v8649
      %v8716 = vpack.c.bf16 %v8652, %v8650
      %v8717 = vld [vmem:[%s18] sm:$0xf]
      %v8718 = vld [vmem:[%s18 + $0x4] sm:$0xf]
      %v8719 = vld [vmem:[%s18 + $0x8] sm:$0xf]
      %v8720 = vld [vmem:[%s18 + $0xc] sm:$0xf]
      %v8721 = vld [vmem:[%s18 + $0x10] sm:$0xf]
      %v8722 = vld [vmem:[%s18 + $0x14] sm:$0xf]
      %v8723 = vld [vmem:[%s18 + $0x18] sm:$0xf]
      %v8724 = vld [vmem:[%s18 + $0x1c] sm:$0xf]
      %v8725 = vld [vmem:[%s18 + $0x20] sm:$0xf]
      %v8726 = vld [vmem:[%s18 + $0x24] sm:$0xf]
      %v8727 = vld [vmem:[%s18 + $0x28] sm:$0xf]
      %v8728 = vld [vmem:[%s18 + $0x2c] sm:$0xf]
      %v8729 = vld [vmem:[%s18 + $0x30] sm:$0xf]
      %v8730 = vld [vmem:[%s18 + $0x34] sm:$0xf]
      %v8731 = vld [vmem:[%s18 + $0x38] sm:$0xf]
      %v8732 = vld [vmem:[%s18 + $0x3c] sm:$0xf]
      %v8733 = vld [vmem:[%s18 + $0x40] sm:$0xf]
      %v8734 = vld [vmem:[%s18 + $0x44] sm:$0xf]
      %v8735 = vld [vmem:[%s18 + $0x48] sm:$0xf]
      %v8736 = vld [vmem:[%s18 + $0x4c] sm:$0xf]
      %v8737 = vld [vmem:[%s18 + $0x50] sm:$0xf]
      %v8738 = vld [vmem:[%s18 + $0x54] sm:$0xf]
      %v8739 = vld [vmem:[%s18 + $0x58] sm:$0xf]
      %v8740 = vld [vmem:[%s18 + $0x5c] sm:$0xf]
      %v8741 = vld [vmem:[%s18 + $0x60] sm:$0xf]
      %v8742 = vld [vmem:[%s18 + $0x64] sm:$0xf]
      %v8743 = vld [vmem:[%s18 + $0x68] sm:$0xf]
      %v8744 = vld [vmem:[%s18 + $0x6c] sm:$0xf]
      %v8745 = vld [vmem:[%s18 + $0x70] sm:$0xf]
      %v8746 = vld [vmem:[%s18 + $0x74] sm:$0xf]
      %v8747 = vld [vmem:[%s18 + $0x78] sm:$0xf]
      %v8748 = vld [vmem:[%s18 + $0x7c] sm:$0xf]
      %v8749 = vld [vmem:[%s19] sm:$0x1]
      %v8751 = vlaneseq
      %v8752 = vshrl.u32 %v8751, 7
      %v8753 = vsub.s32 0, %v8752
      %v8754 = vrot.slane %v8749, %v8753
      %v8788 = vunpack.c.l.b16 %v8717
      %v8789 = vunpack.c.l.b16 %v8718
      %v8790 = vunpack.c.l.b16 %v8719
      %v8791 = vunpack.c.l.b16 %v8720
      %v8792 = vunpack.c.l.b16 %v8721
      %v8793 = vunpack.c.l.b16 %v8722
      %v8794 = vunpack.c.l.b16 %v8723
      %v8795 = vunpack.c.l.b16 %v8724
      %v8796 = vunpack.c.l.b16 %v8725
      %v8797 = vunpack.c.l.b16 %v8726
      %v8798 = vunpack.c.l.b16 %v8727
      %v8799 = vunpack.c.l.b16 %v8728
      %v8800 = vunpack.c.l.b16 %v8729
      %v8801 = vunpack.c.l.b16 %v8730
      %v8802 = vunpack.c.l.b16 %v8731
      %v8803 = vunpack.c.l.b16 %v8732
      %v8804 = vunpack.c.l.b16 %v8733
      %v8805 = vunpack.c.l.b16 %v8734
      %v8806 = vunpack.c.l.b16 %v8735
      %v8807 = vunpack.c.l.b16 %v8736
      %v8808 = vunpack.c.l.b16 %v8737
      %v8809 = vunpack.c.l.b16 %v8738
      %v8810 = vunpack.c.l.b16 %v8739
      %v8811 = vunpack.c.l.b16 %v8740
      %v8812 = vunpack.c.l.b16 %v8741
      %v8813 = vunpack.c.l.b16 %v8742
      %v8814 = vunpack.c.l.b16 %v8743
      %v8815 = vunpack.c.l.b16 %v8744
      %v8816 = vunpack.c.l.b16 %v8745
      %v8817 = vunpack.c.l.b16 %v8746
      %v8818 = vunpack.c.l.b16 %v8747
      %v8819 = vunpack.c.l.b16 %v8748
      %v8820 = vpack.c.b16 %v8789, %v8788
      %v8821 = vpack.c.b16 %v8791, %v8790
      %v8822 = vpack.c.b16 %v8793, %v8792
      %v8823 = vpack.c.b16 %v8795, %v8794
      %v8824 = vpack.c.b16 %v8797, %v8796
      %v8825 = vpack.c.b16 %v8799, %v8798
      %v8826 = vpack.c.b16 %v8801, %v8800
      %v8827 = vpack.c.b16 %v8803, %v8802
      %v8828 = vpack.c.b16 %v8805, %v8804
      %v8829 = vpack.c.b16 %v8807, %v8806
      %v8830 = vpack.c.b16 %v8809, %v8808
      %v8831 = vpack.c.b16 %v8811, %v8810
      %v8832 = vpack.c.b16 %v8813, %v8812
      %v8833 = vpack.c.b16 %v8815, %v8814
      %v8834 = vpack.c.b16 %v8817, %v8816
      %v8835 = vpack.c.b16 %v8819, %v8818
      %8852 = vmatprep.subr.bf16.mxu0 0
      %8853 = vmatpush1.bf16.msra.mxu0 %v8820
      %8854 = vmatprep.subr.bf16.mxu0 0
      %8855 = vmatpush1.bf16.msra.mxu0 %v8821
      %8856 = vmatprep.subr.bf16.mxu0 0
      %8857 = vmatpush1.bf16.msra.mxu0 %v8822
      %8858 = vmatprep.subr.bf16.mxu0 0
      %8859 = vmatpush1.bf16.msra.mxu0 %v8823
      %8860 = vmatprep.subr.bf16.mxu0 0
      %8861 = vmatpush1.bf16.msra.mxu0 %v8824
      %8862 = vmatprep.subr.bf16.mxu0 0
      %8863 = vmatpush1.bf16.msra.mxu0 %v8825
      %8864 = vmatprep.subr.bf16.mxu0 0
      %8865 = vmatpush1.bf16.msra.mxu0 %v8826
      %8866 = vmatprep.subr.bf16.mxu0 0
      %8867 = vmatpush1.bf16.msra.mxu0 %v8827
      %8868 = vmatprep.subr.bf16.mxu0 0
      %8869 = vmatpush1.bf16.msra.mxu0 %v8828
      %8870 = vmatprep.subr.bf16.mxu0 0
      %8871 = vmatpush1.bf16.msra.mxu0 %v8829
      %8872 = vmatprep.subr.bf16.mxu0 0
      %8873 = vmatpush1.bf16.msra.mxu0 %v8830
      %8874 = vmatprep.subr.bf16.mxu0 0
      %8875 = vmatpush1.bf16.msra.mxu0 %v8831
      %8876 = vmatprep.subr.bf16.mxu0 0
      %8877 = vmatpush1.bf16.msra.mxu0 %v8832
      %8878 = vmatprep.subr.bf16.mxu0 0
      %8879 = vmatpush1.bf16.msra.mxu0 %v8833
      %8880 = vmatprep.subr.bf16.mxu0 0
      %8881 = vmatpush1.bf16.msra.mxu0 %v8834
      %8882 = vmatprep.subr.bf16.mxu0 0
      %8883 = vmatpush1.bf16.msra.mxu0 %v8835
      %8884 = vmatprep.mubr.bf16.mxu0 %v8654
      %8885 = vmatmul.mubr.bf16.gmra.mrb[0].mxu0 %v8653
      %v8886 = vpop.f32.mrb[0].mxu0
      %v8887 = vadd.f32 %v8754, %v8886
      %v8888 = vpop.f32.mrb[0].mxu0
      %v8889 = vpop.f32.mrb[0].mxu0
      %v8890 = vadd.f32 %v8754, %v8889
      %v8891 = vpop.f32.mrb[0].mxu0
      %8892 = vmatprep.mubr.bf16.mxu0 %v8656
      %8893 = vmatmul.mubr.bf16.gmra.mrb[0].mxu0 %v8655
      %v8894 = vpop.f32.mrb[0].mxu0
      %v8895 = vadd.f32 %v8754, %v8894
      %v8896 = vpop.f32.mrb[0].mxu0
      %v8897 = vpop.f32.mrb[0].mxu0
      %v8898 = vadd.f32 %v8754, %v8897
      %v8899 = vpop.f32.mrb[0].mxu0
      %8900 = vmatprep.mubr.bf16.mxu0 %v8658
      %8901 = vmatmul.mubr.bf16.gmra.mrb[0].mxu0 %v8657
      %v8902 = vpop.f32.mrb[0].mxu0
      %v8903 = vadd.f32 %v8754, %v8902
      %v8904 = vpop.f32.mrb[0].mxu0
      %v8905 = vpop.f32.mrb[0].mxu0
      %v8906 = vadd.f32 %v8754, %v8905
      %v8907 = vpop.f32.mrb[0].mxu0
      %8908 = vmatprep.mubr.bf16.mxu0 %v8660
      %8909 = vmatmul.mubr.bf16.gmra.mrb[0].mxu0 %v8659
      %v8910 = vpop.f32.mrb[0].mxu0
      %v8911 = vadd.f32 %v8754, %v8910
      %v8912 = vpop.f32.mrb[0].mxu0
      %v8913 = vpop.f32.mrb[0].mxu0
      %v8914 = vadd.f32 %v8754, %v8913
      %v8915 = vpop.f32.mrb[0].mxu0
      %8916 = vmatprep.mubr.bf16.mxu0 %v8662
      %8917 = vmatmul.mubr.bf16.gmra.mrb[0].mxu0 %v8661
      %v8918 = vpop.f32.mrb[0].mxu0
      %v8919 = vadd.f32 %v8754, %v8918
      %v8920 = vpop.f32.mrb[0].mxu0
      %v8921 = vpop.f32.mrb[0].mxu0
      %v8922 = vadd.f32 %v8754, %v8921
      %v8923 = vpop.f32.mrb[0].mxu0
      %8924 = vmatprep.mubr.bf16.mxu0 %v8664
      %8925 = vmatmul.mubr.bf16.gmra.mrb[0].mxu0 %v8663
      %v8926 = vpop.f32.mrb[0].mxu0
      %v8927 = vadd.f32 %v8754, %v8926
      %v8928 = vpop.f32.mrb[0].mxu0
      %v8929 = vpop.f32.mrb[0].mxu0
      %v8930 = vadd.f32 %v8754, %v8929
      %v8931 = vpop.f32.mrb[0].mxu0
      %8932 = vmatprep.mubr.bf16.mxu0 %v8666
      %8933 = vmatmul.mubr.bf16.gmra.mrb[0].mxu0 %v8665
      %v8934 = vpop.f32.mrb[0].mxu0
      %v8935 = vadd.f32 %v8754, %v8934
      %v8936 = vpop.f32.mrb[0].mxu0
      %v8937 = vpop.f32.mrb[0].mxu0
      %v8938 = vadd.f32 %v8754, %v8937
      %v8939 = vpop.f32.mrb[0].mxu0
      %8940 = vmatprep.mubr.bf16.mxu0 %v8668
      %8941 = vmatmul.mubr.bf16.gmra.mrb[0].mxu0 %v8667
      %v8942 = vpop.f32.mrb[0].mxu0
      %v8943 = vadd.f32 %v8754, %v8942
      %v8944 = vpop.f32.mrb[0].mxu0
      %v8945 = vpop.f32.mrb[0].mxu0
      %v8946 = vadd.f32 %v8754, %v8945
      %v8947 = vpop.f32.mrb[0].mxu0
      %8948 = vmatprep.mubr.bf16.mxu0 %v8670
      %8949 = vmatmul.mubr.bf16.gmra.mrb[0].mxu0 %v8669
      %v8950 = vpop.f32.mrb[0].mxu0
      %v8951 = vadd.f32 %v8754, %v8950
      %v8952 = vpop.f32.mrb[0].mxu0
      %v8953 = vpop.f32.mrb[0].mxu0
      %v8954 = vadd.f32 %v8754, %v8953
      %v8955 = vpop.f32.mrb[0].mxu0
      %8956 = vmatprep.mubr.bf16.mxu0 %v8672
      %8957 = vmatmul.mubr.bf16.gmra.mrb[0].mxu0 %v8671
      %v8958 = vpop.f32.mrb[0].mxu0
      %v8959 = vadd.f32 %v8754, %v8958
      %v8960 = vpop.f32.mrb[0].mxu0
      %v8961 = vpop.f32.mrb[0].mxu0
      %v8962 = vadd.f32 %v8754, %v8961
      %v8963 = vpop.f32.mrb[0].mxu0
      %8964 = vmatprep.mubr.bf16.mxu0 %v8674
      %8965 = vmatmul.mubr.bf16.gmra.mrb[0].mxu0 %v8673
      %v8966 = vpop.f32.mrb[0].mxu0
      %v8967 = vadd.f32 %v8754, %v8966
      %v8968 = vpop.f32.mrb[0].mxu0
      %v8969 = vpop.f32.mrb[0].mxu0
      %v8970 = vadd.f32 %v8754, %v8969
      %v8971 = vpop.f32.mrb[0].mxu0
      %8972 = vmatprep.mubr.bf16.mxu0 %v8676
      %8973 = vmatmul.mubr.bf16.gmra.mrb[0].mxu0 %v8675
      %v8974 = vpop.f32.mrb[0].mxu0
      %v8975 = vadd.f32 %v8754, %v8974
      %v8976 = vpop.f32.mrb[0].mxu0
      %v8977 = vpop.f32.mrb[0].mxu0
      %v8978 = vadd.f32 %v8754, %v8977
      %v8979 = vpop.f32.mrb[0].mxu0
      %8980 = vmatprep.mubr.bf16.mxu0 %v8678
      %8981 = vmatmul.mubr.bf16.gmra.mrb[0].mxu0 %v8677
      %v8982 = vpop.f32.mrb[0].mxu0
      %v8983 = vadd.f32 %v8754, %v8982
      %v8984 = vpop.f32.mrb[0].mxu0
      %v8985 = vpop.f32.mrb[0].mxu0
      %v8986 = vadd.f32 %v8754, %v8985
      %v8987 = vpop.f32.mrb[0].mxu0
      %8988 = vmatprep.mubr.bf16.mxu0 %v8680
      %8989 = vmatmul.mubr.bf16.gmra.mrb[0].mxu0 %v8679
      %v8990 = vpop.f32.mrb[0].mxu0
      %v8991 = vadd.f32 %v8754, %v8990
      %v8992 = vpop.f32.mrb[0].mxu0
      %v8993 = vpop.f32.mrb[0].mxu0
      %v8994 = vadd.f32 %v8754, %v8993
      %v8995 = vpop.f32.mrb[0].mxu0
      %8996 = vmatprep.mubr.bf16.mxu0 %v8682
      %8997 = vmatmul.mubr.bf16.gmra.mrb[0].mxu0 %v8681
      %v8998 = vpop.f32.mrb[0].mxu0
      %v8999 = vadd.f32 %v8754, %v8998
      %v9000 = vpop.f32.mrb[0].mxu0
      %v9001 = vpop.f32.mrb[0].mxu0
      %v9002 = vadd.f32 %v8754, %v9001
      %v9003 = vpop.f32.mrb[0].mxu0
      %9004 = vmatprep.mubr.bf16.mxu0 %v8684
      %9005 = vmatmul.mubr.bf16.gmra.mrb[0].mxu0 %v8683
      %v9006 = vpop.f32.mrb[0].mxu0
      %v9007 = vadd.f32 %v8754, %v9006
      %v9008 = vpop.f32.mrb[0].mxu0
      %v9009 = vpop.f32.mrb[0].mxu0
      %v9010 = vadd.f32 %v8754, %v9009
      %v9011 = vpop.f32.mrb[0].mxu0
      %9012 = vmatprep.mubr.bf16.mxu0 %v8686
      %9013 = vmatmul.mubr.bf16.gmra.mrb[0].mxu0 %v8685
      %v9014 = vpop.f32.mrb[0].mxu0
      %v9015 = vadd.f32 %v8754, %v9014
      %v9016 = vpop.f32.mrb[0].mxu0
      %v9017 = vpop.f32.mrb[0].mxu0
      %v9018 = vadd.f32 %v8754, %v9017
      %v9019 = vpop.f32.mrb[0].mxu0
      %9020 = vmatprep.mubr.bf16.mxu0 %v8688
      %9021 = vmatmul.mubr.bf16.gmra.mrb[0].mxu0 %v8687
      %v9022 = vpop.f32.mrb[0].mxu0
      %v9023 = vadd.f32 %v8754, %v9022
      %v9024 = vpop.f32.mrb[0].mxu0
      %v9025 = vpop.f32.mrb[0].mxu0
      %v9026 = vadd.f32 %v8754, %v9025
      %v9027 = vpop.f32.mrb[0].mxu0
      %9028 = vmatprep.mubr.bf16.mxu0 %v8690
      %9029 = vmatmul.mubr.bf16.gmra.mrb[0].mxu0 %v8689
      %v9030 = vpop.f32.mrb[0].mxu0
      %v9031 = vadd.f32 %v8754, %v9030
      %v9032 = vpop.f32.mrb[0].mxu0
      %v9033 = vpop.f32.mrb[0].mxu0
      %v9034 = vadd.f32 %v8754, %v9033
      %v9035 = vpop.f32.mrb[0].mxu0
      %9036 = vmatprep.mubr.bf16.mxu0 %v8692
      %9037 = vmatmul.mubr.bf16.gmra.mrb[0].mxu0 %v8691
      %v9038 = vpop.f32.mrb[0].mxu0
      %v9039 = vadd.f32 %v8754, %v9038
      %v9040 = vpop.f32.mrb[0].mxu0
      %v9041 = vpop.f32.mrb[0].mxu0
      %v9042 = vadd.f32 %v8754, %v9041
      %v9043 = vpop.f32.mrb[0].mxu0
      %9044 = vmatprep.mubr.bf16.mxu0 %v8694
      %9045 = vmatmul.mubr.bf16.gmra.mrb[0].mxu0 %v8693
      %v9046 = vpop.f32.mrb[0].mxu0
      %v9047 = vadd.f32 %v8754, %v9046
      %v9048 = vpop.f32.mrb[0].mxu0
      %v9049 = vpop.f32.mrb[0].mxu0
      %v9050 = vadd.f32 %v8754, %v9049
      %v9051 = vpop.f32.mrb[0].mxu0
      %9052 = vmatprep.mubr.bf16.mxu0 %v8696
      %9053 = vmatmul.mubr.bf16.gmra.mrb[0].mxu0 %v8695
      %v9054 = vpop.f32.mrb[0].mxu0
      %v9055 = vadd.f32 %v8754, %v9054
      %v9056 = vpop.f32.mrb[0].mxu0
      %v9057 = vpop.f32.mrb[0].mxu0
      %v9058 = vadd.f32 %v8754, %v9057
      %v9059 = vpop.f32.mrb[0].mxu0
      %9060 = vmatprep.mubr.bf16.mxu0 %v8698
      %9061 = vmatmul.mubr.bf16.gmra.mrb[0].mxu0 %v8697
      %v9062 = vpop.f32.mrb[0].mxu0
      %v9063 = vadd.f32 %v8754, %v9062
      %v9064 = vpop.f32.mrb[0].mxu0
      %v9065 = vpop.f32.mrb[0].mxu0
      %v9066 = vadd.f32 %v8754, %v9065
      %v9067 = vpop.f32.mrb[0].mxu0
      %9068 = vmatprep.mubr.bf16.mxu0 %v8700
      %9069 = vmatmul.mubr.bf16.gmra.mrb[0].mxu0 %v8699
      %v9070 = vpop.f32.mrb[0].mxu0
      %v9071 = vadd.f32 %v8754, %v9070
      %v9072 = vpop.f32.mrb[0].mxu0
      %v9073 = vpop.f32.mrb[0].mxu0
      %v9074 = vadd.f32 %v8754, %v9073
      %v9075 = vpop.f32.mrb[0].mxu0
      %9076 = vmatprep.mubr.bf16.mxu0 %v8702
      %9077 = vmatmul.mubr.bf16.gmra.mrb[0].mxu0 %v8701
      %v9078 = vpop.f32.mrb[0].mxu0
      %v9079 = vadd.f32 %v8754, %v9078
      %v9080 = vpop.f32.mrb[0].mxu0
      %v9081 = vpop.f32.mrb[0].mxu0
      %v9082 = vadd.f32 %v8754, %v9081
      %v9083 = vpop.f32.mrb[0].mxu0
      %9084 = vmatprep.mubr.bf16.mxu0 %v8704
      %9085 = vmatmul.mubr.bf16.gmra.mrb[0].mxu0 %v8703
      %v9086 = vpop.f32.mrb[0].mxu0
      %v9087 = vadd.f32 %v8754, %v9086
      %v9088 = vpop.f32.mrb[0].mxu0
      %v9089 = vpop.f32.mrb[0].mxu0
      %v9090 = vadd.f32 %v8754, %v9089
      %v9091 = vpop.f32.mrb[0].mxu0
      %9092 = vmatprep.mubr.bf16.mxu0 %v8706
      %9093 = vmatmul.mubr.bf16.gmra.mrb[0].mxu0 %v8705
      %v9094 = vpop.f32.mrb[0].mxu0
      %v9095 = vadd.f32 %v8754, %v9094
      %v9096 = vpop.f32.mrb[0].mxu0
      %v9097 = vpop.f32.mrb[0].mxu0
      %v9098 = vadd.f32 %v8754, %v9097
      %v9099 = vpop.f32.mrb[0].mxu0
      %9100 = vmatprep.mubr.bf16.mxu0 %v8708
      %9101 = vmatmul.mubr.bf16.gmra.mrb[0].mxu0 %v8707
      %v9102 = vpop.f32.mrb[0].mxu0
      %v9103 = vadd.f32 %v8754, %v9102
      %v9104 = vpop.f32.mrb[0].mxu0
      %v9105 = vpop.f32.mrb[0].mxu0
      %v9106 = vadd.f32 %v8754, %v9105
      %v9107 = vpop.f32.mrb[0].mxu0
      %9108 = vmatprep.mubr.bf16.mxu0 %v8710
      %9109 = vmatmul.mubr.bf16.gmra.mrb[0].mxu0 %v8709
      %v9110 = vpop.f32.mrb[0].mxu0
      %v9111 = vadd.f32 %v8754, %v9110
      %v9112 = vpop.f32.mrb[0].mxu0
      %v9113 = vpop.f32.mrb[0].mxu0
      %v9114 = vadd.f32 %v8754, %v9113
      %v9115 = vpop.f32.mrb[0].mxu0
      %9116 = vmatprep.mubr.bf16.mxu0 %v8712
      %9117 = vmatmul.mubr.bf16.gmra.mrb[0].mxu0 %v8711
      %v9118 = vpop.f32.mrb[0].mxu0
      %v9119 = vadd.f32 %v8754, %v9118
      %v9120 = vpop.f32.mrb[0].mxu0
      %v9121 = vpop.f32.mrb[0].mxu0
      %v9122 = vadd.f32 %v8754, %v9121
      %v9123 = vpop.f32.mrb[0].mxu0
      %9124 = vmatprep.mubr.bf16.mxu0 %v8714
      %9125 = vmatmul.mubr.bf16.gmra.mrb[0].mxu0 %v8713
      %v9126 = vpop.f32.mrb[0].mxu0
      %v9127 = vadd.f32 %v8754, %v9126
      %v9128 = vpop.f32.mrb[0].mxu0
      %v9129 = vpop.f32.mrb[0].mxu0
      %v9130 = vadd.f32 %v8754, %v9129
      %v9131 = vpop.f32.mrb[0].mxu0
      %9132 = vmatprep.mubr.bf16.mxu0 %v8716
      %9133 = vmatmul.mubr.bf16.gmra.mrb[0].mxu0 %v8715
      %v9134 = vpop.f32.mrb[0].mxu0
      %v9135 = vadd.f32 %v8754, %v9134
      %v9136 = vpop.f32.mrb[0].mxu0
      %v9137 = vpop.f32.mrb[0].mxu0
      %v9138 = vadd.f32 %v8754, %v9137
      %v9139 = vpop.f32.mrb[0].mxu0
      %9140 = vdwg.mxu0
      %v9141 = vpack.c.bf16 %v8890, %v8887
      %v9142 = vpack.c.bf16 %v8898, %v8895
      %v9143 = vpack.c.bf16 %v8906, %v8903
      %v9144 = vpack.c.bf16 %v8914, %v8911
      %v9145 = vpack.c.bf16 %v8922, %v8919
      %v9146 = vpack.c.bf16 %v8930, %v8927
      %v9147 = vpack.c.bf16 %v8938, %v8935
      %v9148 = vpack.c.bf16 %v8946, %v8943
      %v9149 = vpack.c.bf16 %v8954, %v8951
      %v9150 = vpack.c.bf16 %v8962, %v8959
      %v9151 = vpack.c.bf16 %v8970, %v8967
      %v9152 = vpack.c.bf16 %v8978, %v8975
      %v9153 = vpack.c.bf16 %v8986, %v8983
      %v9154 = vpack.c.bf16 %v8994, %v8991
      %v9155 = vpack.c.bf16 %v9002, %v8999
      %v9156 = vpack.c.bf16 %v9010, %v9007
      %v9157 = vpack.c.bf16 %v9018, %v9015
      %v9158 = vpack.c.bf16 %v9026, %v9023
      %v9159 = vpack.c.bf16 %v9034, %v9031
      %v9160 = vpack.c.bf16 %v9042, %v9039
      %v9161 = vpack.c.bf16 %v9050, %v9047
      %v9162 = vpack.c.bf16 %v9058, %v9055
      %v9163 = vpack.c.bf16 %v9066, %v9063
      %v9164 = vpack.c.bf16 %v9074, %v9071
      %v9165 = vpack.c.bf16 %v9082, %v9079
      %v9166 = vpack.c.bf16 %v9090, %v9087
      %v9167 = vpack.c.bf16 %v9098, %v9095
      %v9168 = vpack.c.bf16 %v9106, %v9103
      %v9169 = vpack.c.bf16 %v9114, %v9111
      %v9170 = vpack.c.bf16 %v9122, %v9119
      %v9171 = vpack.c.bf16 %v9130, %v9127
      %v9172 = vpack.c.bf16 %v9138, %v9135
      %v9205 = vunpack.c.l.b16 %v9141
      %v9206 = vunpack.c.h.b16 %v9141
      %v9207 = vunpack.c.l.b16 %v9142
      %v9208 = vunpack.c.h.b16 %v9142
      %v9209 = vunpack.c.l.b16 %v9143
      %v9210 = vunpack.c.h.b16 %v9143
      %v9211 = vunpack.c.l.b16 %v9144
      %v9212 = vunpack.c.h.b16 %v9144
      %v9213 = vunpack.c.l.b16 %v9145
      %v9214 = vunpack.c.h.b16 %v9145
      %v9215 = vunpack.c.l.b16 %v9146
      %v9216 = vunpack.c.h.b16 %v9146
      %v9217 = vunpack.c.l.b16 %v9147
      %v9218 = vunpack.c.h.b16 %v9147
      %v9219 = vunpack.c.l.b16 %v9148
      %v9220 = vunpack.c.h.b16 %v9148
      %v9221 = vunpack.c.l.b16 %v9149
      %v9222 = vunpack.c.h.b16 %v9149
      %v9223 = vunpack.c.l.b16 %v9150
      %v9224 = vunpack.c.h.b16 %v9150
      %v9225 = vunpack.c.l.b16 %v9151
      %v9226 = vunpack.c.h.b16 %v9151
      %v9227 = vunpack.c.l.b16 %v9152
      %v9228 = vunpack.c.h.b16 %v9152
      %v9229 = vunpack.c.l.b16 %v9153
      %v9230 = vunpack.c.h.b16 %v9153
      %v9231 = vunpack.c.l.b16 %v9154
      %v9232 = vunpack.c.h.b16 %v9154
      %v9233 = vunpack.c.l.b16 %v9155
      %v9234 = vunpack.c.h.b16 %v9155
      %v9235 = vunpack.c.l.b16 %v9156
      %v9236 = vunpack.c.h.b16 %v9156
      %v9237 = vunpack.c.l.b16 %v9157
      %v9238 = vunpack.c.h.b16 %v9157
      %v9239 = vunpack.c.l.b16 %v9158
      %v9240 = vunpack.c.h.b16 %v9158
      %v9241 = vunpack.c.l.b16 %v9159
      %v9242 = vunpack.c.h.b16 %v9159
      %v9243 = vunpack.c.l.b16 %v9160
      %v9244 = vunpack.c.h.b16 %v9160
      %v9245 = vunpack.c.l.b16 %v9161
      %v9246 = vunpack.c.h.b16 %v9161
      %v9247 = vunpack.c.l.b16 %v9162
      %v9248 = vunpack.c.h.b16 %v9162
      %v9249 = vunpack.c.l.b16 %v9163
      %v9250 = vunpack.c.h.b16 %v9163
      %v9251 = vunpack.c.l.b16 %v9164
      %v9252 = vunpack.c.h.b16 %v9164
      %v9253 = vunpack.c.l.b16 %v9165
      %v9254 = vunpack.c.h.b16 %v9165
      %v9255 = vunpack.c.l.b16 %v9166
      %v9256 = vunpack.c.h.b16 %v9166
      %v9257 = vunpack.c.l.b16 %v9167
      %v9258 = vunpack.c.h.b16 %v9167
      %v9259 = vunpack.c.l.b16 %v9168
      %v9260 = vunpack.c.h.b16 %v9168
      %v9261 = vunpack.c.l.b16 %v9169
      %v9262 = vunpack.c.h.b16 %v9169
      %v9263 = vunpack.c.l.b16 %v9170
      %v9264 = vunpack.c.h.b16 %v9170
      %v9265 = vunpack.c.l.b16 %v9171
      %v9266 = vunpack.c.h.b16 %v9171
      %v9267 = vunpack.c.l.b16 %v9172
      %v9268 = vunpack.c.h.b16 %v9172
      %v9269 = vpack.c.b16 %v9205, %v9205
      %v9270 = vpack.c.b16 %v9206, %v9206
      %v9271 = vpack.c.b16 %v9207, %v9207
      %v9272 = vpack.c.b16 %v9208, %v9208
      %v9273 = vpack.c.b16 %v9209, %v9209
      %v9274 = vpack.c.b16 %v9210, %v9210
      %v9275 = vpack.c.b16 %v9211, %v9211
      %v9276 = vpack.c.b16 %v9212, %v9212
      %v9277 = vpack.c.b16 %v9213, %v9213
      %v9278 = vpack.c.b16 %v9214, %v9214
      %v9279 = vpack.c.b16 %v9215, %v9215
      %v9280 = vpack.c.b16 %v9216, %v9216
      %v9281 = vpack.c.b16 %v9217, %v9217
      %v9282 = vpack.c.b16 %v9218, %v9218
      %v9283 = vpack.c.b16 %v9219, %v9219
      %v9284 = vpack.c.b16 %v9220, %v9220
      %v9285 = vpack.c.b16 %v9221, %v9221
      %v9286 = vpack.c.b16 %v9222, %v9222
      %v9287 = vpack.c.b16 %v9223, %v9223
      %v9288 = vpack.c.b16 %v9224, %v9224
      %v9289 = vpack.c.b16 %v9225, %v9225
      %v9290 = vpack.c.b16 %v9226, %v9226
      %v9291 = vpack.c.b16 %v9227, %v9227
      %v9292 = vpack.c.b16 %v9228, %v9228
      %v9293 = vpack.c.b16 %v9229, %v9229
      %v9294 = vpack.c.b16 %v9230, %v9230
      %v9295 = vpack.c.b16 %v9231, %v9231
      %v9296 = vpack.c.b16 %v9232, %v9232
      %v9297 = vpack.c.b16 %v9233, %v9233
      %v9298 = vpack.c.b16 %v9234, %v9234
      %v9299 = vpack.c.b16 %v9235, %v9235
      %v9300 = vpack.c.b16 %v9236, %v9236
      %v9301 = vpack.c.b16 %v9237, %v9237
      %v9302 = vpack.c.b16 %v9238, %v9238
      %v9303 = vpack.c.b16 %v9239, %v9239
      %v9304 = vpack.c.b16 %v9240, %v9240
      %v9305 = vpack.c.b16 %v9241, %v9241
      %v9306 = vpack.c.b16 %v9242, %v9242
      %v9307 = vpack.c.b16 %v9243, %v9243
      %v9308 = vpack.c.b16 %v9244, %v9244
      %v9309 = vpack.c.b16 %v9245, %v9245
      %v9310 = vpack.c.b16 %v9246, %v9246
      %v9311 = vpack.c.b16 %v9247, %v9247
      %v9312 = vpack.c.b16 %v9248, %v9248
      %v9313 = vpack.c.b16 %v9249, %v9249
      %v9314 = vpack.c.b16 %v9250, %v9250
      %v9315 = vpack.c.b16 %v9251, %v9251
      %v9316 = vpack.c.b16 %v9252, %v9252
      %v9317 = vpack.c.b16 %v9253, %v9253
      %v9318 = vpack.c.b16 %v9254, %v9254
      %v9319 = vpack.c.b16 %v9255, %v9255
      %v9320 = vpack.c.b16 %v9256, %v9256
      %v9321 = vpack.c.b16 %v9257, %v9257
      %v9322 = vpack.c.b16 %v9258, %v9258
      %v9323 = vpack.c.b16 %v9259, %v9259
      %v9324 = vpack.c.b16 %v9260, %v9260
      %v9325 = vpack.c.b16 %v9261, %v9261
      %v9326 = vpack.c.b16 %v9262, %v9262
      %v9327 = vpack.c.b16 %v9263, %v9263
      %v9328 = vpack.c.b16 %v9264, %v9264
      %v9329 = vpack.c.b16 %v9265, %v9265
      %v9330 = vpack.c.b16 %v9266, %v9266
      %v9331 = vpack.c.b16 %v9267, %v9267
      %v9332 = vpack.c.b16 %v9268, %v9268
      %9397 = vst [vmem:[%s631] sm:$0xf] %v9269
      %9398 = vst [vmem:[%s631 + $0x4] sm:$0xf] %v9270
      %9399 = vst [vmem:[%s631 + $0x8] sm:$0xf] %v9271
      %9400 = vst [vmem:[%s631 + $0xc] sm:$0xf] %v9272
      %9401 = vst [vmem:[%s631 + $0x10] sm:$0xf] %v9273
      %9402 = vst [vmem:[%s631 + $0x14] sm:$0xf] %v9274
      %9403 = vst [vmem:[%s631 + $0x18] sm:$0xf] %v9275
      %9404 = vst [vmem:[%s631 + $0x1c] sm:$0xf] %v9276
      %9405 = vst [vmem:[%s631 + $0x20] sm:$0xf] %v9277
      %9406 = vst [vmem:[%s631 + $0x24] sm:$0xf] %v9278
      %9407 = vst [vmem:[%s631 + $0x28] sm:$0xf] %v9279
      %9408 = vst [vmem:[%s631 + $0x2c] sm:$0xf] %v9280
      %9409 = vst [vmem:[%s631 + $0x30] sm:$0xf] %v9281
      %9410 = vst [vmem:[%s631 + $0x34] sm:$0xf] %v9282
      %9411 = vst [vmem:[%s631 + $0x38] sm:$0xf] %v9283
      %9412 = vst [vmem:[%s631 + $0x3c] sm:$0xf] %v9284
      %9413 = vst [vmem:[%s631 + $0x40] sm:$0xf] %v9285
      %9414 = vst [vmem:[%s631 + $0x44] sm:$0xf] %v9286
      %9415 = vst [vmem:[%s631 + $0x48] sm:$0xf] %v9287
      %9416 = vst [vmem:[%s631 + $0x4c] sm:$0xf] %v9288
      %9417 = vst [vmem:[%s631 + $0x50] sm:$0xf] %v9289
      %9418 = vst [vmem:[%s631 + $0x54] sm:$0xf] %v9290
      %9419 = vst [vmem:[%s631 + $0x58] sm:$0xf] %v9291
      %9420 = vst [vmem:[%s631 + $0x5c] sm:$0xf] %v9292
      %9421 = vst [vmem:[%s631 + $0x60] sm:$0xf] %v9293
      %9422 = vst [vmem:[%s631 + $0x64] sm:$0xf] %v9294
      %9423 = vst [vmem:[%s631 + $0x68] sm:$0xf] %v9295
      %9424 = vst [vmem:[%s631 + $0x6c] sm:$0xf] %v9296
      %9425 = vst [vmem:[%s631 + $0x70] sm:$0xf] %v9297
      %9426 = vst [vmem:[%s631 + $0x74] sm:$0xf] %v9298
      %9427 = vst [vmem:[%s631 + $0x78] sm:$0xf] %v9299
      %9428 = vst [vmem:[%s631 + $0x7c] sm:$0xf] %v9300
      %9429 = vst [vmem:[%s631 + $0x80] sm:$0xf] %v9301
      %9430 = vst [vmem:[%s631 + $0x84] sm:$0xf] %v9302
      %9431 = vst [vmem:[%s631 + $0x88] sm:$0xf] %v9303
      %9432 = vst [vmem:[%s631 + $0x8c] sm:$0xf] %v9304
      %9433 = vst [vmem:[%s631 + $0x90] sm:$0xf] %v9305
      %9434 = vst [vmem:[%s631 + $0x94] sm:$0xf] %v9306
      %9435 = vst [vmem:[%s631 + $0x98] sm:$0xf] %v9307
      %9436 = vst [vmem:[%s631 + $0x9c] sm:$0xf] %v9308
      %9437 = vst [vmem:[%s631 + $0xa0] sm:$0xf] %v9309
      %9438 = vst [vmem:[%s631 + $0xa4] sm:$0xf] %v9310
      %9439 = vst [vmem:[%s631 + $0xa8] sm:$0xf] %v9311
      %9440 = vst [vmem:[%s631 + $0xac] sm:$0xf] %v9312
      %9441 = vst [vmem:[%s631 + $0xb0] sm:$0xf] %v9313
      %9442 = vst [vmem:[%s631 + $0xb4] sm:$0xf] %v9314
      %9443 = vst [vmem:[%s631 + $0xb8] sm:$0xf] %v9315
      %9444 = vst [vmem:[%s631 + $0xbc] sm:$0xf] %v9316
      %9445 = vst [vmem:[%s631 + $0xc0] sm:$0xf] %v9317
      %9446 = vst [vmem:[%s631 + $0xc4] sm:$0xf] %v9318
      %9447 = vst [vmem:[%s631 + $0xc8] sm:$0xf] %v9319
      %9448 = vst [vmem:[%s631 + $0xcc] sm:$0xf] %v9320
      %9449 = vst [vmem:[%s631 + $0xd0] sm:$0xf] %v9321
      %9450 = vst [vmem:[%s631 + $0xd4] sm:$0xf] %v9322
      %9451 = vst [vmem:[%s631 + $0xd8] sm:$0xf] %v9323
      %9452 = vst [vmem:[%s631 + $0xdc] sm:$0xf] %v9324
      %9453 = vst [vmem:[%s631 + $0xe0] sm:$0xf] %v9325
      %9454 = vst [vmem:[%s631 + $0xe4] sm:$0xf] %v9326
      %9455 = vst [vmem:[%s631 + $0xe8] sm:$0xf] %v9327
      %9456 = vst [vmem:[%s631 + $0xec] sm:$0xf] %v9328
      %9457 = vst [vmem:[%s631 + $0xf0] sm:$0xf] %v9329
      %9458 = vst [vmem:[%s631 + $0xf4] sm:$0xf] %v9330
      %9459 = vst [vmem:[%s631 + $0xf8] sm:$0xf] %v9331
      %9460 = vst [vmem:[%s631 + $0xfc] sm:$0xf] %v9332
      %s9461 = smul.u32 64, %s31
      %p9462 = scmp.lt.s32.totalorder %s9461, 127
      %s9463 = scalar_select %p9462, %s9461, 127
      %s9464 = smul.addr %s9463, 4
      %s9465 = scalar_lea.vmem %s20, %s9464
      // Predicated region
      $region101: #{nerf_forward_pallas.1} parent=99 // pred_check
        %p9466 = pneg %p474
      $region102: #{nerf_forward_pallas.1} parent=99 // pred_check_branch
        %9468 = sbr.rel (%p9466) target = $region104
      $region103: #{nerf_forward_pallas.1} parent=99 // pred_region
        %s9469 = smul.u32 64, %s31
      $region104: #{nerf_forward_pallas.1} parent=99 // pred_fallthru
        _
    $region100: #{nerf_forward_pallas.1} parent=5 // pred_fallthru
      _
    %p9470 = scmp.le.s32.totalorder 2, %s26
    // Predicated region
    $region105: #{nerf_forward_pallas.1} parent=5 // pred_check
      %p9471 = pneg %p9470
    $region106: #{nerf_forward_pallas.1} parent=5 // pred_check_branch
      %9473 = sbr.rel (%p9471) target = $region108
    $region107: #{nerf_forward_pallas.1} parent=5 // pred_region
      %s9474 = ssub.s32 %s26, 2
      // Predicated region
      $region109: #{nerf_forward_pallas.1} parent=107 // pred_check
        %p9475 = pneg %p480
      $region110: #{nerf_forward_pallas.1} parent=107 // pred_check_branch
        %9477 = sbr.rel (%p9475) target = $region112
      $region111: #{nerf_forward_pallas.1} parent=107 // pred_region
        %s9478 = smul.u32 64, %s32
        %p9479 = scmp.lt.s32.totalorder %s9478, 127
        %s9480 = scalar_select %p9479, %s9478, 127
        %s9481 = smul.addr %s9480, 4
        %s9482 = scalar_lea.vmem %s20, %s9481
      $region112: #{nerf_forward_pallas.1} parent=107 // pred_fallthru
        _
    $region108: #{nerf_forward_pallas.1} parent=5 // pred_fallthru
      _
  $region6: #{nerf_forward_pallas.1} parent=0 // loop_footer
    %s30 = sadd.s32 1, %s26
  $region7: #{nerf_forward_pallas.1} parent=0 // loop_footer_branch
    %25 = sbr.rel target = $region3
  $region8: #{nerf_forward_pallas.1} parent=0 // loop_exit
    _

</llo_original>
